<compile_context>
chip_gen: v7x
topology: tpu7x:2x2x1
jax: 0.10.0
libtpu: 0.0.40
codegen_flags: <defaults>
</compile_context>

<pallas_src>
import functools

import jax
import jax.numpy as jnp
import numpy as np
from jax.experimental import pallas as pl
from jax.experimental.pallas import tpu as pltpu


def _parallel(n):
    return pltpu.CompilerParams(dimension_semantics=("parallel",) * n)


# ----------------------------------------------------------------------------
# Kernels
# ----------------------------------------------------------------------------
def _linear_relu_kernel(t_ref, w_ref, b_ref, o_ref):
    """t_emb = relu(t @ W + b), f32."""
    acc = jnp.dot(t_ref[...], w_ref[...], preferred_element_type=jnp.float32)
    o_ref[...] = jnp.maximum(acc + b_ref[...], 0.0).astype(o_ref.dtype)


def _conv2d_kernel(x_ref, w_ref, b_ref, o_ref, *stat_refs, kh, kw, apply_relu):
    """Direct (im2col-free) VALID conv for one image.

    x_ref: (1, Hi, Wi, Cin)   pre-padded input slab
    w_ref: (kh*kw, Cin, Cout) taps
    b_ref: (1, Cout)          f32 bias
    o_ref: (1, Ho, Wo, Cout)
    stat_refs (optional): per-image sum / sum-of-squares, each (1, 1, Cout) f32,
      computed on the post-bias/ReLU f32 values (BN epilogue outputs).
    """
    _, ho, wo, cout = o_ref.shape
    cin = x_ref.shape[-1]
    x = x_ref[0]                                           # (Hi, Wi, Cin)
    acc = jnp.zeros((ho * wo, cout), jnp.float32)
    for dy in range(kh):
        for dx in range(kw):
            xt = x[dy:dy + ho, dx:dx + wo, :].reshape(ho * wo, cin)
            acc += jnp.dot(xt, w_ref[dy * kw + dx],
                           preferred_element_type=jnp.float32)
    acc = acc + b_ref[...]
    if apply_relu:
        acc = jnp.maximum(acc, 0.0)
    o_ref[...] = acc.reshape(1, ho, wo, cout).astype(o_ref.dtype)
    if stat_refs:
        sum_ref, sq_ref = stat_refs
        sum_ref[...] = jnp.sum(acc, axis=0, keepdims=True).reshape(1, 1, cout)
        sq_ref[...] = jnp.sum(acc * acc, axis=0, keepdims=True).reshape(1, 1, cout)


def _bn_kernel(h_ref, sum_ref, sq_ref, *rest, count, add_t, eps=1e-5):
    """Training-mode BatchNorm2d (+ optional fused time-embedding add).

    Lane-dense layout: the W and C axes are folded together.
    h_ref:  (1, H, W*C)      one image tile (bf16 or f32)
    sum_ref/sq_ref: (N, 1, W*C)  per-image partial sums from the conv epilogue,
                    pre-tiled along W so every lane carries its channel's stat.
    rest = (t_ref?, o_ref);  t_ref: (1, 1, W*C) per-image time embedding (f32).
    """
    o_ref = rest[-1]
    s = jnp.sum(sum_ref[...], axis=0)                      # (1, W*C)
    ss = jnp.sum(sq_ref[...], axis=0)                      # (1, W*C)
    mean = s / count
    var = jnp.maximum(ss / count - mean * mean, 0.0)       # biased variance
    scale = jax.lax.rsqrt(var + eps)
    shift = -mean * scale
    if add_t:
        shift = shift + rest[0][0]                         # (1, W*C)
    x = h_ref[...].astype(jnp.float32)                     # (1, H, W*C)
    o_ref[...] = (x * scale + shift).astype(o_ref.dtype)


# ----------------------------------------------------------------------------
# Pallas wrappers
# ----------------------------------------------------------------------------
def linear_relu(t, w, b):
    n, k = t.shape
    _, c = w.shape
    return pl.pallas_call(
        _linear_relu_kernel,
        out_shape=jax.ShapeDtypeStruct((n, c), jnp.float32),
        grid=(1,),
        in_specs=[pl.BlockSpec((n, k), lambda i: (0, 0)),
                  pl.BlockSpec((k, c), lambda i: (0, 0)),
                  pl.BlockSpec((1, c), lambda i: (0, 0))],
        out_specs=pl.BlockSpec((n, c), lambda i: (0, 0)),
    )(t, w, b.reshape(1, c))


def conv2d(xp, w, b, *, kh, kw, relu, stats, out_dtype):
    """VALID conv on a pre-padded NHWC input; grid over batch ("parallel")."""
    n, hi, wi, cin = xp.shape
    kk, cin_w, cout = w.shape
    assert kk == kh * kw and cin_w == cin
    ho, wo = hi - kh + 1, wi - kw + 1
    kernel = functools.partial(_conv2d_kernel, kh=kh, kw=kw, apply_relu=relu)
    in_specs = [pl.BlockSpec((1, hi, wi, cin), lambda i: (i, 0, 0, 0)),
                pl.BlockSpec((kk, cin, cout), lambda i: (0, 0, 0)),
                pl.BlockSpec((1, cout), lambda i: (0, 0))]
    if stats:
        out_shape = (jax.ShapeDtypeStruct((n, ho, wo, cout), out_dtype),
                     jax.ShapeDtypeStruct((n, 1, cout), jnp.float32),
                     jax.ShapeDtypeStruct((n, 1, cout), jnp.float32))
        out_specs = (pl.BlockSpec((1, ho, wo, cout), lambda i: (i, 0, 0, 0)),
                     pl.BlockSpec((1, 1, cout), lambda i: (i, 0, 0)),
                     pl.BlockSpec((1, 1, cout), lambda i: (i, 0, 0)))
    else:
        out_shape = jax.ShapeDtypeStruct((n, ho, wo, cout), out_dtype)
        out_specs = pl.BlockSpec((1, ho, wo, cout), lambda i: (i, 0, 0, 0))
    return pl.pallas_call(
        kernel,
        out_shape=out_shape,
        grid=(n,),
        in_specs=in_specs,
        out_specs=out_specs,
        compiler_params=_parallel(1),
    )(xp, w, b.astype(jnp.float32).reshape(1, cout))


def batchnorm(h, sums, sqs, *, t_emb=None, count):
    """Tiled BN (+ optional time-embedding add) on a lane-dense (N, H, W*C) view."""
    n, hh, ww, c = h.shape
    wc = ww * c
    hf = h.reshape(n, hh, wc)                              # free layout view
    # Pre-tile per-channel stats along W (tiny plumbing): lane k carries channel k % C.
    sums_t = jnp.tile(sums, (1, 1, ww))                    # (N, 1, W*C)
    sqs_t = jnp.tile(sqs, (1, 1, ww))
    add_t = t_emb is not None
    kernel = functools.partial(_bn_kernel, count=float(count), add_t=add_t)
    in_specs = [pl.BlockSpec((1, hh, wc), lambda i: (i, 0, 0)),
                pl.BlockSpec((n, 1, wc), lambda i: (0, 0, 0)),
                pl.BlockSpec((n, 1, wc), lambda i: (0, 0, 0))]
    args = [hf, sums_t, sqs_t]
    if add_t:
        in_specs.append(pl.BlockSpec((1, 1, wc), lambda i: (i, 0, 0)))
        args.append(jnp.tile(t_emb.astype(jnp.float32).reshape(n, 1, c), (1, 1, ww)))
    out = pl.pallas_call(
        kernel,
        out_shape=jax.ShapeDtypeStruct((n, hh, wc), h.dtype),
        grid=(n,),
        in_specs=in_specs,
        out_specs=pl.BlockSpec((1, hh, wc), lambda i: (i, 0, 0)),
        compiler_params=_parallel(1),
    )(*args)
    return out.reshape(n, hh, ww, c)


# ----------------------------------------------------------------------------
# Block.forward (up=False): conv3x3+relu -> bn1 + t -> conv3x3+relu -> bn2 -> conv4x4/s2
# ----------------------------------------------------------------------------
def block_forward(x_nchw, t, params, *, compute_dtype=jnp.bfloat16):
    n, cin, hh, ww = x_nchw.shape
    cout = params["w1"].shape[-1]
    assert hh % 2 == 0 and ww % 2 == 0

    x = jnp.transpose(x_nchw, (0, 2, 3, 1))                          # NCHW -> NHWC

    # t = relu(time_mlp(t))
    t_emb = linear_relu(t, params["wt"], params["bt"])               # (N, Cout) f32

    # x = relu(conv1(x)); BN1 statistics emitted from the conv epilogue.
    xp = jnp.pad(x, ((0, 0), (1, 1), (1, 1), (0, 0))).astype(compute_dtype)
    w1 = params["w1"].reshape(9, cin, cout).astype(compute_dtype)
    h1, s1, q1 = conv2d(xp, w1, params["b1"], kh=3, kw=3, relu=True,
                        stats=True, out_dtype=compute_dtype)

    # x = bnorm1(x) + t[:, :, None, None]   (t-add fused into the BN kernel)
    h1 = batchnorm(h1, s1, q1, t_emb=t_emb, count=n * hh * ww)

    # x = relu(conv2(x)); BN2 statistics emitted from the conv epilogue.
    # TODO(synk): conv outputs could be written pre-padded to drop these XLA pad copies.
    h1p = jnp.pad(h1, ((0, 0), (1, 1), (1, 1), (0, 0)))
    w2 = params["w2"].reshape(9, cout, cout).astype(compute_dtype)
    h2, s2, q2 = conv2d(h1p, w2, params["b2"], kh=3, kw=3, relu=True,
                        stats=True, out_dtype=compute_dtype)

    # x = bnorm2(x)
    h2 = batchnorm(h2, s2, q2, count=n * hh * ww)

    # transform = Conv2d(out_ch, out_ch, 4, stride=2, padding=1):
    # lower the stride-2 4x4 conv to a stride-1 2x2 conv via space-to-depth.
    h2p = jnp.pad(h2, ((0, 0), (1, 1), (1, 1), (0, 0)))              # (N, H+2, W+2, C)
    hp, wp = hh + 2, ww + 2
    h2s = h2p.reshape(n, hp // 2, 2, wp // 2, 2, cout)
    h2s = h2s.transpose(0, 1, 3, 2, 4, 5).reshape(n, hp // 2, wp // 2, 4 * cout)
    w3 = params["w3"].reshape(2, 2, 2, 2, cout, cout)
    w3 = w3.transpose(0, 2, 1, 3, 4, 5).reshape(4, 4 * cout, cout).astype(compute_dtype)
    out = conv2d(h2s, w3, params["b3"], kh=2, kw=2, relu=False,
                 stats=False, out_dtype=jnp.float32)                 # (N, H/2, W/2, Cout)

    return jnp.transpose(out, (0, 3, 1, 2))                          # back to NCHW


# ----------------------------------------------------------------------------
# Pure-JAX reference (for the sanity check)
# ----------------------------------------------------------------------------
def reference_forward(x_nchw, t, params):
    def conv(inp, w, b, stride, pad):
        return jax.lax.conv_general_dilated(
            inp, w, (stride, stride), [(pad, pad), (pad, pad)],
            dimension_numbers=("NHWC", "HWIO", "NHWC")) + b

    def bn(h):
        mean = h.mean(axis=(0, 1, 2), keepdims=True)
        var = ((h - mean) ** 2).mean(axis=(0, 1, 2), keepdims=True)
        return (h - mean) * jax.lax.rsqrt(var + 1e-5)

    t_emb = jax.nn.relu(t @ params["wt"] + params["bt"])
    x = jnp.transpose(x_nchw, (0, 2, 3, 1))
    h = jax.nn.relu(conv(x, params["w1"], params["b1"], 1, 1))
    h = bn(h) + t_emb[:, None, None, :]
    h = jax.nn.relu(conv(h, params["w2"], params["b2"], 1, 1))
    h = bn(h)
    out = conv(h, params["w3"], params["b3"], 2, 1)
    return jnp.transpose(out, (0, 3, 1, 2))


# ----------------------------------------------------------------------------
if __name__ == "__main__":
    in_ch, out_ch, time_dim = 4, 8, 32
    N, H, W = 2, 16, 16

    key = jax.random.PRNGKey(0)
    ks = jax.random.split(key, 10)
    params = {
        "wt": 0.1 * jax.random.normal(ks[0], (time_dim, out_ch), jnp.float32),
        "bt": 0.1 * jax.random.normal(ks[1], (out_ch,), jnp.float32),
        "w1": 0.1 * jax.random.normal(ks[2], (3, 3, in_ch, out_ch), jnp.float32),
        "b1": 0.1 * jax.random.normal(ks[3], (out_ch,), jnp.float32),
        "w2": 0.1 * jax.random.normal(ks[4], (3, 3, out_ch, out_ch), jnp.float32),
        "b2": 0.1 * jax.random.normal(ks[5], (out_ch,), jnp.float32),
        "w3": 0.1 * jax.random.normal(ks[6], (4, 4, out_ch, out_ch), jnp.float32),
        "b3": 0.1 * jax.random.normal(ks[7], (out_ch,), jnp.float32),
    }
    x = jax.random.normal(ks[8], (N, in_ch, H, W), jnp.float32)   # NCHW, like PyTorch
    t = jax.random.normal(ks[9], (N, time_dim), jnp.float32)

    ref = jax.block_until_ready(reference_forward(x, t, params))

    # f32 path: checks the kernel structure against the XLA reference.
    fwd_f32 = jax.jit(functools.partial(block_forward, compute_dtype=jnp.float32))
    out_f32 = jax.block_until_ready(fwd_f32(x, t, params))
    assert out_f32.shape == (N, out_ch, H // 2, W // 2), out_f32.shape
    np.testing.assert_allclose(np.asarray(out_f32), np.asarray(ref),
                               atol=5e-2, rtol=5e-2)

    # bf16 MXU path (default): halved HBM traffic, f32 accumulation + epilogue.
    fwd_bf16 = jax.jit(block_forward)
    out_bf16 = jax.block_until_ready(fwd_bf16(x, t, params))
    assert out_bf16.shape == (N, out_ch, H // 2, W // 2), out_bf16.shape
    np.testing.assert_allclose(np.asarray(out_bf16), np.asarray(ref),
                               atol=1e-1, rtol=1e-1)

    print("KERNEL_OK")
</pallas_src>

<mosaic_0001>
module attributes {stable_mosaic.version = 11 : i64} {
  func.func @_conv2d_kernel(%arg0: i32, %arg1: memref<1x18x18x4xf32, #tpu.memory_space<vmem>>, %arg2: memref<9x4x8xf32, #tpu.memory_space<vmem>>, %arg3: memref<1x8xf32, #tpu.memory_space<vmem>>, %arg4: memref<1x16x16x8xf32, #tpu.memory_space<vmem>>, %arg5: memref<1x1x8xf32, #tpu.memory_space<vmem>>, %arg6: memref<1x1x8xf32, #tpu.memory_space<vmem>>) attributes {dimension_semantics = [#tpu.dimension_semantics<parallel>], iteration_bounds = array<i64: 2>, scalar_prefetch = 0 : i64, scratch_operands = 0 : i64, tpu.core_type = #tpu.core_type<tc>, window_params = [{transform_indices = @transform_0, window_bounds = array<i64: 1, 18, 18, 4>}, {pipeline_mode = #tpu.pipeline_mode<synchronous>, transform_indices = @transform_1, window_bounds = array<i64: 9, 4, 8>}, {pipeline_mode = #tpu.pipeline_mode<synchronous>, transform_indices = @transform_2, window_bounds = array<i64: 1, 8>}, {transform_indices = @transform_3, window_bounds = array<i64: 1, 16, 16, 8>}, {transform_indices = @transform_4, window_bounds = array<i64: 1, 1, 8>}, {transform_indices = @transform_5, window_bounds = array<i64: 1, 1, 8>}]} {
    %c0 = arith.constant 0 : index
    %c0_0 = arith.constant 0 : index
    %c0_1 = arith.constant 0 : index
    %c0_2 = arith.constant 0 : index
    %0 = vector.load %arg1[%c0, %c0_0, %c0_1, %c0_2] : memref<1x18x18x4xf32, #tpu.memory_space<vmem>>, vector<1x18x18x4xf32>
    %1 = vector.shape_cast %0 : vector<1x18x18x4xf32> to vector<18x18x4xf32>
    %cst = arith.constant 0.000000e+00 : f32
    %2 = vector.broadcast %cst : f32 to vector<256x8xf32>
    %3 = vector.extract_strided_slice %1 {offsets = [0, 0, 0], sizes = [16, 16, 4], strides = [1, 1, 1]} : vector<18x18x4xf32> to vector<16x16x4xf32>
    %4 = vector.shape_cast %3 : vector<16x16x4xf32> to vector<256x4xf32>
    %c0_3 = arith.constant 0 : index
    %c0_4 = arith.constant 0 : index
    %c0_5 = arith.constant 0 : index
    %5 = vector.load %arg2[%c0_3, %c0_4, %c0_5] : memref<9x4x8xf32, #tpu.memory_space<vmem>>, vector<1x4x8xf32>
    %6 = vector.shape_cast %5 : vector<1x4x8xf32> to vector<4x8xf32>
    %cst_6 = arith.constant dense<0.000000e+00> : vector<256x8xf32>
    %7 = tpu.matmul %4, %6, %cst_6 {dimension_numbers = #tpu.dot_dimension_numbers<[1], [0], [0], [1], [0, 0, 1, 1], [], []>} : vector<256x4xf32>, vector<4x8xf32>, vector<256x8xf32> -> vector<256x8xf32>
    %8 = arith.addf %2, %7 : vector<256x8xf32>
    %9 = vector.extract_strided_slice %1 {offsets = [0, 1, 0], sizes = [16, 16, 4], strides = [1, 1, 1]} : vector<18x18x4xf32> to vector<16x16x4xf32>
    %10 = vector.shape_cast %9 : vector<16x16x4xf32> to vector<256x4xf32>
    %c1 = arith.constant 1 : index
    %c0_7 = arith.constant 0 : index
    %c0_8 = arith.constant 0 : index
    %11 = vector.load %arg2[%c1, %c0_7, %c0_8] : memref<9x4x8xf32, #tpu.memory_space<vmem>>, vector<1x4x8xf32>
    %12 = vector.shape_cast %11 : vector<1x4x8xf32> to vector<4x8xf32>
    %cst_9 = arith.constant dense<0.000000e+00> : vector<256x8xf32>
    %13 = tpu.matmul %10, %12, %cst_9 {dimension_numbers = #tpu.dot_dimension_numbers<[1], [0], [0], [1], [0, 0, 1, 1], [], []>} : vector<256x4xf32>, vector<4x8xf32>, vector<256x8xf32> -> vector<256x8xf32>
    %14 = arith.addf %8, %13 : vector<256x8xf32>
    %15 = vector.extract_strided_slice %1 {offsets = [0, 2, 0], sizes = [16, 16, 4], strides = [1, 1, 1]} : vector<18x18x4xf32> to vector<16x16x4xf32>
    %16 = vector.shape_cast %15 : vector<16x16x4xf32> to vector<256x4xf32>
    %c2 = arith.constant 2 : index
    %c0_10 = arith.constant 0 : index
    %c0_11 = arith.constant 0 : index
    %17 = vector.load %arg2[%c2, %c0_10, %c0_11] : memref<9x4x8xf32, #tpu.memory_space<vmem>>, vector<1x4x8xf32>
    %18 = vector.shape_cast %17 : vector<1x4x8xf32> to vector<4x8xf32>
    %cst_12 = arith.constant dense<0.000000e+00> : vector<256x8xf32>
    %19 = tpu.matmul %16, %18, %cst_12 {dimension_numbers = #tpu.dot_dimension_numbers<[1], [0], [0], [1], [0, 0, 1, 1], [], []>} : vector<256x4xf32>, vector<4x8xf32>, vector<256x8xf32> -> vector<256x8xf32>
    %20 = arith.addf %14, %19 : vector<256x8xf32>
    %21 = vector.extract_strided_slice %1 {offsets = [1, 0, 0], sizes = [16, 16, 4], strides = [1, 1, 1]} : vector<18x18x4xf32> to vector<16x16x4xf32>
    %22 = vector.shape_cast %21 : vector<16x16x4xf32> to vector<256x4xf32>
    %c3 = arith.constant 3 : index
    %c0_13 = arith.constant 0 : index
    %c0_14 = arith.constant 0 : index
    %23 = vector.load %arg2[%c3, %c0_13, %c0_14] : memref<9x4x8xf32, #tpu.memory_space<vmem>>, vector<1x4x8xf32>
    %24 = vector.shape_cast %23 : vector<1x4x8xf32> to vector<4x8xf32>
    %cst_15 = arith.constant dense<0.000000e+00> : vector<256x8xf32>
    %25 = tpu.matmul %22, %24, %cst_15 {dimension_numbers = #tpu.dot_dimension_numbers<[1], [0], [0], [1], [0, 0, 1, 1], [], []>} : vector<256x4xf32>, vector<4x8xf32>, vector<256x8xf32> -> vector<256x8xf32>
    %26 = arith.addf %20, %25 : vector<256x8xf32>
    %27 = vector.extract_strided_slice %1 {offsets = [1, 1, 0], sizes = [16, 16, 4], strides = [1, 1, 1]} : vector<18x18x4xf32> to vector<16x16x4xf32>
    %28 = vector.shape_cast %27 : vector<16x16x4xf32> to vector<256x4xf32>
    %c4 = arith.constant 4 : index
    %c0_16 = arith.constant 0 : index
    %c0_17 = arith.constant 0 : index
    %29 = vector.load %arg2[%c4, %c0_16, %c0_17] : memref<9x4x8xf32, #tpu.memory_space<vmem>>, vector<1x4x8xf32>
    %30 = vector.shape_cast %29 : vector<1x4x8xf32> to vector<4x8xf32>
    %cst_18 = arith.constant dense<0.000000e+00> : vector<256x8xf32>
    %31 = tpu.matmul %28, %30, %cst_18 {dimension_numbers = #tpu.dot_dimension_numbers<[1], [0], [0], [1], [0, 0, 1, 1], [], []>} : vector<256x4xf32>, vector<4x8xf32>, vector<256x8xf32> -> vector<256x8xf32>
    %32 = arith.addf %26, %31 : vector<256x8xf32>
    %33 = vector.extract_strided_slice %1 {offsets = [1, 2, 0], sizes = [16, 16, 4], strides = [1, 1, 1]} : vector<18x18x4xf32> to vector<16x16x4xf32>
    %34 = vector.shape_cast %33 : vector<16x16x4xf32> to vector<256x4xf32>
    %c5 = arith.constant 5 : index
    %c0_19 = arith.constant 0 : index
    %c0_20 = arith.constant 0 : index
    %35 = vector.load %arg2[%c5, %c0_19, %c0_20] : memref<9x4x8xf32, #tpu.memory_space<vmem>>, vector<1x4x8xf32>
    %36 = vector.shape_cast %35 : vector<1x4x8xf32> to vector<4x8xf32>
    %cst_21 = arith.constant dense<0.000000e+00> : vector<256x8xf32>
    %37 = tpu.matmul %34, %36, %cst_21 {dimension_numbers = #tpu.dot_dimension_numbers<[1], [0], [0], [1], [0, 0, 1, 1], [], []>} : vector<256x4xf32>, vector<4x8xf32>, vector<256x8xf32> -> vector<256x8xf32>
    %38 = arith.addf %32, %37 : vector<256x8xf32>
    %39 = vector.extract_strided_slice %1 {offsets = [2, 0, 0], sizes = [16, 16, 4], strides = [1, 1, 1]} : vector<18x18x4xf32> to vector<16x16x4xf32>
    %40 = vector.shape_cast %39 : vector<16x16x4xf32> to vector<256x4xf32>
    %c6 = arith.constant 6 : index
    %c0_22 = arith.constant 0 : index
    %c0_23 = arith.constant 0 : index
    %41 = vector.load %arg2[%c6, %c0_22, %c0_23] : memref<9x4x8xf32, #tpu.memory_space<vmem>>, vector<1x4x8xf32>
    %42 = vector.shape_cast %41 : vector<1x4x8xf32> to vector<4x8xf32>
    %cst_24 = arith.constant dense<0.000000e+00> : vector<256x8xf32>
    %43 = tpu.matmul %40, %42, %cst_24 {dimension_numbers = #tpu.dot_dimension_numbers<[1], [0], [0], [1], [0, 0, 1, 1], [], []>} : vector<256x4xf32>, vector<4x8xf32>, vector<256x8xf32> -> vector<256x8xf32>
    %44 = arith.addf %38, %43 : vector<256x8xf32>
    %45 = vector.extract_strided_slice %1 {offsets = [2, 1, 0], sizes = [16, 16, 4], strides = [1, 1, 1]} : vector<18x18x4xf32> to vector<16x16x4xf32>
    %46 = vector.shape_cast %45 : vector<16x16x4xf32> to vector<256x4xf32>
    %c7 = arith.constant 7 : index
    %c0_25 = arith.constant 0 : index
    %c0_26 = arith.constant 0 : index
    %47 = vector.load %arg2[%c7, %c0_25, %c0_26] : memref<9x4x8xf32, #tpu.memory_space<vmem>>, vector<1x4x8xf32>
    %48 = vector.shape_cast %47 : vector<1x4x8xf32> to vector<4x8xf32>
    %cst_27 = arith.constant dense<0.000000e+00> : vector<256x8xf32>
    %49 = tpu.matmul %46, %48, %cst_27 {dimension_numbers = #tpu.dot_dimension_numbers<[1], [0], [0], [1], [0, 0, 1, 1], [], []>} : vector<256x4xf32>, vector<4x8xf32>, vector<256x8xf32> -> vector<256x8xf32>
    %50 = arith.addf %44, %49 : vector<256x8xf32>
    %51 = vector.extract_strided_slice %1 {offsets = [2, 2, 0], sizes = [16, 16, 4], strides = [1, 1, 1]} : vector<18x18x4xf32> to vector<16x16x4xf32>
    %52 = vector.shape_cast %51 : vector<16x16x4xf32> to vector<256x4xf32>
    %c8 = arith.constant 8 : index
    %c0_28 = arith.constant 0 : index
    %c0_29 = arith.constant 0 : index
    %53 = vector.load %arg2[%c8, %c0_28, %c0_29] : memref<9x4x8xf32, #tpu.memory_space<vmem>>, vector<1x4x8xf32>
    %54 = vector.shape_cast %53 : vector<1x4x8xf32> to vector<4x8xf32>
    %cst_30 = arith.constant dense<0.000000e+00> : vector<256x8xf32>
    %55 = tpu.matmul %52, %54, %cst_30 {dimension_numbers = #tpu.dot_dimension_numbers<[1], [0], [0], [1], [0, 0, 1, 1], [], []>} : vector<256x4xf32>, vector<4x8xf32>, vector<256x8xf32> -> vector<256x8xf32>
    %56 = arith.addf %50, %55 : vector<256x8xf32>
    %c0_31 = arith.constant 0 : index
    %c0_32 = arith.constant 0 : index
    %57 = vector.load %arg3[%c0_31, %c0_32] : memref<1x8xf32, #tpu.memory_space<vmem>>, vector<1x8xf32>
    %58 = vector.broadcast %57 : vector<1x8xf32> to vector<256x8xf32>
    %59 = arith.addf %56, %58 : vector<256x8xf32>
    %cst_33 = arith.constant 0.000000e+00 : f32
    %60 = vector.broadcast %cst_33 : f32 to vector<256x8xf32>
    %61 = arith.maximumf %59, %60 : vector<256x8xf32>
    %62 = vector.shape_cast %61 : vector<256x8xf32> to vector<1x16x16x8xf32>
    %c0_34 = arith.constant 0 : index
    %c0_35 = arith.constant 0 : index
    %c0_36 = arith.constant 0 : index
    %c0_37 = arith.constant 0 : index
    %63 = vector.load %arg4[%c0_34, %c0_35, %c0_36, %c0_37] : memref<1x16x16x8xf32, #tpu.memory_space<vmem>>, vector<1x16x16x8xf32>
    tpu.vector_store %arg4[%c0_34, %c0_35, %c0_36, %c0_37], %62 {strides = array<i32>} : memref<1x16x16x8xf32, #tpu.memory_space<vmem>>, vector<1x16x16x8xf32>,
    %cst_38 = arith.constant dense<0.000000e+00> : vector<8xf32>
    %64 = vector.multi_reduction <add>, %61, %cst_38 [0] : vector<256x8xf32> to vector<8xf32>
    %65 = vector.shape_cast %64 : vector<8xf32> to vector<1x8xf32>
    %66 = vector.shape_cast %65 : vector<1x8xf32> to vector<1x1x8xf32>
    %c0_39 = arith.constant 0 : index
    %c0_40 = arith.constant 0 : index
    %c0_41 = arith.constant 0 : index
    %67 = vector.load %arg5[%c0_39, %c0_40, %c0_41] : memref<1x1x8xf32, #tpu.memory_space<vmem>>, vector<1x1x8xf32>
    tpu.vector_store %arg5[%c0_39, %c0_40, %c0_41], %66 {strides = array<i32>} : memref<1x1x8xf32, #tpu.memory_space<vmem>>, vector<1x1x8xf32>,
    %68 = arith.mulf %61, %61 : vector<256x8xf32>
    %cst_42 = arith.constant dense<0.000000e+00> : vector<8xf32>
    %69 = vector.multi_reduction <add>, %68, %cst_42 [0] : vector<256x8xf32> to vector<8xf32>
    %70 = vector.shape_cast %69 : vector<8xf32> to vector<1x8xf32>
    %71 = vector.shape_cast %70 : vector<1x8xf32> to vector<1x1x8xf32>
    %c0_43 = arith.constant 0 : index
    %c0_44 = arith.constant 0 : index
    %c0_45 = arith.constant 0 : index
    %72 = vector.load %arg6[%c0_43, %c0_44, %c0_45] : memref<1x1x8xf32, #tpu.memory_space<vmem>>, vector<1x1x8xf32>
    tpu.vector_store %arg6[%c0_43, %c0_44, %c0_45], %71 {strides = array<i32>} : memref<1x1x8xf32, #tpu.memory_space<vmem>>, vector<1x1x8xf32>,
    return
  }
  func.func @transform_0(%arg0: i32) -> (i32, i32, i32, i32) {
    %c0_i32 = arith.constant 0 : i32
    %c0_i32_0 = arith.constant 0 : i32
    %c0_i32_1 = arith.constant 0 : i32
    %c0_i32_2 = arith.constant 0 : i32
    return %arg0, %c0_i32, %c0_i32_0, %c0_i32_1 : i32, i32, i32, i32
  }
  func.func @transform_1(%arg0: i32) -> (i32, i32, i32) {
    %c0_i32 = arith.constant 0 : i32
    %c0_i32_0 = arith.constant 0 : i32
    %c0_i32_1 = arith.constant 0 : i32
    %c0_i32_2 = arith.constant 0 : i32
    return %c0_i32, %c0_i32_0, %c0_i32_1 : i32, i32, i32
  }
  func.func @transform_2(%arg0: i32) -> (i32, i32) {
    %c0_i32 = arith.constant 0 : i32
    %c0_i32_0 = arith.constant 0 : i32
    %c0_i32_1 = arith.constant 0 : i32
    return %c0_i32, %c0_i32_0 : i32, i32
  }
  func.func @transform_3(%arg0: i32) -> (i32, i32, i32, i32) {
    %c0_i32 = arith.constant 0 : i32
    %c0_i32_0 = arith.constant 0 : i32
    %c0_i32_1 = arith.constant 0 : i32
    %c0_i32_2 = arith.constant 0 : i32
    return %arg0, %c0_i32, %c0_i32_0, %c0_i32_1 : i32, i32, i32, i32
  }
  func.func @transform_4(%arg0: i32) -> (i32, i32, i32) {
    %c0_i32 = arith.constant 0 : i32
    %c0_i32_0 = arith.constant 0 : i32
    %c0_i32_1 = arith.constant 0 : i32
    return %arg0, %c0_i32, %c0_i32_0 : i32, i32, i32
  }
  func.func @transform_5(%arg0: i32) -> (i32, i32, i32) {
    %c0_i32 = arith.constant 0 : i32
    %c0_i32_0 = arith.constant 0 : i32
    %c0_i32_1 = arith.constant 0 : i32
    return %arg0, %c0_i32, %c0_i32_0 : i32, i32, i32
  }
}

module attributes {stable_mosaic.version = 11 : i64} {
  func.func @_linear_relu_kernel(%arg0: i32, %arg1: memref<2x32xf32, #tpu.memory_space<vmem>>, %arg2: memref<32x8xf32, #tpu.memory_space<vmem>>, %arg3: memref<1x8xf32, #tpu.memory_space<vmem>>, %arg4: memref<2x8xf32, #tpu.memory_space<vmem>>) attributes {dimension_semantics = [#tpu.dimension_semantics<arbitrary>], iteration_bounds = array<i64: 1>, scalar_prefetch = 0 : i64, scratch_operands = 0 : i64, tpu.core_type = #tpu.core_type<tc>, window_params = [{pipeline_mode = #tpu.pipeline_mode<synchronous>, transform_indices = @transform_0, window_bounds = array<i64: 2, 32>}, {pipeline_mode = #tpu.pipeline_mode<synchronous>, transform_indices = @transform_1, window_bounds = array<i64: 32, 8>}, {pipeline_mode = #tpu.pipeline_mode<synchronous>, transform_indices = @transform_2, window_bounds = array<i64: 1, 8>}, {pipeline_mode = #tpu.pipeline_mode<synchronous>, transform_indices = @transform_3, window_bounds = array<i64: 2, 8>}]} {
    %c0 = arith.constant 0 : index
    %c0_0 = arith.constant 0 : index
    %0 = vector.load %arg1[%c0, %c0_0] : memref<2x32xf32, #tpu.memory_space<vmem>>, vector<2x32xf32>
    %c0_1 = arith.constant 0 : index
    %c0_2 = arith.constant 0 : index
    %1 = vector.load %arg2[%c0_1, %c0_2] : memref<32x8xf32, #tpu.memory_space<vmem>>, vector<32x8xf32>
    %cst = arith.constant dense<0.000000e+00> : vector<2x8xf32>
    %2 = tpu.matmul %0, %1, %cst {dimension_numbers = #tpu.dot_dimension_numbers<[1], [0], [0], [1], [0, 0, 1, 1], [], []>} : vector<2x32xf32>, vector<32x8xf32>, vector<2x8xf32> -> vector<2x8xf32>
    %c0_3 = arith.constant 0 : index
    %c0_4 = arith.constant 0 : index
    %3 = vector.load %arg3[%c0_3, %c0_4] : memref<1x8xf32, #tpu.memory_space<vmem>>, vector<1x8xf32>
    %4 = vector.broadcast %3 : vector<1x8xf32> to vector<2x8xf32>
    %5 = arith.addf %2, %4 : vector<2x8xf32>
    %cst_5 = arith.constant 0.000000e+00 : f32
    %6 = vector.broadcast %cst_5 : f32 to vector<2x8xf32>
    %7 = arith.maximumf %5, %6 : vector<2x8xf32>
    %c0_6 = arith.constant 0 : index
    %c0_7 = arith.constant 0 : index
    %8 = vector.load %arg4[%c0_6, %c0_7] : memref<2x8xf32, #tpu.memory_space<vmem>>, vector<2x8xf32>
    tpu.vector_store %arg4[%c0_6, %c0_7], %7 {strides = array<i32>} : memref<2x8xf32, #tpu.memory_space<vmem>>, vector<2x8xf32>,
    return
  }
  func.func @transform_0(%arg0: i32) -> (i32, i32) {
    %c0_i32 = arith.constant 0 : i32
    %c0_i32_0 = arith.constant 0 : i32
    %c0_i32_1 = arith.constant 0 : i32
    return %c0_i32, %c0_i32_0 : i32, i32
  }
  func.func @transform_1(%arg0: i32) -> (i32, i32) {
    %c0_i32 = arith.constant 0 : i32
    %c0_i32_0 = arith.constant 0 : i32
    %c0_i32_1 = arith.constant 0 : i32
    return %c0_i32, %c0_i32_0 : i32, i32
  }
  func.func @transform_2(%arg0: i32) -> (i32, i32) {
    %c0_i32 = arith.constant 0 : i32
    %c0_i32_0 = arith.constant 0 : i32
    %c0_i32_1 = arith.constant 0 : i32
    return %c0_i32, %c0_i32_0 : i32, i32
  }
  func.func @transform_3(%arg0: i32) -> (i32, i32) {
    %c0_i32 = arith.constant 0 : i32
    %c0_i32_0 = arith.constant 0 : i32
    %c0_i32_1 = arith.constant 0 : i32
    return %c0_i32, %c0_i32_0 : i32, i32
  }
}

module attributes {stable_mosaic.version = 11 : i64} {
  func.func @_bn_kernel(%arg0: i32, %arg1: memref<1x16x128xf32, #tpu.memory_space<vmem>>, %arg2: memref<2x1x128xf32, #tpu.memory_space<vmem>>, %arg3: memref<2x1x128xf32, #tpu.memory_space<vmem>>, %arg4: memref<1x1x128xf32, #tpu.memory_space<vmem>>, %arg5: memref<1x16x128xf32, #tpu.memory_space<vmem>>) attributes {dimension_semantics = [#tpu.dimension_semantics<parallel>], iteration_bounds = array<i64: 2>, scalar_prefetch = 0 : i64, scratch_operands = 0 : i64, tpu.core_type = #tpu.core_type<tc>, window_params = [{transform_indices = @transform_0, window_bounds = array<i64: 1, 16, 128>}, {pipeline_mode = #tpu.pipeline_mode<synchronous>, transform_indices = @transform_1, window_bounds = array<i64: 2, 1, 128>}, {pipeline_mode = #tpu.pipeline_mode<synchronous>, transform_indices = @transform_2, window_bounds = array<i64: 2, 1, 128>}, {transform_indices = @transform_3, window_bounds = array<i64: 1, 1, 128>}, {transform_indices = @transform_4, window_bounds = array<i64: 1, 16, 128>}]} {
    %c0 = arith.constant 0 : index
    %c0_0 = arith.constant 0 : index
    %c0_1 = arith.constant 0 : index
    %0 = vector.load %arg2[%c0, %c0_0, %c0_1] : memref<2x1x128xf32, #tpu.memory_space<vmem>>, vector<2x1x128xf32>
    %cst = arith.constant dense<0.000000e+00> : vector<1x128xf32>
    %1 = vector.multi_reduction <add>, %0, %cst [0] : vector<2x1x128xf32> to vector<1x128xf32>
    %c0_2 = arith.constant 0 : index
    %c0_3 = arith.constant 0 : index
    %c0_4 = arith.constant 0 : index
    %2 = vector.load %arg3[%c0_2, %c0_3, %c0_4] : memref<2x1x128xf32, #tpu.memory_space<vmem>>, vector<2x1x128xf32>
    %cst_5 = arith.constant dense<0.000000e+00> : vector<1x128xf32>
    %3 = vector.multi_reduction <add>, %2, %cst_5 [0] : vector<2x1x128xf32> to vector<1x128xf32>
    %cst_6 = arith.constant 5.120000e+02 : f32
    %4 = vector.broadcast %cst_6 : f32 to vector<1x128xf32>
    %5 = arith.divf %1, %4 : vector<1x128xf32>
    %cst_7 = arith.constant 5.120000e+02 : f32
    %6 = vector.broadcast %cst_7 : f32 to vector<1x128xf32>
    %7 = arith.divf %3, %6 : vector<1x128xf32>
    %8 = arith.mulf %5, %5 : vector<1x128xf32>
    %9 = arith.subf %7, %8 : vector<1x128xf32>
    %cst_8 = arith.constant 0.000000e+00 : f32
    %10 = vector.broadcast %cst_8 : f32 to vector<1x128xf32>
    %11 = arith.maximumf %9, %10 : vector<1x128xf32>
    %cst_9 = arith.constant 9.99999974E-6 : f32
    %12 = vector.broadcast %cst_9 : f32 to vector<1x128xf32>
    %13 = arith.addf %11, %12 : vector<1x128xf32>
    %14 = math.rsqrt %13 : vector<1x128xf32>
    %cst_10 = arith.constant 0.000000e+00 : f32
    %15 = vector.broadcast %cst_10 : f32 to vector<1x128xf32>
    %16 = arith.subf %15, %5 : vector<1x128xf32>
    %17 = arith.mulf %16, %14 : vector<1x128xf32>
    %c0_11 = arith.constant 0 : index
    %c0_12 = arith.constant 0 : index
    %c0_13 = arith.constant 0 : index
    %18 = vector.load %arg4[%c0_11, %c0_12, %c0_13] : memref<1x1x128xf32, #tpu.memory_space<vmem>>, vector<1x1x128xf32>
    %19 = vector.shape_cast %18 : vector<1x1x128xf32> to vector<1x128xf32>
    %20 = arith.addf %17, %19 : vector<1x128xf32>
    %c0_14 = arith.constant 0 : index
    %c0_15 = arith.constant 0 : index
    %c0_16 = arith.constant 0 : index
    %21 = vector.load %arg1[%c0_14, %c0_15, %c0_16] : memref<1x16x128xf32, #tpu.memory_space<vmem>>, vector<1x16x128xf32>
    %22 = vector.shape_cast %14 : vector<1x128xf32> to vector<1x1x128xf32>
    %23 = vector.broadcast %22 : vector<1x1x128xf32> to vector<1x16x128xf32>
    %24 = arith.mulf %21, %23 : vector<1x16x128xf32>
    %25 = vector.shape_cast %20 : vector<1x128xf32> to vector<1x1x128xf32>
    %26 = vector.broadcast %25 : vector<1x1x128xf32> to vector<1x16x128xf32>
    %27 = arith.addf %24, %26 : vector<1x16x128xf32>
    %c0_17 = arith.constant 0 : index
    %c0_18 = arith.constant 0 : index
    %c0_19 = arith.constant 0 : index
    %28 = vector.load %arg5[%c0_17, %c0_18, %c0_19] : memref<1x16x128xf32, #tpu.memory_space<vmem>>, vector<1x16x128xf32>
    tpu.vector_store %arg5[%c0_17, %c0_18, %c0_19], %27 {strides = array<i32>} : memref<1x16x128xf32, #tpu.memory_space<vmem>>, vector<1x16x128xf32>,
    return
  }
  func.func @transform_0(%arg0: i32) -> (i32, i32, i32) {
    %c0_i32 = arith.constant 0 : i32
    %c0_i32_0 = arith.constant 0 : i32
    %c0_i32_1 = arith.constant 0 : i32
    return %arg0, %c0_i32, %c0_i32_0 : i32, i32, i32
  }
  func.func @transform_1(%arg0: i32) -> (i32, i32, i32) {
    %c0_i32 = arith.constant 0 : i32
    %c0_i32_0 = arith.constant 0 : i32
    %c0_i32_1 = arith.constant 0 : i32
    %c0_i32_2 = arith.constant 0 : i32
    return %c0_i32, %c0_i32_0, %c0_i32_1 : i32, i32, i32
  }
  func.func @transform_2(%arg0: i32) -> (i32, i32, i32) {
    %c0_i32 = arith.constant 0 : i32
    %c0_i32_0 = arith.constant 0 : i32
    %c0_i32_1 = arith.constant 0 : i32
    %c0_i32_2 = arith.constant 0 : i32
    return %c0_i32, %c0_i32_0, %c0_i32_1 : i32, i32, i32
  }
  func.func @transform_3(%arg0: i32) -> (i32, i32, i32) {
    %c0_i32 = arith.constant 0 : i32
    %c0_i32_0 = arith.constant 0 : i32
    %c0_i32_1 = arith.constant 0 : i32
    return %arg0, %c0_i32, %c0_i32_0 : i32, i32, i32
  }
  func.func @transform_4(%arg0: i32) -> (i32, i32, i32) {
    %c0_i32 = arith.constant 0 : i32
    %c0_i32_0 = arith.constant 0 : i32
    %c0_i32_1 = arith.constant 0 : i32
    return %arg0, %c0_i32, %c0_i32_0 : i32, i32, i32
  }
}

module attributes {stable_mosaic.version = 11 : i64} {
  func.func @_conv2d_kernel(%arg0: i32, %arg1: memref<1x18x18x8xf32, #tpu.memory_space<vmem>>, %arg2: memref<9x8x8xf32, #tpu.memory_space<vmem>>, %arg3: memref<1x8xf32, #tpu.memory_space<vmem>>, %arg4: memref<1x16x16x8xf32, #tpu.memory_space<vmem>>, %arg5: memref<1x1x8xf32, #tpu.memory_space<vmem>>, %arg6: memref<1x1x8xf32, #tpu.memory_space<vmem>>) attributes {dimension_semantics = [#tpu.dimension_semantics<parallel>], iteration_bounds = array<i64: 2>, scalar_prefetch = 0 : i64, scratch_operands = 0 : i64, tpu.core_type = #tpu.core_type<tc>, window_params = [{transform_indices = @transform_0, window_bounds = array<i64: 1, 18, 18, 8>}, {pipeline_mode = #tpu.pipeline_mode<synchronous>, transform_indices = @transform_1, window_bounds = array<i64: 9, 8, 8>}, {pipeline_mode = #tpu.pipeline_mode<synchronous>, transform_indices = @transform_2, window_bounds = array<i64: 1, 8>}, {transform_indices = @transform_3, window_bounds = array<i64: 1, 16, 16, 8>}, {transform_indices = @transform_4, window_bounds = array<i64: 1, 1, 8>}, {transform_indices = @transform_5, window_bounds = array<i64: 1, 1, 8>}]} {
    %c0 = arith.constant 0 : index
    %c0_0 = arith.constant 0 : index
    %c0_1 = arith.constant 0 : index
    %c0_2 = arith.constant 0 : index
    %0 = vector.load %arg1[%c0, %c0_0, %c0_1, %c0_2] : memref<1x18x18x8xf32, #tpu.memory_space<vmem>>, vector<1x18x18x8xf32>
    %1 = vector.shape_cast %0 : vector<1x18x18x8xf32> to vector<18x18x8xf32>
    %cst = arith.constant 0.000000e+00 : f32
    %2 = vector.broadcast %cst : f32 to vector<256x8xf32>
    %3 = vector.extract_strided_slice %1 {offsets = [0, 0, 0], sizes = [16, 16, 8], strides = [1, 1, 1]} : vector<18x18x8xf32> to vector<16x16x8xf32>
    %4 = vector.shape_cast %3 : vector<16x16x8xf32> to vector<256x8xf32>
    %c0_3 = arith.constant 0 : index
    %c0_4 = arith.constant 0 : index
    %c0_5 = arith.constant 0 : index
    %5 = vector.load %arg2[%c0_3, %c0_4, %c0_5] : memref<9x8x8xf32, #tpu.memory_space<vmem>>, vector<1x8x8xf32>
    %6 = vector.shape_cast %5 : vector<1x8x8xf32> to vector<8x8xf32>
    %cst_6 = arith.constant dense<0.000000e+00> : vector<256x8xf32>
    %7 = tpu.matmul %4, %6, %cst_6 {dimension_numbers = #tpu.dot_dimension_numbers<[1], [0], [0], [1], [0, 0, 1, 1], [], []>} : vector<256x8xf32>, vector<8x8xf32>, vector<256x8xf32> -> vector<256x8xf32>
    %8 = arith.addf %2, %7 : vector<256x8xf32>
    %9 = vector.extract_strided_slice %1 {offsets = [0, 1, 0], sizes = [16, 16, 8], strides = [1, 1, 1]} : vector<18x18x8xf32> to vector<16x16x8xf32>
    %10 = vector.shape_cast %9 : vector<16x16x8xf32> to vector<256x8xf32>
    %c1 = arith.constant 1 : index
    %c0_7 = arith.constant 0 : index
    %c0_8 = arith.constant 0 : index
    %11 = vector.load %arg2[%c1, %c0_7, %c0_8] : memref<9x8x8xf32, #tpu.memory_space<vmem>>, vector<1x8x8xf32>
    %12 = vector.shape_cast %11 : vector<1x8x8xf32> to vector<8x8xf32>
    %cst_9 = arith.constant dense<0.000000e+00> : vector<256x8xf32>
    %13 = tpu.matmul %10, %12, %cst_9 {dimension_numbers = #tpu.dot_dimension_numbers<[1], [0], [0], [1], [0, 0, 1, 1], [], []>} : vector<256x8xf32>, vector<8x8xf32>, vector<256x8xf32> -> vector<256x8xf32>
    %14 = arith.addf %8, %13 : vector<256x8xf32>
    %15 = vector.extract_strided_slice %1 {offsets = [0, 2, 0], sizes = [16, 16, 8], strides = [1, 1, 1]} : vector<18x18x8xf32> to vector<16x16x8xf32>
    %16 = vector.shape_cast %15 : vector<16x16x8xf32> to vector<256x8xf32>
    %c2 = arith.constant 2 : index
    %c0_10 = arith.constant 0 : index
    %c0_11 = arith.constant 0 : index
    %17 = vector.load %arg2[%c2, %c0_10, %c0_11] : memref<9x8x8xf32, #tpu.memory_space<vmem>>, vector<1x8x8xf32>
    %18 = vector.shape_cast %17 : vector<1x8x8xf32> to vector<8x8xf32>
    %cst_12 = arith.constant dense<0.000000e+00> : vector<256x8xf32>
    %19 = tpu.matmul %16, %18, %cst_12 {dimension_numbers = #tpu.dot_dimension_numbers<[1], [0], [0], [1], [0, 0, 1, 1], [], []>} : vector<256x8xf32>, vector<8x8xf32>, vector<256x8xf32> -> vector<256x8xf32>
    %20 = arith.addf %14, %19 : vector<256x8xf32>
    %21 = vector.extract_strided_slice %1 {offsets = [1, 0, 0], sizes = [16, 16, 8], strides = [1, 1, 1]} : vector<18x18x8xf32> to vector<16x16x8xf32>
    %22 = vector.shape_cast %21 : vector<16x16x8xf32> to vector<256x8xf32>
    %c3 = arith.constant 3 : index
    %c0_13 = arith.constant 0 : index
    %c0_14 = arith.constant 0 : index
    %23 = vector.load %arg2[%c3, %c0_13, %c0_14] : memref<9x8x8xf32, #tpu.memory_space<vmem>>, vector<1x8x8xf32>
    %24 = vector.shape_cast %23 : vector<1x8x8xf32> to vector<8x8xf32>
    %cst_15 = arith.constant dense<0.000000e+00> : vector<256x8xf32>
    %25 = tpu.matmul %22, %24, %cst_15 {dimension_numbers = #tpu.dot_dimension_numbers<[1], [0], [0], [1], [0, 0, 1, 1], [], []>} : vector<256x8xf32>, vector<8x8xf32>, vector<256x8xf32> -> vector<256x8xf32>
    %26 = arith.addf %20, %25 : vector<256x8xf32>
    %27 = vector.extract_strided_slice %1 {offsets = [1, 1, 0], sizes = [16, 16, 8], strides = [1, 1, 1]} : vector<18x18x8xf32> to vector<16x16x8xf32>
    %28 = vector.shape_cast %27 : vector<16x16x8xf32> to vector<256x8xf32>
    %c4 = arith.constant 4 : index
    %c0_16 = arith.constant 0 : index
    %c0_17 = arith.constant 0 : index
    %29 = vector.load %arg2[%c4, %c0_16, %c0_17] : memref<9x8x8xf32, #tpu.memory_space<vmem>>, vector<1x8x8xf32>
    %30 = vector.shape_cast %29 : vector<1x8x8xf32> to vector<8x8xf32>
    %cst_18 = arith.constant dense<0.000000e+00> : vector<256x8xf32>
    %31 = tpu.matmul %28, %30, %cst_18 {dimension_numbers = #tpu.dot_dimension_numbers<[1], [0], [0], [1], [0, 0, 1, 1], [], []>} : vector<256x8xf32>, vector<8x8xf32>, vector<256x8xf32> -> vector<256x8xf32>
    %32 = arith.addf %26, %31 : vector<256x8xf32>
    %33 = vector.extract_strided_slice %1 {offsets = [1, 2, 0], sizes = [16, 16, 8], strides = [1, 1, 1]} : vector<18x18x8xf32> to vector<16x16x8xf32>
    %34 = vector.shape_cast %33 : vector<16x16x8xf32> to vector<256x8xf32>
    %c5 = arith.constant 5 : index
    %c0_19 = arith.constant 0 : index
    %c0_20 = arith.constant 0 : index
    %35 = vector.load %arg2[%c5, %c0_19, %c0_20] : memref<9x8x8xf32, #tpu.memory_space<vmem>>, vector<1x8x8xf32>
    %36 = vector.shape_cast %35 : vector<1x8x8xf32> to vector<8x8xf32>
    %cst_21 = arith.constant dense<0.000000e+00> : vector<256x8xf32>
    %37 = tpu.matmul %34, %36, %cst_21 {dimension_numbers = #tpu.dot_dimension_numbers<[1], [0], [0], [1], [0, 0, 1, 1], [], []>} : vector<256x8xf32>, vector<8x8xf32>, vector<256x8xf32> -> vector<256x8xf32>
    %38 = arith.addf %32, %37 : vector<256x8xf32>
    %39 = vector.extract_strided_slice %1 {offsets = [2, 0, 0], sizes = [16, 16, 8], strides = [1, 1, 1]} : vector<18x18x8xf32> to vector<16x16x8xf32>
    %40 = vector.shape_cast %39 : vector<16x16x8xf32> to vector<256x8xf32>
    %c6 = arith.constant 6 : index
    %c0_22 = arith.constant 0 : index
    %c0_23 = arith.constant 0 : index
    %41 = vector.load %arg2[%c6, %c0_22, %c0_23] : memref<9x8x8xf32, #tpu.memory_space<vmem>>, vector<1x8x8xf32>
    %42 = vector.shape_cast %41 : vector<1x8x8xf32> to vector<8x8xf32>
    %cst_24 = arith.constant dense<0.000000e+00> : vector<256x8xf32>
    %43 = tpu.matmul %40, %42, %cst_24 {dimension_numbers = #tpu.dot_dimension_numbers<[1], [0], [0], [1], [0, 0, 1, 1], [], []>} : vector<256x8xf32>, vector<8x8xf32>, vector<256x8xf32> -> vector<256x8xf32>
    %44 = arith.addf %38, %43 : vector<256x8xf32>
    %45 = vector.extract_strided_slice %1 {offsets = [2, 1, 0], sizes = [16, 16, 8], strides = [1, 1, 1]} : vector<18x18x8xf32> to vector<16x16x8xf32>
    %46 = vector.shape_cast %45 : vector<16x16x8xf32> to vector<256x8xf32>
    %c7 = arith.constant 7 : index
    %c0_25 = arith.constant 0 : index
    %c0_26 = arith.constant 0 : index
    %47 = vector.load %arg2[%c7, %c0_25, %c0_26] : memref<9x8x8xf32, #tpu.memory_space<vmem>>, vector<1x8x8xf32>
    %48 = vector.shape_cast %47 : vector<1x8x8xf32> to vector<8x8xf32>
    %cst_27 = arith.constant dense<0.000000e+00> : vector<256x8xf32>
    %49 = tpu.matmul %46, %48, %cst_27 {dimension_numbers = #tpu.dot_dimension_numbers<[1], [0], [0], [1], [0, 0, 1, 1], [], []>} : vector<256x8xf32>, vector<8x8xf32>, vector<256x8xf32> -> vector<256x8xf32>
    %50 = arith.addf %44, %49 : vector<256x8xf32>
    %51 = vector.extract_strided_slice %1 {offsets = [2, 2, 0], sizes = [16, 16, 8], strides = [1, 1, 1]} : vector<18x18x8xf32> to vector<16x16x8xf32>
    %52 = vector.shape_cast %51 : vector<16x16x8xf32> to vector<256x8xf32>
    %c8 = arith.constant 8 : index
    %c0_28 = arith.constant 0 : index
    %c0_29 = arith.constant 0 : index
    %53 = vector.load %arg2[%c8, %c0_28, %c0_29] : memref<9x8x8xf32, #tpu.memory_space<vmem>>, vector<1x8x8xf32>
    %54 = vector.shape_cast %53 : vector<1x8x8xf32> to vector<8x8xf32>
    %cst_30 = arith.constant dense<0.000000e+00> : vector<256x8xf32>
    %55 = tpu.matmul %52, %54, %cst_30 {dimension_numbers = #tpu.dot_dimension_numbers<[1], [0], [0], [1], [0, 0, 1, 1], [], []>} : vector<256x8xf32>, vector<8x8xf32>, vector<256x8xf32> -> vector<256x8xf32>
    %56 = arith.addf %50, %55 : vector<256x8xf32>
    %c0_31 = arith.constant 0 : index
    %c0_32 = arith.constant 0 : index
    %57 = vector.load %arg3[%c0_31, %c0_32] : memref<1x8xf32, #tpu.memory_space<vmem>>, vector<1x8xf32>
    %58 = vector.broadcast %57 : vector<1x8xf32> to vector<256x8xf32>
    %59 = arith.addf %56, %58 : vector<256x8xf32>
    %cst_33 = arith.constant 0.000000e+00 : f32
    %60 = vector.broadcast %cst_33 : f32 to vector<256x8xf32>
    %61 = arith.maximumf %59, %60 : vector<256x8xf32>
    %62 = vector.shape_cast %61 : vector<256x8xf32> to vector<1x16x16x8xf32>
    %c0_34 = arith.constant 0 : index
    %c0_35 = arith.constant 0 : index
    %c0_36 = arith.constant 0 : index
    %c0_37 = arith.constant 0 : index
    %63 = vector.load %arg4[%c0_34, %c0_35, %c0_36, %c0_37] : memref<1x16x16x8xf32, #tpu.memory_space<vmem>>, vector<1x16x16x8xf32>
    tpu.vector_store %arg4[%c0_34, %c0_35, %c0_36, %c0_37], %62 {strides = array<i32>} : memref<1x16x16x8xf32, #tpu.memory_space<vmem>>, vector<1x16x16x8xf32>,
    %cst_38 = arith.constant dense<0.000000e+00> : vector<8xf32>
    %64 = vector.multi_reduction <add>, %61, %cst_38 [0] : vector<256x8xf32> to vector<8xf32>
    %65 = vector.shape_cast %64 : vector<8xf32> to vector<1x8xf32>
    %66 = vector.shape_cast %65 : vector<1x8xf32> to vector<1x1x8xf32>
    %c0_39 = arith.constant 0 : index
    %c0_40 = arith.constant 0 : index
    %c0_41 = arith.constant 0 : index
    %67 = vector.load %arg5[%c0_39, %c0_40, %c0_41] : memref<1x1x8xf32, #tpu.memory_space<vmem>>, vector<1x1x8xf32>
    tpu.vector_store %arg5[%c0_39, %c0_40, %c0_41], %66 {strides = array<i32>} : memref<1x1x8xf32, #tpu.memory_space<vmem>>, vector<1x1x8xf32>,
    %68 = arith.mulf %61, %61 : vector<256x8xf32>
    %cst_42 = arith.constant dense<0.000000e+00> : vector<8xf32>
    %69 = vector.multi_reduction <add>, %68, %cst_42 [0] : vector<256x8xf32> to vector<8xf32>
    %70 = vector.shape_cast %69 : vector<8xf32> to vector<1x8xf32>
    %71 = vector.shape_cast %70 : vector<1x8xf32> to vector<1x1x8xf32>
    %c0_43 = arith.constant 0 : index
    %c0_44 = arith.constant 0 : index
    %c0_45 = arith.constant 0 : index
    %72 = vector.load %arg6[%c0_43, %c0_44, %c0_45] : memref<1x1x8xf32, #tpu.memory_space<vmem>>, vector<1x1x8xf32>
    tpu.vector_store %arg6[%c0_43, %c0_44, %c0_45], %71 {strides = array<i32>} : memref<1x1x8xf32, #tpu.memory_space<vmem>>, vector<1x1x8xf32>,
    return
  }
  func.func @transform_0(%arg0: i32) -> (i32, i32, i32, i32) {
    %c0_i32 = arith.constant 0 : i32
    %c0_i32_0 = arith.constant 0 : i32
    %c0_i32_1 = arith.constant 0 : i32
    %c0_i32_2 = arith.constant 0 : i32
    return %arg0, %c0_i32, %c0_i32_0, %c0_i32_1 : i32, i32, i32, i32
  }
  func.func @transform_1(%arg0: i32) -> (i32, i32, i32) {
    %c0_i32 = arith.constant 0 : i32
    %c0_i32_0 = arith.constant 0 : i32
    %c0_i32_1 = arith.constant 0 : i32
    %c0_i32_2 = arith.constant 0 : i32
    return %c0_i32, %c0_i32_0, %c0_i32_1 : i32, i32, i32
  }
  func.func @transform_2(%arg0: i32) -> (i32, i32) {
    %c0_i32 = arith.constant 0 : i32
    %c0_i32_0 = arith.constant 0 : i32
    %c0_i32_1 = arith.constant 0 : i32
    return %c0_i32, %c0_i32_0 : i32, i32
  }
  func.func @transform_3(%arg0: i32) -> (i32, i32, i32, i32) {
    %c0_i32 = arith.constant 0 : i32
    %c0_i32_0 = arith.constant 0 : i32
    %c0_i32_1 = arith.constant 0 : i32
    %c0_i32_2 = arith.constant 0 : i32
    return %arg0, %c0_i32, %c0_i32_0, %c0_i32_1 : i32, i32, i32, i32
  }
  func.func @transform_4(%arg0: i32) -> (i32, i32, i32) {
    %c0_i32 = arith.constant 0 : i32
    %c0_i32_0 = arith.constant 0 : i32
    %c0_i32_1 = arith.constant 0 : i32
    return %arg0, %c0_i32, %c0_i32_0 : i32, i32, i32
  }
  func.func @transform_5(%arg0: i32) -> (i32, i32, i32) {
    %c0_i32 = arith.constant 0 : i32
    %c0_i32_0 = arith.constant 0 : i32
    %c0_i32_1 = arith.constant 0 : i32
    return %arg0, %c0_i32, %c0_i32_0 : i32, i32, i32
  }
}

module attributes {stable_mosaic.version = 11 : i64} {
  func.func @_bn_kernel(%arg0: i32, %arg1: memref<1x16x128xf32, #tpu.memory_space<vmem>>, %arg2: memref<2x1x128xf32, #tpu.memory_space<vmem>>, %arg3: memref<2x1x128xf32, #tpu.memory_space<vmem>>, %arg4: memref<1x16x128xf32, #tpu.memory_space<vmem>>) attributes {dimension_semantics = [#tpu.dimension_semantics<parallel>], iteration_bounds = array<i64: 2>, scalar_prefetch = 0 : i64, scratch_operands = 0 : i64, tpu.core_type = #tpu.core_type<tc>, window_params = [{transform_indices = @transform_0, window_bounds = array<i64: 1, 16, 128>}, {pipeline_mode = #tpu.pipeline_mode<synchronous>, transform_indices = @transform_1, window_bounds = array<i64: 2, 1, 128>}, {pipeline_mode = #tpu.pipeline_mode<synchronous>, transform_indices = @transform_2, window_bounds = array<i64: 2, 1, 128>}, {transform_indices = @transform_3, window_bounds = array<i64: 1, 16, 128>}]} {
    %c0 = arith.constant 0 : index
    %c0_0 = arith.constant 0 : index
    %c0_1 = arith.constant 0 : index
    %0 = vector.load %arg2[%c0, %c0_0, %c0_1] : memref<2x1x128xf32, #tpu.memory_space<vmem>>, vector<2x1x128xf32>
    %cst = arith.constant dense<0.000000e+00> : vector<1x128xf32>
    %1 = vector.multi_reduction <add>, %0, %cst [0] : vector<2x1x128xf32> to vector<1x128xf32>
    %c0_2 = arith.constant 0 : index
    %c0_3 = arith.constant 0 : index
    %c0_4 = arith.constant 0 : index
    %2 = vector.load %arg3[%c0_2, %c0_3, %c0_4] : memref<2x1x128xf32, #tpu.memory_space<vmem>>, vector<2x1x128xf32>
    %cst_5 = arith.constant dense<0.000000e+00> : vector<1x128xf32>
    %3 = vector.multi_reduction <add>, %2, %cst_5 [0] : vector<2x1x128xf32> to vector<1x128xf32>
    %cst_6 = arith.constant 5.120000e+02 : f32
    %4 = vector.broadcast %cst_6 : f32 to vector<1x128xf32>
    %5 = arith.divf %1, %4 : vector<1x128xf32>
    %cst_7 = arith.constant 5.120000e+02 : f32
    %6 = vector.broadcast %cst_7 : f32 to vector<1x128xf32>
    %7 = arith.divf %3, %6 : vector<1x128xf32>
    %8 = arith.mulf %5, %5 : vector<1x128xf32>
    %9 = arith.subf %7, %8 : vector<1x128xf32>
    %cst_8 = arith.constant 0.000000e+00 : f32
    %10 = vector.broadcast %cst_8 : f32 to vector<1x128xf32>
    %11 = arith.maximumf %9, %10 : vector<1x128xf32>
    %cst_9 = arith.constant 9.99999974E-6 : f32
    %12 = vector.broadcast %cst_9 : f32 to vector<1x128xf32>
    %13 = arith.addf %11, %12 : vector<1x128xf32>
    %14 = math.rsqrt %13 : vector<1x128xf32>
    %cst_10 = arith.constant 0.000000e+00 : f32
    %15 = vector.broadcast %cst_10 : f32 to vector<1x128xf32>
    %16 = arith.subf %15, %5 : vector<1x128xf32>
    %17 = arith.mulf %16, %14 : vector<1x128xf32>
    %c0_11 = arith.constant 0 : index
    %c0_12 = arith.constant 0 : index
    %c0_13 = arith.constant 0 : index
    %18 = vector.load %arg1[%c0_11, %c0_12, %c0_13] : memref<1x16x128xf32, #tpu.memory_space<vmem>>, vector<1x16x128xf32>
    %19 = vector.shape_cast %14 : vector<1x128xf32> to vector<1x1x128xf32>
    %20 = vector.broadcast %19 : vector<1x1x128xf32> to vector<1x16x128xf32>
    %21 = arith.mulf %18, %20 : vector<1x16x128xf32>
    %22 = vector.shape_cast %17 : vector<1x128xf32> to vector<1x1x128xf32>
    %23 = vector.broadcast %22 : vector<1x1x128xf32> to vector<1x16x128xf32>
    %24 = arith.addf %21, %23 : vector<1x16x128xf32>
    %c0_14 = arith.constant 0 : index
    %c0_15 = arith.constant 0 : index
    %c0_16 = arith.constant 0 : index
    %25 = vector.load %arg4[%c0_14, %c0_15, %c0_16] : memref<1x16x128xf32, #tpu.memory_space<vmem>>, vector<1x16x128xf32>
    tpu.vector_store %arg4[%c0_14, %c0_15, %c0_16], %24 {strides = array<i32>} : memref<1x16x128xf32, #tpu.memory_space<vmem>>, vector<1x16x128xf32>,
    return
  }
  func.func @transform_0(%arg0: i32) -> (i32, i32, i32) {
    %c0_i32 = arith.constant 0 : i32
    %c0_i32_0 = arith.constant 0 : i32
    %c0_i32_1 = arith.constant 0 : i32
    return %arg0, %c0_i32, %c0_i32_0 : i32, i32, i32
  }
  func.func @transform_1(%arg0: i32) -> (i32, i32, i32) {
    %c0_i32 = arith.constant 0 : i32
    %c0_i32_0 = arith.constant 0 : i32
    %c0_i32_1 = arith.constant 0 : i32
    %c0_i32_2 = arith.constant 0 : i32
    return %c0_i32, %c0_i32_0, %c0_i32_1 : i32, i32, i32
  }
  func.func @transform_2(%arg0: i32) -> (i32, i32, i32) {
    %c0_i32 = arith.constant 0 : i32
    %c0_i32_0 = arith.constant 0 : i32
    %c0_i32_1 = arith.constant 0 : i32
    %c0_i32_2 = arith.constant 0 : i32
    return %c0_i32, %c0_i32_0, %c0_i32_1 : i32, i32, i32
  }
  func.func @transform_3(%arg0: i32) -> (i32, i32, i32) {
    %c0_i32 = arith.constant 0 : i32
    %c0_i32_0 = arith.constant 0 : i32
    %c0_i32_1 = arith.constant 0 : i32
    return %arg0, %c0_i32, %c0_i32_0 : i32, i32, i32
  }
}

module attributes {stable_mosaic.version = 11 : i64} {
  func.func @_conv2d_kernel(%arg0: i32, %arg1: memref<1x9x9x32xf32, #tpu.memory_space<vmem>>, %arg2: memref<4x32x8xf32, #tpu.memory_space<vmem>>, %arg3: memref<1x8xf32, #tpu.memory_space<vmem>>, %arg4: memref<1x8x8x8xf32, #tpu.memory_space<vmem>>) attributes {dimension_semantics = [#tpu.dimension_semantics<parallel>], iteration_bounds = array<i64: 2>, scalar_prefetch = 0 : i64, scratch_operands = 0 : i64, tpu.core_type = #tpu.core_type<tc>, window_params = [{transform_indices = @transform_0, window_bounds = array<i64: 1, 9, 9, 32>}, {pipeline_mode = #tpu.pipeline_mode<synchronous>, transform_indices = @transform_1, window_bounds = array<i64: 4, 32, 8>}, {pipeline_mode = #tpu.pipeline_mode<synchronous>, transform_indices = @transform_2, window_bounds = array<i64: 1, 8>}, {transform_indices = @transform_3, window_bounds = array<i64: 1, 8, 8, 8>}]} {
    %c0 = arith.constant 0 : index
    %c0_0 = arith.constant 0 : index
    %c0_1 = arith.constant 0 : index
    %c0_2 = arith.constant 0 : index
    %0 = vector.load %arg1[%c0, %c0_0, %c0_1, %c0_2] : memref<1x9x9x32xf32, #tpu.memory_space<vmem>>, vector<1x9x9x32xf32>
    %1 = vector.shape_cast %0 : vector<1x9x9x32xf32> to vector<9x9x32xf32>
    %cst = arith.constant 0.000000e+00 : f32
    %2 = vector.broadcast %cst : f32 to vector<64x8xf32>
    %3 = vector.extract_strided_slice %1 {offsets = [0, 0, 0], sizes = [8, 8, 32], strides = [1, 1, 1]} : vector<9x9x32xf32> to vector<8x8x32xf32>
    %4 = vector.shape_cast %3 : vector<8x8x32xf32> to vector<64x32xf32>
    %c0_3 = arith.constant 0 : index
    %c0_4 = arith.constant 0 : index
    %c0_5 = arith.constant 0 : index
    %5 = vector.load %arg2[%c0_3, %c0_4, %c0_5] : memref<4x32x8xf32, #tpu.memory_space<vmem>>, vector<1x32x8xf32>
    %6 = vector.shape_cast %5 : vector<1x32x8xf32> to vector<32x8xf32>
    %cst_6 = arith.constant dense<0.000000e+00> : vector<64x8xf32>
    %7 = tpu.matmul %4, %6, %cst_6 {dimension_numbers = #tpu.dot_dimension_numbers<[1], [0], [0], [1], [0, 0, 1, 1], [], []>} : vector<64x32xf32>, vector<32x8xf32>, vector<64x8xf32> -> vector<64x8xf32>
    %8 = arith.addf %2, %7 : vector<64x8xf32>
    %9 = vector.extract_strided_slice %1 {offsets = [0, 1, 0], sizes = [8, 8, 32], strides = [1, 1, 1]} : vector<9x9x32xf32> to vector<8x8x32xf32>
    %10 = vector.shape_cast %9 : vector<8x8x32xf32> to vector<64x32xf32>
    %c1 = arith.constant 1 : index
    %c0_7 = arith.constant 0 : index
    %c0_8 = arith.constant 0 : index
    %11 = vector.load %arg2[%c1, %c0_7, %c0_8] : memref<4x32x8xf32, #tpu.memory_space<vmem>>, vector<1x32x8xf32>
    %12 = vector.shape_cast %11 : vector<1x32x8xf32> to vector<32x8xf32>
    %cst_9 = arith.constant dense<0.000000e+00> : vector<64x8xf32>
    %13 = tpu.matmul %10, %12, %cst_9 {dimension_numbers = #tpu.dot_dimension_numbers<[1], [0], [0], [1], [0, 0, 1, 1], [], []>} : vector<64x32xf32>, vector<32x8xf32>, vector<64x8xf32> -> vector<64x8xf32>
    %14 = arith.addf %8, %13 : vector<64x8xf32>
    %15 = vector.extract_strided_slice %1 {offsets = [1, 0, 0], sizes = [8, 8, 32], strides = [1, 1, 1]} : vector<9x9x32xf32> to vector<8x8x32xf32>
    %16 = vector.shape_cast %15 : vector<8x8x32xf32> to vector<64x32xf32>
    %c2 = arith.constant 2 : index
    %c0_10 = arith.constant 0 : index
    %c0_11 = arith.constant 0 : index
    %17 = vector.load %arg2[%c2, %c0_10, %c0_11] : memref<4x32x8xf32, #tpu.memory_space<vmem>>, vector<1x32x8xf32>
    %18 = vector.shape_cast %17 : vector<1x32x8xf32> to vector<32x8xf32>
    %cst_12 = arith.constant dense<0.000000e+00> : vector<64x8xf32>
    %19 = tpu.matmul %16, %18, %cst_12 {dimension_numbers = #tpu.dot_dimension_numbers<[1], [0], [0], [1], [0, 0, 1, 1], [], []>} : vector<64x32xf32>, vector<32x8xf32>, vector<64x8xf32> -> vector<64x8xf32>
    %20 = arith.addf %14, %19 : vector<64x8xf32>
    %21 = vector.extract_strided_slice %1 {offsets = [1, 1, 0], sizes = [8, 8, 32], strides = [1, 1, 1]} : vector<9x9x32xf32> to vector<8x8x32xf32>
    %22 = vector.shape_cast %21 : vector<8x8x32xf32> to vector<64x32xf32>
    %c3 = arith.constant 3 : index
    %c0_13 = arith.constant 0 : index
    %c0_14 = arith.constant 0 : index
    %23 = vector.load %arg2[%c3, %c0_13, %c0_14] : memref<4x32x8xf32, #tpu.memory_space<vmem>>, vector<1x32x8xf32>
    %24 = vector.shape_cast %23 : vector<1x32x8xf32> to vector<32x8xf32>
    %cst_15 = arith.constant dense<0.000000e+00> : vector<64x8xf32>
    %25 = tpu.matmul %22, %24, %cst_15 {dimension_numbers = #tpu.dot_dimension_numbers<[1], [0], [0], [1], [0, 0, 1, 1], [], []>} : vector<64x32xf32>, vector<32x8xf32>, vector<64x8xf32> -> vector<64x8xf32>
    %26 = arith.addf %20, %25 : vector<64x8xf32>
    %c0_16 = arith.constant 0 : index
    %c0_17 = arith.constant 0 : index
    %27 = vector.load %arg3[%c0_16, %c0_17] : memref<1x8xf32, #tpu.memory_space<vmem>>, vector<1x8xf32>
    %28 = vector.broadcast %27 : vector<1x8xf32> to vector<64x8xf32>
    %29 = arith.addf %26, %28 : vector<64x8xf32>
    %30 = vector.shape_cast %29 : vector<64x8xf32> to vector<1x8x8x8xf32>
    %c0_18 = arith.constant 0 : index
    %c0_19 = arith.constant 0 : index
    %c0_20 = arith.constant 0 : index
    %c0_21 = arith.constant 0 : index
    %31 = vector.load %arg4[%c0_18, %c0_19, %c0_20, %c0_21] : memref<1x8x8x8xf32, #tpu.memory_space<vmem>>, vector<1x8x8x8xf32>
    tpu.vector_store %arg4[%c0_18, %c0_19, %c0_20, %c0_21], %30 {strides = array<i32>} : memref<1x8x8x8xf32, #tpu.memory_space<vmem>>, vector<1x8x8x8xf32>,
    return
  }
  func.func @transform_0(%arg0: i32) -> (i32, i32, i32, i32) {
    %c0_i32 = arith.constant 0 : i32
    %c0_i32_0 = arith.constant 0 : i32
    %c0_i32_1 = arith.constant 0 : i32
    %c0_i32_2 = arith.constant 0 : i32
    return %arg0, %c0_i32, %c0_i32_0, %c0_i32_1 : i32, i32, i32, i32
  }
  func.func @transform_1(%arg0: i32) -> (i32, i32, i32) {
    %c0_i32 = arith.constant 0 : i32
    %c0_i32_0 = arith.constant 0 : i32
    %c0_i32_1 = arith.constant 0 : i32
    %c0_i32_2 = arith.constant 0 : i32
    return %c0_i32, %c0_i32_0, %c0_i32_1 : i32, i32, i32
  }
  func.func @transform_2(%arg0: i32) -> (i32, i32) {
    %c0_i32 = arith.constant 0 : i32
    %c0_i32_0 = arith.constant 0 : i32
    %c0_i32_1 = arith.constant 0 : i32
    return %c0_i32, %c0_i32_0 : i32, i32
  }
  func.func @transform_3(%arg0: i32) -> (i32, i32, i32, i32) {
    %c0_i32 = arith.constant 0 : i32
    %c0_i32_0 = arith.constant 0 : i32
    %c0_i32_1 = arith.constant 0 : i32
    %c0_i32_2 = arith.constant 0 : i32
    return %arg0, %c0_i32, %c0_i32_0, %c0_i32_1 : i32, i32, i32, i32
  }
}

</mosaic_0001>

<llo_original>
// kernel: block_forward.6
$region0: #{block_forward.6}
  #allocation0 [shape = 'u32[]', space=smem, size = 0x4, offset = 0x4, fixed_abs, tag = 'smem constant byte address 0x4 - core index']
  #allocation1 [shape = 'u32[144,128]{1,0:T(1,128)}', space=vmem, size = 0x12000, scoped, tag = 'internal scratch']
  %s0 = inlined_call_operand.vmem [shape: f32[2,32], index: 0, kind: input, shape index: {}]
  %s1 = inlined_call_operand.vmem [shape: f32[32,8], index: 1, kind: input, shape index: {}]
  %s2 = inlined_call_operand.vmem [shape: f32[1,8], index: 2, kind: input, shape index: {}]
  %s3 = inlined_call_operand.vmem [shape: f32[2,8], index: 3, kind: output, shape index: {}]
  %s4 = sld [smem:[#allocation0]]
  $region22: #{block_forward.6} parent=0
    _
  %s6 = ssub.s32 1, %s4
  %s7 = scalar_select 0, %s6, %s4
  // Predicated region
  $region2: #{block_forward.6} parent=0 // pred_check
    _
  $region3: #{block_forward.6} parent=0 // pred_check_branch
    %9 = sbr.rel (0) target = $region5
  $region4: #{block_forward.6} parent=0 // pred_region
    _
  $region5: #{block_forward.6} parent=0 // pred_fallthru
    _
  // Predicated region
  $region6: #{block_forward.6} parent=0 // pred_check
    _
  $region7: #{block_forward.6} parent=0 // pred_check_branch
    %11 = sbr.rel (0) target = $region9
  $region8: #{block_forward.6} parent=0 // pred_region
    _
  $region9: #{block_forward.6} parent=0 // pred_fallthru
    _
  // Predicated region
  $region10: #{block_forward.6} parent=0 // pred_check
    _
  $region11: #{block_forward.6} parent=0 // pred_check_branch
    %13 = sbr.rel (0) target = $region13
  $region12: #{block_forward.6} parent=0 // pred_region
    _
  $region13: #{block_forward.6} parent=0 // pred_fallthru
    _
  %v14 = vld [vmem:[%s0] sm:$0x3]
  %v15 = vld [vmem:[%s1] sm:$0xff]
  %v16 = vld [vmem:[%s1 + $0x8] sm:$0xff]
  %v17 = vld [vmem:[%s1 + $0x10] sm:$0xff]
  %v18 = vld [vmem:[%s1 + $0x18] sm:$0xff]
  %v19 = vld [vmem:[%s2] sm:$0x1]
  %v21 = vlaneseq
  %v22 = vshrl.u32 %v21, 7
  %v23 = vsub.s32 0, %v22
  %v24 = vrot.slane %v19, %v23
  %vm26 = vcmask 261120
  %v28 = vsel %vm26, %v14, 0
  %30 = vmatprep.subr.mxu0 0.0
  %31 = vmatpush1.msra.mxu0 %v15
  %32 = vmatprep.subr.mxu0 0.0
  %33 = vmatpush1.msra.mxu0 %v16
  %34 = vmatprep.subr.mxu0 0.0
  %35 = vmatpush1.msra.mxu0 %v17
  %36 = vmatprep.subr.mxu0 0.0
  %37 = vmatpush1.msra.mxu0 %v18
  %38 = vmatprep.subr.mxu0 0.0
  %39 = vmatpush1.msra.mxu0 0.0
  %40 = vmatprep.subr.mxu0 0.0
  %41 = vmatpush1.msra.mxu0 0.0
  %42 = vmatprep.subr.mxu0 0.0
  %43 = vmatpush1.msra.mxu0 0.0
  %44 = vmatprep.subr.mxu0 0.0
  %45 = vmatpush1.msra.mxu0 0.0
  %46 = vmatprep.subr.mxu0 0.0
  %47 = vmatpush1.msra.mxu0 0.0
  %48 = vmatprep.subr.mxu0 0.0
  %49 = vmatpush1.msra.mxu0 0.0
  %50 = vmatprep.subr.mxu0 0.0
  %51 = vmatpush1.msra.mxu0 0.0
  %52 = vmatprep.subr.mxu0 0.0
  %53 = vmatpush1.msra.mxu0 0.0
  %54 = vmatprep.subr.mxu0 0.0
  %55 = vmatpush1.msra.mxu0 0.0
  %56 = vmatprep.subr.mxu0 0.0
  %57 = vmatpush1.msra.mxu0 0.0
  %58 = vmatprep.subr.mxu0 0.0
  %59 = vmatpush1.msra.mxu0 0.0
  %60 = vmatprep.subr.mxu0 0.0
  %61 = vmatpush1.msra.mxu0 0.0
  %62 = vmatprep.subr.mxu0 0.0
  %63 = vmatpush1.msra.mxu0 0.0
  %64 = vmatprep.subr.mxu0 0.0
  %65 = vmatpush1.msra.mxu0 0.0
  %66 = vmatprep.subr.mxu0 0.0
  %67 = vmatpush1.msra.mxu0 0.0
  %68 = vmatprep.subr.mxu0 0.0
  %69 = vmatpush1.msra.mxu0 0.0
  %70 = vmatprep.subr.mxu0 0.0
  %71 = vmatpush1.msra.mxu0 0.0
  %72 = vmatprep.subr.mxu0 0.0
  %73 = vmatpush1.msra.mxu0 0.0
  %74 = vmatprep.subr.mxu0 0.0
  %75 = vmatpush1.msra.mxu0 0.0
  %76 = vmatprep.subr.mxu0 0.0
  %77 = vmatpush1.msra.mxu0 0.0
  %78 = vmatprep.subr.mxu0 0.0
  %79 = vmatpush1.msra.mxu0 0.0
  %80 = vmatprep.subr.mxu0 0.0
  %81 = vmatpush1.msra.mxu0 0.0
  %82 = vmatprep.subr.mxu0 0.0
  %83 = vmatpush1.msra.mxu0 0.0
  %84 = vmatprep.subr.mxu0 0.0
  %85 = vmatpush1.msra.mxu0 0.0
  %86 = vmatprep.subr.mxu0 0.0
  %87 = vmatpush1.msra.mxu0 0.0
  %88 = vmatprep.subr.mxu0 0.0
  %89 = vmatpush1.msra.mxu0 0.0
  %90 = vmatprep.subr.mxu0 0.0
  %91 = vmatpush1.msra.mxu0 0.0
  %92 = vmatprep.subr.mxu0 0.0
  %93 = vmatpush1.msra.mxu0 0.0
  %94 = vmatprep.mubr.f32.mxu0 0.0
  %95 = vmatmul.mubr.f32.gmra.mrb[0].mxu0 %v28
  %v96 = vpop.f32.mrb[0].mxu0
  %v97 = vadd.f32 %v24, %v96
  %v98 = vpop.f32.mrb[0].mxu0
  %99 = vdwg.mxu0
  %v100 = vmax.f32 %v97, 0.0
  %vm101 = vcmask 58368
  %102 = vst.msk [vmem:[%s3] sm:$0x3] %vm101, %v100
  // Predicated region
  $region14: #{block_forward.6} parent=0 // pred_check
    _
  $region15: #{block_forward.6} parent=0 // pred_check_branch
    %104 = sbr.rel (0) target = $region17
  $region16: #{block_forward.6} parent=0 // pred_region
    _
  $region17: #{block_forward.6} parent=0 // pred_fallthru
    _
  // Predicated region
  $region18: #{block_forward.6} parent=0 // pred_check
    _
  $region19: #{block_forward.6} parent=0 // pred_check_branch
    %106 = sbr.rel (0) target = $region21
  $region20: #{block_forward.6} parent=0 // pred_region
    _
  $region21: #{block_forward.6} parent=0 // pred_fallthru
    _

// kernel: block_forward.8
$region0: #{block_forward.8}
  #allocation0 [shape = 'u32[]', space=smem, size = 0x4, offset = 0x4, fixed_abs, tag = 'smem constant byte address 0x4 - core index']
  #allocation1 [shape = 'u32[144,128]{1,0:T(1,128)}', space=vmem, size = 0x12000, scoped, tag = 'internal scratch']
  %s0 = inlined_call_operand.vmem [shape: f32[2,16,128], index: 0, kind: input, shape index: {}]
  %s1 = inlined_call_operand.vmem [shape: f32[2,1,128], index: 1, kind: input, shape index: {}]
  %s2 = inlined_call_operand.vmem [shape: f32[2,1,128], index: 2, kind: input, shape index: {}]
  %s3 = inlined_call_operand.vmem [shape: f32[2,1,128], index: 3, kind: input, shape index: {}]
  %s4 = inlined_call_operand.vmem [shape: f32[2,16,128], index: 4, kind: output, shape index: {}]
  %s5 = sld [smem:[#allocation0]]
  $region49: #{block_forward.8} parent=0
    _
  %s7 = ssub.s32 1, %s5
  %s8 = scalar_select 0, %s7, %s5
  loop: start=0, step=1, limit=4
  $region2: #{block_forward.8} parent=0 // loop_pre_header
    _
  $region3: #{block_forward.8} parent=0 // loop_header
    %s10 = sphi 0, %s14
    %p11 = scmp.ge.s32.totalorder %s10, 4
    %s20 = sphi 0, %s22
    %s23 = sphi 0, %s20
    %s24 = sphi 0, %s23
    %s40 = sphi 0, %s24
    %s44 = sphi 0, %s44
    %s46 = sphi 0, %s44
    %s47 = sphi 0, %s46
    %s61 = sphi 0, %s47
    %s65 = sphi 0, %s65
    %s67 = sphi 0, %s65
    %s68 = sphi 0, %s67
    %s82 = sphi 0, %s68
    %s88 = sphi 0, %s90
    %s91 = sphi 0, %s88
    %s92 = sphi 0, %s91
    %s108 = sphi 0, %s92
    %s114 = sphi 0, %s116
    %s117 = sphi 0, %s114
    %s118 = sphi 0, %s117
    %s134 = sphi 0, %s118
  $region4: #{block_forward.8} parent=0 // loop_header_branch
    %13 = sbr.rel (%p11) target = $region8
  $region5: #{block_forward.8} parent=0 // loop_body
    %s15 = ssub.s32 %s10, 1
    %s16 = ssub.s32 %s10, 2
    %s17 = sadd.s32 %s10, 1
    %s18 = ssub.s32 %s10, %s17
    %p19 = scmp.eq.s32.totalorder %s18, 0
    %s21 = sadd.s32 %s20, 1
    %s22 = scalar_select %p19, %s20, %s21
    %p25 = pneg %p19
    %p26 = scmp.eq.s32.totalorder %s10, 1
    %p27 = por %p25, %p26
    %p28 = scmp.ne.s32.totalorder %s20, %s23
    %p29 = scmp.eq.s32.totalorder %s10, 0
    %p30 = por %p28, %p29
    %p31 = scmp.ne.s32.totalorder %s20, %s23
    %p32 = scmp.eq.s32.totalorder %s15, 1
    %p33 = por %p31, %p32
    %p34 = scmp.ne.s32.totalorder %s23, %s24
    %p35 = scmp.eq.s32.totalorder %s15, 0
    %p36 = por %p34, %p35
    %p37 = scmp.ne.s32.totalorder %s23, %s24
    %p38 = scmp.eq.s32.totalorder %s16, 1
    %p39 = por %p37, %p38
    %p41 = scmp.ne.s32.totalorder %s24, %s40
    %p42 = scmp.eq.s32.totalorder %s16, 0
    %p43 = por %p41, %p42
    %s45 = sadd.s32 %s44, 1
    %p48 = scmp.eq.s32.totalorder %s10, 1
    %p49 = scmp.ne.s32.totalorder %s44, %s46
    %p50 = scmp.eq.s32.totalorder %s10, 0
    %p51 = por %p49, %p50
    %p52 = scmp.ne.s32.totalorder %s44, %s46
    %p53 = scmp.eq.s32.totalorder %s15, 1
    %p54 = por %p52, %p53
    %p55 = scmp.ne.s32.totalorder %s46, %s47
    %p56 = scmp.eq.s32.totalorder %s15, 0
    %p57 = por %p55, %p56
    %p58 = scmp.ne.s32.totalorder %s46, %s47
    %p59 = scmp.eq.s32.totalorder %s16, 1
    %p60 = por %p58, %p59
    %p62 = scmp.ne.s32.totalorder %s47, %s61
    %p63 = scmp.eq.s32.totalorder %s16, 0
    %p64 = por %p62, %p63
    %s66 = sadd.s32 %s65, 1
    %p69 = scmp.eq.s32.totalorder %s10, 1
    %p70 = scmp.ne.s32.totalorder %s65, %s67
    %p71 = scmp.eq.s32.totalorder %s10, 0
    %p72 = por %p70, %p71
    %p73 = scmp.ne.s32.totalorder %s65, %s67
    %p74 = scmp.eq.s32.totalorder %s15, 1
    %p75 = por %p73, %p74
    %p76 = scmp.ne.s32.totalorder %s67, %s68
    %p77 = scmp.eq.s32.totalorder %s15, 0
    %p78 = por %p76, %p77
    %p79 = scmp.ne.s32.totalorder %s67, %s68
    %p80 = scmp.eq.s32.totalorder %s16, 1
    %p81 = por %p79, %p80
    %p83 = scmp.ne.s32.totalorder %s68, %s82
    %p84 = scmp.eq.s32.totalorder %s16, 0
    %p85 = por %p83, %p84
    %s86 = ssub.s32 %s10, %s17
    %p87 = scmp.eq.s32.totalorder %s86, 0
    %s89 = sadd.s32 %s88, 1
    %s90 = scalar_select %p87, %s88, %s89
    %p93 = pneg %p87
    %p94 = scmp.eq.s32.totalorder %s10, 1
    %p95 = por %p93, %p94
    %p96 = scmp.ne.s32.totalorder %s88, %s91
    %p97 = scmp.eq.s32.totalorder %s10, 0
    %p98 = por %p96, %p97
    %p99 = scmp.ne.s32.totalorder %s88, %s91
    %p100 = scmp.eq.s32.totalorder %s15, 1
    %p101 = por %p99, %p100
    %p102 = scmp.ne.s32.totalorder %s91, %s92
    %p103 = scmp.eq.s32.totalorder %s15, 0
    %p104 = por %p102, %p103
    %p105 = scmp.ne.s32.totalorder %s91, %s92
    %p106 = scmp.eq.s32.totalorder %s16, 1
    %p107 = por %p105, %p106
    %p109 = scmp.ne.s32.totalorder %s92, %s108
    %p110 = scmp.eq.s32.totalorder %s16, 0
    %p111 = por %p109, %p110
    %s112 = ssub.s32 %s10, %s17
    %p113 = scmp.eq.s32.totalorder %s112, 0
    %s115 = sadd.s32 %s114, 1
    %s116 = scalar_select %p113, %s114, %s115
    %p119 = pneg %p113
    %p120 = scmp.eq.s32.totalorder %s10, 1
    %p121 = por %p119, %p120
    %p122 = scmp.ne.s32.totalorder %s114, %s117
    %p123 = scmp.eq.s32.totalorder %s10, 0
    %p124 = por %p122, %p123
    %p125 = scmp.ne.s32.totalorder %s114, %s117
    %p126 = scmp.eq.s32.totalorder %s15, 1
    %p127 = por %p125, %p126
    %p128 = scmp.ne.s32.totalorder %s117, %s118
    %p129 = scmp.eq.s32.totalorder %s15, 0
    %p130 = por %p128, %p129
    %p131 = scmp.ne.s32.totalorder %s117, %s118
    %p132 = scmp.eq.s32.totalorder %s16, 1
    %p133 = por %p131, %p132
    %p135 = scmp.ne.s32.totalorder %s118, %s134
    %p136 = scmp.eq.s32.totalorder %s16, 0
    %p137 = por %p135, %p136
    %p138 = scmp.le.s32.totalorder 1, %s10
    %p139 = scmp.lt.s32.totalorder %s10, 3
    %p140 = pnand %p138, %p139
    %p141 = pneg %p140
    // Predicated region
    $region9: #{block_forward.8} parent=5 // pred_check
      _
    $region10: #{block_forward.8} parent=5 // pred_check_branch
      %143 = sbr.rel (%p140) target = $region12
    $region11: #{block_forward.8} parent=5 // pred_region
      %s144 = ssub.s32 %s10, 1
      // Predicated region
      $region13: #{block_forward.8} parent=11 // pred_check
        %p145 = pneg %p57
      $region14: #{block_forward.8} parent=11 // pred_check_branch
        %147 = sbr.rel (%p145) target = $region16
      $region15: #{block_forward.8} parent=11 // pred_region
        _
      $region16: #{block_forward.8} parent=11 // pred_fallthru
        _
      // Predicated region
      $region17: #{block_forward.8} parent=11 // pred_check
        %p148 = pneg %p78
      $region18: #{block_forward.8} parent=11 // pred_check_branch
        %150 = sbr.rel (%p148) target = $region20
      $region19: #{block_forward.8} parent=11 // pred_region
        _
      $region20: #{block_forward.8} parent=11 // pred_fallthru
        _
    $region12: #{block_forward.8} parent=5 // pred_fallthru
      _
    %p151 = scmp.lt.s32.totalorder %s10, 2
    // Predicated region
    $region21: #{block_forward.8} parent=5 // pred_check
      %p152 = pneg %p151
    $region22: #{block_forward.8} parent=5 // pred_check_branch
      %154 = sbr.rel (%p152) target = $region24
    $region23: #{block_forward.8} parent=5 // pred_region
      // Predicated region
      $region25: #{block_forward.8} parent=23 // pred_check
        %p155 = pneg %p30
      $region26: #{block_forward.8} parent=23 // pred_check_branch
        %157 = sbr.rel (%p155) target = $region28
      $region27: #{block_forward.8} parent=23 // pred_region
        %p158 = scmp.lt.s32.totalorder %s10, 1
        %s159 = scalar_select %p158, %s10, 1
        %s160 = smul.addr %s159, 2
        %s161 = smul.addr %s160, 8
        %s162 = scalar_lea.vmem %s0, %s161
      $region28: #{block_forward.8} parent=23 // pred_fallthru
        _
      // Predicated region
      $region29: #{block_forward.8} parent=23 // pred_check
        %p163 = pneg %p98
      $region30: #{block_forward.8} parent=23 // pred_check_branch
        %165 = sbr.rel (%p163) target = $region32
      $region31: #{block_forward.8} parent=23 // pred_region
        %p166 = scmp.lt.s32.totalorder %s10, 1
        %s167 = scalar_select %p166, %s10, 1
        %s168 = scalar_lea.vmem %s3, %s167
      $region32: #{block_forward.8} parent=23 // pred_fallthru
        _
    $region24: #{block_forward.8} parent=5 // pred_fallthru
      _
    %p169 = scmp.le.s32.totalorder 1, %s10
    %p170 = scmp.lt.s32.totalorder %s10, 3
    %p171 = pnand %p169, %p170
    %p172 = pneg %p171
    // Predicated region
    $region33: #{block_forward.8} parent=5 // pred_check
      _
    $region34: #{block_forward.8} parent=5 // pred_check_branch
      %174 = sbr.rel (%p171) target = $region36
    $region35: #{block_forward.8} parent=5 // pred_region
      %s175 = ssub.s32 %s10, 1
      %p176 = scmp.lt.s32.totalorder %s15, 1
      %s177 = scalar_select %p176, %s15, 1
      %s178 = smul.addr %s177, 2
      %s179 = smul.addr %s178, 8
      %s180 = scalar_lea.vmem %s0, %s179
      %p181 = pneg %p36
      %p182 = pneg %p33
      %p183 = pneg %p57
      %p184 = pneg %p54
      %p185 = pneg %p78
      %p186 = pneg %p75
      %p187 = scmp.lt.s32.totalorder %s15, 1
      %s188 = scalar_select %p187, %s15, 1
      %s189 = scalar_lea.vmem %s3, %s188
      %p190 = pneg %p104
      %p191 = pneg %p101
      %p192 = pneg %p130
      %p193 = pneg %p127
      %p194 = scmp.lt.s32.totalorder %s15, 1
      %s195 = scalar_select %p194, %s15, 1
      %s196 = smul.addr %s195, 2
      %s197 = smul.addr %s196, 8
      %s198 = scalar_lea.vmem %s4, %s197
      %p199 = scmp.lt.s32.totalorder %s15, 1
      %s200 = scalar_select %p199, %s15, 1
      %s201 = smul.addr %s200, 2
      %s202 = smul.addr %s201, 8
      %s203 = scalar_lea.vmem %s0, %s202
      %p204 = scmp.lt.s32.totalorder %s15, 1
      %s205 = scalar_select %p204, %s15, 1
      %s206 = scalar_lea.vmem %s3, %s205
      %p207 = scmp.lt.s32.totalorder %s15, 1
      %s208 = scalar_select %p207, %s15, 1
      %s209 = smul.addr %s208, 2
      %s210 = smul.addr %s209, 8
      %s211 = scalar_lea.vmem %s4, %s210
      %v212 = vld [vmem:[%s1] sm:$0x1]
      %v213 = vld [vmem:[%s1 + $0x1] sm:$0x1]
      %vm214 = vcmask 1040384
      %v215 = vsel %vm214, %v212, 0.0
      %v216 = vsel %vm214, %v213, 0.0
      %v217 = vadd.f32 %v215, %v216
      %v218 = vld [vmem:[%s2] sm:$0x1]
      %v219 = vld [vmem:[%s2 + $0x1] sm:$0x1]
      %v220 = vsel %vm214, %v218, 0.0
      %v221 = vsel %vm214, %v219, 0.0
      %v222 = vadd.f32 %v220, %v221
      %v223 = vrcp.pop 512.0
      %v224 = vmul.f32 %v217, %v223
      %v225 = vmul.f32 %v222, %v223
      %v226 = vmul.f32 %v224, %v224
      %v227 = vsub.f32 %v225, %v226
      %v228 = vmax.f32 %v227, 0.0
      %v229 = vadd.f32 %v228, 1e-05
      %v230 = vrsqrt.pop %v229
      %v231 = vsub.f32 0.0, %v224
      %v232 = vmul.f32 %v231, %v230
      %v233 = vld [vmem:[%s206] sm:$0x1]
      %v234 = vadd.f32 %v232, %v233
      %v235 = vld [vmem:[%s203] sm:$0xff]
      %v236 = vld [vmem:[%s203 + $0x8] sm:$0xff]
      %v237 = vlaneseq
      %v238 = vshrl.u32 %v237, 7
      %v239 = vsub.s32 0, %v238
      %v240 = vrot.slane %v230, %v239
      %v241 = vmul.f32 %v235, %v240
      %v242 = vmul.f32 %v236, %v240
      %v243 = vlaneseq
      %v244 = vshrl.u32 %v243, 7
      %v245 = vsub.s32 0, %v244
      %v246 = vrot.slane %v234, %v245
      %v247 = vadd.f32 %v241, %v246
      %v248 = vadd.f32 %v242, %v246
      %249 = vst [vmem:[%s211] sm:$0xff] %v247
      %250 = vst [vmem:[%s211 + $0x8] sm:$0xff] %v248
      %p251 = scmp.lt.s32.totalorder %s15, 1
      %s252 = scalar_select %p251, %s15, 1
      %s253 = smul.addr %s252, 2
      %s254 = smul.addr %s253, 8
      %s255 = scalar_lea.vmem %s4, %s254
      // Predicated region
      $region37: #{block_forward.8} parent=35 // pred_check
        %p256 = pneg %p127
      $region38: #{block_forward.8} parent=35 // pred_check_branch
        %258 = sbr.rel (%p256) target = $region40
      $region39: #{block_forward.8} parent=35 // pred_region
        _
      $region40: #{block_forward.8} parent=35 // pred_fallthru
        _
    $region36: #{block_forward.8} parent=5 // pred_fallthru
      _
    %p259 = scmp.le.s32.totalorder 2, %s10
    // Predicated region
    $region41: #{block_forward.8} parent=5 // pred_check
      %p260 = pneg %p259
    $region42: #{block_forward.8} parent=5 // pred_check_branch
      %262 = sbr.rel (%p260) target = $region44
    $region43: #{block_forward.8} parent=5 // pred_region
      %s263 = ssub.s32 %s10, 2
      // Predicated region
      $region45: #{block_forward.8} parent=43 // pred_check
        %p264 = pneg %p133
      $region46: #{block_forward.8} parent=43 // pred_check_branch
        %266 = sbr.rel (%p264) target = $region48
      $region47: #{block_forward.8} parent=43 // pred_region
        %p267 = scmp.lt.s32.totalorder %s16, 1
        %s268 = scalar_select %p267, %s16, 1
        %s269 = smul.addr %s268, 2
        %s270 = smul.addr %s269, 8
        %s271 = scalar_lea.vmem %s4, %s270
      $region48: #{block_forward.8} parent=43 // pred_fallthru
        _
    $region44: #{block_forward.8} parent=5 // pred_fallthru
      _
  $region6: #{block_forward.8} parent=0 // loop_footer
    %s14 = sadd.s32 1, %s10
  $region7: #{block_forward.8} parent=0 // loop_footer_branch
    %9 = sbr.rel target = $region3
  $region8: #{block_forward.8} parent=0 // loop_exit
    _

// kernel: block_forward.10
$region0: #{block_forward.10}
  #allocation0 [shape = 'u32[]', space=smem, size = 0x4, offset = 0x4, fixed_abs, tag = 'smem constant byte address 0x4 - core index']
  #allocation1 [shape = 'u32[144,128]{1,0:T(1,128)}', space=vmem, size = 0x12000, scoped, tag = 'internal scratch']
  %s0 = inlined_call_operand.vmem [shape: f32[2,16,128], index: 0, kind: input, shape index: {}]
  %s1 = inlined_call_operand.vmem [shape: f32[2,1,128], index: 1, kind: input, shape index: {}]
  %s2 = inlined_call_operand.vmem [shape: f32[2,1,128], index: 2, kind: input, shape index: {}]
  %s3 = inlined_call_operand.vmem [shape: f32[2,16,128], index: 3, kind: output, shape index: {}]
  %s4 = sld [smem:[#allocation0]]
  $region45: #{block_forward.10} parent=0
    _
  %s6 = ssub.s32 1, %s4
  %s7 = scalar_select 0, %s6, %s4
  loop: start=0, step=1, limit=4
  $region2: #{block_forward.10} parent=0 // loop_pre_header
    _
  $region3: #{block_forward.10} parent=0 // loop_header
    %s9 = sphi 0, %s13
    %p10 = scmp.ge.s32.totalorder %s9, 4
    %s19 = sphi 0, %s21
    %s22 = sphi 0, %s19
    %s23 = sphi 0, %s22
    %s39 = sphi 0, %s23
    %s43 = sphi 0, %s43
    %s45 = sphi 0, %s43
    %s46 = sphi 0, %s45
    %s60 = sphi 0, %s46
    %s64 = sphi 0, %s64
    %s66 = sphi 0, %s64
    %s67 = sphi 0, %s66
    %s81 = sphi 0, %s67
    %s87 = sphi 0, %s89
    %s90 = sphi 0, %s87
    %s91 = sphi 0, %s90
    %s107 = sphi 0, %s91
  $region4: #{block_forward.10} parent=0 // loop_header_branch
    %12 = sbr.rel (%p10) target = $region8
  $region5: #{block_forward.10} parent=0 // loop_body
    %s14 = ssub.s32 %s9, 1
    %s15 = ssub.s32 %s9, 2
    %s16 = sadd.s32 %s9, 1
    %s17 = ssub.s32 %s9, %s16
    %p18 = scmp.eq.s32.totalorder %s17, 0
    %s20 = sadd.s32 %s19, 1
    %s21 = scalar_select %p18, %s19, %s20
    %p24 = pneg %p18
    %p25 = scmp.eq.s32.totalorder %s9, 1
    %p26 = por %p24, %p25
    %p27 = scmp.ne.s32.totalorder %s19, %s22
    %p28 = scmp.eq.s32.totalorder %s9, 0
    %p29 = por %p27, %p28
    %p30 = scmp.ne.s32.totalorder %s19, %s22
    %p31 = scmp.eq.s32.totalorder %s14, 1
    %p32 = por %p30, %p31
    %p33 = scmp.ne.s32.totalorder %s22, %s23
    %p34 = scmp.eq.s32.totalorder %s14, 0
    %p35 = por %p33, %p34
    %p36 = scmp.ne.s32.totalorder %s22, %s23
    %p37 = scmp.eq.s32.totalorder %s15, 1
    %p38 = por %p36, %p37
    %p40 = scmp.ne.s32.totalorder %s23, %s39
    %p41 = scmp.eq.s32.totalorder %s15, 0
    %p42 = por %p40, %p41
    %s44 = sadd.s32 %s43, 1
    %p47 = scmp.eq.s32.totalorder %s9, 1
    %p48 = scmp.ne.s32.totalorder %s43, %s45
    %p49 = scmp.eq.s32.totalorder %s9, 0
    %p50 = por %p48, %p49
    %p51 = scmp.ne.s32.totalorder %s43, %s45
    %p52 = scmp.eq.s32.totalorder %s14, 1
    %p53 = por %p51, %p52
    %p54 = scmp.ne.s32.totalorder %s45, %s46
    %p55 = scmp.eq.s32.totalorder %s14, 0
    %p56 = por %p54, %p55
    %p57 = scmp.ne.s32.totalorder %s45, %s46
    %p58 = scmp.eq.s32.totalorder %s15, 1
    %p59 = por %p57, %p58
    %p61 = scmp.ne.s32.totalorder %s46, %s60
    %p62 = scmp.eq.s32.totalorder %s15, 0
    %p63 = por %p61, %p62
    %s65 = sadd.s32 %s64, 1
    %p68 = scmp.eq.s32.totalorder %s9, 1
    %p69 = scmp.ne.s32.totalorder %s64, %s66
    %p70 = scmp.eq.s32.totalorder %s9, 0
    %p71 = por %p69, %p70
    %p72 = scmp.ne.s32.totalorder %s64, %s66
    %p73 = scmp.eq.s32.totalorder %s14, 1
    %p74 = por %p72, %p73
    %p75 = scmp.ne.s32.totalorder %s66, %s67
    %p76 = scmp.eq.s32.totalorder %s14, 0
    %p77 = por %p75, %p76
    %p78 = scmp.ne.s32.totalorder %s66, %s67
    %p79 = scmp.eq.s32.totalorder %s15, 1
    %p80 = por %p78, %p79
    %p82 = scmp.ne.s32.totalorder %s67, %s81
    %p83 = scmp.eq.s32.totalorder %s15, 0
    %p84 = por %p82, %p83
    %s85 = ssub.s32 %s9, %s16
    %p86 = scmp.eq.s32.totalorder %s85, 0
    %s88 = sadd.s32 %s87, 1
    %s89 = scalar_select %p86, %s87, %s88
    %p92 = pneg %p86
    %p93 = scmp.eq.s32.totalorder %s9, 1
    %p94 = por %p92, %p93
    %p95 = scmp.ne.s32.totalorder %s87, %s90
    %p96 = scmp.eq.s32.totalorder %s9, 0
    %p97 = por %p95, %p96
    %p98 = scmp.ne.s32.totalorder %s87, %s90
    %p99 = scmp.eq.s32.totalorder %s14, 1
    %p100 = por %p98, %p99
    %p101 = scmp.ne.s32.totalorder %s90, %s91
    %p102 = scmp.eq.s32.totalorder %s14, 0
    %p103 = por %p101, %p102
    %p104 = scmp.ne.s32.totalorder %s90, %s91
    %p105 = scmp.eq.s32.totalorder %s15, 1
    %p106 = por %p104, %p105
    %p108 = scmp.ne.s32.totalorder %s91, %s107
    %p109 = scmp.eq.s32.totalorder %s15, 0
    %p110 = por %p108, %p109
    %p111 = scmp.le.s32.totalorder 1, %s9
    %p112 = scmp.lt.s32.totalorder %s9, 3
    %p113 = pnand %p111, %p112
    %p114 = pneg %p113
    // Predicated region
    $region9: #{block_forward.10} parent=5 // pred_check
      _
    $region10: #{block_forward.10} parent=5 // pred_check_branch
      %116 = sbr.rel (%p113) target = $region12
    $region11: #{block_forward.10} parent=5 // pred_region
      %s117 = ssub.s32 %s9, 1
      // Predicated region
      $region13: #{block_forward.10} parent=11 // pred_check
        %p118 = pneg %p56
      $region14: #{block_forward.10} parent=11 // pred_check_branch
        %120 = sbr.rel (%p118) target = $region16
      $region15: #{block_forward.10} parent=11 // pred_region
        _
      $region16: #{block_forward.10} parent=11 // pred_fallthru
        _
      // Predicated region
      $region17: #{block_forward.10} parent=11 // pred_check
        %p121 = pneg %p77
      $region18: #{block_forward.10} parent=11 // pred_check_branch
        %123 = sbr.rel (%p121) target = $region20
      $region19: #{block_forward.10} parent=11 // pred_region
        _
      $region20: #{block_forward.10} parent=11 // pred_fallthru
        _
    $region12: #{block_forward.10} parent=5 // pred_fallthru
      _
    %p124 = scmp.lt.s32.totalorder %s9, 2
    // Predicated region
    $region21: #{block_forward.10} parent=5 // pred_check
      %p125 = pneg %p124
    $region22: #{block_forward.10} parent=5 // pred_check_branch
      %127 = sbr.rel (%p125) target = $region24
    $region23: #{block_forward.10} parent=5 // pred_region
      // Predicated region
      $region25: #{block_forward.10} parent=23 // pred_check
        %p128 = pneg %p29
      $region26: #{block_forward.10} parent=23 // pred_check_branch
        %130 = sbr.rel (%p128) target = $region28
      $region27: #{block_forward.10} parent=23 // pred_region
        %p131 = scmp.lt.s32.totalorder %s9, 1
        %s132 = scalar_select %p131, %s9, 1
        %s133 = smul.addr %s132, 2
        %s134 = smul.addr %s133, 8
        %s135 = scalar_lea.vmem %s0, %s134
      $region28: #{block_forward.10} parent=23 // pred_fallthru
        _
    $region24: #{block_forward.10} parent=5 // pred_fallthru
      _
    %p136 = scmp.le.s32.totalorder 1, %s9
    %p137 = scmp.lt.s32.totalorder %s9, 3
    %p138 = pnand %p136, %p137
    %p139 = pneg %p138
    // Predicated region
    $region29: #{block_forward.10} parent=5 // pred_check
      _
    $region30: #{block_forward.10} parent=5 // pred_check_branch
      %141 = sbr.rel (%p138) target = $region32
    $region31: #{block_forward.10} parent=5 // pred_region
      %s142 = ssub.s32 %s9, 1
      %p143 = scmp.lt.s32.totalorder %s14, 1
      %s144 = scalar_select %p143, %s14, 1
      %s145 = smul.addr %s144, 2
      %s146 = smul.addr %s145, 8
      %s147 = scalar_lea.vmem %s0, %s146
      %p148 = pneg %p35
      %p149 = pneg %p32
      %p150 = pneg %p56
      %p151 = pneg %p53
      %p152 = pneg %p77
      %p153 = pneg %p74
      %p154 = pneg %p103
      %p155 = pneg %p100
      %p156 = scmp.lt.s32.totalorder %s14, 1
      %s157 = scalar_select %p156, %s14, 1
      %s158 = smul.addr %s157, 2
      %s159 = smul.addr %s158, 8
      %s160 = scalar_lea.vmem %s3, %s159
      %p161 = scmp.lt.s32.totalorder %s14, 1
      %s162 = scalar_select %p161, %s14, 1
      %s163 = smul.addr %s162, 2
      %s164 = smul.addr %s163, 8
      %s165 = scalar_lea.vmem %s0, %s164
      %p166 = scmp.lt.s32.totalorder %s14, 1
      %s167 = scalar_select %p166, %s14, 1
      %s168 = smul.addr %s167, 2
      %s169 = smul.addr %s168, 8
      %s170 = scalar_lea.vmem %s3, %s169
      %v171 = vld [vmem:[%s1] sm:$0x1]
      %v172 = vld [vmem:[%s1 + $0x1] sm:$0x1]
      %vm173 = vcmask 1040384
      %v174 = vsel %vm173, %v171, 0.0
      %v175 = vsel %vm173, %v172, 0.0
      %v176 = vadd.f32 %v174, %v175
      %v177 = vld [vmem:[%s2] sm:$0x1]
      %v178 = vld [vmem:[%s2 + $0x1] sm:$0x1]
      %v179 = vsel %vm173, %v177, 0.0
      %v180 = vsel %vm173, %v178, 0.0
      %v181 = vadd.f32 %v179, %v180
      %v182 = vrcp.pop 512.0
      %v183 = vmul.f32 %v176, %v182
      %v184 = vmul.f32 %v181, %v182
      %v185 = vmul.f32 %v183, %v183
      %v186 = vsub.f32 %v184, %v185
      %v187 = vmax.f32 %v186, 0.0
      %v188 = vadd.f32 %v187, 1e-05
      %v189 = vrsqrt.pop %v188
      %v190 = vsub.f32 0.0, %v183
      %v191 = vmul.f32 %v190, %v189
      %v192 = vld [vmem:[%s165] sm:$0xff]
      %v193 = vld [vmem:[%s165 + $0x8] sm:$0xff]
      %v194 = vlaneseq
      %v195 = vshrl.u32 %v194, 7
      %v196 = vsub.s32 0, %v195
      %v197 = vrot.slane %v189, %v196
      %v198 = vmul.f32 %v192, %v197
      %v199 = vmul.f32 %v193, %v197
      %v200 = vlaneseq
      %v201 = vshrl.u32 %v200, 7
      %v202 = vsub.s32 0, %v201
      %v203 = vrot.slane %v191, %v202
      %v204 = vadd.f32 %v198, %v203
      %v205 = vadd.f32 %v199, %v203
      %206 = vst [vmem:[%s170] sm:$0xff] %v204
      %207 = vst [vmem:[%s170 + $0x8] sm:$0xff] %v205
      %p208 = scmp.lt.s32.totalorder %s14, 1
      %s209 = scalar_select %p208, %s14, 1
      %s210 = smul.addr %s209, 2
      %s211 = smul.addr %s210, 8
      %s212 = scalar_lea.vmem %s3, %s211
      // Predicated region
      $region33: #{block_forward.10} parent=31 // pred_check
        %p213 = pneg %p100
      $region34: #{block_forward.10} parent=31 // pred_check_branch
        %215 = sbr.rel (%p213) target = $region36
      $region35: #{block_forward.10} parent=31 // pred_region
        _
      $region36: #{block_forward.10} parent=31 // pred_fallthru
        _
    $region32: #{block_forward.10} parent=5 // pred_fallthru
      _
    %p216 = scmp.le.s32.totalorder 2, %s9
    // Predicated region
    $region37: #{block_forward.10} parent=5 // pred_check
      %p217 = pneg %p216
    $region38: #{block_forward.10} parent=5 // pred_check_branch
      %219 = sbr.rel (%p217) target = $region40
    $region39: #{block_forward.10} parent=5 // pred_region
      %s220 = ssub.s32 %s9, 2
      // Predicated region
      $region41: #{block_forward.10} parent=39 // pred_check
        %p221 = pneg %p106
      $region42: #{block_forward.10} parent=39 // pred_check_branch
        %223 = sbr.rel (%p221) target = $region44
      $region43: #{block_forward.10} parent=39 // pred_region
        %p224 = scmp.lt.s32.totalorder %s15, 1
        %s225 = scalar_select %p224, %s15, 1
        %s226 = smul.addr %s225, 2
        %s227 = smul.addr %s226, 8
        %s228 = scalar_lea.vmem %s3, %s227
      $region44: #{block_forward.10} parent=39 // pred_fallthru
        _
    $region40: #{block_forward.10} parent=5 // pred_fallthru
      _
  $region6: #{block_forward.10} parent=0 // loop_footer
    %s13 = sadd.s32 1, %s9
  $region7: #{block_forward.10} parent=0 // loop_footer_branch
    %8 = sbr.rel target = $region3
  $region8: #{block_forward.10} parent=0 // loop_exit
    _

// kernel: block_forward.7
$region0: #{block_forward.7}
  #allocation0 [shape = 'u32[]', space=smem, size = 0x4, offset = 0x4, fixed_abs, tag = 'smem constant byte address 0x4 - core index']
  #allocation1 [shape = 'u32[144,128]{1,0:T(1,128)}', space=vmem, size = 0x12000, scoped, tag = 'internal scratch']
  %s0 = inlined_call_operand.vmem [shape: f32[2,18,18,4], index: 0, kind: input, shape index: {}]
  %s1 = inlined_call_operand.vmem [shape: f32[9,4,8], index: 1, kind: input, shape index: {}]
  %s2 = inlined_call_operand.vmem [shape: f32[1,8], index: 2, kind: input, shape index: {}]
  %s3 = inlined_call_operand.vmem [shape: f32[2,16,16,8], index: 3, kind: output, shape index: {0}]
  %s4 = inlined_call_operand.vmem [shape: f32[2,1,8], index: 4, kind: output, shape index: {1}]
  %s5 = inlined_call_operand.vmem [shape: f32[2,1,8], index: 5, kind: output, shape index: {2}]
  %6 = xla_tuple %s3, %s4, %s5
  %s7 = sld [smem:[#allocation0]]
  $region61: #{block_forward.7} parent=0
    _
  %s9 = ssub.s32 1, %s7
  %s10 = scalar_select 0, %s9, %s7
  loop: start=0, step=1, limit=4
  $region2: #{block_forward.7} parent=0 // loop_pre_header
    _
  $region3: #{block_forward.7} parent=0 // loop_header
    %s12 = sphi 0, %s16
    %p13 = scmp.ge.s32.totalorder %s12, 4
    %s22 = sphi 0, %s24
    %s25 = sphi 0, %s22
    %s26 = sphi 0, %s25
    %s42 = sphi 0, %s26
    %s46 = sphi 0, %s46
    %s48 = sphi 0, %s46
    %s49 = sphi 0, %s48
    %s63 = sphi 0, %s49
    %s67 = sphi 0, %s67
    %s69 = sphi 0, %s67
    %s70 = sphi 0, %s69
    %s84 = sphi 0, %s70
    %s90 = sphi 0, %s92
    %s93 = sphi 0, %s90
    %s94 = sphi 0, %s93
    %s110 = sphi 0, %s94
    %s116 = sphi 0, %s118
    %s119 = sphi 0, %s116
    %s120 = sphi 0, %s119
    %s136 = sphi 0, %s120
    %s142 = sphi 0, %s144
    %s145 = sphi 0, %s142
    %s146 = sphi 0, %s145
    %s162 = sphi 0, %s146
  $region4: #{block_forward.7} parent=0 // loop_header_branch
    %15 = sbr.rel (%p13) target = $region8
  $region5: #{block_forward.7} parent=0 // loop_body
    %s17 = ssub.s32 %s12, 1
    %s18 = ssub.s32 %s12, 2
    %s19 = sadd.s32 %s12, 1
    %s20 = ssub.s32 %s12, %s19
    %p21 = scmp.eq.s32.totalorder %s20, 0
    %s23 = sadd.s32 %s22, 1
    %s24 = scalar_select %p21, %s22, %s23
    %p27 = pneg %p21
    %p28 = scmp.eq.s32.totalorder %s12, 1
    %p29 = por %p27, %p28
    %p30 = scmp.ne.s32.totalorder %s22, %s25
    %p31 = scmp.eq.s32.totalorder %s12, 0
    %p32 = por %p30, %p31
    %p33 = scmp.ne.s32.totalorder %s22, %s25
    %p34 = scmp.eq.s32.totalorder %s17, 1
    %p35 = por %p33, %p34
    %p36 = scmp.ne.s32.totalorder %s25, %s26
    %p37 = scmp.eq.s32.totalorder %s17, 0
    %p38 = por %p36, %p37
    %p39 = scmp.ne.s32.totalorder %s25, %s26
    %p40 = scmp.eq.s32.totalorder %s18, 1
    %p41 = por %p39, %p40
    %p43 = scmp.ne.s32.totalorder %s26, %s42
    %p44 = scmp.eq.s32.totalorder %s18, 0
    %p45 = por %p43, %p44
    %s47 = sadd.s32 %s46, 1
    %p50 = scmp.eq.s32.totalorder %s12, 1
    %p51 = scmp.ne.s32.totalorder %s46, %s48
    %p52 = scmp.eq.s32.totalorder %s12, 0
    %p53 = por %p51, %p52
    %p54 = scmp.ne.s32.totalorder %s46, %s48
    %p55 = scmp.eq.s32.totalorder %s17, 1
    %p56 = por %p54, %p55
    %p57 = scmp.ne.s32.totalorder %s48, %s49
    %p58 = scmp.eq.s32.totalorder %s17, 0
    %p59 = por %p57, %p58
    %p60 = scmp.ne.s32.totalorder %s48, %s49
    %p61 = scmp.eq.s32.totalorder %s18, 1
    %p62 = por %p60, %p61
    %p64 = scmp.ne.s32.totalorder %s49, %s63
    %p65 = scmp.eq.s32.totalorder %s18, 0
    %p66 = por %p64, %p65
    %s68 = sadd.s32 %s67, 1
    %p71 = scmp.eq.s32.totalorder %s12, 1
    %p72 = scmp.ne.s32.totalorder %s67, %s69
    %p73 = scmp.eq.s32.totalorder %s12, 0
    %p74 = por %p72, %p73
    %p75 = scmp.ne.s32.totalorder %s67, %s69
    %p76 = scmp.eq.s32.totalorder %s17, 1
    %p77 = por %p75, %p76
    %p78 = scmp.ne.s32.totalorder %s69, %s70
    %p79 = scmp.eq.s32.totalorder %s17, 0
    %p80 = por %p78, %p79
    %p81 = scmp.ne.s32.totalorder %s69, %s70
    %p82 = scmp.eq.s32.totalorder %s18, 1
    %p83 = por %p81, %p82
    %p85 = scmp.ne.s32.totalorder %s70, %s84
    %p86 = scmp.eq.s32.totalorder %s18, 0
    %p87 = por %p85, %p86
    %s88 = ssub.s32 %s12, %s19
    %p89 = scmp.eq.s32.totalorder %s88, 0
    %s91 = sadd.s32 %s90, 1
    %s92 = scalar_select %p89, %s90, %s91
    %p95 = pneg %p89
    %p96 = scmp.eq.s32.totalorder %s12, 1
    %p97 = por %p95, %p96
    %p98 = scmp.ne.s32.totalorder %s90, %s93
    %p99 = scmp.eq.s32.totalorder %s12, 0
    %p100 = por %p98, %p99
    %p101 = scmp.ne.s32.totalorder %s90, %s93
    %p102 = scmp.eq.s32.totalorder %s17, 1
    %p103 = por %p101, %p102
    %p104 = scmp.ne.s32.totalorder %s93, %s94
    %p105 = scmp.eq.s32.totalorder %s17, 0
    %p106 = por %p104, %p105
    %p107 = scmp.ne.s32.totalorder %s93, %s94
    %p108 = scmp.eq.s32.totalorder %s18, 1
    %p109 = por %p107, %p108
    %p111 = scmp.ne.s32.totalorder %s94, %s110
    %p112 = scmp.eq.s32.totalorder %s18, 0
    %p113 = por %p111, %p112
    %s114 = ssub.s32 %s12, %s19
    %p115 = scmp.eq.s32.totalorder %s114, 0
    %s117 = sadd.s32 %s116, 1
    %s118 = scalar_select %p115, %s116, %s117
    %p121 = pneg %p115
    %p122 = scmp.eq.s32.totalorder %s12, 1
    %p123 = por %p121, %p122
    %p124 = scmp.ne.s32.totalorder %s116, %s119
    %p125 = scmp.eq.s32.totalorder %s12, 0
    %p126 = por %p124, %p125
    %p127 = scmp.ne.s32.totalorder %s116, %s119
    %p128 = scmp.eq.s32.totalorder %s17, 1
    %p129 = por %p127, %p128
    %p130 = scmp.ne.s32.totalorder %s119, %s120
    %p131 = scmp.eq.s32.totalorder %s17, 0
    %p132 = por %p130, %p131
    %p133 = scmp.ne.s32.totalorder %s119, %s120
    %p134 = scmp.eq.s32.totalorder %s18, 1
    %p135 = por %p133, %p134
    %p137 = scmp.ne.s32.totalorder %s120, %s136
    %p138 = scmp.eq.s32.totalorder %s18, 0
    %p139 = por %p137, %p138
    %s140 = ssub.s32 %s12, %s19
    %p141 = scmp.eq.s32.totalorder %s140, 0
    %s143 = sadd.s32 %s142, 1
    %s144 = scalar_select %p141, %s142, %s143
    %p147 = pneg %p141
    %p148 = scmp.eq.s32.totalorder %s12, 1
    %p149 = por %p147, %p148
    %p150 = scmp.ne.s32.totalorder %s142, %s145
    %p151 = scmp.eq.s32.totalorder %s12, 0
    %p152 = por %p150, %p151
    %p153 = scmp.ne.s32.totalorder %s142, %s145
    %p154 = scmp.eq.s32.totalorder %s17, 1
    %p155 = por %p153, %p154
    %p156 = scmp.ne.s32.totalorder %s145, %s146
    %p157 = scmp.eq.s32.totalorder %s17, 0
    %p158 = por %p156, %p157
    %p159 = scmp.ne.s32.totalorder %s145, %s146
    %p160 = scmp.eq.s32.totalorder %s18, 1
    %p161 = por %p159, %p160
    %p163 = scmp.ne.s32.totalorder %s146, %s162
    %p164 = scmp.eq.s32.totalorder %s18, 0
    %p165 = por %p163, %p164
    %p166 = scmp.le.s32.totalorder 1, %s12
    %p167 = scmp.lt.s32.totalorder %s12, 3
    %p168 = pnand %p166, %p167
    %p169 = pneg %p168
    // Predicated region
    $region9: #{block_forward.7} parent=5 // pred_check
      _
    $region10: #{block_forward.7} parent=5 // pred_check_branch
      %171 = sbr.rel (%p168) target = $region12
    $region11: #{block_forward.7} parent=5 // pred_region
      %s172 = ssub.s32 %s12, 1
      // Predicated region
      $region13: #{block_forward.7} parent=11 // pred_check
        %p173 = pneg %p59
      $region14: #{block_forward.7} parent=11 // pred_check_branch
        %175 = sbr.rel (%p173) target = $region16
      $region15: #{block_forward.7} parent=11 // pred_region
        _
      $region16: #{block_forward.7} parent=11 // pred_fallthru
        _
      // Predicated region
      $region17: #{block_forward.7} parent=11 // pred_check
        %p176 = pneg %p80
      $region18: #{block_forward.7} parent=11 // pred_check_branch
        %178 = sbr.rel (%p176) target = $region20
      $region19: #{block_forward.7} parent=11 // pred_region
        _
      $region20: #{block_forward.7} parent=11 // pred_fallthru
        _
    $region12: #{block_forward.7} parent=5 // pred_fallthru
      _
    %p179 = scmp.lt.s32.totalorder %s12, 2
    // Predicated region
    $region21: #{block_forward.7} parent=5 // pred_check
      %p180 = pneg %p179
    $region22: #{block_forward.7} parent=5 // pred_check_branch
      %182 = sbr.rel (%p180) target = $region24
    $region23: #{block_forward.7} parent=5 // pred_region
      // Predicated region
      $region25: #{block_forward.7} parent=23 // pred_check
        %p183 = pneg %p32
      $region26: #{block_forward.7} parent=23 // pred_check_branch
        %185 = sbr.rel (%p183) target = $region28
      $region27: #{block_forward.7} parent=23 // pred_region
        %p186 = scmp.lt.s32.totalorder %s12, 1
        %s187 = scalar_select %p186, %s12, 1
        %s188 = smul.addr %s187, 54
        %s189 = smul.addr %s188, 8
        %s190 = scalar_lea.vmem %s0, %s189
      $region28: #{block_forward.7} parent=23 // pred_fallthru
        _
    $region24: #{block_forward.7} parent=5 // pred_fallthru
      _
    %p191 = scmp.le.s32.totalorder 1, %s12
    %p192 = scmp.lt.s32.totalorder %s12, 3
    %p193 = pnand %p191, %p192
    %p194 = pneg %p193
    // Predicated region
    $region29: #{block_forward.7} parent=5 // pred_check
      _
    $region30: #{block_forward.7} parent=5 // pred_check_branch
      %196 = sbr.rel (%p193) target = $region32
    $region31: #{block_forward.7} parent=5 // pred_region
      %s197 = ssub.s32 %s12, 1
      %p198 = scmp.lt.s32.totalorder %s17, 1
      %s199 = scalar_select %p198, %s17, 1
      %s200 = smul.addr %s199, 54
      %s201 = smul.addr %s200, 8
      %s202 = scalar_lea.vmem %s0, %s201
      %p203 = pneg %p38
      %p204 = pneg %p35
      %p205 = pneg %p59
      %p206 = pneg %p56
      %p207 = pneg %p80
      %p208 = pneg %p77
      %p209 = pneg %p106
      %p210 = pneg %p103
      %p211 = scmp.lt.s32.totalorder %s17, 1
      %s212 = scalar_select %p211, %s17, 1
      %s213 = smul.addr %s212, 32
      %s214 = smul.addr %s213, 8
      %s215 = scalar_lea.vmem %s3, %s214
      %p216 = pneg %p132
      %p217 = pneg %p129
      %p218 = scmp.lt.s32.totalorder %s17, 1
      %s219 = scalar_select %p218, %s17, 1
      %s220 = scalar_lea.vmem %s4, %s219
      %p221 = pneg %p158
      %p222 = pneg %p155
      %p223 = scmp.lt.s32.totalorder %s17, 1
      %s224 = scalar_select %p223, %s17, 1
      %s225 = scalar_lea.vmem %s5, %s224
      %p226 = scmp.lt.s32.totalorder %s17, 1
      %s227 = scalar_select %p226, %s17, 1
      %s228 = smul.addr %s227, 54
      %s229 = smul.addr %s228, 8
      %s230 = scalar_lea.vmem %s0, %s229
      %p231 = scmp.lt.s32.totalorder %s17, 1
      %s232 = scalar_select %p231, %s17, 1
      %s233 = smul.addr %s232, 32
      %s234 = smul.addr %s233, 8
      %s235 = scalar_lea.vmem %s3, %s234
      %p236 = scmp.lt.s32.totalorder %s17, 1
      %s237 = scalar_select %p236, %s17, 1
      %s238 = scalar_lea.vmem %s4, %s237
      %p239 = scmp.lt.s32.totalorder %s17, 1
      %s240 = scalar_select %p239, %s17, 1
      %s241 = scalar_lea.vmem %s5, %s240
      %v242 = vld [vmem:[%s230] sm:$0xff]
      %v243 = vld [vmem:[%s230 + $0x8] sm:$0xff]
      %v244 = vld [vmem:[%s230 + $0x10] sm:$0x3]
      %v245 = vld [vmem:[%s230 + $0x18] sm:$0xff]
      %v246 = vld [vmem:[%s230 + $0x20] sm:$0xff]
      %v247 = vld [vmem:[%s230 + $0x28] sm:$0x3]
      %v248 = vld [vmem:[%s230 + $0x30] sm:$0xff]
      %v249 = vld [vmem:[%s230 + $0x38] sm:$0xff]
      %v250 = vld [vmem:[%s230 + $0x40] sm:$0x3]
      %v251 = vld [vmem:[%s230 + $0x48] sm:$0xff]
      %v252 = vld [vmem:[%s230 + $0x50] sm:$0xff]
      %v253 = vld [vmem:[%s230 + $0x58] sm:$0x3]
      %v254 = vld [vmem:[%s230 + $0x60] sm:$0xff]
      %v255 = vld [vmem:[%s230 + $0x68] sm:$0xff]
      %v256 = vld [vmem:[%s230 + $0x70] sm:$0x3]
      %v257 = vld [vmem:[%s230 + $0x78] sm:$0xff]
      %v258 = vld [vmem:[%s230 + $0x80] sm:$0xff]
      %v259 = vld [vmem:[%s230 + $0x88] sm:$0x3]
      %v260 = vld [vmem:[%s230 + $0x90] sm:$0xff]
      %v261 = vld [vmem:[%s230 + $0x98] sm:$0xff]
      %v262 = vld [vmem:[%s230 + $0xa0] sm:$0x3]
      %v263 = vld [vmem:[%s230 + $0xa8] sm:$0xff]
      %v264 = vld [vmem:[%s230 + $0xb0] sm:$0xff]
      %v265 = vld [vmem:[%s230 + $0xb8] sm:$0x3]
      %v266 = vld [vmem:[%s230 + $0xc0] sm:$0xff]
      %v267 = vld [vmem:[%s230 + $0xc8] sm:$0xff]
      %v268 = vld [vmem:[%s230 + $0xd0] sm:$0x3]
      %v269 = vld [vmem:[%s230 + $0xd8] sm:$0xff]
      %v270 = vld [vmem:[%s230 + $0xe0] sm:$0xff]
      %v271 = vld [vmem:[%s230 + $0xe8] sm:$0x3]
      %v272 = vld [vmem:[%s230 + $0xf0] sm:$0xff]
      %v273 = vld [vmem:[%s230 + $0xf8] sm:$0xff]
      %v274 = vld [vmem:[%s230 + $0x100] sm:$0x3]
      %v275 = vld [vmem:[%s230 + $0x108] sm:$0xff]
      %v276 = vld [vmem:[%s230 + $0x110] sm:$0xff]
      %v277 = vld [vmem:[%s230 + $0x118] sm:$0x3]
      %v278 = vld [vmem:[%s230 + $0x120] sm:$0xff]
      %v279 = vld [vmem:[%s230 + $0x128] sm:$0xff]
      %v280 = vld [vmem:[%s230 + $0x130] sm:$0x3]
      %v281 = vld [vmem:[%s230 + $0x138] sm:$0xff]
      %v282 = vld [vmem:[%s230 + $0x140] sm:$0xff]
      %v283 = vld [vmem:[%s230 + $0x148] sm:$0x3]
      %v284 = vld [vmem:[%s230 + $0x150] sm:$0xff]
      %v285 = vld [vmem:[%s230 + $0x158] sm:$0xff]
      %v286 = vld [vmem:[%s230 + $0x160] sm:$0x3]
      %v287 = vld [vmem:[%s230 + $0x168] sm:$0xff]
      %v288 = vld [vmem:[%s230 + $0x170] sm:$0xff]
      %v289 = vld [vmem:[%s230 + $0x178] sm:$0x3]
      %v290 = vld [vmem:[%s230 + $0x180] sm:$0xff]
      %v291 = vld [vmem:[%s230 + $0x188] sm:$0xff]
      %v292 = vld [vmem:[%s230 + $0x190] sm:$0x3]
      %v293 = vld [vmem:[%s230 + $0x198] sm:$0xff]
      %v294 = vld [vmem:[%s230 + $0x1a0] sm:$0xff]
      %v295 = vld [vmem:[%s230 + $0x1a8] sm:$0x3]
      %v296 = vld [vmem:[%s1] sm:$0xf]
      %vm345 = vcmask 1046528
      %v346 = vrot.slane %v242, 1
      %v347 = vrot.slane %v243, 1
      %v348 = vsel %vm345, %v346, %v347
      %v349 = vrot.slane %v244, 1
      %v350 = vsel %vm345, %v347, %v349
      %v351 = vrot.slane %v245, 1
      %v352 = vrot.slane %v246, 1
      %v353 = vsel %vm345, %v351, %v352
      %v354 = vrot.slane %v247, 1
      %v355 = vsel %vm345, %v352, %v354
      %v356 = vrot.slane %v248, 1
      %v357 = vrot.slane %v249, 1
      %v358 = vsel %vm345, %v356, %v357
      %v359 = vrot.slane %v250, 1
      %v360 = vsel %vm345, %v357, %v359
      %v361 = vrot.slane %v251, 1
      %v362 = vrot.slane %v252, 1
      %v363 = vsel %vm345, %v361, %v362
      %v364 = vrot.slane %v253, 1
      %v365 = vsel %vm345, %v362, %v364
      %v366 = vrot.slane %v254, 1
      %v367 = vrot.slane %v255, 1
      %v368 = vsel %vm345, %v366, %v367
      %v369 = vrot.slane %v256, 1
      %v370 = vsel %vm345, %v367, %v369
      %v371 = vrot.slane %v257, 1
      %v372 = vrot.slane %v258, 1
      %v373 = vsel %vm345, %v371, %v372
      %v374 = vrot.slane %v259, 1
      %v375 = vsel %vm345, %v372, %v374
      %v376 = vrot.slane %v260, 1
      %v377 = vrot.slane %v261, 1
      %v378 = vsel %vm345, %v376, %v377
      %v379 = vrot.slane %v262, 1
      %v380 = vsel %vm345, %v377, %v379
      %v381 = vrot.slane %v263, 1
      %v382 = vrot.slane %v264, 1
      %v383 = vsel %vm345, %v381, %v382
      %v384 = vrot.slane %v265, 1
      %v385 = vsel %vm345, %v382, %v384
      %v386 = vrot.slane %v266, 1
      %v387 = vrot.slane %v267, 1
      %v388 = vsel %vm345, %v386, %v387
      %v389 = vrot.slane %v268, 1
      %v390 = vsel %vm345, %v387, %v389
      %v391 = vrot.slane %v269, 1
      %v392 = vrot.slane %v270, 1
      %v393 = vsel %vm345, %v391, %v392
      %v394 = vrot.slane %v271, 1
      %v395 = vsel %vm345, %v392, %v394
      %v396 = vrot.slane %v272, 1
      %v397 = vrot.slane %v273, 1
      %v398 = vsel %vm345, %v396, %v397
      %v399 = vrot.slane %v274, 1
      %v400 = vsel %vm345, %v397, %v399
      %v401 = vrot.slane %v275, 1
      %v402 = vrot.slane %v276, 1
      %v403 = vsel %vm345, %v401, %v402
      %v404 = vrot.slane %v277, 1
      %v405 = vsel %vm345, %v402, %v404
      %v406 = vrot.slane %v278, 1
      %v407 = vrot.slane %v279, 1
      %v408 = vsel %vm345, %v406, %v407
      %v409 = vrot.slane %v280, 1
      %v410 = vsel %vm345, %v407, %v409
      %v411 = vrot.slane %v281, 1
      %v412 = vrot.slane %v282, 1
      %v413 = vsel %vm345, %v411, %v412
      %v414 = vrot.slane %v283, 1
      %v415 = vsel %vm345, %v412, %v414
      %v416 = vrot.slane %v284, 1
      %v417 = vrot.slane %v285, 1
      %v418 = vsel %vm345, %v416, %v417
      %v419 = vrot.slane %v286, 1
      %v420 = vsel %vm345, %v417, %v419
      %v421 = vrot.slane %v287, 1
      %v422 = vrot.slane %v288, 1
      %v423 = vsel %vm345, %v421, %v422
      %v424 = vrot.slane %v289, 1
      %v425 = vsel %vm345, %v422, %v424
      %s426 = scalar_lea.vmem %s1, 4
      %v427 = vld [vmem:[%s426] sm:$0xf]
      %vm428 = vcmask 31744
      %v429 = vsel %vm428, %v348, 0
      %v431 = vsel %vm428, %v350, 0
      %v433 = vsel %vm428, %v353, 0
      %v435 = vsel %vm428, %v355, 0
      %v437 = vsel %vm428, %v358, 0
      %v439 = vsel %vm428, %v360, 0
      %v441 = vsel %vm428, %v363, 0
      %v443 = vsel %vm428, %v365, 0
      %v445 = vsel %vm428, %v368, 0
      %v447 = vsel %vm428, %v370, 0
      %v449 = vsel %vm428, %v373, 0
      %v451 = vsel %vm428, %v375, 0
      %v453 = vsel %vm428, %v378, 0
      %v455 = vsel %vm428, %v380, 0
      %v457 = vsel %vm428, %v383, 0
      %v459 = vsel %vm428, %v385, 0
      %v461 = vsel %vm428, %v388, 0
      %v463 = vsel %vm428, %v390, 0
      %v465 = vsel %vm428, %v393, 0
      %v467 = vsel %vm428, %v395, 0
      %v469 = vsel %vm428, %v398, 0
      %v471 = vsel %vm428, %v400, 0
      %v473 = vsel %vm428, %v403, 0
      %v475 = vsel %vm428, %v405, 0
      %v477 = vsel %vm428, %v408, 0
      %v479 = vsel %vm428, %v410, 0
      %v481 = vsel %vm428, %v413, 0
      %v483 = vsel %vm428, %v415, 0
      %v485 = vsel %vm428, %v418, 0
      %v487 = vsel %vm428, %v420, 0
      %v489 = vsel %vm428, %v423, 0
      %v491 = vsel %vm428, %v425, 0
      %vm493 = vcmask 1043456
      %v495 = vsel %vm493, %v427, 0
      %497 = vmatprep.subr.mxu0 0.0
      %498 = vmatpush1.msra.mxu0 %v495
      %499 = vmatprep.subr.mxu0 0.0
      %500 = vmatpush1.msra.mxu0 0.0
      %501 = vmatprep.subr.mxu0 0.0
      %502 = vmatpush1.msra.mxu0 0.0
      %503 = vmatprep.subr.mxu0 0.0
      %504 = vmatpush1.msra.mxu0 0.0
      %505 = vmatprep.subr.mxu0 0.0
      %506 = vmatpush1.msra.mxu0 0.0
      %507 = vmatprep.subr.mxu0 0.0
      %508 = vmatpush1.msra.mxu0 0.0
      %509 = vmatprep.subr.mxu0 0.0
      %510 = vmatpush1.msra.mxu0 0.0
      %511 = vmatprep.subr.mxu0 0.0
      %512 = vmatpush1.msra.mxu0 0.0
      %513 = vmatprep.subr.mxu0 0.0
      %514 = vmatpush1.msra.mxu0 0.0
      %515 = vmatprep.subr.mxu0 0.0
      %516 = vmatpush1.msra.mxu0 0.0
      %517 = vmatprep.subr.mxu0 0.0
      %518 = vmatpush1.msra.mxu0 0.0
      %519 = vmatprep.subr.mxu0 0.0
      %520 = vmatpush1.msra.mxu0 0.0
      %521 = vmatprep.subr.mxu0 0.0
      %522 = vmatpush1.msra.mxu0 0.0
      %523 = vmatprep.subr.mxu0 0.0
      %524 = vmatpush1.msra.mxu0 0.0
      %525 = vmatprep.subr.mxu0 0.0
      %526 = vmatpush1.msra.mxu0 0.0
      %527 = vmatprep.subr.mxu0 0.0
      %528 = vmatpush1.msra.mxu0 0.0
      %529 = vmatprep.subr.mxu0 0.0
      %530 = vmatpush1.msra.mxu0 0.0
      %531 = vmatprep.subr.mxu0 0.0
      %532 = vmatpush1.msra.mxu0 0.0
      %533 = vmatprep.subr.mxu0 0.0
      %534 = vmatpush1.msra.mxu0 0.0
      %535 = vmatprep.subr.mxu0 0.0
      %536 = vmatpush1.msra.mxu0 0.0
      %537 = vmatprep.subr.mxu0 0.0
      %538 = vmatpush1.msra.mxu0 0.0
      %539 = vmatprep.subr.mxu0 0.0
      %540 = vmatpush1.msra.mxu0 0.0
      %541 = vmatprep.subr.mxu0 0.0
      %542 = vmatpush1.msra.mxu0 0.0
      %543 = vmatprep.subr.mxu0 0.0
      %544 = vmatpush1.msra.mxu0 0.0
      %545 = vmatprep.subr.mxu0 0.0
      %546 = vmatpush1.msra.mxu0 0.0
      %547 = vmatprep.subr.mxu0 0.0
      %548 = vmatpush1.msra.mxu0 0.0
      %549 = vmatprep.subr.mxu0 0.0
      %550 = vmatpush1.msra.mxu0 0.0
      %551 = vmatprep.subr.mxu0 0.0
      %552 = vmatpush1.msra.mxu0 0.0
      %553 = vmatprep.subr.mxu0 0.0
      %554 = vmatpush1.msra.mxu0 0.0
      %555 = vmatprep.subr.mxu0 0.0
      %556 = vmatpush1.msra.mxu0 0.0
      %557 = vmatprep.subr.mxu0 0.0
      %558 = vmatpush1.msra.mxu0 0.0
      %559 = vmatprep.subr.mxu0 0.0
      %560 = vmatpush1.msra.mxu0 0.0
      %561 = vmatprep.mubr.f32.mxu0 0.0
      %562 = vmatmul.mubr.f32.gmra.mrb[0].mxu0 %v429
      %v563 = vpop.f32.mrb[0].mxu0
      %v564 = vadd.f32 0.0, %v563
      %v565 = vpop.f32.mrb[0].mxu0
      %566 = vmatprep.mubr.f32.mxu0 0.0
      %567 = vmatmul.mubr.f32.gmra.mrb[0].mxu0 %v431
      %v568 = vpop.f32.mrb[0].mxu0
      %v569 = vadd.f32 0.0, %v568
      %v570 = vpop.f32.mrb[0].mxu0
      %571 = vmatprep.mubr.f32.mxu0 0.0
      %572 = vmatmul.mubr.f32.gmra.mrb[0].mxu0 %v433
      %v573 = vpop.f32.mrb[0].mxu0
      %v574 = vadd.f32 0.0, %v573
      %v575 = vpop.f32.mrb[0].mxu0
      %576 = vmatprep.mubr.f32.mxu0 0.0
      %577 = vmatmul.mubr.f32.gmra.mrb[0].mxu0 %v435
      %v578 = vpop.f32.mrb[0].mxu0
      %v579 = vadd.f32 0.0, %v578
      %v580 = vpop.f32.mrb[0].mxu0
      %581 = vmatprep.mubr.f32.mxu0 0.0
      %582 = vmatmul.mubr.f32.gmra.mrb[0].mxu0 %v437
      %v583 = vpop.f32.mrb[0].mxu0
      %v584 = vadd.f32 0.0, %v583
      %v585 = vpop.f32.mrb[0].mxu0
      %586 = vmatprep.mubr.f32.mxu0 0.0
      %587 = vmatmul.mubr.f32.gmra.mrb[0].mxu0 %v439
      %v588 = vpop.f32.mrb[0].mxu0
      %v589 = vadd.f32 0.0, %v588
      %v590 = vpop.f32.mrb[0].mxu0
      %591 = vmatprep.mubr.f32.mxu0 0.0
      %592 = vmatmul.mubr.f32.gmra.mrb[0].mxu0 %v441
      %v593 = vpop.f32.mrb[0].mxu0
      %v594 = vadd.f32 0.0, %v593
      %v595 = vpop.f32.mrb[0].mxu0
      %596 = vmatprep.mubr.f32.mxu0 0.0
      %597 = vmatmul.mubr.f32.gmra.mrb[0].mxu0 %v443
      %v598 = vpop.f32.mrb[0].mxu0
      %v599 = vadd.f32 0.0, %v598
      %v600 = vpop.f32.mrb[0].mxu0
      %601 = vmatprep.mubr.f32.mxu0 0.0
      %602 = vmatmul.mubr.f32.gmra.mrb[0].mxu0 %v445
      %v603 = vpop.f32.mrb[0].mxu0
      %v604 = vadd.f32 0.0, %v603
      %v605 = vpop.f32.mrb[0].mxu0
      %606 = vmatprep.mubr.f32.mxu0 0.0
      %607 = vmatmul.mubr.f32.gmra.mrb[0].mxu0 %v447
      %v608 = vpop.f32.mrb[0].mxu0
      %v609 = vadd.f32 0.0, %v608
      %v610 = vpop.f32.mrb[0].mxu0
      %611 = vmatprep.mubr.f32.mxu0 0.0
      %612 = vmatmul.mubr.f32.gmra.mrb[0].mxu0 %v449
      %v613 = vpop.f32.mrb[0].mxu0
      %v614 = vadd.f32 0.0, %v613
      %v615 = vpop.f32.mrb[0].mxu0
      %616 = vmatprep.mubr.f32.mxu0 0.0
      %617 = vmatmul.mubr.f32.gmra.mrb[0].mxu0 %v451
      %v618 = vpop.f32.mrb[0].mxu0
      %v619 = vadd.f32 0.0, %v618
      %v620 = vpop.f32.mrb[0].mxu0
      %621 = vmatprep.mubr.f32.mxu0 0.0
      %622 = vmatmul.mubr.f32.gmra.mrb[0].mxu0 %v453
      %v623 = vpop.f32.mrb[0].mxu0
      %v624 = vadd.f32 0.0, %v623
      %v625 = vpop.f32.mrb[0].mxu0
      %626 = vmatprep.mubr.f32.mxu0 0.0
      %627 = vmatmul.mubr.f32.gmra.mrb[0].mxu0 %v455
      %v628 = vpop.f32.mrb[0].mxu0
      %v629 = vadd.f32 0.0, %v628
      %v630 = vpop.f32.mrb[0].mxu0
      %631 = vmatprep.mubr.f32.mxu0 0.0
      %632 = vmatmul.mubr.f32.gmra.mrb[0].mxu0 %v457
      %v633 = vpop.f32.mrb[0].mxu0
      %v634 = vadd.f32 0.0, %v633
      %v635 = vpop.f32.mrb[0].mxu0
      %636 = vmatprep.mubr.f32.mxu0 0.0
      %637 = vmatmul.mubr.f32.gmra.mrb[0].mxu0 %v459
      %v638 = vpop.f32.mrb[0].mxu0
      %v639 = vadd.f32 0.0, %v638
      %v640 = vpop.f32.mrb[0].mxu0
      %641 = vmatprep.mubr.f32.mxu0 0.0
      %642 = vmatmul.mubr.f32.gmra.mrb[0].mxu0 %v461
      %v643 = vpop.f32.mrb[0].mxu0
      %v644 = vadd.f32 0.0, %v643
      %v645 = vpop.f32.mrb[0].mxu0
      %646 = vmatprep.mubr.f32.mxu0 0.0
      %647 = vmatmul.mubr.f32.gmra.mrb[0].mxu0 %v463
      %v648 = vpop.f32.mrb[0].mxu0
      %v649 = vadd.f32 0.0, %v648
      %v650 = vpop.f32.mrb[0].mxu0
      %651 = vmatprep.mubr.f32.mxu0 0.0
      %652 = vmatmul.mubr.f32.gmra.mrb[0].mxu0 %v465
      %v653 = vpop.f32.mrb[0].mxu0
      %v654 = vadd.f32 0.0, %v653
      %v655 = vpop.f32.mrb[0].mxu0
      %656 = vmatprep.mubr.f32.mxu0 0.0
      %657 = vmatmul.mubr.f32.gmra.mrb[0].mxu0 %v467
      %v658 = vpop.f32.mrb[0].mxu0
      %v659 = vadd.f32 0.0, %v658
      %v660 = vpop.f32.mrb[0].mxu0
      %661 = vmatprep.mubr.f32.mxu0 0.0
      %662 = vmatmul.mubr.f32.gmra.mrb[0].mxu0 %v469
      %v663 = vpop.f32.mrb[0].mxu0
      %v664 = vadd.f32 0.0, %v663
      %v665 = vpop.f32.mrb[0].mxu0
      %666 = vmatprep.mubr.f32.mxu0 0.0
      %667 = vmatmul.mubr.f32.gmra.mrb[0].mxu0 %v471
      %v668 = vpop.f32.mrb[0].mxu0
      %v669 = vadd.f32 0.0, %v668
      %v670 = vpop.f32.mrb[0].mxu0
      %671 = vmatprep.mubr.f32.mxu0 0.0
      %672 = vmatmul.mubr.f32.gmra.mrb[0].mxu0 %v473
      %v673 = vpop.f32.mrb[0].mxu0
      %v674 = vadd.f32 0.0, %v673
      %v675 = vpop.f32.mrb[0].mxu0
      %676 = vmatprep.mubr.f32.mxu0 0.0
      %677 = vmatmul.mubr.f32.gmra.mrb[0].mxu0 %v475
      %v678 = vpop.f32.mrb[0].mxu0
      %v679 = vadd.f32 0.0, %v678
      %v680 = vpop.f32.mrb[0].mxu0
      %681 = vmatprep.mubr.f32.mxu0 0.0
      %682 = vmatmul.mubr.f32.gmra.mrb[0].mxu0 %v477
      %v683 = vpop.f32.mrb[0].mxu0
      %v684 = vadd.f32 0.0, %v683
      %v685 = vpop.f32.mrb[0].mxu0
      %686 = vmatprep.mubr.f32.mxu0 0.0
      %687 = vmatmul.mubr.f32.gmra.mrb[0].mxu0 %v479
      %v688 = vpop.f32.mrb[0].mxu0
      %v689 = vadd.f32 0.0, %v688
      %v690 = vpop.f32.mrb[0].mxu0
      %691 = vmatprep.mubr.f32.mxu0 0.0
      %692 = vmatmul.mubr.f32.gmra.mrb[0].mxu0 %v481
      %v693 = vpop.f32.mrb[0].mxu0
      %v694 = vadd.f32 0.0, %v693
      %v695 = vpop.f32.mrb[0].mxu0
      %696 = vmatprep.mubr.f32.mxu0 0.0
      %697 = vmatmul.mubr.f32.gmra.mrb[0].mxu0 %v483
      %v698 = vpop.f32.mrb[0].mxu0
      %v699 = vadd.f32 0.0, %v698
      %v700 = vpop.f32.mrb[0].mxu0
      %701 = vmatprep.mubr.f32.mxu0 0.0
      %702 = vmatmul.mubr.f32.gmra.mrb[0].mxu0 %v485
      %v703 = vpop.f32.mrb[0].mxu0
      %v704 = vadd.f32 0.0, %v703
      %v705 = vpop.f32.mrb[0].mxu0
      %706 = vmatprep.mubr.f32.mxu0 0.0
      %707 = vmatmul.mubr.f32.gmra.mrb[0].mxu0 %v487
      %v708 = vpop.f32.mrb[0].mxu0
      %v709 = vadd.f32 0.0, %v708
      %v710 = vpop.f32.mrb[0].mxu0
      %711 = vmatprep.mubr.f32.mxu0 0.0
      %712 = vmatmul.mubr.f32.gmra.mrb[0].mxu0 %v489
      %v713 = vpop.f32.mrb[0].mxu0
      %v714 = vadd.f32 0.0, %v713
      %v715 = vpop.f32.mrb[0].mxu0
      %716 = vmatprep.mubr.f32.mxu0 0.0
      %717 = vmatmul.mubr.f32.gmra.mrb[0].mxu0 %v491
      %v718 = vpop.f32.mrb[0].mxu0
      %v719 = vadd.f32 0.0, %v718
      %v720 = vpop.f32.mrb[0].mxu0
      %721 = vdwg.mxu0
      %v722 = vsel %vm428, %v242, 0
      %v724 = vsel %vm428, %v243, 0
      %v726 = vsel %vm428, %v245, 0
      %v728 = vsel %vm428, %v246, 0
      %v730 = vsel %vm428, %v248, 0
      %v732 = vsel %vm428, %v249, 0
      %v734 = vsel %vm428, %v251, 0
      %v736 = vsel %vm428, %v252, 0
      %v738 = vsel %vm428, %v254, 0
      %v740 = vsel %vm428, %v255, 0
      %v742 = vsel %vm428, %v257, 0
      %v744 = vsel %vm428, %v258, 0
      %v746 = vsel %vm428, %v260, 0
      %v748 = vsel %vm428, %v261, 0
      %v750 = vsel %vm428, %v263, 0
      %v752 = vsel %vm428, %v264, 0
      %v754 = vsel %vm428, %v266, 0
      %v756 = vsel %vm428, %v267, 0
      %v758 = vsel %vm428, %v269, 0
      %v760 = vsel %vm428, %v270, 0
      %v762 = vsel %vm428, %v272, 0
      %v764 = vsel %vm428, %v273, 0
      %v766 = vsel %vm428, %v275, 0
      %v768 = vsel %vm428, %v276, 0
      %v770 = vsel %vm428, %v278, 0
      %v772 = vsel %vm428, %v279, 0
      %v774 = vsel %vm428, %v281, 0
      %v776 = vsel %vm428, %v282, 0
      %v778 = vsel %vm428, %v284, 0
      %v780 = vsel %vm428, %v285, 0
      %v782 = vsel %vm428, %v287, 0
      %v784 = vsel %vm428, %v288, 0
      %v787 = vsel %vm493, %v296, 0
      %789 = vmatprep.subr.mxu0 0.0
      %790 = vmatpush1.msra.mxu0 %v787
      %791 = vmatprep.subr.mxu0 0.0
      %792 = vmatpush1.msra.mxu0 0.0
      %793 = vmatprep.subr.mxu0 0.0
      %794 = vmatpush1.msra.mxu0 0.0
      %795 = vmatprep.subr.mxu0 0.0
      %796 = vmatpush1.msra.mxu0 0.0
      %797 = vmatprep.subr.mxu0 0.0
      %798 = vmatpush1.msra.mxu0 0.0
      %799 = vmatprep.subr.mxu0 0.0
      %800 = vmatpush1.msra.mxu0 0.0
      %801 = vmatprep.subr.mxu0 0.0
      %802 = vmatpush1.msra.mxu0 0.0
      %803 = vmatprep.subr.mxu0 0.0
      %804 = vmatpush1.msra.mxu0 0.0
      %805 = vmatprep.subr.mxu0 0.0
      %806 = vmatpush1.msra.mxu0 0.0
      %807 = vmatprep.subr.mxu0 0.0
      %808 = vmatpush1.msra.mxu0 0.0
      %809 = vmatprep.subr.mxu0 0.0
      %810 = vmatpush1.msra.mxu0 0.0
      %811 = vmatprep.subr.mxu0 0.0
      %812 = vmatpush1.msra.mxu0 0.0
      %813 = vmatprep.subr.mxu0 0.0
      %814 = vmatpush1.msra.mxu0 0.0
      %815 = vmatprep.subr.mxu0 0.0
      %816 = vmatpush1.msra.mxu0 0.0
      %817 = vmatprep.subr.mxu0 0.0
      %818 = vmatpush1.msra.mxu0 0.0
      %819 = vmatprep.subr.mxu0 0.0
      %820 = vmatpush1.msra.mxu0 0.0
      %821 = vmatprep.subr.mxu0 0.0
      %822 = vmatpush1.msra.mxu0 0.0
      %823 = vmatprep.subr.mxu0 0.0
      %824 = vmatpush1.msra.mxu0 0.0
      %825 = vmatprep.subr.mxu0 0.0
      %826 = vmatpush1.msra.mxu0 0.0
      %827 = vmatprep.subr.mxu0 0.0
      %828 = vmatpush1.msra.mxu0 0.0
      %829 = vmatprep.subr.mxu0 0.0
      %830 = vmatpush1.msra.mxu0 0.0
      %831 = vmatprep.subr.mxu0 0.0
      %832 = vmatpush1.msra.mxu0 0.0
      %833 = vmatprep.subr.mxu0 0.0
      %834 = vmatpush1.msra.mxu0 0.0
      %835 = vmatprep.subr.mxu0 0.0
      %836 = vmatpush1.msra.mxu0 0.0
      %837 = vmatprep.subr.mxu0 0.0
      %838 = vmatpush1.msra.mxu0 0.0
      %839 = vmatprep.subr.mxu0 0.0
      %840 = vmatpush1.msra.mxu0 0.0
      %841 = vmatprep.subr.mxu0 0.0
      %842 = vmatpush1.msra.mxu0 0.0
      %843 = vmatprep.subr.mxu0 0.0
      %844 = vmatpush1.msra.mxu0 0.0
      %845 = vmatprep.subr.mxu0 0.0
      %846 = vmatpush1.msra.mxu0 0.0
      %847 = vmatprep.subr.mxu0 0.0
      %848 = vmatpush1.msra.mxu0 0.0
      %849 = vmatprep.subr.mxu0 0.0
      %850 = vmatpush1.msra.mxu0 0.0
      %851 = vmatprep.subr.mxu0 0.0
      %852 = vmatpush1.msra.mxu0 0.0
      %853 = vmatprep.mubr.f32.mxu0 0.0
      %854 = vmatmul.mubr.f32.gmra.mrb[0].mxu0 %v722
      %v855 = vpop.f32.mrb[0].mxu0
      %v856 = vadd.f32 %v564, %v855
      %v857 = vpop.f32.mrb[0].mxu0
      %858 = vmatprep.mubr.f32.mxu0 0.0
      %859 = vmatmul.mubr.f32.gmra.mrb[0].mxu0 %v724
      %v860 = vpop.f32.mrb[0].mxu0
      %v861 = vadd.f32 %v569, %v860
      %v862 = vpop.f32.mrb[0].mxu0
      %863 = vmatprep.mubr.f32.mxu0 0.0
      %864 = vmatmul.mubr.f32.gmra.mrb[0].mxu0 %v726
      %v865 = vpop.f32.mrb[0].mxu0
      %v866 = vadd.f32 %v574, %v865
      %v867 = vpop.f32.mrb[0].mxu0
      %868 = vmatprep.mubr.f32.mxu0 0.0
      %869 = vmatmul.mubr.f32.gmra.mrb[0].mxu0 %v728
      %v870 = vpop.f32.mrb[0].mxu0
      %v871 = vadd.f32 %v579, %v870
      %v872 = vpop.f32.mrb[0].mxu0
      %873 = vmatprep.mubr.f32.mxu0 0.0
      %874 = vmatmul.mubr.f32.gmra.mrb[0].mxu0 %v730
      %v875 = vpop.f32.mrb[0].mxu0
      %v876 = vadd.f32 %v584, %v875
      %v877 = vpop.f32.mrb[0].mxu0
      %878 = vmatprep.mubr.f32.mxu0 0.0
      %879 = vmatmul.mubr.f32.gmra.mrb[0].mxu0 %v732
      %v880 = vpop.f32.mrb[0].mxu0
      %v881 = vadd.f32 %v589, %v880
      %v882 = vpop.f32.mrb[0].mxu0
      %883 = vmatprep.mubr.f32.mxu0 0.0
      %884 = vmatmul.mubr.f32.gmra.mrb[0].mxu0 %v734
      %v885 = vpop.f32.mrb[0].mxu0
      %v886 = vadd.f32 %v594, %v885
      %v887 = vpop.f32.mrb[0].mxu0
      %888 = vmatprep.mubr.f32.mxu0 0.0
      %889 = vmatmul.mubr.f32.gmra.mrb[0].mxu0 %v736
      %v890 = vpop.f32.mrb[0].mxu0
      %v891 = vadd.f32 %v599, %v890
      %v892 = vpop.f32.mrb[0].mxu0
      %893 = vmatprep.mubr.f32.mxu0 0.0
      %894 = vmatmul.mubr.f32.gmra.mrb[0].mxu0 %v738
      %v895 = vpop.f32.mrb[0].mxu0
      %v896 = vadd.f32 %v604, %v895
      %v897 = vpop.f32.mrb[0].mxu0
      %898 = vmatprep.mubr.f32.mxu0 0.0
      %899 = vmatmul.mubr.f32.gmra.mrb[0].mxu0 %v740
      %v900 = vpop.f32.mrb[0].mxu0
      %v901 = vadd.f32 %v609, %v900
      %v902 = vpop.f32.mrb[0].mxu0
      %903 = vmatprep.mubr.f32.mxu0 0.0
      %904 = vmatmul.mubr.f32.gmra.mrb[0].mxu0 %v742
      %v905 = vpop.f32.mrb[0].mxu0
      %v906 = vadd.f32 %v614, %v905
      %v907 = vpop.f32.mrb[0].mxu0
      %908 = vmatprep.mubr.f32.mxu0 0.0
      %909 = vmatmul.mubr.f32.gmra.mrb[0].mxu0 %v744
      %v910 = vpop.f32.mrb[0].mxu0
      %v911 = vadd.f32 %v619, %v910
      %v912 = vpop.f32.mrb[0].mxu0
      %913 = vmatprep.mubr.f32.mxu0 0.0
      %914 = vmatmul.mubr.f32.gmra.mrb[0].mxu0 %v746
      %v915 = vpop.f32.mrb[0].mxu0
      %v916 = vadd.f32 %v624, %v915
      %v917 = vpop.f32.mrb[0].mxu0
      %918 = vmatprep.mubr.f32.mxu0 0.0
      %919 = vmatmul.mubr.f32.gmra.mrb[0].mxu0 %v748
      %v920 = vpop.f32.mrb[0].mxu0
      %v921 = vadd.f32 %v629, %v920
      %v922 = vpop.f32.mrb[0].mxu0
      %923 = vmatprep.mubr.f32.mxu0 0.0
      %924 = vmatmul.mubr.f32.gmra.mrb[0].mxu0 %v750
      %v925 = vpop.f32.mrb[0].mxu0
      %v926 = vadd.f32 %v634, %v925
      %v927 = vpop.f32.mrb[0].mxu0
      %928 = vmatprep.mubr.f32.mxu0 0.0
      %929 = vmatmul.mubr.f32.gmra.mrb[0].mxu0 %v752
      %v930 = vpop.f32.mrb[0].mxu0
      %v931 = vadd.f32 %v639, %v930
      %v932 = vpop.f32.mrb[0].mxu0
      %933 = vmatprep.mubr.f32.mxu0 0.0
      %934 = vmatmul.mubr.f32.gmra.mrb[0].mxu0 %v754
      %v935 = vpop.f32.mrb[0].mxu0
      %v936 = vadd.f32 %v644, %v935
      %v937 = vpop.f32.mrb[0].mxu0
      %938 = vmatprep.mubr.f32.mxu0 0.0
      %939 = vmatmul.mubr.f32.gmra.mrb[0].mxu0 %v756
      %v940 = vpop.f32.mrb[0].mxu0
      %v941 = vadd.f32 %v649, %v940
      %v942 = vpop.f32.mrb[0].mxu0
      %943 = vmatprep.mubr.f32.mxu0 0.0
      %944 = vmatmul.mubr.f32.gmra.mrb[0].mxu0 %v758
      %v945 = vpop.f32.mrb[0].mxu0
      %v946 = vadd.f32 %v654, %v945
      %v947 = vpop.f32.mrb[0].mxu0
      %948 = vmatprep.mubr.f32.mxu0 0.0
      %949 = vmatmul.mubr.f32.gmra.mrb[0].mxu0 %v760
      %v950 = vpop.f32.mrb[0].mxu0
      %v951 = vadd.f32 %v659, %v950
      %v952 = vpop.f32.mrb[0].mxu0
      %953 = vmatprep.mubr.f32.mxu0 0.0
      %954 = vmatmul.mubr.f32.gmra.mrb[0].mxu0 %v762
      %v955 = vpop.f32.mrb[0].mxu0
      %v956 = vadd.f32 %v664, %v955
      %v957 = vpop.f32.mrb[0].mxu0
      %958 = vmatprep.mubr.f32.mxu0 0.0
      %959 = vmatmul.mubr.f32.gmra.mrb[0].mxu0 %v764
      %v960 = vpop.f32.mrb[0].mxu0
      %v961 = vadd.f32 %v669, %v960
      %v962 = vpop.f32.mrb[0].mxu0
      %963 = vmatprep.mubr.f32.mxu0 0.0
      %964 = vmatmul.mubr.f32.gmra.mrb[0].mxu0 %v766
      %v965 = vpop.f32.mrb[0].mxu0
      %v966 = vadd.f32 %v674, %v965
      %v967 = vpop.f32.mrb[0].mxu0
      %968 = vmatprep.mubr.f32.mxu0 0.0
      %969 = vmatmul.mubr.f32.gmra.mrb[0].mxu0 %v768
      %v970 = vpop.f32.mrb[0].mxu0
      %v971 = vadd.f32 %v679, %v970
      %v972 = vpop.f32.mrb[0].mxu0
      %973 = vmatprep.mubr.f32.mxu0 0.0
      %974 = vmatmul.mubr.f32.gmra.mrb[0].mxu0 %v770
      %v975 = vpop.f32.mrb[0].mxu0
      %v976 = vadd.f32 %v684, %v975
      %v977 = vpop.f32.mrb[0].mxu0
      %978 = vmatprep.mubr.f32.mxu0 0.0
      %979 = vmatmul.mubr.f32.gmra.mrb[0].mxu0 %v772
      %v980 = vpop.f32.mrb[0].mxu0
      %v981 = vadd.f32 %v689, %v980
      %v982 = vpop.f32.mrb[0].mxu0
      %983 = vmatprep.mubr.f32.mxu0 0.0
      %984 = vmatmul.mubr.f32.gmra.mrb[0].mxu0 %v774
      %v985 = vpop.f32.mrb[0].mxu0
      %v986 = vadd.f32 %v694, %v985
      %v987 = vpop.f32.mrb[0].mxu0
      %988 = vmatprep.mubr.f32.mxu0 0.0
      %989 = vmatmul.mubr.f32.gmra.mrb[0].mxu0 %v776
      %v990 = vpop.f32.mrb[0].mxu0
      %v991 = vadd.f32 %v699, %v990
      %v992 = vpop.f32.mrb[0].mxu0
      %993 = vmatprep.mubr.f32.mxu0 0.0
      %994 = vmatmul.mubr.f32.gmra.mrb[0].mxu0 %v778
      %v995 = vpop.f32.mrb[0].mxu0
      %v996 = vadd.f32 %v704, %v995
      %v997 = vpop.f32.mrb[0].mxu0
      %998 = vmatprep.mubr.f32.mxu0 0.0
      %999 = vmatmul.mubr.f32.gmra.mrb[0].mxu0 %v780
      %v1000 = vpop.f32.mrb[0].mxu0
      %v1001 = vadd.f32 %v709, %v1000
      %v1002 = vpop.f32.mrb[0].mxu0
      %1003 = vmatprep.mubr.f32.mxu0 0.0
      %1004 = vmatmul.mubr.f32.gmra.mrb[0].mxu0 %v782
      %v1005 = vpop.f32.mrb[0].mxu0
      %v1006 = vadd.f32 %v714, %v1005
      %v1007 = vpop.f32.mrb[0].mxu0
      %1008 = vmatprep.mubr.f32.mxu0 0.0
      %1009 = vmatmul.mubr.f32.gmra.mrb[0].mxu0 %v784
      %v1010 = vpop.f32.mrb[0].mxu0
      %v1011 = vadd.f32 %v719, %v1010
      %v1012 = vpop.f32.mrb[0].mxu0
      %1013 = vdwg.mxu0
      %vm1014 = vcmask 1045504
      %v1015 = vrot.slane %v242, 2
      %v1016 = vrot.slane %v243, 2
      %v1017 = vsel %vm1014, %v1015, %v1016
      %v1018 = vrot.slane %v244, 2
      %v1019 = vsel %vm1014, %v1016, %v1018
      %v1020 = vrot.slane %v245, 2
      %v1021 = vrot.slane %v246, 2
      %v1022 = vsel %vm1014, %v1020, %v1021
      %v1023 = vrot.slane %v247, 2
      %v1024 = vsel %vm1014, %v1021, %v1023
      %v1025 = vrot.slane %v248, 2
      %v1026 = vrot.slane %v249, 2
      %v1027 = vsel %vm1014, %v1025, %v1026
      %v1028 = vrot.slane %v250, 2
      %v1029 = vsel %vm1014, %v1026, %v1028
      %v1030 = vrot.slane %v251, 2
      %v1031 = vrot.slane %v252, 2
      %v1032 = vsel %vm1014, %v1030, %v1031
      %v1033 = vrot.slane %v253, 2
      %v1034 = vsel %vm1014, %v1031, %v1033
      %v1035 = vrot.slane %v254, 2
      %v1036 = vrot.slane %v255, 2
      %v1037 = vsel %vm1014, %v1035, %v1036
      %v1038 = vrot.slane %v256, 2
      %v1039 = vsel %vm1014, %v1036, %v1038
      %v1040 = vrot.slane %v257, 2
      %v1041 = vrot.slane %v258, 2
      %v1042 = vsel %vm1014, %v1040, %v1041
      %v1043 = vrot.slane %v259, 2
      %v1044 = vsel %vm1014, %v1041, %v1043
      %v1045 = vrot.slane %v260, 2
      %v1046 = vrot.slane %v261, 2
      %v1047 = vsel %vm1014, %v1045, %v1046
      %v1048 = vrot.slane %v262, 2
      %v1049 = vsel %vm1014, %v1046, %v1048
      %v1050 = vrot.slane %v263, 2
      %v1051 = vrot.slane %v264, 2
      %v1052 = vsel %vm1014, %v1050, %v1051
      %v1053 = vrot.slane %v265, 2
      %v1054 = vsel %vm1014, %v1051, %v1053
      %v1055 = vrot.slane %v266, 2
      %v1056 = vrot.slane %v267, 2
      %v1057 = vsel %vm1014, %v1055, %v1056
      %v1058 = vrot.slane %v268, 2
      %v1059 = vsel %vm1014, %v1056, %v1058
      %v1060 = vrot.slane %v269, 2
      %v1061 = vrot.slane %v270, 2
      %v1062 = vsel %vm1014, %v1060, %v1061
      %v1063 = vrot.slane %v271, 2
      %v1064 = vsel %vm1014, %v1061, %v1063
      %v1065 = vrot.slane %v272, 2
      %v1066 = vrot.slane %v273, 2
      %v1067 = vsel %vm1014, %v1065, %v1066
      %v1068 = vrot.slane %v274, 2
      %v1069 = vsel %vm1014, %v1066, %v1068
      %v1070 = vrot.slane %v275, 2
      %v1071 = vrot.slane %v276, 2
      %v1072 = vsel %vm1014, %v1070, %v1071
      %v1073 = vrot.slane %v277, 2
      %v1074 = vsel %vm1014, %v1071, %v1073
      %v1075 = vrot.slane %v278, 2
      %v1076 = vrot.slane %v279, 2
      %v1077 = vsel %vm1014, %v1075, %v1076
      %v1078 = vrot.slane %v280, 2
      %v1079 = vsel %vm1014, %v1076, %v1078
      %v1080 = vrot.slane %v281, 2
      %v1081 = vrot.slane %v282, 2
      %v1082 = vsel %vm1014, %v1080, %v1081
      %v1083 = vrot.slane %v283, 2
      %v1084 = vsel %vm1014, %v1081, %v1083
      %v1085 = vrot.slane %v284, 2
      %v1086 = vrot.slane %v285, 2
      %v1087 = vsel %vm1014, %v1085, %v1086
      %v1088 = vrot.slane %v286, 2
      %v1089 = vsel %vm1014, %v1086, %v1088
      %v1090 = vrot.slane %v287, 2
      %v1091 = vrot.slane %v288, 2
      %v1092 = vsel %vm1014, %v1090, %v1091
      %v1093 = vrot.slane %v289, 2
      %v1094 = vsel %vm1014, %v1091, %v1093
      %s1095 = scalar_lea.vmem %s1, 8
      %v1096 = vld [vmem:[%s1095] sm:$0xf]
      %v1097 = vsel %vm428, %v1017, 0
      %v1099 = vsel %vm428, %v1019, 0
      %v1101 = vsel %vm428, %v1022, 0
      %v1103 = vsel %vm428, %v1024, 0
      %v1105 = vsel %vm428, %v1027, 0
      %v1107 = vsel %vm428, %v1029, 0
      %v1109 = vsel %vm428, %v1032, 0
      %v1111 = vsel %vm428, %v1034, 0
      %v1113 = vsel %vm428, %v1037, 0
      %v1115 = vsel %vm428, %v1039, 0
      %v1117 = vsel %vm428, %v1042, 0
      %v1119 = vsel %vm428, %v1044, 0
      %v1121 = vsel %vm428, %v1047, 0
      %v1123 = vsel %vm428, %v1049, 0
      %v1125 = vsel %vm428, %v1052, 0
      %v1127 = vsel %vm428, %v1054, 0
      %v1129 = vsel %vm428, %v1057, 0
      %v1131 = vsel %vm428, %v1059, 0
      %v1133 = vsel %vm428, %v1062, 0
      %v1135 = vsel %vm428, %v1064, 0
      %v1137 = vsel %vm428, %v1067, 0
      %v1139 = vsel %vm428, %v1069, 0
      %v1141 = vsel %vm428, %v1072, 0
      %v1143 = vsel %vm428, %v1074, 0
      %v1145 = vsel %vm428, %v1077, 0
      %v1147 = vsel %vm428, %v1079, 0
      %v1149 = vsel %vm428, %v1082, 0
      %v1151 = vsel %vm428, %v1084, 0
      %v1153 = vsel %vm428, %v1087, 0
      %v1155 = vsel %vm428, %v1089, 0
      %v1157 = vsel %vm428, %v1092, 0
      %v1159 = vsel %vm428, %v1094, 0
      %v1162 = vsel %vm493, %v1096, 0
      %1164 = vmatprep.subr.mxu0 0.0
      %1165 = vmatpush1.msra.mxu0 %v1162
      %1166 = vmatprep.subr.mxu0 0.0
      %1167 = vmatpush1.msra.mxu0 0.0
      %1168 = vmatprep.subr.mxu0 0.0
      %1169 = vmatpush1.msra.mxu0 0.0
      %1170 = vmatprep.subr.mxu0 0.0
      %1171 = vmatpush1.msra.mxu0 0.0
      %1172 = vmatprep.subr.mxu0 0.0
      %1173 = vmatpush1.msra.mxu0 0.0
      %1174 = vmatprep.subr.mxu0 0.0
      %1175 = vmatpush1.msra.mxu0 0.0
      %1176 = vmatprep.subr.mxu0 0.0
      %1177 = vmatpush1.msra.mxu0 0.0
      %1178 = vmatprep.subr.mxu0 0.0
      %1179 = vmatpush1.msra.mxu0 0.0
      %1180 = vmatprep.subr.mxu0 0.0
      %1181 = vmatpush1.msra.mxu0 0.0
      %1182 = vmatprep.subr.mxu0 0.0
      %1183 = vmatpush1.msra.mxu0 0.0
      %1184 = vmatprep.subr.mxu0 0.0
      %1185 = vmatpush1.msra.mxu0 0.0
      %1186 = vmatprep.subr.mxu0 0.0
      %1187 = vmatpush1.msra.mxu0 0.0
      %1188 = vmatprep.subr.mxu0 0.0
      %1189 = vmatpush1.msra.mxu0 0.0
      %1190 = vmatprep.subr.mxu0 0.0
      %1191 = vmatpush1.msra.mxu0 0.0
      %1192 = vmatprep.subr.mxu0 0.0
      %1193 = vmatpush1.msra.mxu0 0.0
      %1194 = vmatprep.subr.mxu0 0.0
      %1195 = vmatpush1.msra.mxu0 0.0
      %1196 = vmatprep.subr.mxu0 0.0
      %1197 = vmatpush1.msra.mxu0 0.0
      %1198 = vmatprep.subr.mxu0 0.0
      %1199 = vmatpush1.msra.mxu0 0.0
      %1200 = vmatprep.subr.mxu0 0.0
      %1201 = vmatpush1.msra.mxu0 0.0
      %1202 = vmatprep.subr.mxu0 0.0
      %1203 = vmatpush1.msra.mxu0 0.0
      %1204 = vmatprep.subr.mxu0 0.0
      %1205 = vmatpush1.msra.mxu0 0.0
      %1206 = vmatprep.subr.mxu0 0.0
      %1207 = vmatpush1.msra.mxu0 0.0
      %1208 = vmatprep.subr.mxu0 0.0
      %1209 = vmatpush1.msra.mxu0 0.0
      %1210 = vmatprep.subr.mxu0 0.0
      %1211 = vmatpush1.msra.mxu0 0.0
      %1212 = vmatprep.subr.mxu0 0.0
      %1213 = vmatpush1.msra.mxu0 0.0
      %1214 = vmatprep.subr.mxu0 0.0
      %1215 = vmatpush1.msra.mxu0 0.0
      %1216 = vmatprep.subr.mxu0 0.0
      %1217 = vmatpush1.msra.mxu0 0.0
      %1218 = vmatprep.subr.mxu0 0.0
      %1219 = vmatpush1.msra.mxu0 0.0
      %1220 = vmatprep.subr.mxu0 0.0
      %1221 = vmatpush1.msra.mxu0 0.0
      %1222 = vmatprep.subr.mxu0 0.0
      %1223 = vmatpush1.msra.mxu0 0.0
      %1224 = vmatprep.subr.mxu0 0.0
      %1225 = vmatpush1.msra.mxu0 0.0
      %1226 = vmatprep.subr.mxu0 0.0
      %1227 = vmatpush1.msra.mxu0 0.0
      %1228 = vmatprep.mubr.f32.mxu0 0.0
      %1229 = vmatmul.mubr.f32.gmra.mrb[0].mxu0 %v1097
      %v1230 = vpop.f32.mrb[0].mxu0
      %v1231 = vadd.f32 0.0, %v1230
      %v1232 = vpop.f32.mrb[0].mxu0
      %1233 = vmatprep.mubr.f32.mxu0 0.0
      %1234 = vmatmul.mubr.f32.gmra.mrb[0].mxu0 %v1099
      %v1235 = vpop.f32.mrb[0].mxu0
      %v1236 = vadd.f32 0.0, %v1235
      %v1237 = vpop.f32.mrb[0].mxu0
      %1238 = vmatprep.mubr.f32.mxu0 0.0
      %1239 = vmatmul.mubr.f32.gmra.mrb[0].mxu0 %v1101
      %v1240 = vpop.f32.mrb[0].mxu0
      %v1241 = vadd.f32 0.0, %v1240
      %v1242 = vpop.f32.mrb[0].mxu0
      %1243 = vmatprep.mubr.f32.mxu0 0.0
      %1244 = vmatmul.mubr.f32.gmra.mrb[0].mxu0 %v1103
      %v1245 = vpop.f32.mrb[0].mxu0
      %v1246 = vadd.f32 0.0, %v1245
      %v1247 = vpop.f32.mrb[0].mxu0
      %1248 = vmatprep.mubr.f32.mxu0 0.0
      %1249 = vmatmul.mubr.f32.gmra.mrb[0].mxu0 %v1105
      %v1250 = vpop.f32.mrb[0].mxu0
      %v1251 = vadd.f32 0.0, %v1250
      %v1252 = vpop.f32.mrb[0].mxu0
      %1253 = vmatprep.mubr.f32.mxu0 0.0
      %1254 = vmatmul.mubr.f32.gmra.mrb[0].mxu0 %v1107
      %v1255 = vpop.f32.mrb[0].mxu0
      %v1256 = vadd.f32 0.0, %v1255
      %v1257 = vpop.f32.mrb[0].mxu0
      %1258 = vmatprep.mubr.f32.mxu0 0.0
      %1259 = vmatmul.mubr.f32.gmra.mrb[0].mxu0 %v1109
      %v1260 = vpop.f32.mrb[0].mxu0
      %v1261 = vadd.f32 0.0, %v1260
      %v1262 = vpop.f32.mrb[0].mxu0
      %1263 = vmatprep.mubr.f32.mxu0 0.0
      %1264 = vmatmul.mubr.f32.gmra.mrb[0].mxu0 %v1111
      %v1265 = vpop.f32.mrb[0].mxu0
      %v1266 = vadd.f32 0.0, %v1265
      %v1267 = vpop.f32.mrb[0].mxu0
      %1268 = vmatprep.mubr.f32.mxu0 0.0
      %1269 = vmatmul.mubr.f32.gmra.mrb[0].mxu0 %v1113
      %v1270 = vpop.f32.mrb[0].mxu0
      %v1271 = vadd.f32 0.0, %v1270
      %v1272 = vpop.f32.mrb[0].mxu0
      %1273 = vmatprep.mubr.f32.mxu0 0.0
      %1274 = vmatmul.mubr.f32.gmra.mrb[0].mxu0 %v1115
      %v1275 = vpop.f32.mrb[0].mxu0
      %v1276 = vadd.f32 0.0, %v1275
      %v1277 = vpop.f32.mrb[0].mxu0
      %1278 = vmatprep.mubr.f32.mxu0 0.0
      %1279 = vmatmul.mubr.f32.gmra.mrb[0].mxu0 %v1117
      %v1280 = vpop.f32.mrb[0].mxu0
      %v1281 = vadd.f32 0.0, %v1280
      %v1282 = vpop.f32.mrb[0].mxu0
      %1283 = vmatprep.mubr.f32.mxu0 0.0
      %1284 = vmatmul.mubr.f32.gmra.mrb[0].mxu0 %v1119
      %v1285 = vpop.f32.mrb[0].mxu0
      %v1286 = vadd.f32 0.0, %v1285
      %v1287 = vpop.f32.mrb[0].mxu0
      %1288 = vmatprep.mubr.f32.mxu0 0.0
      %1289 = vmatmul.mubr.f32.gmra.mrb[0].mxu0 %v1121
      %v1290 = vpop.f32.mrb[0].mxu0
      %v1291 = vadd.f32 0.0, %v1290
      %v1292 = vpop.f32.mrb[0].mxu0
      %1293 = vmatprep.mubr.f32.mxu0 0.0
      %1294 = vmatmul.mubr.f32.gmra.mrb[0].mxu0 %v1123
      %v1295 = vpop.f32.mrb[0].mxu0
      %v1296 = vadd.f32 0.0, %v1295
      %v1297 = vpop.f32.mrb[0].mxu0
      %1298 = vmatprep.mubr.f32.mxu0 0.0
      %1299 = vmatmul.mubr.f32.gmra.mrb[0].mxu0 %v1125
      %v1300 = vpop.f32.mrb[0].mxu0
      %v1301 = vadd.f32 0.0, %v1300
      %v1302 = vpop.f32.mrb[0].mxu0
      %1303 = vmatprep.mubr.f32.mxu0 0.0
      %1304 = vmatmul.mubr.f32.gmra.mrb[0].mxu0 %v1127
      %v1305 = vpop.f32.mrb[0].mxu0
      %v1306 = vadd.f32 0.0, %v1305
      %v1307 = vpop.f32.mrb[0].mxu0
      %1308 = vmatprep.mubr.f32.mxu0 0.0
      %1309 = vmatmul.mubr.f32.gmra.mrb[0].mxu0 %v1129
      %v1310 = vpop.f32.mrb[0].mxu0
      %v1311 = vadd.f32 0.0, %v1310
      %v1312 = vpop.f32.mrb[0].mxu0
      %1313 = vmatprep.mubr.f32.mxu0 0.0
      %1314 = vmatmul.mubr.f32.gmra.mrb[0].mxu0 %v1131
      %v1315 = vpop.f32.mrb[0].mxu0
      %v1316 = vadd.f32 0.0, %v1315
      %v1317 = vpop.f32.mrb[0].mxu0
      %1318 = vmatprep.mubr.f32.mxu0 0.0
      %1319 = vmatmul.mubr.f32.gmra.mrb[0].mxu0 %v1133
      %v1320 = vpop.f32.mrb[0].mxu0
      %v1321 = vadd.f32 0.0, %v1320
      %v1322 = vpop.f32.mrb[0].mxu0
      %1323 = vmatprep.mubr.f32.mxu0 0.0
      %1324 = vmatmul.mubr.f32.gmra.mrb[0].mxu0 %v1135
      %v1325 = vpop.f32.mrb[0].mxu0
      %v1326 = vadd.f32 0.0, %v1325
      %v1327 = vpop.f32.mrb[0].mxu0
      %1328 = vmatprep.mubr.f32.mxu0 0.0
      %1329 = vmatmul.mubr.f32.gmra.mrb[0].mxu0 %v1137
      %v1330 = vpop.f32.mrb[0].mxu0
      %v1331 = vadd.f32 0.0, %v1330
      %v1332 = vpop.f32.mrb[0].mxu0
      %1333 = vmatprep.mubr.f32.mxu0 0.0
      %1334 = vmatmul.mubr.f32.gmra.mrb[0].mxu0 %v1139
      %v1335 = vpop.f32.mrb[0].mxu0
      %v1336 = vadd.f32 0.0, %v1335
      %v1337 = vpop.f32.mrb[0].mxu0
      %1338 = vmatprep.mubr.f32.mxu0 0.0
      %1339 = vmatmul.mubr.f32.gmra.mrb[0].mxu0 %v1141
      %v1340 = vpop.f32.mrb[0].mxu0
      %v1341 = vadd.f32 0.0, %v1340
      %v1342 = vpop.f32.mrb[0].mxu0
      %1343 = vmatprep.mubr.f32.mxu0 0.0
      %1344 = vmatmul.mubr.f32.gmra.mrb[0].mxu0 %v1143
      %v1345 = vpop.f32.mrb[0].mxu0
      %v1346 = vadd.f32 0.0, %v1345
      %v1347 = vpop.f32.mrb[0].mxu0
      %1348 = vmatprep.mubr.f32.mxu0 0.0
      %1349 = vmatmul.mubr.f32.gmra.mrb[0].mxu0 %v1145
      %v1350 = vpop.f32.mrb[0].mxu0
      %v1351 = vadd.f32 0.0, %v1350
      %v1352 = vpop.f32.mrb[0].mxu0
      %1353 = vmatprep.mubr.f32.mxu0 0.0
      %1354 = vmatmul.mubr.f32.gmra.mrb[0].mxu0 %v1147
      %v1355 = vpop.f32.mrb[0].mxu0
      %v1356 = vadd.f32 0.0, %v1355
      %v1357 = vpop.f32.mrb[0].mxu0
      %1358 = vmatprep.mubr.f32.mxu0 0.0
      %1359 = vmatmul.mubr.f32.gmra.mrb[0].mxu0 %v1149
      %v1360 = vpop.f32.mrb[0].mxu0
      %v1361 = vadd.f32 0.0, %v1360
      %v1362 = vpop.f32.mrb[0].mxu0
      %1363 = vmatprep.mubr.f32.mxu0 0.0
      %1364 = vmatmul.mubr.f32.gmra.mrb[0].mxu0 %v1151
      %v1365 = vpop.f32.mrb[0].mxu0
      %v1366 = vadd.f32 0.0, %v1365
      %v1367 = vpop.f32.mrb[0].mxu0
      %1368 = vmatprep.mubr.f32.mxu0 0.0
      %1369 = vmatmul.mubr.f32.gmra.mrb[0].mxu0 %v1153
      %v1370 = vpop.f32.mrb[0].mxu0
      %v1371 = vadd.f32 0.0, %v1370
      %v1372 = vpop.f32.mrb[0].mxu0
      %1373 = vmatprep.mubr.f32.mxu0 0.0
      %1374 = vmatmul.mubr.f32.gmra.mrb[0].mxu0 %v1155
      %v1375 = vpop.f32.mrb[0].mxu0
      %v1376 = vadd.f32 0.0, %v1375
      %v1377 = vpop.f32.mrb[0].mxu0
      %1378 = vmatprep.mubr.f32.mxu0 0.0
      %1379 = vmatmul.mubr.f32.gmra.mrb[0].mxu0 %v1157
      %v1380 = vpop.f32.mrb[0].mxu0
      %v1381 = vadd.f32 0.0, %v1380
      %v1382 = vpop.f32.mrb[0].mxu0
      %1383 = vmatprep.mubr.f32.mxu0 0.0
      %1384 = vmatmul.mubr.f32.gmra.mrb[0].mxu0 %v1159
      %v1385 = vpop.f32.mrb[0].mxu0
      %v1386 = vadd.f32 0.0, %v1385
      %v1387 = vpop.f32.mrb[0].mxu0
      %1388 = vdwg.mxu0
      %v1389 = vadd.f32 %v856, %v1231
      %v1390 = vadd.f32 %v861, %v1236
      %v1391 = vadd.f32 %v866, %v1241
      %v1392 = vadd.f32 %v871, %v1246
      %v1393 = vadd.f32 %v876, %v1251
      %v1394 = vadd.f32 %v881, %v1256
      %v1395 = vadd.f32 %v886, %v1261
      %v1396 = vadd.f32 %v891, %v1266
      %v1397 = vadd.f32 %v896, %v1271
      %v1398 = vadd.f32 %v901, %v1276
      %v1399 = vadd.f32 %v906, %v1281
      %v1400 = vadd.f32 %v911, %v1286
      %v1401 = vadd.f32 %v916, %v1291
      %v1402 = vadd.f32 %v921, %v1296
      %v1403 = vadd.f32 %v926, %v1301
      %v1404 = vadd.f32 %v931, %v1306
      %v1405 = vadd.f32 %v936, %v1311
      %v1406 = vadd.f32 %v941, %v1316
      %v1407 = vadd.f32 %v946, %v1321
      %v1408 = vadd.f32 %v951, %v1326
      %v1409 = vadd.f32 %v956, %v1331
      %v1410 = vadd.f32 %v961, %v1336
      %v1411 = vadd.f32 %v966, %v1341
      %v1412 = vadd.f32 %v971, %v1346
      %v1413 = vadd.f32 %v976, %v1351
      %v1414 = vadd.f32 %v981, %v1356
      %v1415 = vadd.f32 %v986, %v1361
      %v1416 = vadd.f32 %v991, %v1366
      %v1417 = vadd.f32 %v996, %v1371
      %v1418 = vadd.f32 %v1001, %v1376
      %v1419 = vadd.f32 %v1006, %v1381
      %v1420 = vadd.f32 %v1011, %v1386
      %s1421 = scalar_lea.vmem %s1, 12
      %v1422 = vld [vmem:[%s1421] sm:$0xf]
      %v1424 = vsel %vm428, %v290, 0
      %v1427 = vsel %vm428, %v291, 0
      %v1430 = vsel %vm493, %v1422, 0
      %1432 = vmatprep.subr.mxu0 0.0
      %1433 = vmatpush1.msra.mxu0 %v1430
      %1434 = vmatprep.subr.mxu0 0.0
      %1435 = vmatpush1.msra.mxu0 0.0
      %1436 = vmatprep.subr.mxu0 0.0
      %1437 = vmatpush1.msra.mxu0 0.0
      %1438 = vmatprep.subr.mxu0 0.0
      %1439 = vmatpush1.msra.mxu0 0.0
      %1440 = vmatprep.subr.mxu0 0.0
      %1441 = vmatpush1.msra.mxu0 0.0
      %1442 = vmatprep.subr.mxu0 0.0
      %1443 = vmatpush1.msra.mxu0 0.0
      %1444 = vmatprep.subr.mxu0 0.0
      %1445 = vmatpush1.msra.mxu0 0.0
      %1446 = vmatprep.subr.mxu0 0.0
      %1447 = vmatpush1.msra.mxu0 0.0
      %1448 = vmatprep.subr.mxu0 0.0
      %1449 = vmatpush1.msra.mxu0 0.0
      %1450 = vmatprep.subr.mxu0 0.0
      %1451 = vmatpush1.msra.mxu0 0.0
      %1452 = vmatprep.subr.mxu0 0.0
      %1453 = vmatpush1.msra.mxu0 0.0
      %1454 = vmatprep.subr.mxu0 0.0
      %1455 = vmatpush1.msra.mxu0 0.0
      %1456 = vmatprep.subr.mxu0 0.0
      %1457 = vmatpush1.msra.mxu0 0.0
      %1458 = vmatprep.subr.mxu0 0.0
      %1459 = vmatpush1.msra.mxu0 0.0
      %1460 = vmatprep.subr.mxu0 0.0
      %1461 = vmatpush1.msra.mxu0 0.0
      %1462 = vmatprep.subr.mxu0 0.0
      %1463 = vmatpush1.msra.mxu0 0.0
      %1464 = vmatprep.subr.mxu0 0.0
      %1465 = vmatpush1.msra.mxu0 0.0
      %1466 = vmatprep.subr.mxu0 0.0
      %1467 = vmatpush1.msra.mxu0 0.0
      %1468 = vmatprep.subr.mxu0 0.0
      %1469 = vmatpush1.msra.mxu0 0.0
      %1470 = vmatprep.subr.mxu0 0.0
      %1471 = vmatpush1.msra.mxu0 0.0
      %1472 = vmatprep.subr.mxu0 0.0
      %1473 = vmatpush1.msra.mxu0 0.0
      %1474 = vmatprep.subr.mxu0 0.0
      %1475 = vmatpush1.msra.mxu0 0.0
      %1476 = vmatprep.subr.mxu0 0.0
      %1477 = vmatpush1.msra.mxu0 0.0
      %1478 = vmatprep.subr.mxu0 0.0
      %1479 = vmatpush1.msra.mxu0 0.0
      %1480 = vmatprep.subr.mxu0 0.0
      %1481 = vmatpush1.msra.mxu0 0.0
      %1482 = vmatprep.subr.mxu0 0.0
      %1483 = vmatpush1.msra.mxu0 0.0
      %1484 = vmatprep.subr.mxu0 0.0
      %1485 = vmatpush1.msra.mxu0 0.0
      %1486 = vmatprep.subr.mxu0 0.0
      %1487 = vmatpush1.msra.mxu0 0.0
      %1488 = vmatprep.subr.mxu0 0.0
      %1489 = vmatpush1.msra.mxu0 0.0
      %1490 = vmatprep.subr.mxu0 0.0
      %1491 = vmatpush1.msra.mxu0 0.0
      %1492 = vmatprep.subr.mxu0 0.0
      %1493 = vmatpush1.msra.mxu0 0.0
      %1494 = vmatprep.subr.mxu0 0.0
      %1495 = vmatpush1.msra.mxu0 0.0
      %1496 = vmatprep.mubr.f32.mxu0 0.0
      %1497 = vmatmul.mubr.f32.gmra.mrb[0].mxu0 %v726
      %v1498 = vpop.f32.mrb[0].mxu0
      %v1499 = vadd.f32 0.0, %v1498
      %v1500 = vpop.f32.mrb[0].mxu0
      %1501 = vmatprep.mubr.f32.mxu0 0.0
      %1502 = vmatmul.mubr.f32.gmra.mrb[0].mxu0 %v728
      %v1503 = vpop.f32.mrb[0].mxu0
      %v1504 = vadd.f32 0.0, %v1503
      %v1505 = vpop.f32.mrb[0].mxu0
      %1506 = vmatprep.mubr.f32.mxu0 0.0
      %1507 = vmatmul.mubr.f32.gmra.mrb[0].mxu0 %v730
      %v1508 = vpop.f32.mrb[0].mxu0
      %v1509 = vadd.f32 0.0, %v1508
      %v1510 = vpop.f32.mrb[0].mxu0
      %1511 = vmatprep.mubr.f32.mxu0 0.0
      %1512 = vmatmul.mubr.f32.gmra.mrb[0].mxu0 %v732
      %v1513 = vpop.f32.mrb[0].mxu0
      %v1514 = vadd.f32 0.0, %v1513
      %v1515 = vpop.f32.mrb[0].mxu0
      %1516 = vmatprep.mubr.f32.mxu0 0.0
      %1517 = vmatmul.mubr.f32.gmra.mrb[0].mxu0 %v734
      %v1518 = vpop.f32.mrb[0].mxu0
      %v1519 = vadd.f32 0.0, %v1518
      %v1520 = vpop.f32.mrb[0].mxu0
      %1521 = vmatprep.mubr.f32.mxu0 0.0
      %1522 = vmatmul.mubr.f32.gmra.mrb[0].mxu0 %v736
      %v1523 = vpop.f32.mrb[0].mxu0
      %v1524 = vadd.f32 0.0, %v1523
      %v1525 = vpop.f32.mrb[0].mxu0
      %1526 = vmatprep.mubr.f32.mxu0 0.0
      %1527 = vmatmul.mubr.f32.gmra.mrb[0].mxu0 %v738
      %v1528 = vpop.f32.mrb[0].mxu0
      %v1529 = vadd.f32 0.0, %v1528
      %v1530 = vpop.f32.mrb[0].mxu0
      %1531 = vmatprep.mubr.f32.mxu0 0.0
      %1532 = vmatmul.mubr.f32.gmra.mrb[0].mxu0 %v740
      %v1533 = vpop.f32.mrb[0].mxu0
      %v1534 = vadd.f32 0.0, %v1533
      %v1535 = vpop.f32.mrb[0].mxu0
      %1536 = vmatprep.mubr.f32.mxu0 0.0
      %1537 = vmatmul.mubr.f32.gmra.mrb[0].mxu0 %v742
      %v1538 = vpop.f32.mrb[0].mxu0
      %v1539 = vadd.f32 0.0, %v1538
      %v1540 = vpop.f32.mrb[0].mxu0
      %1541 = vmatprep.mubr.f32.mxu0 0.0
      %1542 = vmatmul.mubr.f32.gmra.mrb[0].mxu0 %v744
      %v1543 = vpop.f32.mrb[0].mxu0
      %v1544 = vadd.f32 0.0, %v1543
      %v1545 = vpop.f32.mrb[0].mxu0
      %1546 = vmatprep.mubr.f32.mxu0 0.0
      %1547 = vmatmul.mubr.f32.gmra.mrb[0].mxu0 %v746
      %v1548 = vpop.f32.mrb[0].mxu0
      %v1549 = vadd.f32 0.0, %v1548
      %v1550 = vpop.f32.mrb[0].mxu0
      %1551 = vmatprep.mubr.f32.mxu0 0.0
      %1552 = vmatmul.mubr.f32.gmra.mrb[0].mxu0 %v748
      %v1553 = vpop.f32.mrb[0].mxu0
      %v1554 = vadd.f32 0.0, %v1553
      %v1555 = vpop.f32.mrb[0].mxu0
      %1556 = vmatprep.mubr.f32.mxu0 0.0
      %1557 = vmatmul.mubr.f32.gmra.mrb[0].mxu0 %v750
      %v1558 = vpop.f32.mrb[0].mxu0
      %v1559 = vadd.f32 0.0, %v1558
      %v1560 = vpop.f32.mrb[0].mxu0
      %1561 = vmatprep.mubr.f32.mxu0 0.0
      %1562 = vmatmul.mubr.f32.gmra.mrb[0].mxu0 %v752
      %v1563 = vpop.f32.mrb[0].mxu0
      %v1564 = vadd.f32 0.0, %v1563
      %v1565 = vpop.f32.mrb[0].mxu0
      %1566 = vmatprep.mubr.f32.mxu0 0.0
      %1567 = vmatmul.mubr.f32.gmra.mrb[0].mxu0 %v754
      %v1568 = vpop.f32.mrb[0].mxu0
      %v1569 = vadd.f32 0.0, %v1568
      %v1570 = vpop.f32.mrb[0].mxu0
      %1571 = vmatprep.mubr.f32.mxu0 0.0
      %1572 = vmatmul.mubr.f32.gmra.mrb[0].mxu0 %v756
      %v1573 = vpop.f32.mrb[0].mxu0
      %v1574 = vadd.f32 0.0, %v1573
      %v1575 = vpop.f32.mrb[0].mxu0
      %1576 = vmatprep.mubr.f32.mxu0 0.0
      %1577 = vmatmul.mubr.f32.gmra.mrb[0].mxu0 %v758
      %v1578 = vpop.f32.mrb[0].mxu0
      %v1579 = vadd.f32 0.0, %v1578
      %v1580 = vpop.f32.mrb[0].mxu0
      %1581 = vmatprep.mubr.f32.mxu0 0.0
      %1582 = vmatmul.mubr.f32.gmra.mrb[0].mxu0 %v760
      %v1583 = vpop.f32.mrb[0].mxu0
      %v1584 = vadd.f32 0.0, %v1583
      %v1585 = vpop.f32.mrb[0].mxu0
      %1586 = vmatprep.mubr.f32.mxu0 0.0
      %1587 = vmatmul.mubr.f32.gmra.mrb[0].mxu0 %v762
      %v1588 = vpop.f32.mrb[0].mxu0
      %v1589 = vadd.f32 0.0, %v1588
      %v1590 = vpop.f32.mrb[0].mxu0
      %1591 = vmatprep.mubr.f32.mxu0 0.0
      %1592 = vmatmul.mubr.f32.gmra.mrb[0].mxu0 %v764
      %v1593 = vpop.f32.mrb[0].mxu0
      %v1594 = vadd.f32 0.0, %v1593
      %v1595 = vpop.f32.mrb[0].mxu0
      %1596 = vmatprep.mubr.f32.mxu0 0.0
      %1597 = vmatmul.mubr.f32.gmra.mrb[0].mxu0 %v766
      %v1598 = vpop.f32.mrb[0].mxu0
      %v1599 = vadd.f32 0.0, %v1598
      %v1600 = vpop.f32.mrb[0].mxu0
      %1601 = vmatprep.mubr.f32.mxu0 0.0
      %1602 = vmatmul.mubr.f32.gmra.mrb[0].mxu0 %v768
      %v1603 = vpop.f32.mrb[0].mxu0
      %v1604 = vadd.f32 0.0, %v1603
      %v1605 = vpop.f32.mrb[0].mxu0
      %1606 = vmatprep.mubr.f32.mxu0 0.0
      %1607 = vmatmul.mubr.f32.gmra.mrb[0].mxu0 %v770
      %v1608 = vpop.f32.mrb[0].mxu0
      %v1609 = vadd.f32 0.0, %v1608
      %v1610 = vpop.f32.mrb[0].mxu0
      %1611 = vmatprep.mubr.f32.mxu0 0.0
      %1612 = vmatmul.mubr.f32.gmra.mrb[0].mxu0 %v772
      %v1613 = vpop.f32.mrb[0].mxu0
      %v1614 = vadd.f32 0.0, %v1613
      %v1615 = vpop.f32.mrb[0].mxu0
      %1616 = vmatprep.mubr.f32.mxu0 0.0
      %1617 = vmatmul.mubr.f32.gmra.mrb[0].mxu0 %v774
      %v1618 = vpop.f32.mrb[0].mxu0
      %v1619 = vadd.f32 0.0, %v1618
      %v1620 = vpop.f32.mrb[0].mxu0
      %1621 = vmatprep.mubr.f32.mxu0 0.0
      %1622 = vmatmul.mubr.f32.gmra.mrb[0].mxu0 %v776
      %v1623 = vpop.f32.mrb[0].mxu0
      %v1624 = vadd.f32 0.0, %v1623
      %v1625 = vpop.f32.mrb[0].mxu0
      %1626 = vmatprep.mubr.f32.mxu0 0.0
      %1627 = vmatmul.mubr.f32.gmra.mrb[0].mxu0 %v778
      %v1628 = vpop.f32.mrb[0].mxu0
      %v1629 = vadd.f32 0.0, %v1628
      %v1630 = vpop.f32.mrb[0].mxu0
      %1631 = vmatprep.mubr.f32.mxu0 0.0
      %1632 = vmatmul.mubr.f32.gmra.mrb[0].mxu0 %v780
      %v1633 = vpop.f32.mrb[0].mxu0
      %v1634 = vadd.f32 0.0, %v1633
      %v1635 = vpop.f32.mrb[0].mxu0
      %1636 = vmatprep.mubr.f32.mxu0 0.0
      %1637 = vmatmul.mubr.f32.gmra.mrb[0].mxu0 %v782
      %v1638 = vpop.f32.mrb[0].mxu0
      %v1639 = vadd.f32 0.0, %v1638
      %v1640 = vpop.f32.mrb[0].mxu0
      %1641 = vmatprep.mubr.f32.mxu0 0.0
      %1642 = vmatmul.mubr.f32.gmra.mrb[0].mxu0 %v784
      %v1643 = vpop.f32.mrb[0].mxu0
      %v1644 = vadd.f32 0.0, %v1643
      %v1645 = vpop.f32.mrb[0].mxu0
      %1646 = vmatprep.mubr.f32.mxu0 0.0
      %1647 = vmatmul.mubr.f32.gmra.mrb[0].mxu0 %v1424
      %v1648 = vpop.f32.mrb[0].mxu0
      %v1649 = vadd.f32 0.0, %v1648
      %v1650 = vpop.f32.mrb[0].mxu0
      %1651 = vmatprep.mubr.f32.mxu0 0.0
      %1652 = vmatmul.mubr.f32.gmra.mrb[0].mxu0 %v1427
      %v1653 = vpop.f32.mrb[0].mxu0
      %v1654 = vadd.f32 0.0, %v1653
      %v1655 = vpop.f32.mrb[0].mxu0
      %1656 = vdwg.mxu0
      %v1657 = vadd.f32 %v1389, %v1499
      %v1658 = vadd.f32 %v1390, %v1504
      %v1659 = vadd.f32 %v1391, %v1509
      %v1660 = vadd.f32 %v1392, %v1514
      %v1661 = vadd.f32 %v1393, %v1519
      %v1662 = vadd.f32 %v1394, %v1524
      %v1663 = vadd.f32 %v1395, %v1529
      %v1664 = vadd.f32 %v1396, %v1534
      %v1665 = vadd.f32 %v1397, %v1539
      %v1666 = vadd.f32 %v1398, %v1544
      %v1667 = vadd.f32 %v1399, %v1549
      %v1668 = vadd.f32 %v1400, %v1554
      %v1669 = vadd.f32 %v1401, %v1559
      %v1670 = vadd.f32 %v1402, %v1564
      %v1671 = vadd.f32 %v1403, %v1569
      %v1672 = vadd.f32 %v1404, %v1574
      %v1673 = vadd.f32 %v1405, %v1579
      %v1674 = vadd.f32 %v1406, %v1584
      %v1675 = vadd.f32 %v1407, %v1589
      %v1676 = vadd.f32 %v1408, %v1594
      %v1677 = vadd.f32 %v1409, %v1599
      %v1678 = vadd.f32 %v1410, %v1604
      %v1679 = vadd.f32 %v1411, %v1609
      %v1680 = vadd.f32 %v1412, %v1614
      %v1681 = vadd.f32 %v1413, %v1619
      %v1682 = vadd.f32 %v1414, %v1624
      %v1683 = vadd.f32 %v1415, %v1629
      %v1684 = vadd.f32 %v1416, %v1634
      %v1685 = vadd.f32 %v1417, %v1639
      %v1686 = vadd.f32 %v1418, %v1644
      %v1687 = vadd.f32 %v1419, %v1649
      %v1688 = vadd.f32 %v1420, %v1654
      %v1690 = vrot.slane %v290, 1
      %v1691 = vrot.slane %v291, 1
      %v1692 = vsel %vm345, %v1690, %v1691
      %v1693 = vrot.slane %v292, 1
      %v1694 = vsel %vm345, %v1691, %v1693
      %s1695 = scalar_lea.vmem %s1, 16
      %v1696 = vld [vmem:[%s1695] sm:$0xf]
      %v1697 = vsel %vm428, %v1692, 0
      %v1699 = vsel %vm428, %v1694, 0
      %v1702 = vsel %vm493, %v1696, 0
      %1704 = vmatprep.subr.mxu0 0.0
      %1705 = vmatpush1.msra.mxu0 %v1702
      %1706 = vmatprep.subr.mxu0 0.0
      %1707 = vmatpush1.msra.mxu0 0.0
      %1708 = vmatprep.subr.mxu0 0.0
      %1709 = vmatpush1.msra.mxu0 0.0
      %1710 = vmatprep.subr.mxu0 0.0
      %1711 = vmatpush1.msra.mxu0 0.0
      %1712 = vmatprep.subr.mxu0 0.0
      %1713 = vmatpush1.msra.mxu0 0.0
      %1714 = vmatprep.subr.mxu0 0.0
      %1715 = vmatpush1.msra.mxu0 0.0
      %1716 = vmatprep.subr.mxu0 0.0
      %1717 = vmatpush1.msra.mxu0 0.0
      %1718 = vmatprep.subr.mxu0 0.0
      %1719 = vmatpush1.msra.mxu0 0.0
      %1720 = vmatprep.subr.mxu0 0.0
      %1721 = vmatpush1.msra.mxu0 0.0
      %1722 = vmatprep.subr.mxu0 0.0
      %1723 = vmatpush1.msra.mxu0 0.0
      %1724 = vmatprep.subr.mxu0 0.0
      %1725 = vmatpush1.msra.mxu0 0.0
      %1726 = vmatprep.subr.mxu0 0.0
      %1727 = vmatpush1.msra.mxu0 0.0
      %1728 = vmatprep.subr.mxu0 0.0
      %1729 = vmatpush1.msra.mxu0 0.0
      %1730 = vmatprep.subr.mxu0 0.0
      %1731 = vmatpush1.msra.mxu0 0.0
      %1732 = vmatprep.subr.mxu0 0.0
      %1733 = vmatpush1.msra.mxu0 0.0
      %1734 = vmatprep.subr.mxu0 0.0
      %1735 = vmatpush1.msra.mxu0 0.0
      %1736 = vmatprep.subr.mxu0 0.0
      %1737 = vmatpush1.msra.mxu0 0.0
      %1738 = vmatprep.subr.mxu0 0.0
      %1739 = vmatpush1.msra.mxu0 0.0
      %1740 = vmatprep.subr.mxu0 0.0
      %1741 = vmatpush1.msra.mxu0 0.0
      %1742 = vmatprep.subr.mxu0 0.0
      %1743 = vmatpush1.msra.mxu0 0.0
      %1744 = vmatprep.subr.mxu0 0.0
      %1745 = vmatpush1.msra.mxu0 0.0
      %1746 = vmatprep.subr.mxu0 0.0
      %1747 = vmatpush1.msra.mxu0 0.0
      %1748 = vmatprep.subr.mxu0 0.0
      %1749 = vmatpush1.msra.mxu0 0.0
      %1750 = vmatprep.subr.mxu0 0.0
      %1751 = vmatpush1.msra.mxu0 0.0
      %1752 = vmatprep.subr.mxu0 0.0
      %1753 = vmatpush1.msra.mxu0 0.0
      %1754 = vmatprep.subr.mxu0 0.0
      %1755 = vmatpush1.msra.mxu0 0.0
      %1756 = vmatprep.subr.mxu0 0.0
      %1757 = vmatpush1.msra.mxu0 0.0
      %1758 = vmatprep.subr.mxu0 0.0
      %1759 = vmatpush1.msra.mxu0 0.0
      %1760 = vmatprep.subr.mxu0 0.0
      %1761 = vmatpush1.msra.mxu0 0.0
      %1762 = vmatprep.subr.mxu0 0.0
      %1763 = vmatpush1.msra.mxu0 0.0
      %1764 = vmatprep.subr.mxu0 0.0
      %1765 = vmatpush1.msra.mxu0 0.0
      %1766 = vmatprep.subr.mxu0 0.0
      %1767 = vmatpush1.msra.mxu0 0.0
      %1768 = vmatprep.mubr.f32.mxu0 0.0
      %1769 = vmatmul.mubr.f32.gmra.mrb[0].mxu0 %v433
      %v1770 = vpop.f32.mrb[0].mxu0
      %v1771 = vadd.f32 0.0, %v1770
      %v1772 = vpop.f32.mrb[0].mxu0
      %1773 = vmatprep.mubr.f32.mxu0 0.0
      %1774 = vmatmul.mubr.f32.gmra.mrb[0].mxu0 %v435
      %v1775 = vpop.f32.mrb[0].mxu0
      %v1776 = vadd.f32 0.0, %v1775
      %v1777 = vpop.f32.mrb[0].mxu0
      %1778 = vmatprep.mubr.f32.mxu0 0.0
      %1779 = vmatmul.mubr.f32.gmra.mrb[0].mxu0 %v437
      %v1780 = vpop.f32.mrb[0].mxu0
      %v1781 = vadd.f32 0.0, %v1780
      %v1782 = vpop.f32.mrb[0].mxu0
      %1783 = vmatprep.mubr.f32.mxu0 0.0
      %1784 = vmatmul.mubr.f32.gmra.mrb[0].mxu0 %v439
      %v1785 = vpop.f32.mrb[0].mxu0
      %v1786 = vadd.f32 0.0, %v1785
      %v1787 = vpop.f32.mrb[0].mxu0
      %1788 = vmatprep.mubr.f32.mxu0 0.0
      %1789 = vmatmul.mubr.f32.gmra.mrb[0].mxu0 %v441
      %v1790 = vpop.f32.mrb[0].mxu0
      %v1791 = vadd.f32 0.0, %v1790
      %v1792 = vpop.f32.mrb[0].mxu0
      %1793 = vmatprep.mubr.f32.mxu0 0.0
      %1794 = vmatmul.mubr.f32.gmra.mrb[0].mxu0 %v443
      %v1795 = vpop.f32.mrb[0].mxu0
      %v1796 = vadd.f32 0.0, %v1795
      %v1797 = vpop.f32.mrb[0].mxu0
      %1798 = vmatprep.mubr.f32.mxu0 0.0
      %1799 = vmatmul.mubr.f32.gmra.mrb[0].mxu0 %v445
      %v1800 = vpop.f32.mrb[0].mxu0
      %v1801 = vadd.f32 0.0, %v1800
      %v1802 = vpop.f32.mrb[0].mxu0
      %1803 = vmatprep.mubr.f32.mxu0 0.0
      %1804 = vmatmul.mubr.f32.gmra.mrb[0].mxu0 %v447
      %v1805 = vpop.f32.mrb[0].mxu0
      %v1806 = vadd.f32 0.0, %v1805
      %v1807 = vpop.f32.mrb[0].mxu0
      %1808 = vmatprep.mubr.f32.mxu0 0.0
      %1809 = vmatmul.mubr.f32.gmra.mrb[0].mxu0 %v449
      %v1810 = vpop.f32.mrb[0].mxu0
      %v1811 = vadd.f32 0.0, %v1810
      %v1812 = vpop.f32.mrb[0].mxu0
      %1813 = vmatprep.mubr.f32.mxu0 0.0
      %1814 = vmatmul.mubr.f32.gmra.mrb[0].mxu0 %v451
      %v1815 = vpop.f32.mrb[0].mxu0
      %v1816 = vadd.f32 0.0, %v1815
      %v1817 = vpop.f32.mrb[0].mxu0
      %1818 = vmatprep.mubr.f32.mxu0 0.0
      %1819 = vmatmul.mubr.f32.gmra.mrb[0].mxu0 %v453
      %v1820 = vpop.f32.mrb[0].mxu0
      %v1821 = vadd.f32 0.0, %v1820
      %v1822 = vpop.f32.mrb[0].mxu0
      %1823 = vmatprep.mubr.f32.mxu0 0.0
      %1824 = vmatmul.mubr.f32.gmra.mrb[0].mxu0 %v455
      %v1825 = vpop.f32.mrb[0].mxu0
      %v1826 = vadd.f32 0.0, %v1825
      %v1827 = vpop.f32.mrb[0].mxu0
      %1828 = vmatprep.mubr.f32.mxu0 0.0
      %1829 = vmatmul.mubr.f32.gmra.mrb[0].mxu0 %v457
      %v1830 = vpop.f32.mrb[0].mxu0
      %v1831 = vadd.f32 0.0, %v1830
      %v1832 = vpop.f32.mrb[0].mxu0
      %1833 = vmatprep.mubr.f32.mxu0 0.0
      %1834 = vmatmul.mubr.f32.gmra.mrb[0].mxu0 %v459
      %v1835 = vpop.f32.mrb[0].mxu0
      %v1836 = vadd.f32 0.0, %v1835
      %v1837 = vpop.f32.mrb[0].mxu0
      %1838 = vmatprep.mubr.f32.mxu0 0.0
      %1839 = vmatmul.mubr.f32.gmra.mrb[0].mxu0 %v461
      %v1840 = vpop.f32.mrb[0].mxu0
      %v1841 = vadd.f32 0.0, %v1840
      %v1842 = vpop.f32.mrb[0].mxu0
      %1843 = vmatprep.mubr.f32.mxu0 0.0
      %1844 = vmatmul.mubr.f32.gmra.mrb[0].mxu0 %v463
      %v1845 = vpop.f32.mrb[0].mxu0
      %v1846 = vadd.f32 0.0, %v1845
      %v1847 = vpop.f32.mrb[0].mxu0
      %1848 = vmatprep.mubr.f32.mxu0 0.0
      %1849 = vmatmul.mubr.f32.gmra.mrb[0].mxu0 %v465
      %v1850 = vpop.f32.mrb[0].mxu0
      %v1851 = vadd.f32 0.0, %v1850
      %v1852 = vpop.f32.mrb[0].mxu0
      %1853 = vmatprep.mubr.f32.mxu0 0.0
      %1854 = vmatmul.mubr.f32.gmra.mrb[0].mxu0 %v467
      %v1855 = vpop.f32.mrb[0].mxu0
      %v1856 = vadd.f32 0.0, %v1855
      %v1857 = vpop.f32.mrb[0].mxu0
      %1858 = vmatprep.mubr.f32.mxu0 0.0
      %1859 = vmatmul.mubr.f32.gmra.mrb[0].mxu0 %v469
      %v1860 = vpop.f32.mrb[0].mxu0
      %v1861 = vadd.f32 0.0, %v1860
      %v1862 = vpop.f32.mrb[0].mxu0
      %1863 = vmatprep.mubr.f32.mxu0 0.0
      %1864 = vmatmul.mubr.f32.gmra.mrb[0].mxu0 %v471
      %v1865 = vpop.f32.mrb[0].mxu0
      %v1866 = vadd.f32 0.0, %v1865
      %v1867 = vpop.f32.mrb[0].mxu0
      %1868 = vmatprep.mubr.f32.mxu0 0.0
      %1869 = vmatmul.mubr.f32.gmra.mrb[0].mxu0 %v473
      %v1870 = vpop.f32.mrb[0].mxu0
      %v1871 = vadd.f32 0.0, %v1870
      %v1872 = vpop.f32.mrb[0].mxu0
      %1873 = vmatprep.mubr.f32.mxu0 0.0
      %1874 = vmatmul.mubr.f32.gmra.mrb[0].mxu0 %v475
      %v1875 = vpop.f32.mrb[0].mxu0
      %v1876 = vadd.f32 0.0, %v1875
      %v1877 = vpop.f32.mrb[0].mxu0
      %1878 = vmatprep.mubr.f32.mxu0 0.0
      %1879 = vmatmul.mubr.f32.gmra.mrb[0].mxu0 %v477
      %v1880 = vpop.f32.mrb[0].mxu0
      %v1881 = vadd.f32 0.0, %v1880
      %v1882 = vpop.f32.mrb[0].mxu0
      %1883 = vmatprep.mubr.f32.mxu0 0.0
      %1884 = vmatmul.mubr.f32.gmra.mrb[0].mxu0 %v479
      %v1885 = vpop.f32.mrb[0].mxu0
      %v1886 = vadd.f32 0.0, %v1885
      %v1887 = vpop.f32.mrb[0].mxu0
      %1888 = vmatprep.mubr.f32.mxu0 0.0
      %1889 = vmatmul.mubr.f32.gmra.mrb[0].mxu0 %v481
      %v1890 = vpop.f32.mrb[0].mxu0
      %v1891 = vadd.f32 0.0, %v1890
      %v1892 = vpop.f32.mrb[0].mxu0
      %1893 = vmatprep.mubr.f32.mxu0 0.0
      %1894 = vmatmul.mubr.f32.gmra.mrb[0].mxu0 %v483
      %v1895 = vpop.f32.mrb[0].mxu0
      %v1896 = vadd.f32 0.0, %v1895
      %v1897 = vpop.f32.mrb[0].mxu0
      %1898 = vmatprep.mubr.f32.mxu0 0.0
      %1899 = vmatmul.mubr.f32.gmra.mrb[0].mxu0 %v485
      %v1900 = vpop.f32.mrb[0].mxu0
      %v1901 = vadd.f32 0.0, %v1900
      %v1902 = vpop.f32.mrb[0].mxu0
      %1903 = vmatprep.mubr.f32.mxu0 0.0
      %1904 = vmatmul.mubr.f32.gmra.mrb[0].mxu0 %v487
      %v1905 = vpop.f32.mrb[0].mxu0
      %v1906 = vadd.f32 0.0, %v1905
      %v1907 = vpop.f32.mrb[0].mxu0
      %1908 = vmatprep.mubr.f32.mxu0 0.0
      %1909 = vmatmul.mubr.f32.gmra.mrb[0].mxu0 %v489
      %v1910 = vpop.f32.mrb[0].mxu0
      %v1911 = vadd.f32 0.0, %v1910
      %v1912 = vpop.f32.mrb[0].mxu0
      %1913 = vmatprep.mubr.f32.mxu0 0.0
      %1914 = vmatmul.mubr.f32.gmra.mrb[0].mxu0 %v491
      %v1915 = vpop.f32.mrb[0].mxu0
      %v1916 = vadd.f32 0.0, %v1915
      %v1917 = vpop.f32.mrb[0].mxu0
      %1918 = vmatprep.mubr.f32.mxu0 0.0
      %1919 = vmatmul.mubr.f32.gmra.mrb[0].mxu0 %v1697
      %v1920 = vpop.f32.mrb[0].mxu0
      %v1921 = vadd.f32 0.0, %v1920
      %v1922 = vpop.f32.mrb[0].mxu0
      %1923 = vmatprep.mubr.f32.mxu0 0.0
      %1924 = vmatmul.mubr.f32.gmra.mrb[0].mxu0 %v1699
      %v1925 = vpop.f32.mrb[0].mxu0
      %v1926 = vadd.f32 0.0, %v1925
      %v1927 = vpop.f32.mrb[0].mxu0
      %1928 = vdwg.mxu0
      %v1929 = vadd.f32 %v1657, %v1771
      %v1930 = vadd.f32 %v1658, %v1776
      %v1931 = vadd.f32 %v1659, %v1781
      %v1932 = vadd.f32 %v1660, %v1786
      %v1933 = vadd.f32 %v1661, %v1791
      %v1934 = vadd.f32 %v1662, %v1796
      %v1935 = vadd.f32 %v1663, %v1801
      %v1936 = vadd.f32 %v1664, %v1806
      %v1937 = vadd.f32 %v1665, %v1811
      %v1938 = vadd.f32 %v1666, %v1816
      %v1939 = vadd.f32 %v1667, %v1821
      %v1940 = vadd.f32 %v1668, %v1826
      %v1941 = vadd.f32 %v1669, %v1831
      %v1942 = vadd.f32 %v1670, %v1836
      %v1943 = vadd.f32 %v1671, %v1841
      %v1944 = vadd.f32 %v1672, %v1846
      %v1945 = vadd.f32 %v1673, %v1851
      %v1946 = vadd.f32 %v1674, %v1856
      %v1947 = vadd.f32 %v1675, %v1861
      %v1948 = vadd.f32 %v1676, %v1866
      %v1949 = vadd.f32 %v1677, %v1871
      %v1950 = vadd.f32 %v1678, %v1876
      %v1951 = vadd.f32 %v1679, %v1881
      %v1952 = vadd.f32 %v1680, %v1886
      %v1953 = vadd.f32 %v1681, %v1891
      %v1954 = vadd.f32 %v1682, %v1896
      %v1955 = vadd.f32 %v1683, %v1901
      %v1956 = vadd.f32 %v1684, %v1906
      %v1957 = vadd.f32 %v1685, %v1911
      %v1958 = vadd.f32 %v1686, %v1916
      %v1959 = vadd.f32 %v1687, %v1921
      %v1960 = vadd.f32 %v1688, %v1926
      %v1961 = vrot.slane %v290, 2
      %v1962 = vrot.slane %v291, 2
      %v1963 = vsel %vm1014, %v1961, %v1962
      %v1964 = vrot.slane %v292, 2
      %v1965 = vsel %vm1014, %v1962, %v1964
      %s1966 = scalar_lea.vmem %s1, 20
      %v1967 = vld [vmem:[%s1966] sm:$0xf]
      %v1968 = vsel %vm428, %v1963, 0
      %v1970 = vsel %vm428, %v1965, 0
      %v1973 = vsel %vm493, %v1967, 0
      %1975 = vmatprep.subr.mxu0 0.0
      %1976 = vmatpush1.msra.mxu0 %v1973
      %1977 = vmatprep.subr.mxu0 0.0
      %1978 = vmatpush1.msra.mxu0 0.0
      %1979 = vmatprep.subr.mxu0 0.0
      %1980 = vmatpush1.msra.mxu0 0.0
      %1981 = vmatprep.subr.mxu0 0.0
      %1982 = vmatpush1.msra.mxu0 0.0
      %1983 = vmatprep.subr.mxu0 0.0
      %1984 = vmatpush1.msra.mxu0 0.0
      %1985 = vmatprep.subr.mxu0 0.0
      %1986 = vmatpush1.msra.mxu0 0.0
      %1987 = vmatprep.subr.mxu0 0.0
      %1988 = vmatpush1.msra.mxu0 0.0
      %1989 = vmatprep.subr.mxu0 0.0
      %1990 = vmatpush1.msra.mxu0 0.0
      %1991 = vmatprep.subr.mxu0 0.0
      %1992 = vmatpush1.msra.mxu0 0.0
      %1993 = vmatprep.subr.mxu0 0.0
      %1994 = vmatpush1.msra.mxu0 0.0
      %1995 = vmatprep.subr.mxu0 0.0
      %1996 = vmatpush1.msra.mxu0 0.0
      %1997 = vmatprep.subr.mxu0 0.0
      %1998 = vmatpush1.msra.mxu0 0.0
      %1999 = vmatprep.subr.mxu0 0.0
      %2000 = vmatpush1.msra.mxu0 0.0
      %2001 = vmatprep.subr.mxu0 0.0
      %2002 = vmatpush1.msra.mxu0 0.0
      %2003 = vmatprep.subr.mxu0 0.0
      %2004 = vmatpush1.msra.mxu0 0.0
      %2005 = vmatprep.subr.mxu0 0.0
      %2006 = vmatpush1.msra.mxu0 0.0
      %2007 = vmatprep.subr.mxu0 0.0
      %2008 = vmatpush1.msra.mxu0 0.0
      %2009 = vmatprep.subr.mxu0 0.0
      %2010 = vmatpush1.msra.mxu0 0.0
      %2011 = vmatprep.subr.mxu0 0.0
      %2012 = vmatpush1.msra.mxu0 0.0
      %2013 = vmatprep.subr.mxu0 0.0
      %2014 = vmatpush1.msra.mxu0 0.0
      %2015 = vmatprep.subr.mxu0 0.0
      %2016 = vmatpush1.msra.mxu0 0.0
      %2017 = vmatprep.subr.mxu0 0.0
      %2018 = vmatpush1.msra.mxu0 0.0
      %2019 = vmatprep.subr.mxu0 0.0
      %2020 = vmatpush1.msra.mxu0 0.0
      %2021 = vmatprep.subr.mxu0 0.0
      %2022 = vmatpush1.msra.mxu0 0.0
      %2023 = vmatprep.subr.mxu0 0.0
      %2024 = vmatpush1.msra.mxu0 0.0
      %2025 = vmatprep.subr.mxu0 0.0
      %2026 = vmatpush1.msra.mxu0 0.0
      %2027 = vmatprep.subr.mxu0 0.0
      %2028 = vmatpush1.msra.mxu0 0.0
      %2029 = vmatprep.subr.mxu0 0.0
      %2030 = vmatpush1.msra.mxu0 0.0
      %2031 = vmatprep.subr.mxu0 0.0
      %2032 = vmatpush1.msra.mxu0 0.0
      %2033 = vmatprep.subr.mxu0 0.0
      %2034 = vmatpush1.msra.mxu0 0.0
      %2035 = vmatprep.subr.mxu0 0.0
      %2036 = vmatpush1.msra.mxu0 0.0
      %2037 = vmatprep.subr.mxu0 0.0
      %2038 = vmatpush1.msra.mxu0 0.0
      %2039 = vmatprep.mubr.f32.mxu0 0.0
      %2040 = vmatmul.mubr.f32.gmra.mrb[0].mxu0 %v1101
      %v2041 = vpop.f32.mrb[0].mxu0
      %v2042 = vadd.f32 0.0, %v2041
      %v2043 = vpop.f32.mrb[0].mxu0
      %2044 = vmatprep.mubr.f32.mxu0 0.0
      %2045 = vmatmul.mubr.f32.gmra.mrb[0].mxu0 %v1103
      %v2046 = vpop.f32.mrb[0].mxu0
      %v2047 = vadd.f32 0.0, %v2046
      %v2048 = vpop.f32.mrb[0].mxu0
      %2049 = vmatprep.mubr.f32.mxu0 0.0
      %2050 = vmatmul.mubr.f32.gmra.mrb[0].mxu0 %v1105
      %v2051 = vpop.f32.mrb[0].mxu0
      %v2052 = vadd.f32 0.0, %v2051
      %v2053 = vpop.f32.mrb[0].mxu0
      %2054 = vmatprep.mubr.f32.mxu0 0.0
      %2055 = vmatmul.mubr.f32.gmra.mrb[0].mxu0 %v1107
      %v2056 = vpop.f32.mrb[0].mxu0
      %v2057 = vadd.f32 0.0, %v2056
      %v2058 = vpop.f32.mrb[0].mxu0
      %2059 = vmatprep.mubr.f32.mxu0 0.0
      %2060 = vmatmul.mubr.f32.gmra.mrb[0].mxu0 %v1109
      %v2061 = vpop.f32.mrb[0].mxu0
      %v2062 = vadd.f32 0.0, %v2061
      %v2063 = vpop.f32.mrb[0].mxu0
      %2064 = vmatprep.mubr.f32.mxu0 0.0
      %2065 = vmatmul.mubr.f32.gmra.mrb[0].mxu0 %v1111
      %v2066 = vpop.f32.mrb[0].mxu0
      %v2067 = vadd.f32 0.0, %v2066
      %v2068 = vpop.f32.mrb[0].mxu0
      %2069 = vmatprep.mubr.f32.mxu0 0.0
      %2070 = vmatmul.mubr.f32.gmra.mrb[0].mxu0 %v1113
      %v2071 = vpop.f32.mrb[0].mxu0
      %v2072 = vadd.f32 0.0, %v2071
      %v2073 = vpop.f32.mrb[0].mxu0
      %2074 = vmatprep.mubr.f32.mxu0 0.0
      %2075 = vmatmul.mubr.f32.gmra.mrb[0].mxu0 %v1115
      %v2076 = vpop.f32.mrb[0].mxu0
      %v2077 = vadd.f32 0.0, %v2076
      %v2078 = vpop.f32.mrb[0].mxu0
      %2079 = vmatprep.mubr.f32.mxu0 0.0
      %2080 = vmatmul.mubr.f32.gmra.mrb[0].mxu0 %v1117
      %v2081 = vpop.f32.mrb[0].mxu0
      %v2082 = vadd.f32 0.0, %v2081
      %v2083 = vpop.f32.mrb[0].mxu0
      %2084 = vmatprep.mubr.f32.mxu0 0.0
      %2085 = vmatmul.mubr.f32.gmra.mrb[0].mxu0 %v1119
      %v2086 = vpop.f32.mrb[0].mxu0
      %v2087 = vadd.f32 0.0, %v2086
      %v2088 = vpop.f32.mrb[0].mxu0
      %2089 = vmatprep.mubr.f32.mxu0 0.0
      %2090 = vmatmul.mubr.f32.gmra.mrb[0].mxu0 %v1121
      %v2091 = vpop.f32.mrb[0].mxu0
      %v2092 = vadd.f32 0.0, %v2091
      %v2093 = vpop.f32.mrb[0].mxu0
      %2094 = vmatprep.mubr.f32.mxu0 0.0
      %2095 = vmatmul.mubr.f32.gmra.mrb[0].mxu0 %v1123
      %v2096 = vpop.f32.mrb[0].mxu0
      %v2097 = vadd.f32 0.0, %v2096
      %v2098 = vpop.f32.mrb[0].mxu0
      %2099 = vmatprep.mubr.f32.mxu0 0.0
      %2100 = vmatmul.mubr.f32.gmra.mrb[0].mxu0 %v1125
      %v2101 = vpop.f32.mrb[0].mxu0
      %v2102 = vadd.f32 0.0, %v2101
      %v2103 = vpop.f32.mrb[0].mxu0
      %2104 = vmatprep.mubr.f32.mxu0 0.0
      %2105 = vmatmul.mubr.f32.gmra.mrb[0].mxu0 %v1127
      %v2106 = vpop.f32.mrb[0].mxu0
      %v2107 = vadd.f32 0.0, %v2106
      %v2108 = vpop.f32.mrb[0].mxu0
      %2109 = vmatprep.mubr.f32.mxu0 0.0
      %2110 = vmatmul.mubr.f32.gmra.mrb[0].mxu0 %v1129
      %v2111 = vpop.f32.mrb[0].mxu0
      %v2112 = vadd.f32 0.0, %v2111
      %v2113 = vpop.f32.mrb[0].mxu0
      %2114 = vmatprep.mubr.f32.mxu0 0.0
      %2115 = vmatmul.mubr.f32.gmra.mrb[0].mxu0 %v1131
      %v2116 = vpop.f32.mrb[0].mxu0
      %v2117 = vadd.f32 0.0, %v2116
      %v2118 = vpop.f32.mrb[0].mxu0
      %2119 = vmatprep.mubr.f32.mxu0 0.0
      %2120 = vmatmul.mubr.f32.gmra.mrb[0].mxu0 %v1133
      %v2121 = vpop.f32.mrb[0].mxu0
      %v2122 = vadd.f32 0.0, %v2121
      %v2123 = vpop.f32.mrb[0].mxu0
      %2124 = vmatprep.mubr.f32.mxu0 0.0
      %2125 = vmatmul.mubr.f32.gmra.mrb[0].mxu0 %v1135
      %v2126 = vpop.f32.mrb[0].mxu0
      %v2127 = vadd.f32 0.0, %v2126
      %v2128 = vpop.f32.mrb[0].mxu0
      %2129 = vmatprep.mubr.f32.mxu0 0.0
      %2130 = vmatmul.mubr.f32.gmra.mrb[0].mxu0 %v1137
      %v2131 = vpop.f32.mrb[0].mxu0
      %v2132 = vadd.f32 0.0, %v2131
      %v2133 = vpop.f32.mrb[0].mxu0
      %2134 = vmatprep.mubr.f32.mxu0 0.0
      %2135 = vmatmul.mubr.f32.gmra.mrb[0].mxu0 %v1139
      %v2136 = vpop.f32.mrb[0].mxu0
      %v2137 = vadd.f32 0.0, %v2136
      %v2138 = vpop.f32.mrb[0].mxu0
      %2139 = vmatprep.mubr.f32.mxu0 0.0
      %2140 = vmatmul.mubr.f32.gmra.mrb[0].mxu0 %v1141
      %v2141 = vpop.f32.mrb[0].mxu0
      %v2142 = vadd.f32 0.0, %v2141
      %v2143 = vpop.f32.mrb[0].mxu0
      %2144 = vmatprep.mubr.f32.mxu0 0.0
      %2145 = vmatmul.mubr.f32.gmra.mrb[0].mxu0 %v1143
      %v2146 = vpop.f32.mrb[0].mxu0
      %v2147 = vadd.f32 0.0, %v2146
      %v2148 = vpop.f32.mrb[0].mxu0
      %2149 = vmatprep.mubr.f32.mxu0 0.0
      %2150 = vmatmul.mubr.f32.gmra.mrb[0].mxu0 %v1145
      %v2151 = vpop.f32.mrb[0].mxu0
      %v2152 = vadd.f32 0.0, %v2151
      %v2153 = vpop.f32.mrb[0].mxu0
      %2154 = vmatprep.mubr.f32.mxu0 0.0
      %2155 = vmatmul.mubr.f32.gmra.mrb[0].mxu0 %v1147
      %v2156 = vpop.f32.mrb[0].mxu0
      %v2157 = vadd.f32 0.0, %v2156
      %v2158 = vpop.f32.mrb[0].mxu0
      %2159 = vmatprep.mubr.f32.mxu0 0.0
      %2160 = vmatmul.mubr.f32.gmra.mrb[0].mxu0 %v1149
      %v2161 = vpop.f32.mrb[0].mxu0
      %v2162 = vadd.f32 0.0, %v2161
      %v2163 = vpop.f32.mrb[0].mxu0
      %2164 = vmatprep.mubr.f32.mxu0 0.0
      %2165 = vmatmul.mubr.f32.gmra.mrb[0].mxu0 %v1151
      %v2166 = vpop.f32.mrb[0].mxu0
      %v2167 = vadd.f32 0.0, %v2166
      %v2168 = vpop.f32.mrb[0].mxu0
      %2169 = vmatprep.mubr.f32.mxu0 0.0
      %2170 = vmatmul.mubr.f32.gmra.mrb[0].mxu0 %v1153
      %v2171 = vpop.f32.mrb[0].mxu0
      %v2172 = vadd.f32 0.0, %v2171
      %v2173 = vpop.f32.mrb[0].mxu0
      %2174 = vmatprep.mubr.f32.mxu0 0.0
      %2175 = vmatmul.mubr.f32.gmra.mrb[0].mxu0 %v1155
      %v2176 = vpop.f32.mrb[0].mxu0
      %v2177 = vadd.f32 0.0, %v2176
      %v2178 = vpop.f32.mrb[0].mxu0
      %2179 = vmatprep.mubr.f32.mxu0 0.0
      %2180 = vmatmul.mubr.f32.gmra.mrb[0].mxu0 %v1157
      %v2181 = vpop.f32.mrb[0].mxu0
      %v2182 = vadd.f32 0.0, %v2181
      %v2183 = vpop.f32.mrb[0].mxu0
      %2184 = vmatprep.mubr.f32.mxu0 0.0
      %2185 = vmatmul.mubr.f32.gmra.mrb[0].mxu0 %v1159
      %v2186 = vpop.f32.mrb[0].mxu0
      %v2187 = vadd.f32 0.0, %v2186
      %v2188 = vpop.f32.mrb[0].mxu0
      %2189 = vmatprep.mubr.f32.mxu0 0.0
      %2190 = vmatmul.mubr.f32.gmra.mrb[0].mxu0 %v1968
      %v2191 = vpop.f32.mrb[0].mxu0
      %v2192 = vadd.f32 0.0, %v2191
      %v2193 = vpop.f32.mrb[0].mxu0
      %2194 = vmatprep.mubr.f32.mxu0 0.0
      %2195 = vmatmul.mubr.f32.gmra.mrb[0].mxu0 %v1970
      %v2196 = vpop.f32.mrb[0].mxu0
      %v2197 = vadd.f32 0.0, %v2196
      %v2198 = vpop.f32.mrb[0].mxu0
      %2199 = vdwg.mxu0
      %v2200 = vadd.f32 %v1929, %v2042
      %v2201 = vadd.f32 %v1930, %v2047
      %v2202 = vadd.f32 %v1931, %v2052
      %v2203 = vadd.f32 %v1932, %v2057
      %v2204 = vadd.f32 %v1933, %v2062
      %v2205 = vadd.f32 %v1934, %v2067
      %v2206 = vadd.f32 %v1935, %v2072
      %v2207 = vadd.f32 %v1936, %v2077
      %v2208 = vadd.f32 %v1937, %v2082
      %v2209 = vadd.f32 %v1938, %v2087
      %v2210 = vadd.f32 %v1939, %v2092
      %v2211 = vadd.f32 %v1940, %v2097
      %v2212 = vadd.f32 %v1941, %v2102
      %v2213 = vadd.f32 %v1942, %v2107
      %v2214 = vadd.f32 %v1943, %v2112
      %v2215 = vadd.f32 %v1944, %v2117
      %v2216 = vadd.f32 %v1945, %v2122
      %v2217 = vadd.f32 %v1946, %v2127
      %v2218 = vadd.f32 %v1947, %v2132
      %v2219 = vadd.f32 %v1948, %v2137
      %v2220 = vadd.f32 %v1949, %v2142
      %v2221 = vadd.f32 %v1950, %v2147
      %v2222 = vadd.f32 %v1951, %v2152
      %v2223 = vadd.f32 %v1952, %v2157
      %v2224 = vadd.f32 %v1953, %v2162
      %v2225 = vadd.f32 %v1954, %v2167
      %v2226 = vadd.f32 %v1955, %v2172
      %v2227 = vadd.f32 %v1956, %v2177
      %v2228 = vadd.f32 %v1957, %v2182
      %v2229 = vadd.f32 %v1958, %v2187
      %v2230 = vadd.f32 %v1959, %v2192
      %v2231 = vadd.f32 %v1960, %v2197
      %s2232 = scalar_lea.vmem %s1, 24
      %v2233 = vld [vmem:[%s2232] sm:$0xf]
      %v2235 = vsel %vm428, %v293, 0
      %v2238 = vsel %vm428, %v294, 0
      %v2241 = vsel %vm493, %v2233, 0
      %2243 = vmatprep.subr.mxu0 0.0
      %2244 = vmatpush1.msra.mxu0 %v2241
      %2245 = vmatprep.subr.mxu0 0.0
      %2246 = vmatpush1.msra.mxu0 0.0
      %2247 = vmatprep.subr.mxu0 0.0
      %2248 = vmatpush1.msra.mxu0 0.0
      %2249 = vmatprep.subr.mxu0 0.0
      %2250 = vmatpush1.msra.mxu0 0.0
      %2251 = vmatprep.subr.mxu0 0.0
      %2252 = vmatpush1.msra.mxu0 0.0
      %2253 = vmatprep.subr.mxu0 0.0
      %2254 = vmatpush1.msra.mxu0 0.0
      %2255 = vmatprep.subr.mxu0 0.0
      %2256 = vmatpush1.msra.mxu0 0.0
      %2257 = vmatprep.subr.mxu0 0.0
      %2258 = vmatpush1.msra.mxu0 0.0
      %2259 = vmatprep.subr.mxu0 0.0
      %2260 = vmatpush1.msra.mxu0 0.0
      %2261 = vmatprep.subr.mxu0 0.0
      %2262 = vmatpush1.msra.mxu0 0.0
      %2263 = vmatprep.subr.mxu0 0.0
      %2264 = vmatpush1.msra.mxu0 0.0
      %2265 = vmatprep.subr.mxu0 0.0
      %2266 = vmatpush1.msra.mxu0 0.0
      %2267 = vmatprep.subr.mxu0 0.0
      %2268 = vmatpush1.msra.mxu0 0.0
      %2269 = vmatprep.subr.mxu0 0.0
      %2270 = vmatpush1.msra.mxu0 0.0
      %2271 = vmatprep.subr.mxu0 0.0
      %2272 = vmatpush1.msra.mxu0 0.0
      %2273 = vmatprep.subr.mxu0 0.0
      %2274 = vmatpush1.msra.mxu0 0.0
      %2275 = vmatprep.subr.mxu0 0.0
      %2276 = vmatpush1.msra.mxu0 0.0
      %2277 = vmatprep.subr.mxu0 0.0
      %2278 = vmatpush1.msra.mxu0 0.0
      %2279 = vmatprep.subr.mxu0 0.0
      %2280 = vmatpush1.msra.mxu0 0.0
      %2281 = vmatprep.subr.mxu0 0.0
      %2282 = vmatpush1.msra.mxu0 0.0
      %2283 = vmatprep.subr.mxu0 0.0
      %2284 = vmatpush1.msra.mxu0 0.0
      %2285 = vmatprep.subr.mxu0 0.0
      %2286 = vmatpush1.msra.mxu0 0.0
      %2287 = vmatprep.subr.mxu0 0.0
      %2288 = vmatpush1.msra.mxu0 0.0
      %2289 = vmatprep.subr.mxu0 0.0
      %2290 = vmatpush1.msra.mxu0 0.0
      %2291 = vmatprep.subr.mxu0 0.0
      %2292 = vmatpush1.msra.mxu0 0.0
      %2293 = vmatprep.subr.mxu0 0.0
      %2294 = vmatpush1.msra.mxu0 0.0
      %2295 = vmatprep.subr.mxu0 0.0
      %2296 = vmatpush1.msra.mxu0 0.0
      %2297 = vmatprep.subr.mxu0 0.0
      %2298 = vmatpush1.msra.mxu0 0.0
      %2299 = vmatprep.subr.mxu0 0.0
      %2300 = vmatpush1.msra.mxu0 0.0
      %2301 = vmatprep.subr.mxu0 0.0
      %2302 = vmatpush1.msra.mxu0 0.0
      %2303 = vmatprep.subr.mxu0 0.0
      %2304 = vmatpush1.msra.mxu0 0.0
      %2305 = vmatprep.subr.mxu0 0.0
      %2306 = vmatpush1.msra.mxu0 0.0
      %2307 = vmatprep.mubr.f32.mxu0 0.0
      %2308 = vmatmul.mubr.f32.gmra.mrb[0].mxu0 %v730
      %v2309 = vpop.f32.mrb[0].mxu0
      %v2310 = vadd.f32 0.0, %v2309
      %v2311 = vpop.f32.mrb[0].mxu0
      %2312 = vmatprep.mubr.f32.mxu0 0.0
      %2313 = vmatmul.mubr.f32.gmra.mrb[0].mxu0 %v732
      %v2314 = vpop.f32.mrb[0].mxu0
      %v2315 = vadd.f32 0.0, %v2314
      %v2316 = vpop.f32.mrb[0].mxu0
      %2317 = vmatprep.mubr.f32.mxu0 0.0
      %2318 = vmatmul.mubr.f32.gmra.mrb[0].mxu0 %v734
      %v2319 = vpop.f32.mrb[0].mxu0
      %v2320 = vadd.f32 0.0, %v2319
      %v2321 = vpop.f32.mrb[0].mxu0
      %2322 = vmatprep.mubr.f32.mxu0 0.0
      %2323 = vmatmul.mubr.f32.gmra.mrb[0].mxu0 %v736
      %v2324 = vpop.f32.mrb[0].mxu0
      %v2325 = vadd.f32 0.0, %v2324
      %v2326 = vpop.f32.mrb[0].mxu0
      %2327 = vmatprep.mubr.f32.mxu0 0.0
      %2328 = vmatmul.mubr.f32.gmra.mrb[0].mxu0 %v738
      %v2329 = vpop.f32.mrb[0].mxu0
      %v2330 = vadd.f32 0.0, %v2329
      %v2331 = vpop.f32.mrb[0].mxu0
      %2332 = vmatprep.mubr.f32.mxu0 0.0
      %2333 = vmatmul.mubr.f32.gmra.mrb[0].mxu0 %v740
      %v2334 = vpop.f32.mrb[0].mxu0
      %v2335 = vadd.f32 0.0, %v2334
      %v2336 = vpop.f32.mrb[0].mxu0
      %2337 = vmatprep.mubr.f32.mxu0 0.0
      %2338 = vmatmul.mubr.f32.gmra.mrb[0].mxu0 %v742
      %v2339 = vpop.f32.mrb[0].mxu0
      %v2340 = vadd.f32 0.0, %v2339
      %v2341 = vpop.f32.mrb[0].mxu0
      %2342 = vmatprep.mubr.f32.mxu0 0.0
      %2343 = vmatmul.mubr.f32.gmra.mrb[0].mxu0 %v744
      %v2344 = vpop.f32.mrb[0].mxu0
      %v2345 = vadd.f32 0.0, %v2344
      %v2346 = vpop.f32.mrb[0].mxu0
      %2347 = vmatprep.mubr.f32.mxu0 0.0
      %2348 = vmatmul.mubr.f32.gmra.mrb[0].mxu0 %v746
      %v2349 = vpop.f32.mrb[0].mxu0
      %v2350 = vadd.f32 0.0, %v2349
      %v2351 = vpop.f32.mrb[0].mxu0
      %2352 = vmatprep.mubr.f32.mxu0 0.0
      %2353 = vmatmul.mubr.f32.gmra.mrb[0].mxu0 %v748
      %v2354 = vpop.f32.mrb[0].mxu0
      %v2355 = vadd.f32 0.0, %v2354
      %v2356 = vpop.f32.mrb[0].mxu0
      %2357 = vmatprep.mubr.f32.mxu0 0.0
      %2358 = vmatmul.mubr.f32.gmra.mrb[0].mxu0 %v750
      %v2359 = vpop.f32.mrb[0].mxu0
      %v2360 = vadd.f32 0.0, %v2359
      %v2361 = vpop.f32.mrb[0].mxu0
      %2362 = vmatprep.mubr.f32.mxu0 0.0
      %2363 = vmatmul.mubr.f32.gmra.mrb[0].mxu0 %v752
      %v2364 = vpop.f32.mrb[0].mxu0
      %v2365 = vadd.f32 0.0, %v2364
      %v2366 = vpop.f32.mrb[0].mxu0
      %2367 = vmatprep.mubr.f32.mxu0 0.0
      %2368 = vmatmul.mubr.f32.gmra.mrb[0].mxu0 %v754
      %v2369 = vpop.f32.mrb[0].mxu0
      %v2370 = vadd.f32 0.0, %v2369
      %v2371 = vpop.f32.mrb[0].mxu0
      %2372 = vmatprep.mubr.f32.mxu0 0.0
      %2373 = vmatmul.mubr.f32.gmra.mrb[0].mxu0 %v756
      %v2374 = vpop.f32.mrb[0].mxu0
      %v2375 = vadd.f32 0.0, %v2374
      %v2376 = vpop.f32.mrb[0].mxu0
      %2377 = vmatprep.mubr.f32.mxu0 0.0
      %2378 = vmatmul.mubr.f32.gmra.mrb[0].mxu0 %v758
      %v2379 = vpop.f32.mrb[0].mxu0
      %v2380 = vadd.f32 0.0, %v2379
      %v2381 = vpop.f32.mrb[0].mxu0
      %2382 = vmatprep.mubr.f32.mxu0 0.0
      %2383 = vmatmul.mubr.f32.gmra.mrb[0].mxu0 %v760
      %v2384 = vpop.f32.mrb[0].mxu0
      %v2385 = vadd.f32 0.0, %v2384
      %v2386 = vpop.f32.mrb[0].mxu0
      %2387 = vmatprep.mubr.f32.mxu0 0.0
      %2388 = vmatmul.mubr.f32.gmra.mrb[0].mxu0 %v762
      %v2389 = vpop.f32.mrb[0].mxu0
      %v2390 = vadd.f32 0.0, %v2389
      %v2391 = vpop.f32.mrb[0].mxu0
      %2392 = vmatprep.mubr.f32.mxu0 0.0
      %2393 = vmatmul.mubr.f32.gmra.mrb[0].mxu0 %v764
      %v2394 = vpop.f32.mrb[0].mxu0
      %v2395 = vadd.f32 0.0, %v2394
      %v2396 = vpop.f32.mrb[0].mxu0
      %2397 = vmatprep.mubr.f32.mxu0 0.0
      %2398 = vmatmul.mubr.f32.gmra.mrb[0].mxu0 %v766
      %v2399 = vpop.f32.mrb[0].mxu0
      %v2400 = vadd.f32 0.0, %v2399
      %v2401 = vpop.f32.mrb[0].mxu0
      %2402 = vmatprep.mubr.f32.mxu0 0.0
      %2403 = vmatmul.mubr.f32.gmra.mrb[0].mxu0 %v768
      %v2404 = vpop.f32.mrb[0].mxu0
      %v2405 = vadd.f32 0.0, %v2404
      %v2406 = vpop.f32.mrb[0].mxu0
      %2407 = vmatprep.mubr.f32.mxu0 0.0
      %2408 = vmatmul.mubr.f32.gmra.mrb[0].mxu0 %v770
      %v2409 = vpop.f32.mrb[0].mxu0
      %v2410 = vadd.f32 0.0, %v2409
      %v2411 = vpop.f32.mrb[0].mxu0
      %2412 = vmatprep.mubr.f32.mxu0 0.0
      %2413 = vmatmul.mubr.f32.gmra.mrb[0].mxu0 %v772
      %v2414 = vpop.f32.mrb[0].mxu0
      %v2415 = vadd.f32 0.0, %v2414
      %v2416 = vpop.f32.mrb[0].mxu0
      %2417 = vmatprep.mubr.f32.mxu0 0.0
      %2418 = vmatmul.mubr.f32.gmra.mrb[0].mxu0 %v774
      %v2419 = vpop.f32.mrb[0].mxu0
      %v2420 = vadd.f32 0.0, %v2419
      %v2421 = vpop.f32.mrb[0].mxu0
      %2422 = vmatprep.mubr.f32.mxu0 0.0
      %2423 = vmatmul.mubr.f32.gmra.mrb[0].mxu0 %v776
      %v2424 = vpop.f32.mrb[0].mxu0
      %v2425 = vadd.f32 0.0, %v2424
      %v2426 = vpop.f32.mrb[0].mxu0
      %2427 = vmatprep.mubr.f32.mxu0 0.0
      %2428 = vmatmul.mubr.f32.gmra.mrb[0].mxu0 %v778
      %v2429 = vpop.f32.mrb[0].mxu0
      %v2430 = vadd.f32 0.0, %v2429
      %v2431 = vpop.f32.mrb[0].mxu0
      %2432 = vmatprep.mubr.f32.mxu0 0.0
      %2433 = vmatmul.mubr.f32.gmra.mrb[0].mxu0 %v780
      %v2434 = vpop.f32.mrb[0].mxu0
      %v2435 = vadd.f32 0.0, %v2434
      %v2436 = vpop.f32.mrb[0].mxu0
      %2437 = vmatprep.mubr.f32.mxu0 0.0
      %2438 = vmatmul.mubr.f32.gmra.mrb[0].mxu0 %v782
      %v2439 = vpop.f32.mrb[0].mxu0
      %v2440 = vadd.f32 0.0, %v2439
      %v2441 = vpop.f32.mrb[0].mxu0
      %2442 = vmatprep.mubr.f32.mxu0 0.0
      %2443 = vmatmul.mubr.f32.gmra.mrb[0].mxu0 %v784
      %v2444 = vpop.f32.mrb[0].mxu0
      %v2445 = vadd.f32 0.0, %v2444
      %v2446 = vpop.f32.mrb[0].mxu0
      %2447 = vmatprep.mubr.f32.mxu0 0.0
      %2448 = vmatmul.mubr.f32.gmra.mrb[0].mxu0 %v1424
      %v2449 = vpop.f32.mrb[0].mxu0
      %v2450 = vadd.f32 0.0, %v2449
      %v2451 = vpop.f32.mrb[0].mxu0
      %2452 = vmatprep.mubr.f32.mxu0 0.0
      %2453 = vmatmul.mubr.f32.gmra.mrb[0].mxu0 %v1427
      %v2454 = vpop.f32.mrb[0].mxu0
      %v2455 = vadd.f32 0.0, %v2454
      %v2456 = vpop.f32.mrb[0].mxu0
      %2457 = vmatprep.mubr.f32.mxu0 0.0
      %2458 = vmatmul.mubr.f32.gmra.mrb[0].mxu0 %v2235
      %v2459 = vpop.f32.mrb[0].mxu0
      %v2460 = vadd.f32 0.0, %v2459
      %v2461 = vpop.f32.mrb[0].mxu0
      %2462 = vmatprep.mubr.f32.mxu0 0.0
      %2463 = vmatmul.mubr.f32.gmra.mrb[0].mxu0 %v2238
      %v2464 = vpop.f32.mrb[0].mxu0
      %v2465 = vadd.f32 0.0, %v2464
      %v2466 = vpop.f32.mrb[0].mxu0
      %2467 = vdwg.mxu0
      %v2468 = vadd.f32 %v2200, %v2310
      %v2469 = vadd.f32 %v2201, %v2315
      %v2470 = vadd.f32 %v2202, %v2320
      %v2471 = vadd.f32 %v2203, %v2325
      %v2472 = vadd.f32 %v2204, %v2330
      %v2473 = vadd.f32 %v2205, %v2335
      %v2474 = vadd.f32 %v2206, %v2340
      %v2475 = vadd.f32 %v2207, %v2345
      %v2476 = vadd.f32 %v2208, %v2350
      %v2477 = vadd.f32 %v2209, %v2355
      %v2478 = vadd.f32 %v2210, %v2360
      %v2479 = vadd.f32 %v2211, %v2365
      %v2480 = vadd.f32 %v2212, %v2370
      %v2481 = vadd.f32 %v2213, %v2375
      %v2482 = vadd.f32 %v2214, %v2380
      %v2483 = vadd.f32 %v2215, %v2385
      %v2484 = vadd.f32 %v2216, %v2390
      %v2485 = vadd.f32 %v2217, %v2395
      %v2486 = vadd.f32 %v2218, %v2400
      %v2487 = vadd.f32 %v2219, %v2405
      %v2488 = vadd.f32 %v2220, %v2410
      %v2489 = vadd.f32 %v2221, %v2415
      %v2490 = vadd.f32 %v2222, %v2420
      %v2491 = vadd.f32 %v2223, %v2425
      %v2492 = vadd.f32 %v2224, %v2430
      %v2493 = vadd.f32 %v2225, %v2435
      %v2494 = vadd.f32 %v2226, %v2440
      %v2495 = vadd.f32 %v2227, %v2445
      %v2496 = vadd.f32 %v2228, %v2450
      %v2497 = vadd.f32 %v2229, %v2455
      %v2498 = vadd.f32 %v2230, %v2460
      %v2499 = vadd.f32 %v2231, %v2465
      %v2501 = vrot.slane %v293, 1
      %v2502 = vrot.slane %v294, 1
      %v2503 = vsel %vm345, %v2501, %v2502
      %v2504 = vrot.slane %v295, 1
      %v2505 = vsel %vm345, %v2502, %v2504
      %s2506 = scalar_lea.vmem %s1, 28
      %v2507 = vld [vmem:[%s2506] sm:$0xf]
      %v2508 = vsel %vm428, %v2503, 0
      %v2510 = vsel %vm428, %v2505, 0
      %v2513 = vsel %vm493, %v2507, 0
      %2515 = vmatprep.subr.mxu0 0.0
      %2516 = vmatpush1.msra.mxu0 %v2513
      %2517 = vmatprep.subr.mxu0 0.0
      %2518 = vmatpush1.msra.mxu0 0.0
      %2519 = vmatprep.subr.mxu0 0.0
      %2520 = vmatpush1.msra.mxu0 0.0
      %2521 = vmatprep.subr.mxu0 0.0
      %2522 = vmatpush1.msra.mxu0 0.0
      %2523 = vmatprep.subr.mxu0 0.0
      %2524 = vmatpush1.msra.mxu0 0.0
      %2525 = vmatprep.subr.mxu0 0.0
      %2526 = vmatpush1.msra.mxu0 0.0
      %2527 = vmatprep.subr.mxu0 0.0
      %2528 = vmatpush1.msra.mxu0 0.0
      %2529 = vmatprep.subr.mxu0 0.0
      %2530 = vmatpush1.msra.mxu0 0.0
      %2531 = vmatprep.subr.mxu0 0.0
      %2532 = vmatpush1.msra.mxu0 0.0
      %2533 = vmatprep.subr.mxu0 0.0
      %2534 = vmatpush1.msra.mxu0 0.0
      %2535 = vmatprep.subr.mxu0 0.0
      %2536 = vmatpush1.msra.mxu0 0.0
      %2537 = vmatprep.subr.mxu0 0.0
      %2538 = vmatpush1.msra.mxu0 0.0
      %2539 = vmatprep.subr.mxu0 0.0
      %2540 = vmatpush1.msra.mxu0 0.0
      %2541 = vmatprep.subr.mxu0 0.0
      %2542 = vmatpush1.msra.mxu0 0.0
      %2543 = vmatprep.subr.mxu0 0.0
      %2544 = vmatpush1.msra.mxu0 0.0
      %2545 = vmatprep.subr.mxu0 0.0
      %2546 = vmatpush1.msra.mxu0 0.0
      %2547 = vmatprep.subr.mxu0 0.0
      %2548 = vmatpush1.msra.mxu0 0.0
      %2549 = vmatprep.subr.mxu0 0.0
      %2550 = vmatpush1.msra.mxu0 0.0
      %2551 = vmatprep.subr.mxu0 0.0
      %2552 = vmatpush1.msra.mxu0 0.0
      %2553 = vmatprep.subr.mxu0 0.0
      %2554 = vmatpush1.msra.mxu0 0.0
      %2555 = vmatprep.subr.mxu0 0.0
      %2556 = vmatpush1.msra.mxu0 0.0
      %2557 = vmatprep.subr.mxu0 0.0
      %2558 = vmatpush1.msra.mxu0 0.0
      %2559 = vmatprep.subr.mxu0 0.0
      %2560 = vmatpush1.msra.mxu0 0.0
      %2561 = vmatprep.subr.mxu0 0.0
      %2562 = vmatpush1.msra.mxu0 0.0
      %2563 = vmatprep.subr.mxu0 0.0
      %2564 = vmatpush1.msra.mxu0 0.0
      %2565 = vmatprep.subr.mxu0 0.0
      %2566 = vmatpush1.msra.mxu0 0.0
      %2567 = vmatprep.subr.mxu0 0.0
      %2568 = vmatpush1.msra.mxu0 0.0
      %2569 = vmatprep.subr.mxu0 0.0
      %2570 = vmatpush1.msra.mxu0 0.0
      %2571 = vmatprep.subr.mxu0 0.0
      %2572 = vmatpush1.msra.mxu0 0.0
      %2573 = vmatprep.subr.mxu0 0.0
      %2574 = vmatpush1.msra.mxu0 0.0
      %2575 = vmatprep.subr.mxu0 0.0
      %2576 = vmatpush1.msra.mxu0 0.0
      %2577 = vmatprep.subr.mxu0 0.0
      %2578 = vmatpush1.msra.mxu0 0.0
      %2579 = vmatprep.mubr.f32.mxu0 0.0
      %2580 = vmatmul.mubr.f32.gmra.mrb[0].mxu0 %v437
      %v2581 = vpop.f32.mrb[0].mxu0
      %v2582 = vadd.f32 0.0, %v2581
      %v2583 = vpop.f32.mrb[0].mxu0
      %2584 = vmatprep.mubr.f32.mxu0 0.0
      %2585 = vmatmul.mubr.f32.gmra.mrb[0].mxu0 %v439
      %v2586 = vpop.f32.mrb[0].mxu0
      %v2587 = vadd.f32 0.0, %v2586
      %v2588 = vpop.f32.mrb[0].mxu0
      %2589 = vmatprep.mubr.f32.mxu0 0.0
      %2590 = vmatmul.mubr.f32.gmra.mrb[0].mxu0 %v441
      %v2591 = vpop.f32.mrb[0].mxu0
      %v2592 = vadd.f32 0.0, %v2591
      %v2593 = vpop.f32.mrb[0].mxu0
      %2594 = vmatprep.mubr.f32.mxu0 0.0
      %2595 = vmatmul.mubr.f32.gmra.mrb[0].mxu0 %v443
      %v2596 = vpop.f32.mrb[0].mxu0
      %v2597 = vadd.f32 0.0, %v2596
      %v2598 = vpop.f32.mrb[0].mxu0
      %2599 = vmatprep.mubr.f32.mxu0 0.0
      %2600 = vmatmul.mubr.f32.gmra.mrb[0].mxu0 %v445
      %v2601 = vpop.f32.mrb[0].mxu0
      %v2602 = vadd.f32 0.0, %v2601
      %v2603 = vpop.f32.mrb[0].mxu0
      %2604 = vmatprep.mubr.f32.mxu0 0.0
      %2605 = vmatmul.mubr.f32.gmra.mrb[0].mxu0 %v447
      %v2606 = vpop.f32.mrb[0].mxu0
      %v2607 = vadd.f32 0.0, %v2606
      %v2608 = vpop.f32.mrb[0].mxu0
      %2609 = vmatprep.mubr.f32.mxu0 0.0
      %2610 = vmatmul.mubr.f32.gmra.mrb[0].mxu0 %v449
      %v2611 = vpop.f32.mrb[0].mxu0
      %v2612 = vadd.f32 0.0, %v2611
      %v2613 = vpop.f32.mrb[0].mxu0
      %2614 = vmatprep.mubr.f32.mxu0 0.0
      %2615 = vmatmul.mubr.f32.gmra.mrb[0].mxu0 %v451
      %v2616 = vpop.f32.mrb[0].mxu0
      %v2617 = vadd.f32 0.0, %v2616
      %v2618 = vpop.f32.mrb[0].mxu0
      %2619 = vmatprep.mubr.f32.mxu0 0.0
      %2620 = vmatmul.mubr.f32.gmra.mrb[0].mxu0 %v453
      %v2621 = vpop.f32.mrb[0].mxu0
      %v2622 = vadd.f32 0.0, %v2621
      %v2623 = vpop.f32.mrb[0].mxu0
      %2624 = vmatprep.mubr.f32.mxu0 0.0
      %2625 = vmatmul.mubr.f32.gmra.mrb[0].mxu0 %v455
      %v2626 = vpop.f32.mrb[0].mxu0
      %v2627 = vadd.f32 0.0, %v2626
      %v2628 = vpop.f32.mrb[0].mxu0
      %2629 = vmatprep.mubr.f32.mxu0 0.0
      %2630 = vmatmul.mubr.f32.gmra.mrb[0].mxu0 %v457
      %v2631 = vpop.f32.mrb[0].mxu0
      %v2632 = vadd.f32 0.0, %v2631
      %v2633 = vpop.f32.mrb[0].mxu0
      %2634 = vmatprep.mubr.f32.mxu0 0.0
      %2635 = vmatmul.mubr.f32.gmra.mrb[0].mxu0 %v459
      %v2636 = vpop.f32.mrb[0].mxu0
      %v2637 = vadd.f32 0.0, %v2636
      %v2638 = vpop.f32.mrb[0].mxu0
      %2639 = vmatprep.mubr.f32.mxu0 0.0
      %2640 = vmatmul.mubr.f32.gmra.mrb[0].mxu0 %v461
      %v2641 = vpop.f32.mrb[0].mxu0
      %v2642 = vadd.f32 0.0, %v2641
      %v2643 = vpop.f32.mrb[0].mxu0
      %2644 = vmatprep.mubr.f32.mxu0 0.0
      %2645 = vmatmul.mubr.f32.gmra.mrb[0].mxu0 %v463
      %v2646 = vpop.f32.mrb[0].mxu0
      %v2647 = vadd.f32 0.0, %v2646
      %v2648 = vpop.f32.mrb[0].mxu0
      %2649 = vmatprep.mubr.f32.mxu0 0.0
      %2650 = vmatmul.mubr.f32.gmra.mrb[0].mxu0 %v465
      %v2651 = vpop.f32.mrb[0].mxu0
      %v2652 = vadd.f32 0.0, %v2651
      %v2653 = vpop.f32.mrb[0].mxu0
      %2654 = vmatprep.mubr.f32.mxu0 0.0
      %2655 = vmatmul.mubr.f32.gmra.mrb[0].mxu0 %v467
      %v2656 = vpop.f32.mrb[0].mxu0
      %v2657 = vadd.f32 0.0, %v2656
      %v2658 = vpop.f32.mrb[0].mxu0
      %2659 = vmatprep.mubr.f32.mxu0 0.0
      %2660 = vmatmul.mubr.f32.gmra.mrb[0].mxu0 %v469
      %v2661 = vpop.f32.mrb[0].mxu0
      %v2662 = vadd.f32 0.0, %v2661
      %v2663 = vpop.f32.mrb[0].mxu0
      %2664 = vmatprep.mubr.f32.mxu0 0.0
      %2665 = vmatmul.mubr.f32.gmra.mrb[0].mxu0 %v471
      %v2666 = vpop.f32.mrb[0].mxu0
      %v2667 = vadd.f32 0.0, %v2666
      %v2668 = vpop.f32.mrb[0].mxu0
      %2669 = vmatprep.mubr.f32.mxu0 0.0
      %2670 = vmatmul.mubr.f32.gmra.mrb[0].mxu0 %v473
      %v2671 = vpop.f32.mrb[0].mxu0
      %v2672 = vadd.f32 0.0, %v2671
      %v2673 = vpop.f32.mrb[0].mxu0
      %2674 = vmatprep.mubr.f32.mxu0 0.0
      %2675 = vmatmul.mubr.f32.gmra.mrb[0].mxu0 %v475
      %v2676 = vpop.f32.mrb[0].mxu0
      %v2677 = vadd.f32 0.0, %v2676
      %v2678 = vpop.f32.mrb[0].mxu0
      %2679 = vmatprep.mubr.f32.mxu0 0.0
      %2680 = vmatmul.mubr.f32.gmra.mrb[0].mxu0 %v477
      %v2681 = vpop.f32.mrb[0].mxu0
      %v2682 = vadd.f32 0.0, %v2681
      %v2683 = vpop.f32.mrb[0].mxu0
      %2684 = vmatprep.mubr.f32.mxu0 0.0
      %2685 = vmatmul.mubr.f32.gmra.mrb[0].mxu0 %v479
      %v2686 = vpop.f32.mrb[0].mxu0
      %v2687 = vadd.f32 0.0, %v2686
      %v2688 = vpop.f32.mrb[0].mxu0
      %2689 = vmatprep.mubr.f32.mxu0 0.0
      %2690 = vmatmul.mubr.f32.gmra.mrb[0].mxu0 %v481
      %v2691 = vpop.f32.mrb[0].mxu0
      %v2692 = vadd.f32 0.0, %v2691
      %v2693 = vpop.f32.mrb[0].mxu0
      %2694 = vmatprep.mubr.f32.mxu0 0.0
      %2695 = vmatmul.mubr.f32.gmra.mrb[0].mxu0 %v483
      %v2696 = vpop.f32.mrb[0].mxu0
      %v2697 = vadd.f32 0.0, %v2696
      %v2698 = vpop.f32.mrb[0].mxu0
      %2699 = vmatprep.mubr.f32.mxu0 0.0
      %2700 = vmatmul.mubr.f32.gmra.mrb[0].mxu0 %v485
      %v2701 = vpop.f32.mrb[0].mxu0
      %v2702 = vadd.f32 0.0, %v2701
      %v2703 = vpop.f32.mrb[0].mxu0
      %2704 = vmatprep.mubr.f32.mxu0 0.0
      %2705 = vmatmul.mubr.f32.gmra.mrb[0].mxu0 %v487
      %v2706 = vpop.f32.mrb[0].mxu0
      %v2707 = vadd.f32 0.0, %v2706
      %v2708 = vpop.f32.mrb[0].mxu0
      %2709 = vmatprep.mubr.f32.mxu0 0.0
      %2710 = vmatmul.mubr.f32.gmra.mrb[0].mxu0 %v489
      %v2711 = vpop.f32.mrb[0].mxu0
      %v2712 = vadd.f32 0.0, %v2711
      %v2713 = vpop.f32.mrb[0].mxu0
      %2714 = vmatprep.mubr.f32.mxu0 0.0
      %2715 = vmatmul.mubr.f32.gmra.mrb[0].mxu0 %v491
      %v2716 = vpop.f32.mrb[0].mxu0
      %v2717 = vadd.f32 0.0, %v2716
      %v2718 = vpop.f32.mrb[0].mxu0
      %2719 = vmatprep.mubr.f32.mxu0 0.0
      %2720 = vmatmul.mubr.f32.gmra.mrb[0].mxu0 %v1697
      %v2721 = vpop.f32.mrb[0].mxu0
      %v2722 = vadd.f32 0.0, %v2721
      %v2723 = vpop.f32.mrb[0].mxu0
      %2724 = vmatprep.mubr.f32.mxu0 0.0
      %2725 = vmatmul.mubr.f32.gmra.mrb[0].mxu0 %v1699
      %v2726 = vpop.f32.mrb[0].mxu0
      %v2727 = vadd.f32 0.0, %v2726
      %v2728 = vpop.f32.mrb[0].mxu0
      %2729 = vmatprep.mubr.f32.mxu0 0.0
      %2730 = vmatmul.mubr.f32.gmra.mrb[0].mxu0 %v2508
      %v2731 = vpop.f32.mrb[0].mxu0
      %v2732 = vadd.f32 0.0, %v2731
      %v2733 = vpop.f32.mrb[0].mxu0
      %2734 = vmatprep.mubr.f32.mxu0 0.0
      %2735 = vmatmul.mubr.f32.gmra.mrb[0].mxu0 %v2510
      %v2736 = vpop.f32.mrb[0].mxu0
      %v2737 = vadd.f32 0.0, %v2736
      %v2738 = vpop.f32.mrb[0].mxu0
      %2739 = vdwg.mxu0
      %v2740 = vadd.f32 %v2468, %v2582
      %v2741 = vadd.f32 %v2469, %v2587
      %v2742 = vadd.f32 %v2470, %v2592
      %v2743 = vadd.f32 %v2471, %v2597
      %v2744 = vadd.f32 %v2472, %v2602
      %v2745 = vadd.f32 %v2473, %v2607
      %v2746 = vadd.f32 %v2474, %v2612
      %v2747 = vadd.f32 %v2475, %v2617
      %v2748 = vadd.f32 %v2476, %v2622
      %v2749 = vadd.f32 %v2477, %v2627
      %v2750 = vadd.f32 %v2478, %v2632
      %v2751 = vadd.f32 %v2479, %v2637
      %v2752 = vadd.f32 %v2480, %v2642
      %v2753 = vadd.f32 %v2481, %v2647
      %v2754 = vadd.f32 %v2482, %v2652
      %v2755 = vadd.f32 %v2483, %v2657
      %v2756 = vadd.f32 %v2484, %v2662
      %v2757 = vadd.f32 %v2485, %v2667
      %v2758 = vadd.f32 %v2486, %v2672
      %v2759 = vadd.f32 %v2487, %v2677
      %v2760 = vadd.f32 %v2488, %v2682
      %v2761 = vadd.f32 %v2489, %v2687
      %v2762 = vadd.f32 %v2490, %v2692
      %v2763 = vadd.f32 %v2491, %v2697
      %v2764 = vadd.f32 %v2492, %v2702
      %v2765 = vadd.f32 %v2493, %v2707
      %v2766 = vadd.f32 %v2494, %v2712
      %v2767 = vadd.f32 %v2495, %v2717
      %v2768 = vadd.f32 %v2496, %v2722
      %v2769 = vadd.f32 %v2497, %v2727
      %v2770 = vadd.f32 %v2498, %v2732
      %v2771 = vadd.f32 %v2499, %v2737
      %v2772 = vrot.slane %v293, 2
      %v2773 = vrot.slane %v294, 2
      %v2774 = vsel %vm1014, %v2772, %v2773
      %v2775 = vrot.slane %v295, 2
      %v2776 = vsel %vm1014, %v2773, %v2775
      %s2777 = scalar_lea.vmem %s1, 32
      %v2778 = vld [vmem:[%s2777] sm:$0xf]
      %v2779 = vsel %vm428, %v2774, 0
      %v2781 = vsel %vm428, %v2776, 0
      %v2784 = vsel %vm493, %v2778, 0
      %2786 = vmatprep.subr.mxu0 0.0
      %2787 = vmatpush1.msra.mxu0 %v2784
      %2788 = vmatprep.subr.mxu0 0.0
      %2789 = vmatpush1.msra.mxu0 0.0
      %2790 = vmatprep.subr.mxu0 0.0
      %2791 = vmatpush1.msra.mxu0 0.0
      %2792 = vmatprep.subr.mxu0 0.0
      %2793 = vmatpush1.msra.mxu0 0.0
      %2794 = vmatprep.subr.mxu0 0.0
      %2795 = vmatpush1.msra.mxu0 0.0
      %2796 = vmatprep.subr.mxu0 0.0
      %2797 = vmatpush1.msra.mxu0 0.0
      %2798 = vmatprep.subr.mxu0 0.0
      %2799 = vmatpush1.msra.mxu0 0.0
      %2800 = vmatprep.subr.mxu0 0.0
      %2801 = vmatpush1.msra.mxu0 0.0
      %2802 = vmatprep.subr.mxu0 0.0
      %2803 = vmatpush1.msra.mxu0 0.0
      %2804 = vmatprep.subr.mxu0 0.0
      %2805 = vmatpush1.msra.mxu0 0.0
      %2806 = vmatprep.subr.mxu0 0.0
      %2807 = vmatpush1.msra.mxu0 0.0
      %2808 = vmatprep.subr.mxu0 0.0
      %2809 = vmatpush1.msra.mxu0 0.0
      %2810 = vmatprep.subr.mxu0 0.0
      %2811 = vmatpush1.msra.mxu0 0.0
      %2812 = vmatprep.subr.mxu0 0.0
      %2813 = vmatpush1.msra.mxu0 0.0
      %2814 = vmatprep.subr.mxu0 0.0
      %2815 = vmatpush1.msra.mxu0 0.0
      %2816 = vmatprep.subr.mxu0 0.0
      %2817 = vmatpush1.msra.mxu0 0.0
      %2818 = vmatprep.subr.mxu0 0.0
      %2819 = vmatpush1.msra.mxu0 0.0
      %2820 = vmatprep.subr.mxu0 0.0
      %2821 = vmatpush1.msra.mxu0 0.0
      %2822 = vmatprep.subr.mxu0 0.0
      %2823 = vmatpush1.msra.mxu0 0.0
      %2824 = vmatprep.subr.mxu0 0.0
      %2825 = vmatpush1.msra.mxu0 0.0
      %2826 = vmatprep.subr.mxu0 0.0
      %2827 = vmatpush1.msra.mxu0 0.0
      %2828 = vmatprep.subr.mxu0 0.0
      %2829 = vmatpush1.msra.mxu0 0.0
      %2830 = vmatprep.subr.mxu0 0.0
      %2831 = vmatpush1.msra.mxu0 0.0
      %2832 = vmatprep.subr.mxu0 0.0
      %2833 = vmatpush1.msra.mxu0 0.0
      %2834 = vmatprep.subr.mxu0 0.0
      %2835 = vmatpush1.msra.mxu0 0.0
      %2836 = vmatprep.subr.mxu0 0.0
      %2837 = vmatpush1.msra.mxu0 0.0
      %2838 = vmatprep.subr.mxu0 0.0
      %2839 = vmatpush1.msra.mxu0 0.0
      %2840 = vmatprep.subr.mxu0 0.0
      %2841 = vmatpush1.msra.mxu0 0.0
      %2842 = vmatprep.subr.mxu0 0.0
      %2843 = vmatpush1.msra.mxu0 0.0
      %2844 = vmatprep.subr.mxu0 0.0
      %2845 = vmatpush1.msra.mxu0 0.0
      %2846 = vmatprep.subr.mxu0 0.0
      %2847 = vmatpush1.msra.mxu0 0.0
      %2848 = vmatprep.subr.mxu0 0.0
      %2849 = vmatpush1.msra.mxu0 0.0
      %2850 = vmatprep.mubr.f32.mxu0 0.0
      %2851 = vmatmul.mubr.f32.gmra.mrb[0].mxu0 %v1105
      %v2852 = vpop.f32.mrb[0].mxu0
      %v2853 = vadd.f32 0.0, %v2852
      %v2854 = vpop.f32.mrb[0].mxu0
      %2855 = vmatprep.mubr.f32.mxu0 0.0
      %2856 = vmatmul.mubr.f32.gmra.mrb[0].mxu0 %v1107
      %v2857 = vpop.f32.mrb[0].mxu0
      %v2858 = vadd.f32 0.0, %v2857
      %v2859 = vpop.f32.mrb[0].mxu0
      %2860 = vmatprep.mubr.f32.mxu0 0.0
      %2861 = vmatmul.mubr.f32.gmra.mrb[0].mxu0 %v1109
      %v2862 = vpop.f32.mrb[0].mxu0
      %v2863 = vadd.f32 0.0, %v2862
      %v2864 = vpop.f32.mrb[0].mxu0
      %2865 = vmatprep.mubr.f32.mxu0 0.0
      %2866 = vmatmul.mubr.f32.gmra.mrb[0].mxu0 %v1111
      %v2867 = vpop.f32.mrb[0].mxu0
      %v2868 = vadd.f32 0.0, %v2867
      %v2869 = vpop.f32.mrb[0].mxu0
      %2870 = vmatprep.mubr.f32.mxu0 0.0
      %2871 = vmatmul.mubr.f32.gmra.mrb[0].mxu0 %v1113
      %v2872 = vpop.f32.mrb[0].mxu0
      %v2873 = vadd.f32 0.0, %v2872
      %v2874 = vpop.f32.mrb[0].mxu0
      %2875 = vmatprep.mubr.f32.mxu0 0.0
      %2876 = vmatmul.mubr.f32.gmra.mrb[0].mxu0 %v1115
      %v2877 = vpop.f32.mrb[0].mxu0
      %v2878 = vadd.f32 0.0, %v2877
      %v2879 = vpop.f32.mrb[0].mxu0
      %2880 = vmatprep.mubr.f32.mxu0 0.0
      %2881 = vmatmul.mubr.f32.gmra.mrb[0].mxu0 %v1117
      %v2882 = vpop.f32.mrb[0].mxu0
      %v2883 = vadd.f32 0.0, %v2882
      %v2884 = vpop.f32.mrb[0].mxu0
      %2885 = vmatprep.mubr.f32.mxu0 0.0
      %2886 = vmatmul.mubr.f32.gmra.mrb[0].mxu0 %v1119
      %v2887 = vpop.f32.mrb[0].mxu0
      %v2888 = vadd.f32 0.0, %v2887
      %v2889 = vpop.f32.mrb[0].mxu0
      %2890 = vmatprep.mubr.f32.mxu0 0.0
      %2891 = vmatmul.mubr.f32.gmra.mrb[0].mxu0 %v1121
      %v2892 = vpop.f32.mrb[0].mxu0
      %v2893 = vadd.f32 0.0, %v2892
      %v2894 = vpop.f32.mrb[0].mxu0
      %2895 = vmatprep.mubr.f32.mxu0 0.0
      %2896 = vmatmul.mubr.f32.gmra.mrb[0].mxu0 %v1123
      %v2897 = vpop.f32.mrb[0].mxu0
      %v2898 = vadd.f32 0.0, %v2897
      %v2899 = vpop.f32.mrb[0].mxu0
      %2900 = vmatprep.mubr.f32.mxu0 0.0
      %2901 = vmatmul.mubr.f32.gmra.mrb[0].mxu0 %v1125
      %v2902 = vpop.f32.mrb[0].mxu0
      %v2903 = vadd.f32 0.0, %v2902
      %v2904 = vpop.f32.mrb[0].mxu0
      %2905 = vmatprep.mubr.f32.mxu0 0.0
      %2906 = vmatmul.mubr.f32.gmra.mrb[0].mxu0 %v1127
      %v2907 = vpop.f32.mrb[0].mxu0
      %v2908 = vadd.f32 0.0, %v2907
      %v2909 = vpop.f32.mrb[0].mxu0
      %2910 = vmatprep.mubr.f32.mxu0 0.0
      %2911 = vmatmul.mubr.f32.gmra.mrb[0].mxu0 %v1129
      %v2912 = vpop.f32.mrb[0].mxu0
      %v2913 = vadd.f32 0.0, %v2912
      %v2914 = vpop.f32.mrb[0].mxu0
      %2915 = vmatprep.mubr.f32.mxu0 0.0
      %2916 = vmatmul.mubr.f32.gmra.mrb[0].mxu0 %v1131
      %v2917 = vpop.f32.mrb[0].mxu0
      %v2918 = vadd.f32 0.0, %v2917
      %v2919 = vpop.f32.mrb[0].mxu0
      %2920 = vmatprep.mubr.f32.mxu0 0.0
      %2921 = vmatmul.mubr.f32.gmra.mrb[0].mxu0 %v1133
      %v2922 = vpop.f32.mrb[0].mxu0
      %v2923 = vadd.f32 0.0, %v2922
      %v2924 = vpop.f32.mrb[0].mxu0
      %2925 = vmatprep.mubr.f32.mxu0 0.0
      %2926 = vmatmul.mubr.f32.gmra.mrb[0].mxu0 %v1135
      %v2927 = vpop.f32.mrb[0].mxu0
      %v2928 = vadd.f32 0.0, %v2927
      %v2929 = vpop.f32.mrb[0].mxu0
      %2930 = vmatprep.mubr.f32.mxu0 0.0
      %2931 = vmatmul.mubr.f32.gmra.mrb[0].mxu0 %v1137
      %v2932 = vpop.f32.mrb[0].mxu0
      %v2933 = vadd.f32 0.0, %v2932
      %v2934 = vpop.f32.mrb[0].mxu0
      %2935 = vmatprep.mubr.f32.mxu0 0.0
      %2936 = vmatmul.mubr.f32.gmra.mrb[0].mxu0 %v1139
      %v2937 = vpop.f32.mrb[0].mxu0
      %v2938 = vadd.f32 0.0, %v2937
      %v2939 = vpop.f32.mrb[0].mxu0
      %2940 = vmatprep.mubr.f32.mxu0 0.0
      %2941 = vmatmul.mubr.f32.gmra.mrb[0].mxu0 %v1141
      %v2942 = vpop.f32.mrb[0].mxu0
      %v2943 = vadd.f32 0.0, %v2942
      %v2944 = vpop.f32.mrb[0].mxu0
      %2945 = vmatprep.mubr.f32.mxu0 0.0
      %2946 = vmatmul.mubr.f32.gmra.mrb[0].mxu0 %v1143
      %v2947 = vpop.f32.mrb[0].mxu0
      %v2948 = vadd.f32 0.0, %v2947
      %v2949 = vpop.f32.mrb[0].mxu0
      %2950 = vmatprep.mubr.f32.mxu0 0.0
      %2951 = vmatmul.mubr.f32.gmra.mrb[0].mxu0 %v1145
      %v2952 = vpop.f32.mrb[0].mxu0
      %v2953 = vadd.f32 0.0, %v2952
      %v2954 = vpop.f32.mrb[0].mxu0
      %2955 = vmatprep.mubr.f32.mxu0 0.0
      %2956 = vmatmul.mubr.f32.gmra.mrb[0].mxu0 %v1147
      %v2957 = vpop.f32.mrb[0].mxu0
      %v2958 = vadd.f32 0.0, %v2957
      %v2959 = vpop.f32.mrb[0].mxu0
      %2960 = vmatprep.mubr.f32.mxu0 0.0
      %2961 = vmatmul.mubr.f32.gmra.mrb[0].mxu0 %v1149
      %v2962 = vpop.f32.mrb[0].mxu0
      %v2963 = vadd.f32 0.0, %v2962
      %v2964 = vpop.f32.mrb[0].mxu0
      %2965 = vmatprep.mubr.f32.mxu0 0.0
      %2966 = vmatmul.mubr.f32.gmra.mrb[0].mxu0 %v1151
      %v2967 = vpop.f32.mrb[0].mxu0
      %v2968 = vadd.f32 0.0, %v2967
      %v2969 = vpop.f32.mrb[0].mxu0
      %2970 = vmatprep.mubr.f32.mxu0 0.0
      %2971 = vmatmul.mubr.f32.gmra.mrb[0].mxu0 %v1153
      %v2972 = vpop.f32.mrb[0].mxu0
      %v2973 = vadd.f32 0.0, %v2972
      %v2974 = vpop.f32.mrb[0].mxu0
      %2975 = vmatprep.mubr.f32.mxu0 0.0
      %2976 = vmatmul.mubr.f32.gmra.mrb[0].mxu0 %v1155
      %v2977 = vpop.f32.mrb[0].mxu0
      %v2978 = vadd.f32 0.0, %v2977
      %v2979 = vpop.f32.mrb[0].mxu0
      %2980 = vmatprep.mubr.f32.mxu0 0.0
      %2981 = vmatmul.mubr.f32.gmra.mrb[0].mxu0 %v1157
      %v2982 = vpop.f32.mrb[0].mxu0
      %v2983 = vadd.f32 0.0, %v2982
      %v2984 = vpop.f32.mrb[0].mxu0
      %2985 = vmatprep.mubr.f32.mxu0 0.0
      %2986 = vmatmul.mubr.f32.gmra.mrb[0].mxu0 %v1159
      %v2987 = vpop.f32.mrb[0].mxu0
      %v2988 = vadd.f32 0.0, %v2987
      %v2989 = vpop.f32.mrb[0].mxu0
      %2990 = vmatprep.mubr.f32.mxu0 0.0
      %2991 = vmatmul.mubr.f32.gmra.mrb[0].mxu0 %v1968
      %v2992 = vpop.f32.mrb[0].mxu0
      %v2993 = vadd.f32 0.0, %v2992
      %v2994 = vpop.f32.mrb[0].mxu0
      %2995 = vmatprep.mubr.f32.mxu0 0.0
      %2996 = vmatmul.mubr.f32.gmra.mrb[0].mxu0 %v1970
      %v2997 = vpop.f32.mrb[0].mxu0
      %v2998 = vadd.f32 0.0, %v2997
      %v2999 = vpop.f32.mrb[0].mxu0
      %3000 = vmatprep.mubr.f32.mxu0 0.0
      %3001 = vmatmul.mubr.f32.gmra.mrb[0].mxu0 %v2779
      %v3002 = vpop.f32.mrb[0].mxu0
      %v3003 = vadd.f32 0.0, %v3002
      %v3004 = vpop.f32.mrb[0].mxu0
      %3005 = vmatprep.mubr.f32.mxu0 0.0
      %3006 = vmatmul.mubr.f32.gmra.mrb[0].mxu0 %v2781
      %v3007 = vpop.f32.mrb[0].mxu0
      %v3008 = vadd.f32 0.0, %v3007
      %v3009 = vpop.f32.mrb[0].mxu0
      %3010 = vdwg.mxu0
      %v3011 = vadd.f32 %v2740, %v2853
      %v3012 = vadd.f32 %v2741, %v2858
      %v3013 = vadd.f32 %v2742, %v2863
      %v3014 = vadd.f32 %v2743, %v2868
      %v3015 = vadd.f32 %v2744, %v2873
      %v3016 = vadd.f32 %v2745, %v2878
      %v3017 = vadd.f32 %v2746, %v2883
      %v3018 = vadd.f32 %v2747, %v2888
      %v3019 = vadd.f32 %v2748, %v2893
      %v3020 = vadd.f32 %v2749, %v2898
      %v3021 = vadd.f32 %v2750, %v2903
      %v3022 = vadd.f32 %v2751, %v2908
      %v3023 = vadd.f32 %v2752, %v2913
      %v3024 = vadd.f32 %v2753, %v2918
      %v3025 = vadd.f32 %v2754, %v2923
      %v3026 = vadd.f32 %v2755, %v2928
      %v3027 = vadd.f32 %v2756, %v2933
      %v3028 = vadd.f32 %v2757, %v2938
      %v3029 = vadd.f32 %v2758, %v2943
      %v3030 = vadd.f32 %v2759, %v2948
      %v3031 = vadd.f32 %v2760, %v2953
      %v3032 = vadd.f32 %v2761, %v2958
      %v3033 = vadd.f32 %v2762, %v2963
      %v3034 = vadd.f32 %v2763, %v2968
      %v3035 = vadd.f32 %v2764, %v2973
      %v3036 = vadd.f32 %v2765, %v2978
      %v3037 = vadd.f32 %v2766, %v2983
      %v3038 = vadd.f32 %v2767, %v2988
      %v3039 = vadd.f32 %v2768, %v2993
      %v3040 = vadd.f32 %v2769, %v2998
      %v3041 = vadd.f32 %v2770, %v3003
      %v3042 = vadd.f32 %v2771, %v3008
      %v3043 = vld [vmem:[%s2] sm:$0x1]
      %v3045 = vlaneseq
      %v3046 = vshrl.u32 %v3045, 7
      %v3047 = vsub.s32 0, %v3046
      %v3048 = vrot.slane %v3043, %v3047
      %v3050 = vadd.f32 %v3011, %v3048
      %v3051 = vadd.f32 %v3012, %v3048
      %v3052 = vadd.f32 %v3013, %v3048
      %v3053 = vadd.f32 %v3014, %v3048
      %v3054 = vadd.f32 %v3015, %v3048
      %v3055 = vadd.f32 %v3016, %v3048
      %v3056 = vadd.f32 %v3017, %v3048
      %v3057 = vadd.f32 %v3018, %v3048
      %v3058 = vadd.f32 %v3019, %v3048
      %v3059 = vadd.f32 %v3020, %v3048
      %v3060 = vadd.f32 %v3021, %v3048
      %v3061 = vadd.f32 %v3022, %v3048
      %v3062 = vadd.f32 %v3023, %v3048
      %v3063 = vadd.f32 %v3024, %v3048
      %v3064 = vadd.f32 %v3025, %v3048
      %v3065 = vadd.f32 %v3026, %v3048
      %v3066 = vadd.f32 %v3027, %v3048
      %v3067 = vadd.f32 %v3028, %v3048
      %v3068 = vadd.f32 %v3029, %v3048
      %v3069 = vadd.f32 %v3030, %v3048
      %v3070 = vadd.f32 %v3031, %v3048
      %v3071 = vadd.f32 %v3032, %v3048
      %v3072 = vadd.f32 %v3033, %v3048
      %v3073 = vadd.f32 %v3034, %v3048
      %v3074 = vadd.f32 %v3035, %v3048
      %v3075 = vadd.f32 %v3036, %v3048
      %v3076 = vadd.f32 %v3037, %v3048
      %v3077 = vadd.f32 %v3038, %v3048
      %v3078 = vadd.f32 %v3039, %v3048
      %v3079 = vadd.f32 %v3040, %v3048
      %v3080 = vadd.f32 %v3041, %v3048
      %v3081 = vadd.f32 %v3042, %v3048
      %v3082 = vmax.f32 %v3050, 0.0
      %v3083 = vmax.f32 %v3051, 0.0
      %v3084 = vmax.f32 %v3052, 0.0
      %v3085 = vmax.f32 %v3053, 0.0
      %v3086 = vmax.f32 %v3054, 0.0
      %v3087 = vmax.f32 %v3055, 0.0
      %v3088 = vmax.f32 %v3056, 0.0
      %v3089 = vmax.f32 %v3057, 0.0
      %v3090 = vmax.f32 %v3058, 0.0
      %v3091 = vmax.f32 %v3059, 0.0
      %v3092 = vmax.f32 %v3060, 0.0
      %v3093 = vmax.f32 %v3061, 0.0
      %v3094 = vmax.f32 %v3062, 0.0
      %v3095 = vmax.f32 %v3063, 0.0
      %v3096 = vmax.f32 %v3064, 0.0
      %v3097 = vmax.f32 %v3065, 0.0
      %v3098 = vmax.f32 %v3066, 0.0
      %v3099 = vmax.f32 %v3067, 0.0
      %v3100 = vmax.f32 %v3068, 0.0
      %v3101 = vmax.f32 %v3069, 0.0
      %v3102 = vmax.f32 %v3070, 0.0
      %v3103 = vmax.f32 %v3071, 0.0
      %v3104 = vmax.f32 %v3072, 0.0
      %v3105 = vmax.f32 %v3073, 0.0
      %v3106 = vmax.f32 %v3074, 0.0
      %v3107 = vmax.f32 %v3075, 0.0
      %v3108 = vmax.f32 %v3076, 0.0
      %v3109 = vmax.f32 %v3077, 0.0
      %v3110 = vmax.f32 %v3078, 0.0
      %v3111 = vmax.f32 %v3079, 0.0
      %v3112 = vmax.f32 %v3080, 0.0
      %v3113 = vmax.f32 %v3081, 0.0
      %vm3114 = vcmask 64512
      %3115 = vst.msk [vmem:[%s235] sm:$0xff] %vm3114, %v3082
      %3116 = vst.msk [vmem:[%s235 + $0x8] sm:$0xff] %vm3114, %v3083
      %3117 = vst.msk [vmem:[%s235 + $0x10] sm:$0xff] %vm3114, %v3084
      %3118 = vst.msk [vmem:[%s235 + $0x18] sm:$0xff] %vm3114, %v3085
      %3119 = vst.msk [vmem:[%s235 + $0x20] sm:$0xff] %vm3114, %v3086
      %3120 = vst.msk [vmem:[%s235 + $0x28] sm:$0xff] %vm3114, %v3087
      %3121 = vst.msk [vmem:[%s235 + $0x30] sm:$0xff] %vm3114, %v3088
      %3122 = vst.msk [vmem:[%s235 + $0x38] sm:$0xff] %vm3114, %v3089
      %3123 = vst.msk [vmem:[%s235 + $0x40] sm:$0xff] %vm3114, %v3090
      %3124 = vst.msk [vmem:[%s235 + $0x48] sm:$0xff] %vm3114, %v3091
      %3125 = vst.msk [vmem:[%s235 + $0x50] sm:$0xff] %vm3114, %v3092
      %3126 = vst.msk [vmem:[%s235 + $0x58] sm:$0xff] %vm3114, %v3093
      %3127 = vst.msk [vmem:[%s235 + $0x60] sm:$0xff] %vm3114, %v3094
      %3128 = vst.msk [vmem:[%s235 + $0x68] sm:$0xff] %vm3114, %v3095
      %3129 = vst.msk [vmem:[%s235 + $0x70] sm:$0xff] %vm3114, %v3096
      %3130 = vst.msk [vmem:[%s235 + $0x78] sm:$0xff] %vm3114, %v3097
      %3131 = vst.msk [vmem:[%s235 + $0x80] sm:$0xff] %vm3114, %v3098
      %3132 = vst.msk [vmem:[%s235 + $0x88] sm:$0xff] %vm3114, %v3099
      %3133 = vst.msk [vmem:[%s235 + $0x90] sm:$0xff] %vm3114, %v3100
      %3134 = vst.msk [vmem:[%s235 + $0x98] sm:$0xff] %vm3114, %v3101
      %3135 = vst.msk [vmem:[%s235 + $0xa0] sm:$0xff] %vm3114, %v3102
      %3136 = vst.msk [vmem:[%s235 + $0xa8] sm:$0xff] %vm3114, %v3103
      %3137 = vst.msk [vmem:[%s235 + $0xb0] sm:$0xff] %vm3114, %v3104
      %3138 = vst.msk [vmem:[%s235 + $0xb8] sm:$0xff] %vm3114, %v3105
      %3139 = vst.msk [vmem:[%s235 + $0xc0] sm:$0xff] %vm3114, %v3106
      %3140 = vst.msk [vmem:[%s235 + $0xc8] sm:$0xff] %vm3114, %v3107
      %3141 = vst.msk [vmem:[%s235 + $0xd0] sm:$0xff] %vm3114, %v3108
      %3142 = vst.msk [vmem:[%s235 + $0xd8] sm:$0xff] %vm3114, %v3109
      %3143 = vst.msk [vmem:[%s235 + $0xe0] sm:$0xff] %vm3114, %v3110
      %3144 = vst.msk [vmem:[%s235 + $0xe8] sm:$0xff] %vm3114, %v3111
      %3145 = vst.msk [vmem:[%s235 + $0xf0] sm:$0xff] %vm3114, %v3112
      %3146 = vst.msk [vmem:[%s235 + $0xf8] sm:$0xff] %vm3114, %v3113
      %v3147 = vsel %vm3114, %v3082, 0.0
      %v3148 = vsel %vm3114, %v3083, 0.0
      %v3149 = vadd.f32 %v3147, %v3148
      %v3150 = vsel %vm3114, %v3084, 0.0
      %v3151 = vadd.f32 %v3149, %v3150
      %v3152 = vsel %vm3114, %v3085, 0.0
      %v3153 = vadd.f32 %v3151, %v3152
      %v3154 = vsel %vm3114, %v3086, 0.0
      %v3155 = vadd.f32 %v3153, %v3154
      %v3156 = vsel %vm3114, %v3087, 0.0
      %v3157 = vadd.f32 %v3155, %v3156
      %v3158 = vsel %vm3114, %v3088, 0.0
      %v3159 = vadd.f32 %v3157, %v3158
      %v3160 = vsel %vm3114, %v3089, 0.0
      %v3161 = vadd.f32 %v3159, %v3160
      %v3162 = vsel %vm3114, %v3090, 0.0
      %v3163 = vadd.f32 %v3161, %v3162
      %v3164 = vsel %vm3114, %v3091, 0.0
      %v3165 = vadd.f32 %v3163, %v3164
      %v3166 = vsel %vm3114, %v3092, 0.0
      %v3167 = vadd.f32 %v3165, %v3166
      %v3168 = vsel %vm3114, %v3093, 0.0
      %v3169 = vadd.f32 %v3167, %v3168
      %v3170 = vsel %vm3114, %v3094, 0.0
      %v3171 = vadd.f32 %v3169, %v3170
      %v3172 = vsel %vm3114, %v3095, 0.0
      %v3173 = vadd.f32 %v3171, %v3172
      %v3174 = vsel %vm3114, %v3096, 0.0
      %v3175 = vadd.f32 %v3173, %v3174
      %v3176 = vsel %vm3114, %v3097, 0.0
      %v3177 = vadd.f32 %v3175, %v3176
      %v3178 = vsel %vm3114, %v3098, 0.0
      %v3179 = vadd.f32 %v3177, %v3178
      %v3180 = vsel %vm3114, %v3099, 0.0
      %v3181 = vadd.f32 %v3179, %v3180
      %v3182 = vsel %vm3114, %v3100, 0.0
      %v3183 = vadd.f32 %v3181, %v3182
      %v3184 = vsel %vm3114, %v3101, 0.0
      %v3185 = vadd.f32 %v3183, %v3184
      %v3186 = vsel %vm3114, %v3102, 0.0
      %v3187 = vadd.f32 %v3185, %v3186
      %v3188 = vsel %vm3114, %v3103, 0.0
      %v3189 = vadd.f32 %v3187, %v3188
      %v3190 = vsel %vm3114, %v3104, 0.0
      %v3191 = vadd.f32 %v3189, %v3190
      %v3192 = vsel %vm3114, %v3105, 0.0
      %v3193 = vadd.f32 %v3191, %v3192
      %v3194 = vsel %vm3114, %v3106, 0.0
      %v3195 = vadd.f32 %v3193, %v3194
      %v3196 = vsel %vm3114, %v3107, 0.0
      %v3197 = vadd.f32 %v3195, %v3196
      %v3198 = vsel %vm3114, %v3108, 0.0
      %v3199 = vadd.f32 %v3197, %v3198
      %v3200 = vsel %vm3114, %v3109, 0.0
      %v3201 = vadd.f32 %v3199, %v3200
      %v3202 = vsel %vm3114, %v3110, 0.0
      %v3203 = vadd.f32 %v3201, %v3202
      %v3204 = vsel %vm3114, %v3111, 0.0
      %v3205 = vadd.f32 %v3203, %v3204
      %v3206 = vsel %vm3114, %v3112, 0.0
      %v3207 = vadd.f32 %v3205, %v3206
      %v3208 = vsel %vm3114, %v3113, 0.0
      %v3209 = vadd.f32 %v3207, %v3208
      %v3210 = vrot.slane %v3209, 4
      %v3211 = vadd.f32 %v3209, %v3210
      %v3212 = vrot.slane %v3211, 2
      %v3213 = vadd.f32 %v3211, %v3212
      %v3214 = vrot.slane %v3213, 1
      %v3215 = vadd.f32 %v3213, %v3214
      %vm3216 = vcmask 57344
      %3217 = vst.msk [vmem:[%s238] sm:$0x1] %vm3216, %v3215
      %v3218 = vmul.f32 %v3082, %v3082
      %v3219 = vmul.f32 %v3083, %v3083
      %v3220 = vmul.f32 %v3084, %v3084
      %v3221 = vmul.f32 %v3085, %v3085
      %v3222 = vmul.f32 %v3086, %v3086
      %v3223 = vmul.f32 %v3087, %v3087
      %v3224 = vmul.f32 %v3088, %v3088
      %v3225 = vmul.f32 %v3089, %v3089
      %v3226 = vmul.f32 %v3090, %v3090
      %v3227 = vmul.f32 %v3091, %v3091
      %v3228 = vmul.f32 %v3092, %v3092
      %v3229 = vmul.f32 %v3093, %v3093
      %v3230 = vmul.f32 %v3094, %v3094
      %v3231 = vmul.f32 %v3095, %v3095
      %v3232 = vmul.f32 %v3096, %v3096
      %v3233 = vmul.f32 %v3097, %v3097
      %v3234 = vmul.f32 %v3098, %v3098
      %v3235 = vmul.f32 %v3099, %v3099
      %v3236 = vmul.f32 %v3100, %v3100
      %v3237 = vmul.f32 %v3101, %v3101
      %v3238 = vmul.f32 %v3102, %v3102
      %v3239 = vmul.f32 %v3103, %v3103
      %v3240 = vmul.f32 %v3104, %v3104
      %v3241 = vmul.f32 %v3105, %v3105
      %v3242 = vmul.f32 %v3106, %v3106
      %v3243 = vmul.f32 %v3107, %v3107
      %v3244 = vmul.f32 %v3108, %v3108
      %v3245 = vmul.f32 %v3109, %v3109
      %v3246 = vmul.f32 %v3110, %v3110
      %v3247 = vmul.f32 %v3111, %v3111
      %v3248 = vmul.f32 %v3112, %v3112
      %v3249 = vmul.f32 %v3113, %v3113
      %v3250 = vsel %vm3114, %v3218, 0.0
      %v3251 = vsel %vm3114, %v3219, 0.0
      %v3252 = vadd.f32 %v3250, %v3251
      %v3253 = vsel %vm3114, %v3220, 0.0
      %v3254 = vadd.f32 %v3252, %v3253
      %v3255 = vsel %vm3114, %v3221, 0.0
      %v3256 = vadd.f32 %v3254, %v3255
      %v3257 = vsel %vm3114, %v3222, 0.0
      %v3258 = vadd.f32 %v3256, %v3257
      %v3259 = vsel %vm3114, %v3223, 0.0
      %v3260 = vadd.f32 %v3258, %v3259
      %v3261 = vsel %vm3114, %v3224, 0.0
      %v3262 = vadd.f32 %v3260, %v3261
      %v3263 = vsel %vm3114, %v3225, 0.0
      %v3264 = vadd.f32 %v3262, %v3263
      %v3265 = vsel %vm3114, %v3226, 0.0
      %v3266 = vadd.f32 %v3264, %v3265
      %v3267 = vsel %vm3114, %v3227, 0.0
      %v3268 = vadd.f32 %v3266, %v3267
      %v3269 = vsel %vm3114, %v3228, 0.0
      %v3270 = vadd.f32 %v3268, %v3269
      %v3271 = vsel %vm3114, %v3229, 0.0
      %v3272 = vadd.f32 %v3270, %v3271
      %v3273 = vsel %vm3114, %v3230, 0.0
      %v3274 = vadd.f32 %v3272, %v3273
      %v3275 = vsel %vm3114, %v3231, 0.0
      %v3276 = vadd.f32 %v3274, %v3275
      %v3277 = vsel %vm3114, %v3232, 0.0
      %v3278 = vadd.f32 %v3276, %v3277
      %v3279 = vsel %vm3114, %v3233, 0.0
      %v3280 = vadd.f32 %v3278, %v3279
      %v3281 = vsel %vm3114, %v3234, 0.0
      %v3282 = vadd.f32 %v3280, %v3281
      %v3283 = vsel %vm3114, %v3235, 0.0
      %v3284 = vadd.f32 %v3282, %v3283
      %v3285 = vsel %vm3114, %v3236, 0.0
      %v3286 = vadd.f32 %v3284, %v3285
      %v3287 = vsel %vm3114, %v3237, 0.0
      %v3288 = vadd.f32 %v3286, %v3287
      %v3289 = vsel %vm3114, %v3238, 0.0
      %v3290 = vadd.f32 %v3288, %v3289
      %v3291 = vsel %vm3114, %v3239, 0.0
      %v3292 = vadd.f32 %v3290, %v3291
      %v3293 = vsel %vm3114, %v3240, 0.0
      %v3294 = vadd.f32 %v3292, %v3293
      %v3295 = vsel %vm3114, %v3241, 0.0
      %v3296 = vadd.f32 %v3294, %v3295
      %v3297 = vsel %vm3114, %v3242, 0.0
      %v3298 = vadd.f32 %v3296, %v3297
      %v3299 = vsel %vm3114, %v3243, 0.0
      %v3300 = vadd.f32 %v3298, %v3299
      %v3301 = vsel %vm3114, %v3244, 0.0
      %v3302 = vadd.f32 %v3300, %v3301
      %v3303 = vsel %vm3114, %v3245, 0.0
      %v3304 = vadd.f32 %v3302, %v3303
      %v3305 = vsel %vm3114, %v3246, 0.0
      %v3306 = vadd.f32 %v3304, %v3305
      %v3307 = vsel %vm3114, %v3247, 0.0
      %v3308 = vadd.f32 %v3306, %v3307
      %v3309 = vsel %vm3114, %v3248, 0.0
      %v3310 = vadd.f32 %v3308, %v3309
      %v3311 = vsel %vm3114, %v3249, 0.0
      %v3312 = vadd.f32 %v3310, %v3311
      %v3313 = vrot.slane %v3312, 4
      %v3314 = vadd.f32 %v3312, %v3313
      %v3315 = vrot.slane %v3314, 2
      %v3316 = vadd.f32 %v3314, %v3315
      %v3317 = vrot.slane %v3316, 1
      %v3318 = vadd.f32 %v3316, %v3317
      %3319 = vst.msk [vmem:[%s241] sm:$0x1] %vm3216, %v3318
      %p3320 = scmp.lt.s32.totalorder %s17, 1
      %s3321 = scalar_select %p3320, %s17, 1
      %s3322 = smul.addr %s3321, 32
      %s3323 = smul.addr %s3322, 8
      %s3324 = scalar_lea.vmem %s3, %s3323
      %p3325 = scmp.lt.s32.totalorder %s17, 1
      %s3326 = scalar_select %p3325, %s17, 1
      %s3327 = scalar_lea.vmem %s4, %s3326
      %p3328 = scmp.lt.s32.totalorder %s17, 1
      %s3329 = scalar_select %p3328, %s17, 1
      %s3330 = scalar_lea.vmem %s5, %s3329
      // Predicated region
      $region33: #{block_forward.7} parent=31 // pred_check
        %p3331 = pneg %p103
      $region34: #{block_forward.7} parent=31 // pred_check_branch
        %3333 = sbr.rel (%p3331) target = $region36
      $region35: #{block_forward.7} parent=31 // pred_region
        _
      $region36: #{block_forward.7} parent=31 // pred_fallthru
        _
      // Predicated region
      $region37: #{block_forward.7} parent=31 // pred_check
        %p3334 = pneg %p129
      $region38: #{block_forward.7} parent=31 // pred_check_branch
        %3336 = sbr.rel (%p3334) target = $region40
      $region39: #{block_forward.7} parent=31 // pred_region
        _
      $region40: #{block_forward.7} parent=31 // pred_fallthru
        _
      // Predicated region
      $region41: #{block_forward.7} parent=31 // pred_check
        %p3337 = pneg %p155
      $region42: #{block_forward.7} parent=31 // pred_check_branch
        %3339 = sbr.rel (%p3337) target = $region44
      $region43: #{block_forward.7} parent=31 // pred_region
        _
      $region44: #{block_forward.7} parent=31 // pred_fallthru
        _
    $region32: #{block_forward.7} parent=5 // pred_fallthru
      _
    %p3340 = scmp.le.s32.totalorder 2, %s12
    // Predicated region
    $region45: #{block_forward.7} parent=5 // pred_check
      %p3341 = pneg %p3340
    $region46: #{block_forward.7} parent=5 // pred_check_branch
      %3343 = sbr.rel (%p3341) target = $region48
    $region47: #{block_forward.7} parent=5 // pred_region
      %s3344 = ssub.s32 %s12, 2
      // Predicated region
      $region49: #{block_forward.7} parent=47 // pred_check
        %p3345 = pneg %p109
      $region50: #{block_forward.7} parent=47 // pred_check_branch
        %3347 = sbr.rel (%p3345) target = $region52
      $region51: #{block_forward.7} parent=47 // pred_region
        %p3348 = scmp.lt.s32.totalorder %s18, 1
        %s3349 = scalar_select %p3348, %s18, 1
        %s3350 = smul.addr %s3349, 32
        %s3351 = smul.addr %s3350, 8
        %s3352 = scalar_lea.vmem %s3, %s3351
      $region52: #{block_forward.7} parent=47 // pred_fallthru
        _
      // Predicated region
      $region53: #{block_forward.7} parent=47 // pred_check
        %p3353 = pneg %p135
      $region54: #{block_forward.7} parent=47 // pred_check_branch
        %3355 = sbr.rel (%p3353) target = $region56
      $region55: #{block_forward.7} parent=47 // pred_region
        %p3356 = scmp.lt.s32.totalorder %s18, 1
        %s3357 = scalar_select %p3356, %s18, 1
        %s3358 = scalar_lea.vmem %s4, %s3357
      $region56: #{block_forward.7} parent=47 // pred_fallthru
        _
      // Predicated region
      $region57: #{block_forward.7} parent=47 // pred_check
        %p3359 = pneg %p161
      $region58: #{block_forward.7} parent=47 // pred_check_branch
        %3361 = sbr.rel (%p3359) target = $region60
      $region59: #{block_forward.7} parent=47 // pred_region
        %p3362 = scmp.lt.s32.totalorder %s18, 1
        %s3363 = scalar_select %p3362, %s18, 1
        %s3364 = scalar_lea.vmem %s5, %s3363
      $region60: #{block_forward.7} parent=47 // pred_fallthru
        _
    $region48: #{block_forward.7} parent=5 // pred_fallthru
      _
  $region6: #{block_forward.7} parent=0 // loop_footer
    %s16 = sadd.s32 1, %s12
  $region7: #{block_forward.7} parent=0 // loop_footer_branch
    %11 = sbr.rel target = $region3
  $region8: #{block_forward.7} parent=0 // loop_exit
    _

// kernel: block_forward.9
$region0: #{block_forward.9}
  #allocation0 [shape = 'u32[]', space=smem, size = 0x4, offset = 0x4, fixed_abs, tag = 'smem constant byte address 0x4 - core index']
  #allocation1 [shape = 'u32[144,128]{1,0:T(1,128)}', space=vmem, size = 0x12000, scoped, tag = 'internal scratch']
  %s0 = inlined_call_operand.vmem [shape: f32[2,18,18,8], index: 0, kind: input, shape index: {}]
  %s1 = inlined_call_operand.vmem [shape: f32[9,8,8], index: 1, kind: input, shape index: {}]
  %s2 = inlined_call_operand.vmem [shape: f32[1,8], index: 2, kind: input, shape index: {}]
  %s3 = inlined_call_operand.vmem [shape: f32[2,16,16,8], index: 3, kind: output, shape index: {0}]
  %s4 = inlined_call_operand.vmem [shape: f32[2,1,8], index: 4, kind: output, shape index: {1}]
  %s5 = inlined_call_operand.vmem [shape: f32[2,1,8], index: 5, kind: output, shape index: {2}]
  %6 = xla_tuple %s3, %s4, %s5
  %s7 = sld [smem:[#allocation0]]
  $region61: #{block_forward.9} parent=0
    _
  %s9 = ssub.s32 1, %s7
  %s10 = scalar_select 0, %s9, %s7
  loop: start=0, step=1, limit=4
  $region2: #{block_forward.9} parent=0 // loop_pre_header
    _
  $region3: #{block_forward.9} parent=0 // loop_header
    %s12 = sphi 0, %s16
    %p13 = scmp.ge.s32.totalorder %s12, 4
    %s22 = sphi 0, %s24
    %s25 = sphi 0, %s22
    %s26 = sphi 0, %s25
    %s42 = sphi 0, %s26
    %s46 = sphi 0, %s46
    %s48 = sphi 0, %s46
    %s49 = sphi 0, %s48
    %s63 = sphi 0, %s49
    %s67 = sphi 0, %s67
    %s69 = sphi 0, %s67
    %s70 = sphi 0, %s69
    %s84 = sphi 0, %s70
    %s90 = sphi 0, %s92
    %s93 = sphi 0, %s90
    %s94 = sphi 0, %s93
    %s110 = sphi 0, %s94
    %s116 = sphi 0, %s118
    %s119 = sphi 0, %s116
    %s120 = sphi 0, %s119
    %s136 = sphi 0, %s120
    %s142 = sphi 0, %s144
    %s145 = sphi 0, %s142
    %s146 = sphi 0, %s145
    %s162 = sphi 0, %s146
  $region4: #{block_forward.9} parent=0 // loop_header_branch
    %15 = sbr.rel (%p13) target = $region8
  $region5: #{block_forward.9} parent=0 // loop_body
    %s17 = ssub.s32 %s12, 1
    %s18 = ssub.s32 %s12, 2
    %s19 = sadd.s32 %s12, 1
    %s20 = ssub.s32 %s12, %s19
    %p21 = scmp.eq.s32.totalorder %s20, 0
    %s23 = sadd.s32 %s22, 1
    %s24 = scalar_select %p21, %s22, %s23
    %p27 = pneg %p21
    %p28 = scmp.eq.s32.totalorder %s12, 1
    %p29 = por %p27, %p28
    %p30 = scmp.ne.s32.totalorder %s22, %s25
    %p31 = scmp.eq.s32.totalorder %s12, 0
    %p32 = por %p30, %p31
    %p33 = scmp.ne.s32.totalorder %s22, %s25
    %p34 = scmp.eq.s32.totalorder %s17, 1
    %p35 = por %p33, %p34
    %p36 = scmp.ne.s32.totalorder %s25, %s26
    %p37 = scmp.eq.s32.totalorder %s17, 0
    %p38 = por %p36, %p37
    %p39 = scmp.ne.s32.totalorder %s25, %s26
    %p40 = scmp.eq.s32.totalorder %s18, 1
    %p41 = por %p39, %p40
    %p43 = scmp.ne.s32.totalorder %s26, %s42
    %p44 = scmp.eq.s32.totalorder %s18, 0
    %p45 = por %p43, %p44
    %s47 = sadd.s32 %s46, 1
    %p50 = scmp.eq.s32.totalorder %s12, 1
    %p51 = scmp.ne.s32.totalorder %s46, %s48
    %p52 = scmp.eq.s32.totalorder %s12, 0
    %p53 = por %p51, %p52
    %p54 = scmp.ne.s32.totalorder %s46, %s48
    %p55 = scmp.eq.s32.totalorder %s17, 1
    %p56 = por %p54, %p55
    %p57 = scmp.ne.s32.totalorder %s48, %s49
    %p58 = scmp.eq.s32.totalorder %s17, 0
    %p59 = por %p57, %p58
    %p60 = scmp.ne.s32.totalorder %s48, %s49
    %p61 = scmp.eq.s32.totalorder %s18, 1
    %p62 = por %p60, %p61
    %p64 = scmp.ne.s32.totalorder %s49, %s63
    %p65 = scmp.eq.s32.totalorder %s18, 0
    %p66 = por %p64, %p65
    %s68 = sadd.s32 %s67, 1
    %p71 = scmp.eq.s32.totalorder %s12, 1
    %p72 = scmp.ne.s32.totalorder %s67, %s69
    %p73 = scmp.eq.s32.totalorder %s12, 0
    %p74 = por %p72, %p73
    %p75 = scmp.ne.s32.totalorder %s67, %s69
    %p76 = scmp.eq.s32.totalorder %s17, 1
    %p77 = por %p75, %p76
    %p78 = scmp.ne.s32.totalorder %s69, %s70
    %p79 = scmp.eq.s32.totalorder %s17, 0
    %p80 = por %p78, %p79
    %p81 = scmp.ne.s32.totalorder %s69, %s70
    %p82 = scmp.eq.s32.totalorder %s18, 1
    %p83 = por %p81, %p82
    %p85 = scmp.ne.s32.totalorder %s70, %s84
    %p86 = scmp.eq.s32.totalorder %s18, 0
    %p87 = por %p85, %p86
    %s88 = ssub.s32 %s12, %s19
    %p89 = scmp.eq.s32.totalorder %s88, 0
    %s91 = sadd.s32 %s90, 1
    %s92 = scalar_select %p89, %s90, %s91
    %p95 = pneg %p89
    %p96 = scmp.eq.s32.totalorder %s12, 1
    %p97 = por %p95, %p96
    %p98 = scmp.ne.s32.totalorder %s90, %s93
    %p99 = scmp.eq.s32.totalorder %s12, 0
    %p100 = por %p98, %p99
    %p101 = scmp.ne.s32.totalorder %s90, %s93
    %p102 = scmp.eq.s32.totalorder %s17, 1
    %p103 = por %p101, %p102
    %p104 = scmp.ne.s32.totalorder %s93, %s94
    %p105 = scmp.eq.s32.totalorder %s17, 0
    %p106 = por %p104, %p105
    %p107 = scmp.ne.s32.totalorder %s93, %s94
    %p108 = scmp.eq.s32.totalorder %s18, 1
    %p109 = por %p107, %p108
    %p111 = scmp.ne.s32.totalorder %s94, %s110
    %p112 = scmp.eq.s32.totalorder %s18, 0
    %p113 = por %p111, %p112
    %s114 = ssub.s32 %s12, %s19
    %p115 = scmp.eq.s32.totalorder %s114, 0
    %s117 = sadd.s32 %s116, 1
    %s118 = scalar_select %p115, %s116, %s117
    %p121 = pneg %p115
    %p122 = scmp.eq.s32.totalorder %s12, 1
    %p123 = por %p121, %p122
    %p124 = scmp.ne.s32.totalorder %s116, %s119
    %p125 = scmp.eq.s32.totalorder %s12, 0
    %p126 = por %p124, %p125
    %p127 = scmp.ne.s32.totalorder %s116, %s119
    %p128 = scmp.eq.s32.totalorder %s17, 1
    %p129 = por %p127, %p128
    %p130 = scmp.ne.s32.totalorder %s119, %s120
    %p131 = scmp.eq.s32.totalorder %s17, 0
    %p132 = por %p130, %p131
    %p133 = scmp.ne.s32.totalorder %s119, %s120
    %p134 = scmp.eq.s32.totalorder %s18, 1
    %p135 = por %p133, %p134
    %p137 = scmp.ne.s32.totalorder %s120, %s136
    %p138 = scmp.eq.s32.totalorder %s18, 0
    %p139 = por %p137, %p138
    %s140 = ssub.s32 %s12, %s19
    %p141 = scmp.eq.s32.totalorder %s140, 0
    %s143 = sadd.s32 %s142, 1
    %s144 = scalar_select %p141, %s142, %s143
    %p147 = pneg %p141
    %p148 = scmp.eq.s32.totalorder %s12, 1
    %p149 = por %p147, %p148
    %p150 = scmp.ne.s32.totalorder %s142, %s145
    %p151 = scmp.eq.s32.totalorder %s12, 0
    %p152 = por %p150, %p151
    %p153 = scmp.ne.s32.totalorder %s142, %s145
    %p154 = scmp.eq.s32.totalorder %s17, 1
    %p155 = por %p153, %p154
    %p156 = scmp.ne.s32.totalorder %s145, %s146
    %p157 = scmp.eq.s32.totalorder %s17, 0
    %p158 = por %p156, %p157
    %p159 = scmp.ne.s32.totalorder %s145, %s146
    %p160 = scmp.eq.s32.totalorder %s18, 1
    %p161 = por %p159, %p160
    %p163 = scmp.ne.s32.totalorder %s146, %s162
    %p164 = scmp.eq.s32.totalorder %s18, 0
    %p165 = por %p163, %p164
    %p166 = scmp.le.s32.totalorder 1, %s12
    %p167 = scmp.lt.s32.totalorder %s12, 3
    %p168 = pnand %p166, %p167
    %p169 = pneg %p168
    // Predicated region
    $region9: #{block_forward.9} parent=5 // pred_check
      _
    $region10: #{block_forward.9} parent=5 // pred_check_branch
      %171 = sbr.rel (%p168) target = $region12
    $region11: #{block_forward.9} parent=5 // pred_region
      %s172 = ssub.s32 %s12, 1
      // Predicated region
      $region13: #{block_forward.9} parent=11 // pred_check
        %p173 = pneg %p59
      $region14: #{block_forward.9} parent=11 // pred_check_branch
        %175 = sbr.rel (%p173) target = $region16
      $region15: #{block_forward.9} parent=11 // pred_region
        _
      $region16: #{block_forward.9} parent=11 // pred_fallthru
        _
      // Predicated region
      $region17: #{block_forward.9} parent=11 // pred_check
        %p176 = pneg %p80
      $region18: #{block_forward.9} parent=11 // pred_check_branch
        %178 = sbr.rel (%p176) target = $region20
      $region19: #{block_forward.9} parent=11 // pred_region
        _
      $region20: #{block_forward.9} parent=11 // pred_fallthru
        _
    $region12: #{block_forward.9} parent=5 // pred_fallthru
      _
    %p179 = scmp.lt.s32.totalorder %s12, 2
    // Predicated region
    $region21: #{block_forward.9} parent=5 // pred_check
      %p180 = pneg %p179
    $region22: #{block_forward.9} parent=5 // pred_check_branch
      %182 = sbr.rel (%p180) target = $region24
    $region23: #{block_forward.9} parent=5 // pred_region
      // Predicated region
      $region25: #{block_forward.9} parent=23 // pred_check
        %p183 = pneg %p32
      $region26: #{block_forward.9} parent=23 // pred_check_branch
        %185 = sbr.rel (%p183) target = $region28
      $region27: #{block_forward.9} parent=23 // pred_region
        %p186 = scmp.lt.s32.totalorder %s12, 1
        %s187 = scalar_select %p186, %s12, 1
        %s188 = smul.addr %s187, 54
        %s189 = smul.addr %s188, 8
        %s190 = scalar_lea.vmem %s0, %s189
      $region28: #{block_forward.9} parent=23 // pred_fallthru
        _
    $region24: #{block_forward.9} parent=5 // pred_fallthru
      _
    %p191 = scmp.le.s32.totalorder 1, %s12
    %p192 = scmp.lt.s32.totalorder %s12, 3
    %p193 = pnand %p191, %p192
    %p194 = pneg %p193
    // Predicated region
    $region29: #{block_forward.9} parent=5 // pred_check
      _
    $region30: #{block_forward.9} parent=5 // pred_check_branch
      %196 = sbr.rel (%p193) target = $region32
    $region31: #{block_forward.9} parent=5 // pred_region
      %s197 = ssub.s32 %s12, 1
      %p198 = scmp.lt.s32.totalorder %s17, 1
      %s199 = scalar_select %p198, %s17, 1
      %s200 = smul.addr %s199, 54
      %s201 = smul.addr %s200, 8
      %s202 = scalar_lea.vmem %s0, %s201
      %p203 = pneg %p38
      %p204 = pneg %p35
      %p205 = pneg %p59
      %p206 = pneg %p56
      %p207 = pneg %p80
      %p208 = pneg %p77
      %p209 = pneg %p106
      %p210 = pneg %p103
      %p211 = scmp.lt.s32.totalorder %s17, 1
      %s212 = scalar_select %p211, %s17, 1
      %s213 = smul.addr %s212, 32
      %s214 = smul.addr %s213, 8
      %s215 = scalar_lea.vmem %s3, %s214
      %p216 = pneg %p132
      %p217 = pneg %p129
      %p218 = scmp.lt.s32.totalorder %s17, 1
      %s219 = scalar_select %p218, %s17, 1
      %s220 = scalar_lea.vmem %s4, %s219
      %p221 = pneg %p158
      %p222 = pneg %p155
      %p223 = scmp.lt.s32.totalorder %s17, 1
      %s224 = scalar_select %p223, %s17, 1
      %s225 = scalar_lea.vmem %s5, %s224
      %p226 = scmp.lt.s32.totalorder %s17, 1
      %s227 = scalar_select %p226, %s17, 1
      %s228 = smul.addr %s227, 54
      %s229 = smul.addr %s228, 8
      %s230 = scalar_lea.vmem %s0, %s229
      %p231 = scmp.lt.s32.totalorder %s17, 1
      %s232 = scalar_select %p231, %s17, 1
      %s233 = smul.addr %s232, 32
      %s234 = smul.addr %s233, 8
      %s235 = scalar_lea.vmem %s3, %s234
      %p236 = scmp.lt.s32.totalorder %s17, 1
      %s237 = scalar_select %p236, %s17, 1
      %s238 = scalar_lea.vmem %s4, %s237
      %p239 = scmp.lt.s32.totalorder %s17, 1
      %s240 = scalar_select %p239, %s17, 1
      %s241 = scalar_lea.vmem %s5, %s240
      %v242 = vld [vmem:[%s230] sm:$0xff]
      %v243 = vld [vmem:[%s230 + $0x8] sm:$0xff]
      %v244 = vld [vmem:[%s230 + $0x10] sm:$0x3]
      %v245 = vld [vmem:[%s230 + $0x18] sm:$0xff]
      %v246 = vld [vmem:[%s230 + $0x20] sm:$0xff]
      %v247 = vld [vmem:[%s230 + $0x28] sm:$0x3]
      %v248 = vld [vmem:[%s230 + $0x30] sm:$0xff]
      %v249 = vld [vmem:[%s230 + $0x38] sm:$0xff]
      %v250 = vld [vmem:[%s230 + $0x40] sm:$0x3]
      %v251 = vld [vmem:[%s230 + $0x48] sm:$0xff]
      %v252 = vld [vmem:[%s230 + $0x50] sm:$0xff]
      %v253 = vld [vmem:[%s230 + $0x58] sm:$0x3]
      %v254 = vld [vmem:[%s230 + $0x60] sm:$0xff]
      %v255 = vld [vmem:[%s230 + $0x68] sm:$0xff]
      %v256 = vld [vmem:[%s230 + $0x70] sm:$0x3]
      %v257 = vld [vmem:[%s230 + $0x78] sm:$0xff]
      %v258 = vld [vmem:[%s230 + $0x80] sm:$0xff]
      %v259 = vld [vmem:[%s230 + $0x88] sm:$0x3]
      %v260 = vld [vmem:[%s230 + $0x90] sm:$0xff]
      %v261 = vld [vmem:[%s230 + $0x98] sm:$0xff]
      %v262 = vld [vmem:[%s230 + $0xa0] sm:$0x3]
      %v263 = vld [vmem:[%s230 + $0xa8] sm:$0xff]
      %v264 = vld [vmem:[%s230 + $0xb0] sm:$0xff]
      %v265 = vld [vmem:[%s230 + $0xb8] sm:$0x3]
      %v266 = vld [vmem:[%s230 + $0xc0] sm:$0xff]
      %v267 = vld [vmem:[%s230 + $0xc8] sm:$0xff]
      %v268 = vld [vmem:[%s230 + $0xd0] sm:$0x3]
      %v269 = vld [vmem:[%s230 + $0xd8] sm:$0xff]
      %v270 = vld [vmem:[%s230 + $0xe0] sm:$0xff]
      %v271 = vld [vmem:[%s230 + $0xe8] sm:$0x3]
      %v272 = vld [vmem:[%s230 + $0xf0] sm:$0xff]
      %v273 = vld [vmem:[%s230 + $0xf8] sm:$0xff]
      %v274 = vld [vmem:[%s230 + $0x100] sm:$0x3]
      %v275 = vld [vmem:[%s230 + $0x108] sm:$0xff]
      %v276 = vld [vmem:[%s230 + $0x110] sm:$0xff]
      %v277 = vld [vmem:[%s230 + $0x118] sm:$0x3]
      %v278 = vld [vmem:[%s230 + $0x120] sm:$0xff]
      %v279 = vld [vmem:[%s230 + $0x128] sm:$0xff]
      %v280 = vld [vmem:[%s230 + $0x130] sm:$0x3]
      %v281 = vld [vmem:[%s230 + $0x138] sm:$0xff]
      %v282 = vld [vmem:[%s230 + $0x140] sm:$0xff]
      %v283 = vld [vmem:[%s230 + $0x148] sm:$0x3]
      %v284 = vld [vmem:[%s230 + $0x150] sm:$0xff]
      %v285 = vld [vmem:[%s230 + $0x158] sm:$0xff]
      %v286 = vld [vmem:[%s230 + $0x160] sm:$0x3]
      %v287 = vld [vmem:[%s230 + $0x168] sm:$0xff]
      %v288 = vld [vmem:[%s230 + $0x170] sm:$0xff]
      %v289 = vld [vmem:[%s230 + $0x178] sm:$0x3]
      %v290 = vld [vmem:[%s230 + $0x180] sm:$0xff]
      %v291 = vld [vmem:[%s230 + $0x188] sm:$0xff]
      %v292 = vld [vmem:[%s230 + $0x190] sm:$0x3]
      %v293 = vld [vmem:[%s230 + $0x198] sm:$0xff]
      %v294 = vld [vmem:[%s230 + $0x1a0] sm:$0xff]
      %v295 = vld [vmem:[%s230 + $0x1a8] sm:$0x3]
      %v296 = vld [vmem:[%s1] sm:$0xff]
      %vm345 = vcmask 1046528
      %v346 = vrot.slane %v242, 1
      %v347 = vrot.slane %v243, 1
      %v348 = vsel %vm345, %v346, %v347
      %v349 = vrot.slane %v244, 1
      %v350 = vsel %vm345, %v347, %v349
      %v351 = vrot.slane %v245, 1
      %v352 = vrot.slane %v246, 1
      %v353 = vsel %vm345, %v351, %v352
      %v354 = vrot.slane %v247, 1
      %v355 = vsel %vm345, %v352, %v354
      %v356 = vrot.slane %v248, 1
      %v357 = vrot.slane %v249, 1
      %v358 = vsel %vm345, %v356, %v357
      %v359 = vrot.slane %v250, 1
      %v360 = vsel %vm345, %v357, %v359
      %v361 = vrot.slane %v251, 1
      %v362 = vrot.slane %v252, 1
      %v363 = vsel %vm345, %v361, %v362
      %v364 = vrot.slane %v253, 1
      %v365 = vsel %vm345, %v362, %v364
      %v366 = vrot.slane %v254, 1
      %v367 = vrot.slane %v255, 1
      %v368 = vsel %vm345, %v366, %v367
      %v369 = vrot.slane %v256, 1
      %v370 = vsel %vm345, %v367, %v369
      %v371 = vrot.slane %v257, 1
      %v372 = vrot.slane %v258, 1
      %v373 = vsel %vm345, %v371, %v372
      %v374 = vrot.slane %v259, 1
      %v375 = vsel %vm345, %v372, %v374
      %v376 = vrot.slane %v260, 1
      %v377 = vrot.slane %v261, 1
      %v378 = vsel %vm345, %v376, %v377
      %v379 = vrot.slane %v262, 1
      %v380 = vsel %vm345, %v377, %v379
      %v381 = vrot.slane %v263, 1
      %v382 = vrot.slane %v264, 1
      %v383 = vsel %vm345, %v381, %v382
      %v384 = vrot.slane %v265, 1
      %v385 = vsel %vm345, %v382, %v384
      %v386 = vrot.slane %v266, 1
      %v387 = vrot.slane %v267, 1
      %v388 = vsel %vm345, %v386, %v387
      %v389 = vrot.slane %v268, 1
      %v390 = vsel %vm345, %v387, %v389
      %v391 = vrot.slane %v269, 1
      %v392 = vrot.slane %v270, 1
      %v393 = vsel %vm345, %v391, %v392
      %v394 = vrot.slane %v271, 1
      %v395 = vsel %vm345, %v392, %v394
      %v396 = vrot.slane %v272, 1
      %v397 = vrot.slane %v273, 1
      %v398 = vsel %vm345, %v396, %v397
      %v399 = vrot.slane %v274, 1
      %v400 = vsel %vm345, %v397, %v399
      %v401 = vrot.slane %v275, 1
      %v402 = vrot.slane %v276, 1
      %v403 = vsel %vm345, %v401, %v402
      %v404 = vrot.slane %v277, 1
      %v405 = vsel %vm345, %v402, %v404
      %v406 = vrot.slane %v278, 1
      %v407 = vrot.slane %v279, 1
      %v408 = vsel %vm345, %v406, %v407
      %v409 = vrot.slane %v280, 1
      %v410 = vsel %vm345, %v407, %v409
      %v411 = vrot.slane %v281, 1
      %v412 = vrot.slane %v282, 1
      %v413 = vsel %vm345, %v411, %v412
      %v414 = vrot.slane %v283, 1
      %v415 = vsel %vm345, %v412, %v414
      %v416 = vrot.slane %v284, 1
      %v417 = vrot.slane %v285, 1
      %v418 = vsel %vm345, %v416, %v417
      %v419 = vrot.slane %v286, 1
      %v420 = vsel %vm345, %v417, %v419
      %v421 = vrot.slane %v287, 1
      %v422 = vrot.slane %v288, 1
      %v423 = vsel %vm345, %v421, %v422
      %v424 = vrot.slane %v289, 1
      %v425 = vsel %vm345, %v422, %v424
      %s426 = scalar_lea.vmem %s1, 8
      %v427 = vld [vmem:[%s426] sm:$0xff]
      %vm428 = vcmask 64512
      %v429 = vsel %vm428, %v348, 0
      %v431 = vsel %vm428, %v350, 0
      %v433 = vsel %vm428, %v353, 0
      %v435 = vsel %vm428, %v355, 0
      %v437 = vsel %vm428, %v358, 0
      %v439 = vsel %vm428, %v360, 0
      %v441 = vsel %vm428, %v363, 0
      %v443 = vsel %vm428, %v365, 0
      %v445 = vsel %vm428, %v368, 0
      %v447 = vsel %vm428, %v370, 0
      %v449 = vsel %vm428, %v373, 0
      %v451 = vsel %vm428, %v375, 0
      %v453 = vsel %vm428, %v378, 0
      %v455 = vsel %vm428, %v380, 0
      %v457 = vsel %vm428, %v383, 0
      %v459 = vsel %vm428, %v385, 0
      %v461 = vsel %vm428, %v388, 0
      %v463 = vsel %vm428, %v390, 0
      %v465 = vsel %vm428, %v393, 0
      %v467 = vsel %vm428, %v395, 0
      %v469 = vsel %vm428, %v398, 0
      %v471 = vsel %vm428, %v400, 0
      %v473 = vsel %vm428, %v403, 0
      %v475 = vsel %vm428, %v405, 0
      %v477 = vsel %vm428, %v408, 0
      %v479 = vsel %vm428, %v410, 0
      %v481 = vsel %vm428, %v413, 0
      %v483 = vsel %vm428, %v415, 0
      %v485 = vsel %vm428, %v418, 0
      %v487 = vsel %vm428, %v420, 0
      %v489 = vsel %vm428, %v423, 0
      %v491 = vsel %vm428, %v425, 0
      %493 = vmatprep.subr.mxu0 0.0
      %494 = vmatpush1.msra.mxu0 %v427
      %495 = vmatprep.subr.mxu0 0.0
      %496 = vmatpush1.msra.mxu0 0.0
      %497 = vmatprep.subr.mxu0 0.0
      %498 = vmatpush1.msra.mxu0 0.0
      %499 = vmatprep.subr.mxu0 0.0
      %500 = vmatpush1.msra.mxu0 0.0
      %501 = vmatprep.subr.mxu0 0.0
      %502 = vmatpush1.msra.mxu0 0.0
      %503 = vmatprep.subr.mxu0 0.0
      %504 = vmatpush1.msra.mxu0 0.0
      %505 = vmatprep.subr.mxu0 0.0
      %506 = vmatpush1.msra.mxu0 0.0
      %507 = vmatprep.subr.mxu0 0.0
      %508 = vmatpush1.msra.mxu0 0.0
      %509 = vmatprep.subr.mxu0 0.0
      %510 = vmatpush1.msra.mxu0 0.0
      %511 = vmatprep.subr.mxu0 0.0
      %512 = vmatpush1.msra.mxu0 0.0
      %513 = vmatprep.subr.mxu0 0.0
      %514 = vmatpush1.msra.mxu0 0.0
      %515 = vmatprep.subr.mxu0 0.0
      %516 = vmatpush1.msra.mxu0 0.0
      %517 = vmatprep.subr.mxu0 0.0
      %518 = vmatpush1.msra.mxu0 0.0
      %519 = vmatprep.subr.mxu0 0.0
      %520 = vmatpush1.msra.mxu0 0.0
      %521 = vmatprep.subr.mxu0 0.0
      %522 = vmatpush1.msra.mxu0 0.0
      %523 = vmatprep.subr.mxu0 0.0
      %524 = vmatpush1.msra.mxu0 0.0
      %525 = vmatprep.subr.mxu0 0.0
      %526 = vmatpush1.msra.mxu0 0.0
      %527 = vmatprep.subr.mxu0 0.0
      %528 = vmatpush1.msra.mxu0 0.0
      %529 = vmatprep.subr.mxu0 0.0
      %530 = vmatpush1.msra.mxu0 0.0
      %531 = vmatprep.subr.mxu0 0.0
      %532 = vmatpush1.msra.mxu0 0.0
      %533 = vmatprep.subr.mxu0 0.0
      %534 = vmatpush1.msra.mxu0 0.0
      %535 = vmatprep.subr.mxu0 0.0
      %536 = vmatpush1.msra.mxu0 0.0
      %537 = vmatprep.subr.mxu0 0.0
      %538 = vmatpush1.msra.mxu0 0.0
      %539 = vmatprep.subr.mxu0 0.0
      %540 = vmatpush1.msra.mxu0 0.0
      %541 = vmatprep.subr.mxu0 0.0
      %542 = vmatpush1.msra.mxu0 0.0
      %543 = vmatprep.subr.mxu0 0.0
      %544 = vmatpush1.msra.mxu0 0.0
      %545 = vmatprep.subr.mxu0 0.0
      %546 = vmatpush1.msra.mxu0 0.0
      %547 = vmatprep.subr.mxu0 0.0
      %548 = vmatpush1.msra.mxu0 0.0
      %549 = vmatprep.subr.mxu0 0.0
      %550 = vmatpush1.msra.mxu0 0.0
      %551 = vmatprep.subr.mxu0 0.0
      %552 = vmatpush1.msra.mxu0 0.0
      %553 = vmatprep.subr.mxu0 0.0
      %554 = vmatpush1.msra.mxu0 0.0
      %555 = vmatprep.subr.mxu0 0.0
      %556 = vmatpush1.msra.mxu0 0.0
      %557 = vmatprep.mubr.f32.mxu0 0.0
      %558 = vmatmul.mubr.f32.gmra.mrb[0].mxu0 %v429
      %v559 = vpop.f32.mrb[0].mxu0
      %v560 = vadd.f32 0.0, %v559
      %v561 = vpop.f32.mrb[0].mxu0
      %562 = vmatprep.mubr.f32.mxu0 0.0
      %563 = vmatmul.mubr.f32.gmra.mrb[0].mxu0 %v431
      %v564 = vpop.f32.mrb[0].mxu0
      %v565 = vadd.f32 0.0, %v564
      %v566 = vpop.f32.mrb[0].mxu0
      %567 = vmatprep.mubr.f32.mxu0 0.0
      %568 = vmatmul.mubr.f32.gmra.mrb[0].mxu0 %v433
      %v569 = vpop.f32.mrb[0].mxu0
      %v570 = vadd.f32 0.0, %v569
      %v571 = vpop.f32.mrb[0].mxu0
      %572 = vmatprep.mubr.f32.mxu0 0.0
      %573 = vmatmul.mubr.f32.gmra.mrb[0].mxu0 %v435
      %v574 = vpop.f32.mrb[0].mxu0
      %v575 = vadd.f32 0.0, %v574
      %v576 = vpop.f32.mrb[0].mxu0
      %577 = vmatprep.mubr.f32.mxu0 0.0
      %578 = vmatmul.mubr.f32.gmra.mrb[0].mxu0 %v437
      %v579 = vpop.f32.mrb[0].mxu0
      %v580 = vadd.f32 0.0, %v579
      %v581 = vpop.f32.mrb[0].mxu0
      %582 = vmatprep.mubr.f32.mxu0 0.0
      %583 = vmatmul.mubr.f32.gmra.mrb[0].mxu0 %v439
      %v584 = vpop.f32.mrb[0].mxu0
      %v585 = vadd.f32 0.0, %v584
      %v586 = vpop.f32.mrb[0].mxu0
      %587 = vmatprep.mubr.f32.mxu0 0.0
      %588 = vmatmul.mubr.f32.gmra.mrb[0].mxu0 %v441
      %v589 = vpop.f32.mrb[0].mxu0
      %v590 = vadd.f32 0.0, %v589
      %v591 = vpop.f32.mrb[0].mxu0
      %592 = vmatprep.mubr.f32.mxu0 0.0
      %593 = vmatmul.mubr.f32.gmra.mrb[0].mxu0 %v443
      %v594 = vpop.f32.mrb[0].mxu0
      %v595 = vadd.f32 0.0, %v594
      %v596 = vpop.f32.mrb[0].mxu0
      %597 = vmatprep.mubr.f32.mxu0 0.0
      %598 = vmatmul.mubr.f32.gmra.mrb[0].mxu0 %v445
      %v599 = vpop.f32.mrb[0].mxu0
      %v600 = vadd.f32 0.0, %v599
      %v601 = vpop.f32.mrb[0].mxu0
      %602 = vmatprep.mubr.f32.mxu0 0.0
      %603 = vmatmul.mubr.f32.gmra.mrb[0].mxu0 %v447
      %v604 = vpop.f32.mrb[0].mxu0
      %v605 = vadd.f32 0.0, %v604
      %v606 = vpop.f32.mrb[0].mxu0
      %607 = vmatprep.mubr.f32.mxu0 0.0
      %608 = vmatmul.mubr.f32.gmra.mrb[0].mxu0 %v449
      %v609 = vpop.f32.mrb[0].mxu0
      %v610 = vadd.f32 0.0, %v609
      %v611 = vpop.f32.mrb[0].mxu0
      %612 = vmatprep.mubr.f32.mxu0 0.0
      %613 = vmatmul.mubr.f32.gmra.mrb[0].mxu0 %v451
      %v614 = vpop.f32.mrb[0].mxu0
      %v615 = vadd.f32 0.0, %v614
      %v616 = vpop.f32.mrb[0].mxu0
      %617 = vmatprep.mubr.f32.mxu0 0.0
      %618 = vmatmul.mubr.f32.gmra.mrb[0].mxu0 %v453
      %v619 = vpop.f32.mrb[0].mxu0
      %v620 = vadd.f32 0.0, %v619
      %v621 = vpop.f32.mrb[0].mxu0
      %622 = vmatprep.mubr.f32.mxu0 0.0
      %623 = vmatmul.mubr.f32.gmra.mrb[0].mxu0 %v455
      %v624 = vpop.f32.mrb[0].mxu0
      %v625 = vadd.f32 0.0, %v624
      %v626 = vpop.f32.mrb[0].mxu0
      %627 = vmatprep.mubr.f32.mxu0 0.0
      %628 = vmatmul.mubr.f32.gmra.mrb[0].mxu0 %v457
      %v629 = vpop.f32.mrb[0].mxu0
      %v630 = vadd.f32 0.0, %v629
      %v631 = vpop.f32.mrb[0].mxu0
      %632 = vmatprep.mubr.f32.mxu0 0.0
      %633 = vmatmul.mubr.f32.gmra.mrb[0].mxu0 %v459
      %v634 = vpop.f32.mrb[0].mxu0
      %v635 = vadd.f32 0.0, %v634
      %v636 = vpop.f32.mrb[0].mxu0
      %637 = vmatprep.mubr.f32.mxu0 0.0
      %638 = vmatmul.mubr.f32.gmra.mrb[0].mxu0 %v461
      %v639 = vpop.f32.mrb[0].mxu0
      %v640 = vadd.f32 0.0, %v639
      %v641 = vpop.f32.mrb[0].mxu0
      %642 = vmatprep.mubr.f32.mxu0 0.0
      %643 = vmatmul.mubr.f32.gmra.mrb[0].mxu0 %v463
      %v644 = vpop.f32.mrb[0].mxu0
      %v645 = vadd.f32 0.0, %v644
      %v646 = vpop.f32.mrb[0].mxu0
      %647 = vmatprep.mubr.f32.mxu0 0.0
      %648 = vmatmul.mubr.f32.gmra.mrb[0].mxu0 %v465
      %v649 = vpop.f32.mrb[0].mxu0
      %v650 = vadd.f32 0.0, %v649
      %v651 = vpop.f32.mrb[0].mxu0
      %652 = vmatprep.mubr.f32.mxu0 0.0
      %653 = vmatmul.mubr.f32.gmra.mrb[0].mxu0 %v467
      %v654 = vpop.f32.mrb[0].mxu0
      %v655 = vadd.f32 0.0, %v654
      %v656 = vpop.f32.mrb[0].mxu0
      %657 = vmatprep.mubr.f32.mxu0 0.0
      %658 = vmatmul.mubr.f32.gmra.mrb[0].mxu0 %v469
      %v659 = vpop.f32.mrb[0].mxu0
      %v660 = vadd.f32 0.0, %v659
      %v661 = vpop.f32.mrb[0].mxu0
      %662 = vmatprep.mubr.f32.mxu0 0.0
      %663 = vmatmul.mubr.f32.gmra.mrb[0].mxu0 %v471
      %v664 = vpop.f32.mrb[0].mxu0
      %v665 = vadd.f32 0.0, %v664
      %v666 = vpop.f32.mrb[0].mxu0
      %667 = vmatprep.mubr.f32.mxu0 0.0
      %668 = vmatmul.mubr.f32.gmra.mrb[0].mxu0 %v473
      %v669 = vpop.f32.mrb[0].mxu0
      %v670 = vadd.f32 0.0, %v669
      %v671 = vpop.f32.mrb[0].mxu0
      %672 = vmatprep.mubr.f32.mxu0 0.0
      %673 = vmatmul.mubr.f32.gmra.mrb[0].mxu0 %v475
      %v674 = vpop.f32.mrb[0].mxu0
      %v675 = vadd.f32 0.0, %v674
      %v676 = vpop.f32.mrb[0].mxu0
      %677 = vmatprep.mubr.f32.mxu0 0.0
      %678 = vmatmul.mubr.f32.gmra.mrb[0].mxu0 %v477
      %v679 = vpop.f32.mrb[0].mxu0
      %v680 = vadd.f32 0.0, %v679
      %v681 = vpop.f32.mrb[0].mxu0
      %682 = vmatprep.mubr.f32.mxu0 0.0
      %683 = vmatmul.mubr.f32.gmra.mrb[0].mxu0 %v479
      %v684 = vpop.f32.mrb[0].mxu0
      %v685 = vadd.f32 0.0, %v684
      %v686 = vpop.f32.mrb[0].mxu0
      %687 = vmatprep.mubr.f32.mxu0 0.0
      %688 = vmatmul.mubr.f32.gmra.mrb[0].mxu0 %v481
      %v689 = vpop.f32.mrb[0].mxu0
      %v690 = vadd.f32 0.0, %v689
      %v691 = vpop.f32.mrb[0].mxu0
      %692 = vmatprep.mubr.f32.mxu0 0.0
      %693 = vmatmul.mubr.f32.gmra.mrb[0].mxu0 %v483
      %v694 = vpop.f32.mrb[0].mxu0
      %v695 = vadd.f32 0.0, %v694
      %v696 = vpop.f32.mrb[0].mxu0
      %697 = vmatprep.mubr.f32.mxu0 0.0
      %698 = vmatmul.mubr.f32.gmra.mrb[0].mxu0 %v485
      %v699 = vpop.f32.mrb[0].mxu0
      %v700 = vadd.f32 0.0, %v699
      %v701 = vpop.f32.mrb[0].mxu0
      %702 = vmatprep.mubr.f32.mxu0 0.0
      %703 = vmatmul.mubr.f32.gmra.mrb[0].mxu0 %v487
      %v704 = vpop.f32.mrb[0].mxu0
      %v705 = vadd.f32 0.0, %v704
      %v706 = vpop.f32.mrb[0].mxu0
      %707 = vmatprep.mubr.f32.mxu0 0.0
      %708 = vmatmul.mubr.f32.gmra.mrb[0].mxu0 %v489
      %v709 = vpop.f32.mrb[0].mxu0
      %v710 = vadd.f32 0.0, %v709
      %v711 = vpop.f32.mrb[0].mxu0
      %712 = vmatprep.mubr.f32.mxu0 0.0
      %713 = vmatmul.mubr.f32.gmra.mrb[0].mxu0 %v491
      %v714 = vpop.f32.mrb[0].mxu0
      %v715 = vadd.f32 0.0, %v714
      %v716 = vpop.f32.mrb[0].mxu0
      %717 = vdwg.mxu0
      %v718 = vsel %vm428, %v242, 0
      %v720 = vsel %vm428, %v243, 0
      %v722 = vsel %vm428, %v245, 0
      %v724 = vsel %vm428, %v246, 0
      %v726 = vsel %vm428, %v248, 0
      %v728 = vsel %vm428, %v249, 0
      %v730 = vsel %vm428, %v251, 0
      %v732 = vsel %vm428, %v252, 0
      %v734 = vsel %vm428, %v254, 0
      %v736 = vsel %vm428, %v255, 0
      %v738 = vsel %vm428, %v257, 0
      %v740 = vsel %vm428, %v258, 0
      %v742 = vsel %vm428, %v260, 0
      %v744 = vsel %vm428, %v261, 0
      %v746 = vsel %vm428, %v263, 0
      %v748 = vsel %vm428, %v264, 0
      %v750 = vsel %vm428, %v266, 0
      %v752 = vsel %vm428, %v267, 0
      %v754 = vsel %vm428, %v269, 0
      %v756 = vsel %vm428, %v270, 0
      %v758 = vsel %vm428, %v272, 0
      %v760 = vsel %vm428, %v273, 0
      %v762 = vsel %vm428, %v275, 0
      %v764 = vsel %vm428, %v276, 0
      %v766 = vsel %vm428, %v278, 0
      %v768 = vsel %vm428, %v279, 0
      %v770 = vsel %vm428, %v281, 0
      %v772 = vsel %vm428, %v282, 0
      %v774 = vsel %vm428, %v284, 0
      %v776 = vsel %vm428, %v285, 0
      %v778 = vsel %vm428, %v287, 0
      %v780 = vsel %vm428, %v288, 0
      %782 = vmatprep.subr.mxu0 0.0
      %783 = vmatpush1.msra.mxu0 %v296
      %784 = vmatprep.subr.mxu0 0.0
      %785 = vmatpush1.msra.mxu0 0.0
      %786 = vmatprep.subr.mxu0 0.0
      %787 = vmatpush1.msra.mxu0 0.0
      %788 = vmatprep.subr.mxu0 0.0
      %789 = vmatpush1.msra.mxu0 0.0
      %790 = vmatprep.subr.mxu0 0.0
      %791 = vmatpush1.msra.mxu0 0.0
      %792 = vmatprep.subr.mxu0 0.0
      %793 = vmatpush1.msra.mxu0 0.0
      %794 = vmatprep.subr.mxu0 0.0
      %795 = vmatpush1.msra.mxu0 0.0
      %796 = vmatprep.subr.mxu0 0.0
      %797 = vmatpush1.msra.mxu0 0.0
      %798 = vmatprep.subr.mxu0 0.0
      %799 = vmatpush1.msra.mxu0 0.0
      %800 = vmatprep.subr.mxu0 0.0
      %801 = vmatpush1.msra.mxu0 0.0
      %802 = vmatprep.subr.mxu0 0.0
      %803 = vmatpush1.msra.mxu0 0.0
      %804 = vmatprep.subr.mxu0 0.0
      %805 = vmatpush1.msra.mxu0 0.0
      %806 = vmatprep.subr.mxu0 0.0
      %807 = vmatpush1.msra.mxu0 0.0
      %808 = vmatprep.subr.mxu0 0.0
      %809 = vmatpush1.msra.mxu0 0.0
      %810 = vmatprep.subr.mxu0 0.0
      %811 = vmatpush1.msra.mxu0 0.0
      %812 = vmatprep.subr.mxu0 0.0
      %813 = vmatpush1.msra.mxu0 0.0
      %814 = vmatprep.subr.mxu0 0.0
      %815 = vmatpush1.msra.mxu0 0.0
      %816 = vmatprep.subr.mxu0 0.0
      %817 = vmatpush1.msra.mxu0 0.0
      %818 = vmatprep.subr.mxu0 0.0
      %819 = vmatpush1.msra.mxu0 0.0
      %820 = vmatprep.subr.mxu0 0.0
      %821 = vmatpush1.msra.mxu0 0.0
      %822 = vmatprep.subr.mxu0 0.0
      %823 = vmatpush1.msra.mxu0 0.0
      %824 = vmatprep.subr.mxu0 0.0
      %825 = vmatpush1.msra.mxu0 0.0
      %826 = vmatprep.subr.mxu0 0.0
      %827 = vmatpush1.msra.mxu0 0.0
      %828 = vmatprep.subr.mxu0 0.0
      %829 = vmatpush1.msra.mxu0 0.0
      %830 = vmatprep.subr.mxu0 0.0
      %831 = vmatpush1.msra.mxu0 0.0
      %832 = vmatprep.subr.mxu0 0.0
      %833 = vmatpush1.msra.mxu0 0.0
      %834 = vmatprep.subr.mxu0 0.0
      %835 = vmatpush1.msra.mxu0 0.0
      %836 = vmatprep.subr.mxu0 0.0
      %837 = vmatpush1.msra.mxu0 0.0
      %838 = vmatprep.subr.mxu0 0.0
      %839 = vmatpush1.msra.mxu0 0.0
      %840 = vmatprep.subr.mxu0 0.0
      %841 = vmatpush1.msra.mxu0 0.0
      %842 = vmatprep.subr.mxu0 0.0
      %843 = vmatpush1.msra.mxu0 0.0
      %844 = vmatprep.subr.mxu0 0.0
      %845 = vmatpush1.msra.mxu0 0.0
      %846 = vmatprep.mubr.f32.mxu0 0.0
      %847 = vmatmul.mubr.f32.gmra.mrb[0].mxu0 %v718
      %v848 = vpop.f32.mrb[0].mxu0
      %v849 = vadd.f32 %v560, %v848
      %v850 = vpop.f32.mrb[0].mxu0
      %851 = vmatprep.mubr.f32.mxu0 0.0
      %852 = vmatmul.mubr.f32.gmra.mrb[0].mxu0 %v720
      %v853 = vpop.f32.mrb[0].mxu0
      %v854 = vadd.f32 %v565, %v853
      %v855 = vpop.f32.mrb[0].mxu0
      %856 = vmatprep.mubr.f32.mxu0 0.0
      %857 = vmatmul.mubr.f32.gmra.mrb[0].mxu0 %v722
      %v858 = vpop.f32.mrb[0].mxu0
      %v859 = vadd.f32 %v570, %v858
      %v860 = vpop.f32.mrb[0].mxu0
      %861 = vmatprep.mubr.f32.mxu0 0.0
      %862 = vmatmul.mubr.f32.gmra.mrb[0].mxu0 %v724
      %v863 = vpop.f32.mrb[0].mxu0
      %v864 = vadd.f32 %v575, %v863
      %v865 = vpop.f32.mrb[0].mxu0
      %866 = vmatprep.mubr.f32.mxu0 0.0
      %867 = vmatmul.mubr.f32.gmra.mrb[0].mxu0 %v726
      %v868 = vpop.f32.mrb[0].mxu0
      %v869 = vadd.f32 %v580, %v868
      %v870 = vpop.f32.mrb[0].mxu0
      %871 = vmatprep.mubr.f32.mxu0 0.0
      %872 = vmatmul.mubr.f32.gmra.mrb[0].mxu0 %v728
      %v873 = vpop.f32.mrb[0].mxu0
      %v874 = vadd.f32 %v585, %v873
      %v875 = vpop.f32.mrb[0].mxu0
      %876 = vmatprep.mubr.f32.mxu0 0.0
      %877 = vmatmul.mubr.f32.gmra.mrb[0].mxu0 %v730
      %v878 = vpop.f32.mrb[0].mxu0
      %v879 = vadd.f32 %v590, %v878
      %v880 = vpop.f32.mrb[0].mxu0
      %881 = vmatprep.mubr.f32.mxu0 0.0
      %882 = vmatmul.mubr.f32.gmra.mrb[0].mxu0 %v732
      %v883 = vpop.f32.mrb[0].mxu0
      %v884 = vadd.f32 %v595, %v883
      %v885 = vpop.f32.mrb[0].mxu0
      %886 = vmatprep.mubr.f32.mxu0 0.0
      %887 = vmatmul.mubr.f32.gmra.mrb[0].mxu0 %v734
      %v888 = vpop.f32.mrb[0].mxu0
      %v889 = vadd.f32 %v600, %v888
      %v890 = vpop.f32.mrb[0].mxu0
      %891 = vmatprep.mubr.f32.mxu0 0.0
      %892 = vmatmul.mubr.f32.gmra.mrb[0].mxu0 %v736
      %v893 = vpop.f32.mrb[0].mxu0
      %v894 = vadd.f32 %v605, %v893
      %v895 = vpop.f32.mrb[0].mxu0
      %896 = vmatprep.mubr.f32.mxu0 0.0
      %897 = vmatmul.mubr.f32.gmra.mrb[0].mxu0 %v738
      %v898 = vpop.f32.mrb[0].mxu0
      %v899 = vadd.f32 %v610, %v898
      %v900 = vpop.f32.mrb[0].mxu0
      %901 = vmatprep.mubr.f32.mxu0 0.0
      %902 = vmatmul.mubr.f32.gmra.mrb[0].mxu0 %v740
      %v903 = vpop.f32.mrb[0].mxu0
      %v904 = vadd.f32 %v615, %v903
      %v905 = vpop.f32.mrb[0].mxu0
      %906 = vmatprep.mubr.f32.mxu0 0.0
      %907 = vmatmul.mubr.f32.gmra.mrb[0].mxu0 %v742
      %v908 = vpop.f32.mrb[0].mxu0
      %v909 = vadd.f32 %v620, %v908
      %v910 = vpop.f32.mrb[0].mxu0
      %911 = vmatprep.mubr.f32.mxu0 0.0
      %912 = vmatmul.mubr.f32.gmra.mrb[0].mxu0 %v744
      %v913 = vpop.f32.mrb[0].mxu0
      %v914 = vadd.f32 %v625, %v913
      %v915 = vpop.f32.mrb[0].mxu0
      %916 = vmatprep.mubr.f32.mxu0 0.0
      %917 = vmatmul.mubr.f32.gmra.mrb[0].mxu0 %v746
      %v918 = vpop.f32.mrb[0].mxu0
      %v919 = vadd.f32 %v630, %v918
      %v920 = vpop.f32.mrb[0].mxu0
      %921 = vmatprep.mubr.f32.mxu0 0.0
      %922 = vmatmul.mubr.f32.gmra.mrb[0].mxu0 %v748
      %v923 = vpop.f32.mrb[0].mxu0
      %v924 = vadd.f32 %v635, %v923
      %v925 = vpop.f32.mrb[0].mxu0
      %926 = vmatprep.mubr.f32.mxu0 0.0
      %927 = vmatmul.mubr.f32.gmra.mrb[0].mxu0 %v750
      %v928 = vpop.f32.mrb[0].mxu0
      %v929 = vadd.f32 %v640, %v928
      %v930 = vpop.f32.mrb[0].mxu0
      %931 = vmatprep.mubr.f32.mxu0 0.0
      %932 = vmatmul.mubr.f32.gmra.mrb[0].mxu0 %v752
      %v933 = vpop.f32.mrb[0].mxu0
      %v934 = vadd.f32 %v645, %v933
      %v935 = vpop.f32.mrb[0].mxu0
      %936 = vmatprep.mubr.f32.mxu0 0.0
      %937 = vmatmul.mubr.f32.gmra.mrb[0].mxu0 %v754
      %v938 = vpop.f32.mrb[0].mxu0
      %v939 = vadd.f32 %v650, %v938
      %v940 = vpop.f32.mrb[0].mxu0
      %941 = vmatprep.mubr.f32.mxu0 0.0
      %942 = vmatmul.mubr.f32.gmra.mrb[0].mxu0 %v756
      %v943 = vpop.f32.mrb[0].mxu0
      %v944 = vadd.f32 %v655, %v943
      %v945 = vpop.f32.mrb[0].mxu0
      %946 = vmatprep.mubr.f32.mxu0 0.0
      %947 = vmatmul.mubr.f32.gmra.mrb[0].mxu0 %v758
      %v948 = vpop.f32.mrb[0].mxu0
      %v949 = vadd.f32 %v660, %v948
      %v950 = vpop.f32.mrb[0].mxu0
      %951 = vmatprep.mubr.f32.mxu0 0.0
      %952 = vmatmul.mubr.f32.gmra.mrb[0].mxu0 %v760
      %v953 = vpop.f32.mrb[0].mxu0
      %v954 = vadd.f32 %v665, %v953
      %v955 = vpop.f32.mrb[0].mxu0
      %956 = vmatprep.mubr.f32.mxu0 0.0
      %957 = vmatmul.mubr.f32.gmra.mrb[0].mxu0 %v762
      %v958 = vpop.f32.mrb[0].mxu0
      %v959 = vadd.f32 %v670, %v958
      %v960 = vpop.f32.mrb[0].mxu0
      %961 = vmatprep.mubr.f32.mxu0 0.0
      %962 = vmatmul.mubr.f32.gmra.mrb[0].mxu0 %v764
      %v963 = vpop.f32.mrb[0].mxu0
      %v964 = vadd.f32 %v675, %v963
      %v965 = vpop.f32.mrb[0].mxu0
      %966 = vmatprep.mubr.f32.mxu0 0.0
      %967 = vmatmul.mubr.f32.gmra.mrb[0].mxu0 %v766
      %v968 = vpop.f32.mrb[0].mxu0
      %v969 = vadd.f32 %v680, %v968
      %v970 = vpop.f32.mrb[0].mxu0
      %971 = vmatprep.mubr.f32.mxu0 0.0
      %972 = vmatmul.mubr.f32.gmra.mrb[0].mxu0 %v768
      %v973 = vpop.f32.mrb[0].mxu0
      %v974 = vadd.f32 %v685, %v973
      %v975 = vpop.f32.mrb[0].mxu0
      %976 = vmatprep.mubr.f32.mxu0 0.0
      %977 = vmatmul.mubr.f32.gmra.mrb[0].mxu0 %v770
      %v978 = vpop.f32.mrb[0].mxu0
      %v979 = vadd.f32 %v690, %v978
      %v980 = vpop.f32.mrb[0].mxu0
      %981 = vmatprep.mubr.f32.mxu0 0.0
      %982 = vmatmul.mubr.f32.gmra.mrb[0].mxu0 %v772
      %v983 = vpop.f32.mrb[0].mxu0
      %v984 = vadd.f32 %v695, %v983
      %v985 = vpop.f32.mrb[0].mxu0
      %986 = vmatprep.mubr.f32.mxu0 0.0
      %987 = vmatmul.mubr.f32.gmra.mrb[0].mxu0 %v774
      %v988 = vpop.f32.mrb[0].mxu0
      %v989 = vadd.f32 %v700, %v988
      %v990 = vpop.f32.mrb[0].mxu0
      %991 = vmatprep.mubr.f32.mxu0 0.0
      %992 = vmatmul.mubr.f32.gmra.mrb[0].mxu0 %v776
      %v993 = vpop.f32.mrb[0].mxu0
      %v994 = vadd.f32 %v705, %v993
      %v995 = vpop.f32.mrb[0].mxu0
      %996 = vmatprep.mubr.f32.mxu0 0.0
      %997 = vmatmul.mubr.f32.gmra.mrb[0].mxu0 %v778
      %v998 = vpop.f32.mrb[0].mxu0
      %v999 = vadd.f32 %v710, %v998
      %v1000 = vpop.f32.mrb[0].mxu0
      %1001 = vmatprep.mubr.f32.mxu0 0.0
      %1002 = vmatmul.mubr.f32.gmra.mrb[0].mxu0 %v780
      %v1003 = vpop.f32.mrb[0].mxu0
      %v1004 = vadd.f32 %v715, %v1003
      %v1005 = vpop.f32.mrb[0].mxu0
      %1006 = vdwg.mxu0
      %vm1007 = vcmask 1045504
      %v1008 = vrot.slane %v242, 2
      %v1009 = vrot.slane %v243, 2
      %v1010 = vsel %vm1007, %v1008, %v1009
      %v1011 = vrot.slane %v244, 2
      %v1012 = vsel %vm1007, %v1009, %v1011
      %v1013 = vrot.slane %v245, 2
      %v1014 = vrot.slane %v246, 2
      %v1015 = vsel %vm1007, %v1013, %v1014
      %v1016 = vrot.slane %v247, 2
      %v1017 = vsel %vm1007, %v1014, %v1016
      %v1018 = vrot.slane %v248, 2
      %v1019 = vrot.slane %v249, 2
      %v1020 = vsel %vm1007, %v1018, %v1019
      %v1021 = vrot.slane %v250, 2
      %v1022 = vsel %vm1007, %v1019, %v1021
      %v1023 = vrot.slane %v251, 2
      %v1024 = vrot.slane %v252, 2
      %v1025 = vsel %vm1007, %v1023, %v1024
      %v1026 = vrot.slane %v253, 2
      %v1027 = vsel %vm1007, %v1024, %v1026
      %v1028 = vrot.slane %v254, 2
      %v1029 = vrot.slane %v255, 2
      %v1030 = vsel %vm1007, %v1028, %v1029
      %v1031 = vrot.slane %v256, 2
      %v1032 = vsel %vm1007, %v1029, %v1031
      %v1033 = vrot.slane %v257, 2
      %v1034 = vrot.slane %v258, 2
      %v1035 = vsel %vm1007, %v1033, %v1034
      %v1036 = vrot.slane %v259, 2
      %v1037 = vsel %vm1007, %v1034, %v1036
      %v1038 = vrot.slane %v260, 2
      %v1039 = vrot.slane %v261, 2
      %v1040 = vsel %vm1007, %v1038, %v1039
      %v1041 = vrot.slane %v262, 2
      %v1042 = vsel %vm1007, %v1039, %v1041
      %v1043 = vrot.slane %v263, 2
      %v1044 = vrot.slane %v264, 2
      %v1045 = vsel %vm1007, %v1043, %v1044
      %v1046 = vrot.slane %v265, 2
      %v1047 = vsel %vm1007, %v1044, %v1046
      %v1048 = vrot.slane %v266, 2
      %v1049 = vrot.slane %v267, 2
      %v1050 = vsel %vm1007, %v1048, %v1049
      %v1051 = vrot.slane %v268, 2
      %v1052 = vsel %vm1007, %v1049, %v1051
      %v1053 = vrot.slane %v269, 2
      %v1054 = vrot.slane %v270, 2
      %v1055 = vsel %vm1007, %v1053, %v1054
      %v1056 = vrot.slane %v271, 2
      %v1057 = vsel %vm1007, %v1054, %v1056
      %v1058 = vrot.slane %v272, 2
      %v1059 = vrot.slane %v273, 2
      %v1060 = vsel %vm1007, %v1058, %v1059
      %v1061 = vrot.slane %v274, 2
      %v1062 = vsel %vm1007, %v1059, %v1061
      %v1063 = vrot.slane %v275, 2
      %v1064 = vrot.slane %v276, 2
      %v1065 = vsel %vm1007, %v1063, %v1064
      %v1066 = vrot.slane %v277, 2
      %v1067 = vsel %vm1007, %v1064, %v1066
      %v1068 = vrot.slane %v278, 2
      %v1069 = vrot.slane %v279, 2
      %v1070 = vsel %vm1007, %v1068, %v1069
      %v1071 = vrot.slane %v280, 2
      %v1072 = vsel %vm1007, %v1069, %v1071
      %v1073 = vrot.slane %v281, 2
      %v1074 = vrot.slane %v282, 2
      %v1075 = vsel %vm1007, %v1073, %v1074
      %v1076 = vrot.slane %v283, 2
      %v1077 = vsel %vm1007, %v1074, %v1076
      %v1078 = vrot.slane %v284, 2
      %v1079 = vrot.slane %v285, 2
      %v1080 = vsel %vm1007, %v1078, %v1079
      %v1081 = vrot.slane %v286, 2
      %v1082 = vsel %vm1007, %v1079, %v1081
      %v1083 = vrot.slane %v287, 2
      %v1084 = vrot.slane %v288, 2
      %v1085 = vsel %vm1007, %v1083, %v1084
      %v1086 = vrot.slane %v289, 2
      %v1087 = vsel %vm1007, %v1084, %v1086
      %s1088 = scalar_lea.vmem %s1, 16
      %v1089 = vld [vmem:[%s1088] sm:$0xff]
      %v1090 = vsel %vm428, %v1010, 0
      %v1092 = vsel %vm428, %v1012, 0
      %v1094 = vsel %vm428, %v1015, 0
      %v1096 = vsel %vm428, %v1017, 0
      %v1098 = vsel %vm428, %v1020, 0
      %v1100 = vsel %vm428, %v1022, 0
      %v1102 = vsel %vm428, %v1025, 0
      %v1104 = vsel %vm428, %v1027, 0
      %v1106 = vsel %vm428, %v1030, 0
      %v1108 = vsel %vm428, %v1032, 0
      %v1110 = vsel %vm428, %v1035, 0
      %v1112 = vsel %vm428, %v1037, 0
      %v1114 = vsel %vm428, %v1040, 0
      %v1116 = vsel %vm428, %v1042, 0
      %v1118 = vsel %vm428, %v1045, 0
      %v1120 = vsel %vm428, %v1047, 0
      %v1122 = vsel %vm428, %v1050, 0
      %v1124 = vsel %vm428, %v1052, 0
      %v1126 = vsel %vm428, %v1055, 0
      %v1128 = vsel %vm428, %v1057, 0
      %v1130 = vsel %vm428, %v1060, 0
      %v1132 = vsel %vm428, %v1062, 0
      %v1134 = vsel %vm428, %v1065, 0
      %v1136 = vsel %vm428, %v1067, 0
      %v1138 = vsel %vm428, %v1070, 0
      %v1140 = vsel %vm428, %v1072, 0
      %v1142 = vsel %vm428, %v1075, 0
      %v1144 = vsel %vm428, %v1077, 0
      %v1146 = vsel %vm428, %v1080, 0
      %v1148 = vsel %vm428, %v1082, 0
      %v1150 = vsel %vm428, %v1085, 0
      %v1152 = vsel %vm428, %v1087, 0
      %1154 = vmatprep.subr.mxu0 0.0
      %1155 = vmatpush1.msra.mxu0 %v1089
      %1156 = vmatprep.subr.mxu0 0.0
      %1157 = vmatpush1.msra.mxu0 0.0
      %1158 = vmatprep.subr.mxu0 0.0
      %1159 = vmatpush1.msra.mxu0 0.0
      %1160 = vmatprep.subr.mxu0 0.0
      %1161 = vmatpush1.msra.mxu0 0.0
      %1162 = vmatprep.subr.mxu0 0.0
      %1163 = vmatpush1.msra.mxu0 0.0
      %1164 = vmatprep.subr.mxu0 0.0
      %1165 = vmatpush1.msra.mxu0 0.0
      %1166 = vmatprep.subr.mxu0 0.0
      %1167 = vmatpush1.msra.mxu0 0.0
      %1168 = vmatprep.subr.mxu0 0.0
      %1169 = vmatpush1.msra.mxu0 0.0
      %1170 = vmatprep.subr.mxu0 0.0
      %1171 = vmatpush1.msra.mxu0 0.0
      %1172 = vmatprep.subr.mxu0 0.0
      %1173 = vmatpush1.msra.mxu0 0.0
      %1174 = vmatprep.subr.mxu0 0.0
      %1175 = vmatpush1.msra.mxu0 0.0
      %1176 = vmatprep.subr.mxu0 0.0
      %1177 = vmatpush1.msra.mxu0 0.0
      %1178 = vmatprep.subr.mxu0 0.0
      %1179 = vmatpush1.msra.mxu0 0.0
      %1180 = vmatprep.subr.mxu0 0.0
      %1181 = vmatpush1.msra.mxu0 0.0
      %1182 = vmatprep.subr.mxu0 0.0
      %1183 = vmatpush1.msra.mxu0 0.0
      %1184 = vmatprep.subr.mxu0 0.0
      %1185 = vmatpush1.msra.mxu0 0.0
      %1186 = vmatprep.subr.mxu0 0.0
      %1187 = vmatpush1.msra.mxu0 0.0
      %1188 = vmatprep.subr.mxu0 0.0
      %1189 = vmatpush1.msra.mxu0 0.0
      %1190 = vmatprep.subr.mxu0 0.0
      %1191 = vmatpush1.msra.mxu0 0.0
      %1192 = vmatprep.subr.mxu0 0.0
      %1193 = vmatpush1.msra.mxu0 0.0
      %1194 = vmatprep.subr.mxu0 0.0
      %1195 = vmatpush1.msra.mxu0 0.0
      %1196 = vmatprep.subr.mxu0 0.0
      %1197 = vmatpush1.msra.mxu0 0.0
      %1198 = vmatprep.subr.mxu0 0.0
      %1199 = vmatpush1.msra.mxu0 0.0
      %1200 = vmatprep.subr.mxu0 0.0
      %1201 = vmatpush1.msra.mxu0 0.0
      %1202 = vmatprep.subr.mxu0 0.0
      %1203 = vmatpush1.msra.mxu0 0.0
      %1204 = vmatprep.subr.mxu0 0.0
      %1205 = vmatpush1.msra.mxu0 0.0
      %1206 = vmatprep.subr.mxu0 0.0
      %1207 = vmatpush1.msra.mxu0 0.0
      %1208 = vmatprep.subr.mxu0 0.0
      %1209 = vmatpush1.msra.mxu0 0.0
      %1210 = vmatprep.subr.mxu0 0.0
      %1211 = vmatpush1.msra.mxu0 0.0
      %1212 = vmatprep.subr.mxu0 0.0
      %1213 = vmatpush1.msra.mxu0 0.0
      %1214 = vmatprep.subr.mxu0 0.0
      %1215 = vmatpush1.msra.mxu0 0.0
      %1216 = vmatprep.subr.mxu0 0.0
      %1217 = vmatpush1.msra.mxu0 0.0
      %1218 = vmatprep.mubr.f32.mxu0 0.0
      %1219 = vmatmul.mubr.f32.gmra.mrb[0].mxu0 %v1090
      %v1220 = vpop.f32.mrb[0].mxu0
      %v1221 = vadd.f32 0.0, %v1220
      %v1222 = vpop.f32.mrb[0].mxu0
      %1223 = vmatprep.mubr.f32.mxu0 0.0
      %1224 = vmatmul.mubr.f32.gmra.mrb[0].mxu0 %v1092
      %v1225 = vpop.f32.mrb[0].mxu0
      %v1226 = vadd.f32 0.0, %v1225
      %v1227 = vpop.f32.mrb[0].mxu0
      %1228 = vmatprep.mubr.f32.mxu0 0.0
      %1229 = vmatmul.mubr.f32.gmra.mrb[0].mxu0 %v1094
      %v1230 = vpop.f32.mrb[0].mxu0
      %v1231 = vadd.f32 0.0, %v1230
      %v1232 = vpop.f32.mrb[0].mxu0
      %1233 = vmatprep.mubr.f32.mxu0 0.0
      %1234 = vmatmul.mubr.f32.gmra.mrb[0].mxu0 %v1096
      %v1235 = vpop.f32.mrb[0].mxu0
      %v1236 = vadd.f32 0.0, %v1235
      %v1237 = vpop.f32.mrb[0].mxu0
      %1238 = vmatprep.mubr.f32.mxu0 0.0
      %1239 = vmatmul.mubr.f32.gmra.mrb[0].mxu0 %v1098
      %v1240 = vpop.f32.mrb[0].mxu0
      %v1241 = vadd.f32 0.0, %v1240
      %v1242 = vpop.f32.mrb[0].mxu0
      %1243 = vmatprep.mubr.f32.mxu0 0.0
      %1244 = vmatmul.mubr.f32.gmra.mrb[0].mxu0 %v1100
      %v1245 = vpop.f32.mrb[0].mxu0
      %v1246 = vadd.f32 0.0, %v1245
      %v1247 = vpop.f32.mrb[0].mxu0
      %1248 = vmatprep.mubr.f32.mxu0 0.0
      %1249 = vmatmul.mubr.f32.gmra.mrb[0].mxu0 %v1102
      %v1250 = vpop.f32.mrb[0].mxu0
      %v1251 = vadd.f32 0.0, %v1250
      %v1252 = vpop.f32.mrb[0].mxu0
      %1253 = vmatprep.mubr.f32.mxu0 0.0
      %1254 = vmatmul.mubr.f32.gmra.mrb[0].mxu0 %v1104
      %v1255 = vpop.f32.mrb[0].mxu0
      %v1256 = vadd.f32 0.0, %v1255
      %v1257 = vpop.f32.mrb[0].mxu0
      %1258 = vmatprep.mubr.f32.mxu0 0.0
      %1259 = vmatmul.mubr.f32.gmra.mrb[0].mxu0 %v1106
      %v1260 = vpop.f32.mrb[0].mxu0
      %v1261 = vadd.f32 0.0, %v1260
      %v1262 = vpop.f32.mrb[0].mxu0
      %1263 = vmatprep.mubr.f32.mxu0 0.0
      %1264 = vmatmul.mubr.f32.gmra.mrb[0].mxu0 %v1108
      %v1265 = vpop.f32.mrb[0].mxu0
      %v1266 = vadd.f32 0.0, %v1265
      %v1267 = vpop.f32.mrb[0].mxu0
      %1268 = vmatprep.mubr.f32.mxu0 0.0
      %1269 = vmatmul.mubr.f32.gmra.mrb[0].mxu0 %v1110
      %v1270 = vpop.f32.mrb[0].mxu0
      %v1271 = vadd.f32 0.0, %v1270
      %v1272 = vpop.f32.mrb[0].mxu0
      %1273 = vmatprep.mubr.f32.mxu0 0.0
      %1274 = vmatmul.mubr.f32.gmra.mrb[0].mxu0 %v1112
      %v1275 = vpop.f32.mrb[0].mxu0
      %v1276 = vadd.f32 0.0, %v1275
      %v1277 = vpop.f32.mrb[0].mxu0
      %1278 = vmatprep.mubr.f32.mxu0 0.0
      %1279 = vmatmul.mubr.f32.gmra.mrb[0].mxu0 %v1114
      %v1280 = vpop.f32.mrb[0].mxu0
      %v1281 = vadd.f32 0.0, %v1280
      %v1282 = vpop.f32.mrb[0].mxu0
      %1283 = vmatprep.mubr.f32.mxu0 0.0
      %1284 = vmatmul.mubr.f32.gmra.mrb[0].mxu0 %v1116
      %v1285 = vpop.f32.mrb[0].mxu0
      %v1286 = vadd.f32 0.0, %v1285
      %v1287 = vpop.f32.mrb[0].mxu0
      %1288 = vmatprep.mubr.f32.mxu0 0.0
      %1289 = vmatmul.mubr.f32.gmra.mrb[0].mxu0 %v1118
      %v1290 = vpop.f32.mrb[0].mxu0
      %v1291 = vadd.f32 0.0, %v1290
      %v1292 = vpop.f32.mrb[0].mxu0
      %1293 = vmatprep.mubr.f32.mxu0 0.0
      %1294 = vmatmul.mubr.f32.gmra.mrb[0].mxu0 %v1120
      %v1295 = vpop.f32.mrb[0].mxu0
      %v1296 = vadd.f32 0.0, %v1295
      %v1297 = vpop.f32.mrb[0].mxu0
      %1298 = vmatprep.mubr.f32.mxu0 0.0
      %1299 = vmatmul.mubr.f32.gmra.mrb[0].mxu0 %v1122
      %v1300 = vpop.f32.mrb[0].mxu0
      %v1301 = vadd.f32 0.0, %v1300
      %v1302 = vpop.f32.mrb[0].mxu0
      %1303 = vmatprep.mubr.f32.mxu0 0.0
      %1304 = vmatmul.mubr.f32.gmra.mrb[0].mxu0 %v1124
      %v1305 = vpop.f32.mrb[0].mxu0
      %v1306 = vadd.f32 0.0, %v1305
      %v1307 = vpop.f32.mrb[0].mxu0
      %1308 = vmatprep.mubr.f32.mxu0 0.0
      %1309 = vmatmul.mubr.f32.gmra.mrb[0].mxu0 %v1126
      %v1310 = vpop.f32.mrb[0].mxu0
      %v1311 = vadd.f32 0.0, %v1310
      %v1312 = vpop.f32.mrb[0].mxu0
      %1313 = vmatprep.mubr.f32.mxu0 0.0
      %1314 = vmatmul.mubr.f32.gmra.mrb[0].mxu0 %v1128
      %v1315 = vpop.f32.mrb[0].mxu0
      %v1316 = vadd.f32 0.0, %v1315
      %v1317 = vpop.f32.mrb[0].mxu0
      %1318 = vmatprep.mubr.f32.mxu0 0.0
      %1319 = vmatmul.mubr.f32.gmra.mrb[0].mxu0 %v1130
      %v1320 = vpop.f32.mrb[0].mxu0
      %v1321 = vadd.f32 0.0, %v1320
      %v1322 = vpop.f32.mrb[0].mxu0
      %1323 = vmatprep.mubr.f32.mxu0 0.0
      %1324 = vmatmul.mubr.f32.gmra.mrb[0].mxu0 %v1132
      %v1325 = vpop.f32.mrb[0].mxu0
      %v1326 = vadd.f32 0.0, %v1325
      %v1327 = vpop.f32.mrb[0].mxu0
      %1328 = vmatprep.mubr.f32.mxu0 0.0
      %1329 = vmatmul.mubr.f32.gmra.mrb[0].mxu0 %v1134
      %v1330 = vpop.f32.mrb[0].mxu0
      %v1331 = vadd.f32 0.0, %v1330
      %v1332 = vpop.f32.mrb[0].mxu0
      %1333 = vmatprep.mubr.f32.mxu0 0.0
      %1334 = vmatmul.mubr.f32.gmra.mrb[0].mxu0 %v1136
      %v1335 = vpop.f32.mrb[0].mxu0
      %v1336 = vadd.f32 0.0, %v1335
      %v1337 = vpop.f32.mrb[0].mxu0
      %1338 = vmatprep.mubr.f32.mxu0 0.0
      %1339 = vmatmul.mubr.f32.gmra.mrb[0].mxu0 %v1138
      %v1340 = vpop.f32.mrb[0].mxu0
      %v1341 = vadd.f32 0.0, %v1340
      %v1342 = vpop.f32.mrb[0].mxu0
      %1343 = vmatprep.mubr.f32.mxu0 0.0
      %1344 = vmatmul.mubr.f32.gmra.mrb[0].mxu0 %v1140
      %v1345 = vpop.f32.mrb[0].mxu0
      %v1346 = vadd.f32 0.0, %v1345
      %v1347 = vpop.f32.mrb[0].mxu0
      %1348 = vmatprep.mubr.f32.mxu0 0.0
      %1349 = vmatmul.mubr.f32.gmra.mrb[0].mxu0 %v1142
      %v1350 = vpop.f32.mrb[0].mxu0
      %v1351 = vadd.f32 0.0, %v1350
      %v1352 = vpop.f32.mrb[0].mxu0
      %1353 = vmatprep.mubr.f32.mxu0 0.0
      %1354 = vmatmul.mubr.f32.gmra.mrb[0].mxu0 %v1144
      %v1355 = vpop.f32.mrb[0].mxu0
      %v1356 = vadd.f32 0.0, %v1355
      %v1357 = vpop.f32.mrb[0].mxu0
      %1358 = vmatprep.mubr.f32.mxu0 0.0
      %1359 = vmatmul.mubr.f32.gmra.mrb[0].mxu0 %v1146
      %v1360 = vpop.f32.mrb[0].mxu0
      %v1361 = vadd.f32 0.0, %v1360
      %v1362 = vpop.f32.mrb[0].mxu0
      %1363 = vmatprep.mubr.f32.mxu0 0.0
      %1364 = vmatmul.mubr.f32.gmra.mrb[0].mxu0 %v1148
      %v1365 = vpop.f32.mrb[0].mxu0
      %v1366 = vadd.f32 0.0, %v1365
      %v1367 = vpop.f32.mrb[0].mxu0
      %1368 = vmatprep.mubr.f32.mxu0 0.0
      %1369 = vmatmul.mubr.f32.gmra.mrb[0].mxu0 %v1150
      %v1370 = vpop.f32.mrb[0].mxu0
      %v1371 = vadd.f32 0.0, %v1370
      %v1372 = vpop.f32.mrb[0].mxu0
      %1373 = vmatprep.mubr.f32.mxu0 0.0
      %1374 = vmatmul.mubr.f32.gmra.mrb[0].mxu0 %v1152
      %v1375 = vpop.f32.mrb[0].mxu0
      %v1376 = vadd.f32 0.0, %v1375
      %v1377 = vpop.f32.mrb[0].mxu0
      %1378 = vdwg.mxu0
      %v1379 = vadd.f32 %v849, %v1221
      %v1380 = vadd.f32 %v854, %v1226
      %v1381 = vadd.f32 %v859, %v1231
      %v1382 = vadd.f32 %v864, %v1236
      %v1383 = vadd.f32 %v869, %v1241
      %v1384 = vadd.f32 %v874, %v1246
      %v1385 = vadd.f32 %v879, %v1251
      %v1386 = vadd.f32 %v884, %v1256
      %v1387 = vadd.f32 %v889, %v1261
      %v1388 = vadd.f32 %v894, %v1266
      %v1389 = vadd.f32 %v899, %v1271
      %v1390 = vadd.f32 %v904, %v1276
      %v1391 = vadd.f32 %v909, %v1281
      %v1392 = vadd.f32 %v914, %v1286
      %v1393 = vadd.f32 %v919, %v1291
      %v1394 = vadd.f32 %v924, %v1296
      %v1395 = vadd.f32 %v929, %v1301
      %v1396 = vadd.f32 %v934, %v1306
      %v1397 = vadd.f32 %v939, %v1311
      %v1398 = vadd.f32 %v944, %v1316
      %v1399 = vadd.f32 %v949, %v1321
      %v1400 = vadd.f32 %v954, %v1326
      %v1401 = vadd.f32 %v959, %v1331
      %v1402 = vadd.f32 %v964, %v1336
      %v1403 = vadd.f32 %v969, %v1341
      %v1404 = vadd.f32 %v974, %v1346
      %v1405 = vadd.f32 %v979, %v1351
      %v1406 = vadd.f32 %v984, %v1356
      %v1407 = vadd.f32 %v989, %v1361
      %v1408 = vadd.f32 %v994, %v1366
      %v1409 = vadd.f32 %v999, %v1371
      %v1410 = vadd.f32 %v1004, %v1376
      %s1411 = scalar_lea.vmem %s1, 24
      %v1412 = vld [vmem:[%s1411] sm:$0xff]
      %v1414 = vsel %vm428, %v290, 0
      %v1417 = vsel %vm428, %v291, 0
      %1419 = vmatprep.subr.mxu0 0.0
      %1420 = vmatpush1.msra.mxu0 %v1412
      %1421 = vmatprep.subr.mxu0 0.0
      %1422 = vmatpush1.msra.mxu0 0.0
      %1423 = vmatprep.subr.mxu0 0.0
      %1424 = vmatpush1.msra.mxu0 0.0
      %1425 = vmatprep.subr.mxu0 0.0
      %1426 = vmatpush1.msra.mxu0 0.0
      %1427 = vmatprep.subr.mxu0 0.0
      %1428 = vmatpush1.msra.mxu0 0.0
      %1429 = vmatprep.subr.mxu0 0.0
      %1430 = vmatpush1.msra.mxu0 0.0
      %1431 = vmatprep.subr.mxu0 0.0
      %1432 = vmatpush1.msra.mxu0 0.0
      %1433 = vmatprep.subr.mxu0 0.0
      %1434 = vmatpush1.msra.mxu0 0.0
      %1435 = vmatprep.subr.mxu0 0.0
      %1436 = vmatpush1.msra.mxu0 0.0
      %1437 = vmatprep.subr.mxu0 0.0
      %1438 = vmatpush1.msra.mxu0 0.0
      %1439 = vmatprep.subr.mxu0 0.0
      %1440 = vmatpush1.msra.mxu0 0.0
      %1441 = vmatprep.subr.mxu0 0.0
      %1442 = vmatpush1.msra.mxu0 0.0
      %1443 = vmatprep.subr.mxu0 0.0
      %1444 = vmatpush1.msra.mxu0 0.0
      %1445 = vmatprep.subr.mxu0 0.0
      %1446 = vmatpush1.msra.mxu0 0.0
      %1447 = vmatprep.subr.mxu0 0.0
      %1448 = vmatpush1.msra.mxu0 0.0
      %1449 = vmatprep.subr.mxu0 0.0
      %1450 = vmatpush1.msra.mxu0 0.0
      %1451 = vmatprep.subr.mxu0 0.0
      %1452 = vmatpush1.msra.mxu0 0.0
      %1453 = vmatprep.subr.mxu0 0.0
      %1454 = vmatpush1.msra.mxu0 0.0
      %1455 = vmatprep.subr.mxu0 0.0
      %1456 = vmatpush1.msra.mxu0 0.0
      %1457 = vmatprep.subr.mxu0 0.0
      %1458 = vmatpush1.msra.mxu0 0.0
      %1459 = vmatprep.subr.mxu0 0.0
      %1460 = vmatpush1.msra.mxu0 0.0
      %1461 = vmatprep.subr.mxu0 0.0
      %1462 = vmatpush1.msra.mxu0 0.0
      %1463 = vmatprep.subr.mxu0 0.0
      %1464 = vmatpush1.msra.mxu0 0.0
      %1465 = vmatprep.subr.mxu0 0.0
      %1466 = vmatpush1.msra.mxu0 0.0
      %1467 = vmatprep.subr.mxu0 0.0
      %1468 = vmatpush1.msra.mxu0 0.0
      %1469 = vmatprep.subr.mxu0 0.0
      %1470 = vmatpush1.msra.mxu0 0.0
      %1471 = vmatprep.subr.mxu0 0.0
      %1472 = vmatpush1.msra.mxu0 0.0
      %1473 = vmatprep.subr.mxu0 0.0
      %1474 = vmatpush1.msra.mxu0 0.0
      %1475 = vmatprep.subr.mxu0 0.0
      %1476 = vmatpush1.msra.mxu0 0.0
      %1477 = vmatprep.subr.mxu0 0.0
      %1478 = vmatpush1.msra.mxu0 0.0
      %1479 = vmatprep.subr.mxu0 0.0
      %1480 = vmatpush1.msra.mxu0 0.0
      %1481 = vmatprep.subr.mxu0 0.0
      %1482 = vmatpush1.msra.mxu0 0.0
      %1483 = vmatprep.mubr.f32.mxu0 0.0
      %1484 = vmatmul.mubr.f32.gmra.mrb[0].mxu0 %v722
      %v1485 = vpop.f32.mrb[0].mxu0
      %v1486 = vadd.f32 0.0, %v1485
      %v1487 = vpop.f32.mrb[0].mxu0
      %1488 = vmatprep.mubr.f32.mxu0 0.0
      %1489 = vmatmul.mubr.f32.gmra.mrb[0].mxu0 %v724
      %v1490 = vpop.f32.mrb[0].mxu0
      %v1491 = vadd.f32 0.0, %v1490
      %v1492 = vpop.f32.mrb[0].mxu0
      %1493 = vmatprep.mubr.f32.mxu0 0.0
      %1494 = vmatmul.mubr.f32.gmra.mrb[0].mxu0 %v726
      %v1495 = vpop.f32.mrb[0].mxu0
      %v1496 = vadd.f32 0.0, %v1495
      %v1497 = vpop.f32.mrb[0].mxu0
      %1498 = vmatprep.mubr.f32.mxu0 0.0
      %1499 = vmatmul.mubr.f32.gmra.mrb[0].mxu0 %v728
      %v1500 = vpop.f32.mrb[0].mxu0
      %v1501 = vadd.f32 0.0, %v1500
      %v1502 = vpop.f32.mrb[0].mxu0
      %1503 = vmatprep.mubr.f32.mxu0 0.0
      %1504 = vmatmul.mubr.f32.gmra.mrb[0].mxu0 %v730
      %v1505 = vpop.f32.mrb[0].mxu0
      %v1506 = vadd.f32 0.0, %v1505
      %v1507 = vpop.f32.mrb[0].mxu0
      %1508 = vmatprep.mubr.f32.mxu0 0.0
      %1509 = vmatmul.mubr.f32.gmra.mrb[0].mxu0 %v732
      %v1510 = vpop.f32.mrb[0].mxu0
      %v1511 = vadd.f32 0.0, %v1510
      %v1512 = vpop.f32.mrb[0].mxu0
      %1513 = vmatprep.mubr.f32.mxu0 0.0
      %1514 = vmatmul.mubr.f32.gmra.mrb[0].mxu0 %v734
      %v1515 = vpop.f32.mrb[0].mxu0
      %v1516 = vadd.f32 0.0, %v1515
      %v1517 = vpop.f32.mrb[0].mxu0
      %1518 = vmatprep.mubr.f32.mxu0 0.0
      %1519 = vmatmul.mubr.f32.gmra.mrb[0].mxu0 %v736
      %v1520 = vpop.f32.mrb[0].mxu0
      %v1521 = vadd.f32 0.0, %v1520
      %v1522 = vpop.f32.mrb[0].mxu0
      %1523 = vmatprep.mubr.f32.mxu0 0.0
      %1524 = vmatmul.mubr.f32.gmra.mrb[0].mxu0 %v738
      %v1525 = vpop.f32.mrb[0].mxu0
      %v1526 = vadd.f32 0.0, %v1525
      %v1527 = vpop.f32.mrb[0].mxu0
      %1528 = vmatprep.mubr.f32.mxu0 0.0
      %1529 = vmatmul.mubr.f32.gmra.mrb[0].mxu0 %v740
      %v1530 = vpop.f32.mrb[0].mxu0
      %v1531 = vadd.f32 0.0, %v1530
      %v1532 = vpop.f32.mrb[0].mxu0
      %1533 = vmatprep.mubr.f32.mxu0 0.0
      %1534 = vmatmul.mubr.f32.gmra.mrb[0].mxu0 %v742
      %v1535 = vpop.f32.mrb[0].mxu0
      %v1536 = vadd.f32 0.0, %v1535
      %v1537 = vpop.f32.mrb[0].mxu0
      %1538 = vmatprep.mubr.f32.mxu0 0.0
      %1539 = vmatmul.mubr.f32.gmra.mrb[0].mxu0 %v744
      %v1540 = vpop.f32.mrb[0].mxu0
      %v1541 = vadd.f32 0.0, %v1540
      %v1542 = vpop.f32.mrb[0].mxu0
      %1543 = vmatprep.mubr.f32.mxu0 0.0
      %1544 = vmatmul.mubr.f32.gmra.mrb[0].mxu0 %v746
      %v1545 = vpop.f32.mrb[0].mxu0
      %v1546 = vadd.f32 0.0, %v1545
      %v1547 = vpop.f32.mrb[0].mxu0
      %1548 = vmatprep.mubr.f32.mxu0 0.0
      %1549 = vmatmul.mubr.f32.gmra.mrb[0].mxu0 %v748
      %v1550 = vpop.f32.mrb[0].mxu0
      %v1551 = vadd.f32 0.0, %v1550
      %v1552 = vpop.f32.mrb[0].mxu0
      %1553 = vmatprep.mubr.f32.mxu0 0.0
      %1554 = vmatmul.mubr.f32.gmra.mrb[0].mxu0 %v750
      %v1555 = vpop.f32.mrb[0].mxu0
      %v1556 = vadd.f32 0.0, %v1555
      %v1557 = vpop.f32.mrb[0].mxu0
      %1558 = vmatprep.mubr.f32.mxu0 0.0
      %1559 = vmatmul.mubr.f32.gmra.mrb[0].mxu0 %v752
      %v1560 = vpop.f32.mrb[0].mxu0
      %v1561 = vadd.f32 0.0, %v1560
      %v1562 = vpop.f32.mrb[0].mxu0
      %1563 = vmatprep.mubr.f32.mxu0 0.0
      %1564 = vmatmul.mubr.f32.gmra.mrb[0].mxu0 %v754
      %v1565 = vpop.f32.mrb[0].mxu0
      %v1566 = vadd.f32 0.0, %v1565
      %v1567 = vpop.f32.mrb[0].mxu0
      %1568 = vmatprep.mubr.f32.mxu0 0.0
      %1569 = vmatmul.mubr.f32.gmra.mrb[0].mxu0 %v756
      %v1570 = vpop.f32.mrb[0].mxu0
      %v1571 = vadd.f32 0.0, %v1570
      %v1572 = vpop.f32.mrb[0].mxu0
      %1573 = vmatprep.mubr.f32.mxu0 0.0
      %1574 = vmatmul.mubr.f32.gmra.mrb[0].mxu0 %v758
      %v1575 = vpop.f32.mrb[0].mxu0
      %v1576 = vadd.f32 0.0, %v1575
      %v1577 = vpop.f32.mrb[0].mxu0
      %1578 = vmatprep.mubr.f32.mxu0 0.0
      %1579 = vmatmul.mubr.f32.gmra.mrb[0].mxu0 %v760
      %v1580 = vpop.f32.mrb[0].mxu0
      %v1581 = vadd.f32 0.0, %v1580
      %v1582 = vpop.f32.mrb[0].mxu0
      %1583 = vmatprep.mubr.f32.mxu0 0.0
      %1584 = vmatmul.mubr.f32.gmra.mrb[0].mxu0 %v762
      %v1585 = vpop.f32.mrb[0].mxu0
      %v1586 = vadd.f32 0.0, %v1585
      %v1587 = vpop.f32.mrb[0].mxu0
      %1588 = vmatprep.mubr.f32.mxu0 0.0
      %1589 = vmatmul.mubr.f32.gmra.mrb[0].mxu0 %v764
      %v1590 = vpop.f32.mrb[0].mxu0
      %v1591 = vadd.f32 0.0, %v1590
      %v1592 = vpop.f32.mrb[0].mxu0
      %1593 = vmatprep.mubr.f32.mxu0 0.0
      %1594 = vmatmul.mubr.f32.gmra.mrb[0].mxu0 %v766
      %v1595 = vpop.f32.mrb[0].mxu0
      %v1596 = vadd.f32 0.0, %v1595
      %v1597 = vpop.f32.mrb[0].mxu0
      %1598 = vmatprep.mubr.f32.mxu0 0.0
      %1599 = vmatmul.mubr.f32.gmra.mrb[0].mxu0 %v768
      %v1600 = vpop.f32.mrb[0].mxu0
      %v1601 = vadd.f32 0.0, %v1600
      %v1602 = vpop.f32.mrb[0].mxu0
      %1603 = vmatprep.mubr.f32.mxu0 0.0
      %1604 = vmatmul.mubr.f32.gmra.mrb[0].mxu0 %v770
      %v1605 = vpop.f32.mrb[0].mxu0
      %v1606 = vadd.f32 0.0, %v1605
      %v1607 = vpop.f32.mrb[0].mxu0
      %1608 = vmatprep.mubr.f32.mxu0 0.0
      %1609 = vmatmul.mubr.f32.gmra.mrb[0].mxu0 %v772
      %v1610 = vpop.f32.mrb[0].mxu0
      %v1611 = vadd.f32 0.0, %v1610
      %v1612 = vpop.f32.mrb[0].mxu0
      %1613 = vmatprep.mubr.f32.mxu0 0.0
      %1614 = vmatmul.mubr.f32.gmra.mrb[0].mxu0 %v774
      %v1615 = vpop.f32.mrb[0].mxu0
      %v1616 = vadd.f32 0.0, %v1615
      %v1617 = vpop.f32.mrb[0].mxu0
      %1618 = vmatprep.mubr.f32.mxu0 0.0
      %1619 = vmatmul.mubr.f32.gmra.mrb[0].mxu0 %v776
      %v1620 = vpop.f32.mrb[0].mxu0
      %v1621 = vadd.f32 0.0, %v1620
      %v1622 = vpop.f32.mrb[0].mxu0
      %1623 = vmatprep.mubr.f32.mxu0 0.0
      %1624 = vmatmul.mubr.f32.gmra.mrb[0].mxu0 %v778
      %v1625 = vpop.f32.mrb[0].mxu0
      %v1626 = vadd.f32 0.0, %v1625
      %v1627 = vpop.f32.mrb[0].mxu0
      %1628 = vmatprep.mubr.f32.mxu0 0.0
      %1629 = vmatmul.mubr.f32.gmra.mrb[0].mxu0 %v780
      %v1630 = vpop.f32.mrb[0].mxu0
      %v1631 = vadd.f32 0.0, %v1630
      %v1632 = vpop.f32.mrb[0].mxu0
      %1633 = vmatprep.mubr.f32.mxu0 0.0
      %1634 = vmatmul.mubr.f32.gmra.mrb[0].mxu0 %v1414
      %v1635 = vpop.f32.mrb[0].mxu0
      %v1636 = vadd.f32 0.0, %v1635
      %v1637 = vpop.f32.mrb[0].mxu0
      %1638 = vmatprep.mubr.f32.mxu0 0.0
      %1639 = vmatmul.mubr.f32.gmra.mrb[0].mxu0 %v1417
      %v1640 = vpop.f32.mrb[0].mxu0
      %v1641 = vadd.f32 0.0, %v1640
      %v1642 = vpop.f32.mrb[0].mxu0
      %1643 = vdwg.mxu0
      %v1644 = vadd.f32 %v1379, %v1486
      %v1645 = vadd.f32 %v1380, %v1491
      %v1646 = vadd.f32 %v1381, %v1496
      %v1647 = vadd.f32 %v1382, %v1501
      %v1648 = vadd.f32 %v1383, %v1506
      %v1649 = vadd.f32 %v1384, %v1511
      %v1650 = vadd.f32 %v1385, %v1516
      %v1651 = vadd.f32 %v1386, %v1521
      %v1652 = vadd.f32 %v1387, %v1526
      %v1653 = vadd.f32 %v1388, %v1531
      %v1654 = vadd.f32 %v1389, %v1536
      %v1655 = vadd.f32 %v1390, %v1541
      %v1656 = vadd.f32 %v1391, %v1546
      %v1657 = vadd.f32 %v1392, %v1551
      %v1658 = vadd.f32 %v1393, %v1556
      %v1659 = vadd.f32 %v1394, %v1561
      %v1660 = vadd.f32 %v1395, %v1566
      %v1661 = vadd.f32 %v1396, %v1571
      %v1662 = vadd.f32 %v1397, %v1576
      %v1663 = vadd.f32 %v1398, %v1581
      %v1664 = vadd.f32 %v1399, %v1586
      %v1665 = vadd.f32 %v1400, %v1591
      %v1666 = vadd.f32 %v1401, %v1596
      %v1667 = vadd.f32 %v1402, %v1601
      %v1668 = vadd.f32 %v1403, %v1606
      %v1669 = vadd.f32 %v1404, %v1611
      %v1670 = vadd.f32 %v1405, %v1616
      %v1671 = vadd.f32 %v1406, %v1621
      %v1672 = vadd.f32 %v1407, %v1626
      %v1673 = vadd.f32 %v1408, %v1631
      %v1674 = vadd.f32 %v1409, %v1636
      %v1675 = vadd.f32 %v1410, %v1641
      %v1677 = vrot.slane %v290, 1
      %v1678 = vrot.slane %v291, 1
      %v1679 = vsel %vm345, %v1677, %v1678
      %v1680 = vrot.slane %v292, 1
      %v1681 = vsel %vm345, %v1678, %v1680
      %s1682 = scalar_lea.vmem %s1, 32
      %v1683 = vld [vmem:[%s1682] sm:$0xff]
      %v1684 = vsel %vm428, %v1679, 0
      %v1686 = vsel %vm428, %v1681, 0
      %1688 = vmatprep.subr.mxu0 0.0
      %1689 = vmatpush1.msra.mxu0 %v1683
      %1690 = vmatprep.subr.mxu0 0.0
      %1691 = vmatpush1.msra.mxu0 0.0
      %1692 = vmatprep.subr.mxu0 0.0
      %1693 = vmatpush1.msra.mxu0 0.0
      %1694 = vmatprep.subr.mxu0 0.0
      %1695 = vmatpush1.msra.mxu0 0.0
      %1696 = vmatprep.subr.mxu0 0.0
      %1697 = vmatpush1.msra.mxu0 0.0
      %1698 = vmatprep.subr.mxu0 0.0
      %1699 = vmatpush1.msra.mxu0 0.0
      %1700 = vmatprep.subr.mxu0 0.0
      %1701 = vmatpush1.msra.mxu0 0.0
      %1702 = vmatprep.subr.mxu0 0.0
      %1703 = vmatpush1.msra.mxu0 0.0
      %1704 = vmatprep.subr.mxu0 0.0
      %1705 = vmatpush1.msra.mxu0 0.0
      %1706 = vmatprep.subr.mxu0 0.0
      %1707 = vmatpush1.msra.mxu0 0.0
      %1708 = vmatprep.subr.mxu0 0.0
      %1709 = vmatpush1.msra.mxu0 0.0
      %1710 = vmatprep.subr.mxu0 0.0
      %1711 = vmatpush1.msra.mxu0 0.0
      %1712 = vmatprep.subr.mxu0 0.0
      %1713 = vmatpush1.msra.mxu0 0.0
      %1714 = vmatprep.subr.mxu0 0.0
      %1715 = vmatpush1.msra.mxu0 0.0
      %1716 = vmatprep.subr.mxu0 0.0
      %1717 = vmatpush1.msra.mxu0 0.0
      %1718 = vmatprep.subr.mxu0 0.0
      %1719 = vmatpush1.msra.mxu0 0.0
      %1720 = vmatprep.subr.mxu0 0.0
      %1721 = vmatpush1.msra.mxu0 0.0
      %1722 = vmatprep.subr.mxu0 0.0
      %1723 = vmatpush1.msra.mxu0 0.0
      %1724 = vmatprep.subr.mxu0 0.0
      %1725 = vmatpush1.msra.mxu0 0.0
      %1726 = vmatprep.subr.mxu0 0.0
      %1727 = vmatpush1.msra.mxu0 0.0
      %1728 = vmatprep.subr.mxu0 0.0
      %1729 = vmatpush1.msra.mxu0 0.0
      %1730 = vmatprep.subr.mxu0 0.0
      %1731 = vmatpush1.msra.mxu0 0.0
      %1732 = vmatprep.subr.mxu0 0.0
      %1733 = vmatpush1.msra.mxu0 0.0
      %1734 = vmatprep.subr.mxu0 0.0
      %1735 = vmatpush1.msra.mxu0 0.0
      %1736 = vmatprep.subr.mxu0 0.0
      %1737 = vmatpush1.msra.mxu0 0.0
      %1738 = vmatprep.subr.mxu0 0.0
      %1739 = vmatpush1.msra.mxu0 0.0
      %1740 = vmatprep.subr.mxu0 0.0
      %1741 = vmatpush1.msra.mxu0 0.0
      %1742 = vmatprep.subr.mxu0 0.0
      %1743 = vmatpush1.msra.mxu0 0.0
      %1744 = vmatprep.subr.mxu0 0.0
      %1745 = vmatpush1.msra.mxu0 0.0
      %1746 = vmatprep.subr.mxu0 0.0
      %1747 = vmatpush1.msra.mxu0 0.0
      %1748 = vmatprep.subr.mxu0 0.0
      %1749 = vmatpush1.msra.mxu0 0.0
      %1750 = vmatprep.subr.mxu0 0.0
      %1751 = vmatpush1.msra.mxu0 0.0
      %1752 = vmatprep.mubr.f32.mxu0 0.0
      %1753 = vmatmul.mubr.f32.gmra.mrb[0].mxu0 %v433
      %v1754 = vpop.f32.mrb[0].mxu0
      %v1755 = vadd.f32 0.0, %v1754
      %v1756 = vpop.f32.mrb[0].mxu0
      %1757 = vmatprep.mubr.f32.mxu0 0.0
      %1758 = vmatmul.mubr.f32.gmra.mrb[0].mxu0 %v435
      %v1759 = vpop.f32.mrb[0].mxu0
      %v1760 = vadd.f32 0.0, %v1759
      %v1761 = vpop.f32.mrb[0].mxu0
      %1762 = vmatprep.mubr.f32.mxu0 0.0
      %1763 = vmatmul.mubr.f32.gmra.mrb[0].mxu0 %v437
      %v1764 = vpop.f32.mrb[0].mxu0
      %v1765 = vadd.f32 0.0, %v1764
      %v1766 = vpop.f32.mrb[0].mxu0
      %1767 = vmatprep.mubr.f32.mxu0 0.0
      %1768 = vmatmul.mubr.f32.gmra.mrb[0].mxu0 %v439
      %v1769 = vpop.f32.mrb[0].mxu0
      %v1770 = vadd.f32 0.0, %v1769
      %v1771 = vpop.f32.mrb[0].mxu0
      %1772 = vmatprep.mubr.f32.mxu0 0.0
      %1773 = vmatmul.mubr.f32.gmra.mrb[0].mxu0 %v441
      %v1774 = vpop.f32.mrb[0].mxu0
      %v1775 = vadd.f32 0.0, %v1774
      %v1776 = vpop.f32.mrb[0].mxu0
      %1777 = vmatprep.mubr.f32.mxu0 0.0
      %1778 = vmatmul.mubr.f32.gmra.mrb[0].mxu0 %v443
      %v1779 = vpop.f32.mrb[0].mxu0
      %v1780 = vadd.f32 0.0, %v1779
      %v1781 = vpop.f32.mrb[0].mxu0
      %1782 = vmatprep.mubr.f32.mxu0 0.0
      %1783 = vmatmul.mubr.f32.gmra.mrb[0].mxu0 %v445
      %v1784 = vpop.f32.mrb[0].mxu0
      %v1785 = vadd.f32 0.0, %v1784
      %v1786 = vpop.f32.mrb[0].mxu0
      %1787 = vmatprep.mubr.f32.mxu0 0.0
      %1788 = vmatmul.mubr.f32.gmra.mrb[0].mxu0 %v447
      %v1789 = vpop.f32.mrb[0].mxu0
      %v1790 = vadd.f32 0.0, %v1789
      %v1791 = vpop.f32.mrb[0].mxu0
      %1792 = vmatprep.mubr.f32.mxu0 0.0
      %1793 = vmatmul.mubr.f32.gmra.mrb[0].mxu0 %v449
      %v1794 = vpop.f32.mrb[0].mxu0
      %v1795 = vadd.f32 0.0, %v1794
      %v1796 = vpop.f32.mrb[0].mxu0
      %1797 = vmatprep.mubr.f32.mxu0 0.0
      %1798 = vmatmul.mubr.f32.gmra.mrb[0].mxu0 %v451
      %v1799 = vpop.f32.mrb[0].mxu0
      %v1800 = vadd.f32 0.0, %v1799
      %v1801 = vpop.f32.mrb[0].mxu0
      %1802 = vmatprep.mubr.f32.mxu0 0.0
      %1803 = vmatmul.mubr.f32.gmra.mrb[0].mxu0 %v453
      %v1804 = vpop.f32.mrb[0].mxu0
      %v1805 = vadd.f32 0.0, %v1804
      %v1806 = vpop.f32.mrb[0].mxu0
      %1807 = vmatprep.mubr.f32.mxu0 0.0
      %1808 = vmatmul.mubr.f32.gmra.mrb[0].mxu0 %v455
      %v1809 = vpop.f32.mrb[0].mxu0
      %v1810 = vadd.f32 0.0, %v1809
      %v1811 = vpop.f32.mrb[0].mxu0
      %1812 = vmatprep.mubr.f32.mxu0 0.0
      %1813 = vmatmul.mubr.f32.gmra.mrb[0].mxu0 %v457
      %v1814 = vpop.f32.mrb[0].mxu0
      %v1815 = vadd.f32 0.0, %v1814
      %v1816 = vpop.f32.mrb[0].mxu0
      %1817 = vmatprep.mubr.f32.mxu0 0.0
      %1818 = vmatmul.mubr.f32.gmra.mrb[0].mxu0 %v459
      %v1819 = vpop.f32.mrb[0].mxu0
      %v1820 = vadd.f32 0.0, %v1819
      %v1821 = vpop.f32.mrb[0].mxu0
      %1822 = vmatprep.mubr.f32.mxu0 0.0
      %1823 = vmatmul.mubr.f32.gmra.mrb[0].mxu0 %v461
      %v1824 = vpop.f32.mrb[0].mxu0
      %v1825 = vadd.f32 0.0, %v1824
      %v1826 = vpop.f32.mrb[0].mxu0
      %1827 = vmatprep.mubr.f32.mxu0 0.0
      %1828 = vmatmul.mubr.f32.gmra.mrb[0].mxu0 %v463
      %v1829 = vpop.f32.mrb[0].mxu0
      %v1830 = vadd.f32 0.0, %v1829
      %v1831 = vpop.f32.mrb[0].mxu0
      %1832 = vmatprep.mubr.f32.mxu0 0.0
      %1833 = vmatmul.mubr.f32.gmra.mrb[0].mxu0 %v465
      %v1834 = vpop.f32.mrb[0].mxu0
      %v1835 = vadd.f32 0.0, %v1834
      %v1836 = vpop.f32.mrb[0].mxu0
      %1837 = vmatprep.mubr.f32.mxu0 0.0
      %1838 = vmatmul.mubr.f32.gmra.mrb[0].mxu0 %v467
      %v1839 = vpop.f32.mrb[0].mxu0
      %v1840 = vadd.f32 0.0, %v1839
      %v1841 = vpop.f32.mrb[0].mxu0
      %1842 = vmatprep.mubr.f32.mxu0 0.0
      %1843 = vmatmul.mubr.f32.gmra.mrb[0].mxu0 %v469
      %v1844 = vpop.f32.mrb[0].mxu0
      %v1845 = vadd.f32 0.0, %v1844
      %v1846 = vpop.f32.mrb[0].mxu0
      %1847 = vmatprep.mubr.f32.mxu0 0.0
      %1848 = vmatmul.mubr.f32.gmra.mrb[0].mxu0 %v471
      %v1849 = vpop.f32.mrb[0].mxu0
      %v1850 = vadd.f32 0.0, %v1849
      %v1851 = vpop.f32.mrb[0].mxu0
      %1852 = vmatprep.mubr.f32.mxu0 0.0
      %1853 = vmatmul.mubr.f32.gmra.mrb[0].mxu0 %v473
      %v1854 = vpop.f32.mrb[0].mxu0
      %v1855 = vadd.f32 0.0, %v1854
      %v1856 = vpop.f32.mrb[0].mxu0
      %1857 = vmatprep.mubr.f32.mxu0 0.0
      %1858 = vmatmul.mubr.f32.gmra.mrb[0].mxu0 %v475
      %v1859 = vpop.f32.mrb[0].mxu0
      %v1860 = vadd.f32 0.0, %v1859
      %v1861 = vpop.f32.mrb[0].mxu0
      %1862 = vmatprep.mubr.f32.mxu0 0.0
      %1863 = vmatmul.mubr.f32.gmra.mrb[0].mxu0 %v477
      %v1864 = vpop.f32.mrb[0].mxu0
      %v1865 = vadd.f32 0.0, %v1864
      %v1866 = vpop.f32.mrb[0].mxu0
      %1867 = vmatprep.mubr.f32.mxu0 0.0
      %1868 = vmatmul.mubr.f32.gmra.mrb[0].mxu0 %v479
      %v1869 = vpop.f32.mrb[0].mxu0
      %v1870 = vadd.f32 0.0, %v1869
      %v1871 = vpop.f32.mrb[0].mxu0
      %1872 = vmatprep.mubr.f32.mxu0 0.0
      %1873 = vmatmul.mubr.f32.gmra.mrb[0].mxu0 %v481
      %v1874 = vpop.f32.mrb[0].mxu0
      %v1875 = vadd.f32 0.0, %v1874
      %v1876 = vpop.f32.mrb[0].mxu0
      %1877 = vmatprep.mubr.f32.mxu0 0.0
      %1878 = vmatmul.mubr.f32.gmra.mrb[0].mxu0 %v483
      %v1879 = vpop.f32.mrb[0].mxu0
      %v1880 = vadd.f32 0.0, %v1879
      %v1881 = vpop.f32.mrb[0].mxu0
      %1882 = vmatprep.mubr.f32.mxu0 0.0
      %1883 = vmatmul.mubr.f32.gmra.mrb[0].mxu0 %v485
      %v1884 = vpop.f32.mrb[0].mxu0
      %v1885 = vadd.f32 0.0, %v1884
      %v1886 = vpop.f32.mrb[0].mxu0
      %1887 = vmatprep.mubr.f32.mxu0 0.0
      %1888 = vmatmul.mubr.f32.gmra.mrb[0].mxu0 %v487
      %v1889 = vpop.f32.mrb[0].mxu0
      %v1890 = vadd.f32 0.0, %v1889
      %v1891 = vpop.f32.mrb[0].mxu0
      %1892 = vmatprep.mubr.f32.mxu0 0.0
      %1893 = vmatmul.mubr.f32.gmra.mrb[0].mxu0 %v489
      %v1894 = vpop.f32.mrb[0].mxu0
      %v1895 = vadd.f32 0.0, %v1894
      %v1896 = vpop.f32.mrb[0].mxu0
      %1897 = vmatprep.mubr.f32.mxu0 0.0
      %1898 = vmatmul.mubr.f32.gmra.mrb[0].mxu0 %v491
      %v1899 = vpop.f32.mrb[0].mxu0
      %v1900 = vadd.f32 0.0, %v1899
      %v1901 = vpop.f32.mrb[0].mxu0
      %1902 = vmatprep.mubr.f32.mxu0 0.0
      %1903 = vmatmul.mubr.f32.gmra.mrb[0].mxu0 %v1684
      %v1904 = vpop.f32.mrb[0].mxu0
      %v1905 = vadd.f32 0.0, %v1904
      %v1906 = vpop.f32.mrb[0].mxu0
      %1907 = vmatprep.mubr.f32.mxu0 0.0
      %1908 = vmatmul.mubr.f32.gmra.mrb[0].mxu0 %v1686
      %v1909 = vpop.f32.mrb[0].mxu0
      %v1910 = vadd.f32 0.0, %v1909
      %v1911 = vpop.f32.mrb[0].mxu0
      %1912 = vdwg.mxu0
      %v1913 = vadd.f32 %v1644, %v1755
      %v1914 = vadd.f32 %v1645, %v1760
      %v1915 = vadd.f32 %v1646, %v1765
      %v1916 = vadd.f32 %v1647, %v1770
      %v1917 = vadd.f32 %v1648, %v1775
      %v1918 = vadd.f32 %v1649, %v1780
      %v1919 = vadd.f32 %v1650, %v1785
      %v1920 = vadd.f32 %v1651, %v1790
      %v1921 = vadd.f32 %v1652, %v1795
      %v1922 = vadd.f32 %v1653, %v1800
      %v1923 = vadd.f32 %v1654, %v1805
      %v1924 = vadd.f32 %v1655, %v1810
      %v1925 = vadd.f32 %v1656, %v1815
      %v1926 = vadd.f32 %v1657, %v1820
      %v1927 = vadd.f32 %v1658, %v1825
      %v1928 = vadd.f32 %v1659, %v1830
      %v1929 = vadd.f32 %v1660, %v1835
      %v1930 = vadd.f32 %v1661, %v1840
      %v1931 = vadd.f32 %v1662, %v1845
      %v1932 = vadd.f32 %v1663, %v1850
      %v1933 = vadd.f32 %v1664, %v1855
      %v1934 = vadd.f32 %v1665, %v1860
      %v1935 = vadd.f32 %v1666, %v1865
      %v1936 = vadd.f32 %v1667, %v1870
      %v1937 = vadd.f32 %v1668, %v1875
      %v1938 = vadd.f32 %v1669, %v1880
      %v1939 = vadd.f32 %v1670, %v1885
      %v1940 = vadd.f32 %v1671, %v1890
      %v1941 = vadd.f32 %v1672, %v1895
      %v1942 = vadd.f32 %v1673, %v1900
      %v1943 = vadd.f32 %v1674, %v1905
      %v1944 = vadd.f32 %v1675, %v1910
      %v1945 = vrot.slane %v290, 2
      %v1946 = vrot.slane %v291, 2
      %v1947 = vsel %vm1007, %v1945, %v1946
      %v1948 = vrot.slane %v292, 2
      %v1949 = vsel %vm1007, %v1946, %v1948
      %s1950 = scalar_lea.vmem %s1, 40
      %v1951 = vld [vmem:[%s1950] sm:$0xff]
      %v1952 = vsel %vm428, %v1947, 0
      %v1954 = vsel %vm428, %v1949, 0
      %1956 = vmatprep.subr.mxu0 0.0
      %1957 = vmatpush1.msra.mxu0 %v1951
      %1958 = vmatprep.subr.mxu0 0.0
      %1959 = vmatpush1.msra.mxu0 0.0
      %1960 = vmatprep.subr.mxu0 0.0
      %1961 = vmatpush1.msra.mxu0 0.0
      %1962 = vmatprep.subr.mxu0 0.0
      %1963 = vmatpush1.msra.mxu0 0.0
      %1964 = vmatprep.subr.mxu0 0.0
      %1965 = vmatpush1.msra.mxu0 0.0
      %1966 = vmatprep.subr.mxu0 0.0
      %1967 = vmatpush1.msra.mxu0 0.0
      %1968 = vmatprep.subr.mxu0 0.0
      %1969 = vmatpush1.msra.mxu0 0.0
      %1970 = vmatprep.subr.mxu0 0.0
      %1971 = vmatpush1.msra.mxu0 0.0
      %1972 = vmatprep.subr.mxu0 0.0
      %1973 = vmatpush1.msra.mxu0 0.0
      %1974 = vmatprep.subr.mxu0 0.0
      %1975 = vmatpush1.msra.mxu0 0.0
      %1976 = vmatprep.subr.mxu0 0.0
      %1977 = vmatpush1.msra.mxu0 0.0
      %1978 = vmatprep.subr.mxu0 0.0
      %1979 = vmatpush1.msra.mxu0 0.0
      %1980 = vmatprep.subr.mxu0 0.0
      %1981 = vmatpush1.msra.mxu0 0.0
      %1982 = vmatprep.subr.mxu0 0.0
      %1983 = vmatpush1.msra.mxu0 0.0
      %1984 = vmatprep.subr.mxu0 0.0
      %1985 = vmatpush1.msra.mxu0 0.0
      %1986 = vmatprep.subr.mxu0 0.0
      %1987 = vmatpush1.msra.mxu0 0.0
      %1988 = vmatprep.subr.mxu0 0.0
      %1989 = vmatpush1.msra.mxu0 0.0
      %1990 = vmatprep.subr.mxu0 0.0
      %1991 = vmatpush1.msra.mxu0 0.0
      %1992 = vmatprep.subr.mxu0 0.0
      %1993 = vmatpush1.msra.mxu0 0.0
      %1994 = vmatprep.subr.mxu0 0.0
      %1995 = vmatpush1.msra.mxu0 0.0
      %1996 = vmatprep.subr.mxu0 0.0
      %1997 = vmatpush1.msra.mxu0 0.0
      %1998 = vmatprep.subr.mxu0 0.0
      %1999 = vmatpush1.msra.mxu0 0.0
      %2000 = vmatprep.subr.mxu0 0.0
      %2001 = vmatpush1.msra.mxu0 0.0
      %2002 = vmatprep.subr.mxu0 0.0
      %2003 = vmatpush1.msra.mxu0 0.0
      %2004 = vmatprep.subr.mxu0 0.0
      %2005 = vmatpush1.msra.mxu0 0.0
      %2006 = vmatprep.subr.mxu0 0.0
      %2007 = vmatpush1.msra.mxu0 0.0
      %2008 = vmatprep.subr.mxu0 0.0
      %2009 = vmatpush1.msra.mxu0 0.0
      %2010 = vmatprep.subr.mxu0 0.0
      %2011 = vmatpush1.msra.mxu0 0.0
      %2012 = vmatprep.subr.mxu0 0.0
      %2013 = vmatpush1.msra.mxu0 0.0
      %2014 = vmatprep.subr.mxu0 0.0
      %2015 = vmatpush1.msra.mxu0 0.0
      %2016 = vmatprep.subr.mxu0 0.0
      %2017 = vmatpush1.msra.mxu0 0.0
      %2018 = vmatprep.subr.mxu0 0.0
      %2019 = vmatpush1.msra.mxu0 0.0
      %2020 = vmatprep.mubr.f32.mxu0 0.0
      %2021 = vmatmul.mubr.f32.gmra.mrb[0].mxu0 %v1094
      %v2022 = vpop.f32.mrb[0].mxu0
      %v2023 = vadd.f32 0.0, %v2022
      %v2024 = vpop.f32.mrb[0].mxu0
      %2025 = vmatprep.mubr.f32.mxu0 0.0
      %2026 = vmatmul.mubr.f32.gmra.mrb[0].mxu0 %v1096
      %v2027 = vpop.f32.mrb[0].mxu0
      %v2028 = vadd.f32 0.0, %v2027
      %v2029 = vpop.f32.mrb[0].mxu0
      %2030 = vmatprep.mubr.f32.mxu0 0.0
      %2031 = vmatmul.mubr.f32.gmra.mrb[0].mxu0 %v1098
      %v2032 = vpop.f32.mrb[0].mxu0
      %v2033 = vadd.f32 0.0, %v2032
      %v2034 = vpop.f32.mrb[0].mxu0
      %2035 = vmatprep.mubr.f32.mxu0 0.0
      %2036 = vmatmul.mubr.f32.gmra.mrb[0].mxu0 %v1100
      %v2037 = vpop.f32.mrb[0].mxu0
      %v2038 = vadd.f32 0.0, %v2037
      %v2039 = vpop.f32.mrb[0].mxu0
      %2040 = vmatprep.mubr.f32.mxu0 0.0
      %2041 = vmatmul.mubr.f32.gmra.mrb[0].mxu0 %v1102
      %v2042 = vpop.f32.mrb[0].mxu0
      %v2043 = vadd.f32 0.0, %v2042
      %v2044 = vpop.f32.mrb[0].mxu0
      %2045 = vmatprep.mubr.f32.mxu0 0.0
      %2046 = vmatmul.mubr.f32.gmra.mrb[0].mxu0 %v1104
      %v2047 = vpop.f32.mrb[0].mxu0
      %v2048 = vadd.f32 0.0, %v2047
      %v2049 = vpop.f32.mrb[0].mxu0
      %2050 = vmatprep.mubr.f32.mxu0 0.0
      %2051 = vmatmul.mubr.f32.gmra.mrb[0].mxu0 %v1106
      %v2052 = vpop.f32.mrb[0].mxu0
      %v2053 = vadd.f32 0.0, %v2052
      %v2054 = vpop.f32.mrb[0].mxu0
      %2055 = vmatprep.mubr.f32.mxu0 0.0
      %2056 = vmatmul.mubr.f32.gmra.mrb[0].mxu0 %v1108
      %v2057 = vpop.f32.mrb[0].mxu0
      %v2058 = vadd.f32 0.0, %v2057
      %v2059 = vpop.f32.mrb[0].mxu0
      %2060 = vmatprep.mubr.f32.mxu0 0.0
      %2061 = vmatmul.mubr.f32.gmra.mrb[0].mxu0 %v1110
      %v2062 = vpop.f32.mrb[0].mxu0
      %v2063 = vadd.f32 0.0, %v2062
      %v2064 = vpop.f32.mrb[0].mxu0
      %2065 = vmatprep.mubr.f32.mxu0 0.0
      %2066 = vmatmul.mubr.f32.gmra.mrb[0].mxu0 %v1112
      %v2067 = vpop.f32.mrb[0].mxu0
      %v2068 = vadd.f32 0.0, %v2067
      %v2069 = vpop.f32.mrb[0].mxu0
      %2070 = vmatprep.mubr.f32.mxu0 0.0
      %2071 = vmatmul.mubr.f32.gmra.mrb[0].mxu0 %v1114
      %v2072 = vpop.f32.mrb[0].mxu0
      %v2073 = vadd.f32 0.0, %v2072
      %v2074 = vpop.f32.mrb[0].mxu0
      %2075 = vmatprep.mubr.f32.mxu0 0.0
      %2076 = vmatmul.mubr.f32.gmra.mrb[0].mxu0 %v1116
      %v2077 = vpop.f32.mrb[0].mxu0
      %v2078 = vadd.f32 0.0, %v2077
      %v2079 = vpop.f32.mrb[0].mxu0
      %2080 = vmatprep.mubr.f32.mxu0 0.0
      %2081 = vmatmul.mubr.f32.gmra.mrb[0].mxu0 %v1118
      %v2082 = vpop.f32.mrb[0].mxu0
      %v2083 = vadd.f32 0.0, %v2082
      %v2084 = vpop.f32.mrb[0].mxu0
      %2085 = vmatprep.mubr.f32.mxu0 0.0
      %2086 = vmatmul.mubr.f32.gmra.mrb[0].mxu0 %v1120
      %v2087 = vpop.f32.mrb[0].mxu0
      %v2088 = vadd.f32 0.0, %v2087
      %v2089 = vpop.f32.mrb[0].mxu0
      %2090 = vmatprep.mubr.f32.mxu0 0.0
      %2091 = vmatmul.mubr.f32.gmra.mrb[0].mxu0 %v1122
      %v2092 = vpop.f32.mrb[0].mxu0
      %v2093 = vadd.f32 0.0, %v2092
      %v2094 = vpop.f32.mrb[0].mxu0
      %2095 = vmatprep.mubr.f32.mxu0 0.0
      %2096 = vmatmul.mubr.f32.gmra.mrb[0].mxu0 %v1124
      %v2097 = vpop.f32.mrb[0].mxu0
      %v2098 = vadd.f32 0.0, %v2097
      %v2099 = vpop.f32.mrb[0].mxu0
      %2100 = vmatprep.mubr.f32.mxu0 0.0
      %2101 = vmatmul.mubr.f32.gmra.mrb[0].mxu0 %v1126
      %v2102 = vpop.f32.mrb[0].mxu0
      %v2103 = vadd.f32 0.0, %v2102
      %v2104 = vpop.f32.mrb[0].mxu0
      %2105 = vmatprep.mubr.f32.mxu0 0.0
      %2106 = vmatmul.mubr.f32.gmra.mrb[0].mxu0 %v1128
      %v2107 = vpop.f32.mrb[0].mxu0
      %v2108 = vadd.f32 0.0, %v2107
      %v2109 = vpop.f32.mrb[0].mxu0
      %2110 = vmatprep.mubr.f32.mxu0 0.0
      %2111 = vmatmul.mubr.f32.gmra.mrb[0].mxu0 %v1130
      %v2112 = vpop.f32.mrb[0].mxu0
      %v2113 = vadd.f32 0.0, %v2112
      %v2114 = vpop.f32.mrb[0].mxu0
      %2115 = vmatprep.mubr.f32.mxu0 0.0
      %2116 = vmatmul.mubr.f32.gmra.mrb[0].mxu0 %v1132
      %v2117 = vpop.f32.mrb[0].mxu0
      %v2118 = vadd.f32 0.0, %v2117
      %v2119 = vpop.f32.mrb[0].mxu0
      %2120 = vmatprep.mubr.f32.mxu0 0.0
      %2121 = vmatmul.mubr.f32.gmra.mrb[0].mxu0 %v1134
      %v2122 = vpop.f32.mrb[0].mxu0
      %v2123 = vadd.f32 0.0, %v2122
      %v2124 = vpop.f32.mrb[0].mxu0
      %2125 = vmatprep.mubr.f32.mxu0 0.0
      %2126 = vmatmul.mubr.f32.gmra.mrb[0].mxu0 %v1136
      %v2127 = vpop.f32.mrb[0].mxu0
      %v2128 = vadd.f32 0.0, %v2127
      %v2129 = vpop.f32.mrb[0].mxu0
      %2130 = vmatprep.mubr.f32.mxu0 0.0
      %2131 = vmatmul.mubr.f32.gmra.mrb[0].mxu0 %v1138
      %v2132 = vpop.f32.mrb[0].mxu0
      %v2133 = vadd.f32 0.0, %v2132
      %v2134 = vpop.f32.mrb[0].mxu0
      %2135 = vmatprep.mubr.f32.mxu0 0.0
      %2136 = vmatmul.mubr.f32.gmra.mrb[0].mxu0 %v1140
      %v2137 = vpop.f32.mrb[0].mxu0
      %v2138 = vadd.f32 0.0, %v2137
      %v2139 = vpop.f32.mrb[0].mxu0
      %2140 = vmatprep.mubr.f32.mxu0 0.0
      %2141 = vmatmul.mubr.f32.gmra.mrb[0].mxu0 %v1142
      %v2142 = vpop.f32.mrb[0].mxu0
      %v2143 = vadd.f32 0.0, %v2142
      %v2144 = vpop.f32.mrb[0].mxu0
      %2145 = vmatprep.mubr.f32.mxu0 0.0
      %2146 = vmatmul.mubr.f32.gmra.mrb[0].mxu0 %v1144
      %v2147 = vpop.f32.mrb[0].mxu0
      %v2148 = vadd.f32 0.0, %v2147
      %v2149 = vpop.f32.mrb[0].mxu0
      %2150 = vmatprep.mubr.f32.mxu0 0.0
      %2151 = vmatmul.mubr.f32.gmra.mrb[0].mxu0 %v1146
      %v2152 = vpop.f32.mrb[0].mxu0
      %v2153 = vadd.f32 0.0, %v2152
      %v2154 = vpop.f32.mrb[0].mxu0
      %2155 = vmatprep.mubr.f32.mxu0 0.0
      %2156 = vmatmul.mubr.f32.gmra.mrb[0].mxu0 %v1148
      %v2157 = vpop.f32.mrb[0].mxu0
      %v2158 = vadd.f32 0.0, %v2157
      %v2159 = vpop.f32.mrb[0].mxu0
      %2160 = vmatprep.mubr.f32.mxu0 0.0
      %2161 = vmatmul.mubr.f32.gmra.mrb[0].mxu0 %v1150
      %v2162 = vpop.f32.mrb[0].mxu0
      %v2163 = vadd.f32 0.0, %v2162
      %v2164 = vpop.f32.mrb[0].mxu0
      %2165 = vmatprep.mubr.f32.mxu0 0.0
      %2166 = vmatmul.mubr.f32.gmra.mrb[0].mxu0 %v1152
      %v2167 = vpop.f32.mrb[0].mxu0
      %v2168 = vadd.f32 0.0, %v2167
      %v2169 = vpop.f32.mrb[0].mxu0
      %2170 = vmatprep.mubr.f32.mxu0 0.0
      %2171 = vmatmul.mubr.f32.gmra.mrb[0].mxu0 %v1952
      %v2172 = vpop.f32.mrb[0].mxu0
      %v2173 = vadd.f32 0.0, %v2172
      %v2174 = vpop.f32.mrb[0].mxu0
      %2175 = vmatprep.mubr.f32.mxu0 0.0
      %2176 = vmatmul.mubr.f32.gmra.mrb[0].mxu0 %v1954
      %v2177 = vpop.f32.mrb[0].mxu0
      %v2178 = vadd.f32 0.0, %v2177
      %v2179 = vpop.f32.mrb[0].mxu0
      %2180 = vdwg.mxu0
      %v2181 = vadd.f32 %v1913, %v2023
      %v2182 = vadd.f32 %v1914, %v2028
      %v2183 = vadd.f32 %v1915, %v2033
      %v2184 = vadd.f32 %v1916, %v2038
      %v2185 = vadd.f32 %v1917, %v2043
      %v2186 = vadd.f32 %v1918, %v2048
      %v2187 = vadd.f32 %v1919, %v2053
      %v2188 = vadd.f32 %v1920, %v2058
      %v2189 = vadd.f32 %v1921, %v2063
      %v2190 = vadd.f32 %v1922, %v2068
      %v2191 = vadd.f32 %v1923, %v2073
      %v2192 = vadd.f32 %v1924, %v2078
      %v2193 = vadd.f32 %v1925, %v2083
      %v2194 = vadd.f32 %v1926, %v2088
      %v2195 = vadd.f32 %v1927, %v2093
      %v2196 = vadd.f32 %v1928, %v2098
      %v2197 = vadd.f32 %v1929, %v2103
      %v2198 = vadd.f32 %v1930, %v2108
      %v2199 = vadd.f32 %v1931, %v2113
      %v2200 = vadd.f32 %v1932, %v2118
      %v2201 = vadd.f32 %v1933, %v2123
      %v2202 = vadd.f32 %v1934, %v2128
      %v2203 = vadd.f32 %v1935, %v2133
      %v2204 = vadd.f32 %v1936, %v2138
      %v2205 = vadd.f32 %v1937, %v2143
      %v2206 = vadd.f32 %v1938, %v2148
      %v2207 = vadd.f32 %v1939, %v2153
      %v2208 = vadd.f32 %v1940, %v2158
      %v2209 = vadd.f32 %v1941, %v2163
      %v2210 = vadd.f32 %v1942, %v2168
      %v2211 = vadd.f32 %v1943, %v2173
      %v2212 = vadd.f32 %v1944, %v2178
      %s2213 = scalar_lea.vmem %s1, 48
      %v2214 = vld [vmem:[%s2213] sm:$0xff]
      %v2216 = vsel %vm428, %v293, 0
      %v2219 = vsel %vm428, %v294, 0
      %2221 = vmatprep.subr.mxu0 0.0
      %2222 = vmatpush1.msra.mxu0 %v2214
      %2223 = vmatprep.subr.mxu0 0.0
      %2224 = vmatpush1.msra.mxu0 0.0
      %2225 = vmatprep.subr.mxu0 0.0
      %2226 = vmatpush1.msra.mxu0 0.0
      %2227 = vmatprep.subr.mxu0 0.0
      %2228 = vmatpush1.msra.mxu0 0.0
      %2229 = vmatprep.subr.mxu0 0.0
      %2230 = vmatpush1.msra.mxu0 0.0
      %2231 = vmatprep.subr.mxu0 0.0
      %2232 = vmatpush1.msra.mxu0 0.0
      %2233 = vmatprep.subr.mxu0 0.0
      %2234 = vmatpush1.msra.mxu0 0.0
      %2235 = vmatprep.subr.mxu0 0.0
      %2236 = vmatpush1.msra.mxu0 0.0
      %2237 = vmatprep.subr.mxu0 0.0
      %2238 = vmatpush1.msra.mxu0 0.0
      %2239 = vmatprep.subr.mxu0 0.0
      %2240 = vmatpush1.msra.mxu0 0.0
      %2241 = vmatprep.subr.mxu0 0.0
      %2242 = vmatpush1.msra.mxu0 0.0
      %2243 = vmatprep.subr.mxu0 0.0
      %2244 = vmatpush1.msra.mxu0 0.0
      %2245 = vmatprep.subr.mxu0 0.0
      %2246 = vmatpush1.msra.mxu0 0.0
      %2247 = vmatprep.subr.mxu0 0.0
      %2248 = vmatpush1.msra.mxu0 0.0
      %2249 = vmatprep.subr.mxu0 0.0
      %2250 = vmatpush1.msra.mxu0 0.0
      %2251 = vmatprep.subr.mxu0 0.0
      %2252 = vmatpush1.msra.mxu0 0.0
      %2253 = vmatprep.subr.mxu0 0.0
      %2254 = vmatpush1.msra.mxu0 0.0
      %2255 = vmatprep.subr.mxu0 0.0
      %2256 = vmatpush1.msra.mxu0 0.0
      %2257 = vmatprep.subr.mxu0 0.0
      %2258 = vmatpush1.msra.mxu0 0.0
      %2259 = vmatprep.subr.mxu0 0.0
      %2260 = vmatpush1.msra.mxu0 0.0
      %2261 = vmatprep.subr.mxu0 0.0
      %2262 = vmatpush1.msra.mxu0 0.0
      %2263 = vmatprep.subr.mxu0 0.0
      %2264 = vmatpush1.msra.mxu0 0.0
      %2265 = vmatprep.subr.mxu0 0.0
      %2266 = vmatpush1.msra.mxu0 0.0
      %2267 = vmatprep.subr.mxu0 0.0
      %2268 = vmatpush1.msra.mxu0 0.0
      %2269 = vmatprep.subr.mxu0 0.0
      %2270 = vmatpush1.msra.mxu0 0.0
      %2271 = vmatprep.subr.mxu0 0.0
      %2272 = vmatpush1.msra.mxu0 0.0
      %2273 = vmatprep.subr.mxu0 0.0
      %2274 = vmatpush1.msra.mxu0 0.0
      %2275 = vmatprep.subr.mxu0 0.0
      %2276 = vmatpush1.msra.mxu0 0.0
      %2277 = vmatprep.subr.mxu0 0.0
      %2278 = vmatpush1.msra.mxu0 0.0
      %2279 = vmatprep.subr.mxu0 0.0
      %2280 = vmatpush1.msra.mxu0 0.0
      %2281 = vmatprep.subr.mxu0 0.0
      %2282 = vmatpush1.msra.mxu0 0.0
      %2283 = vmatprep.subr.mxu0 0.0
      %2284 = vmatpush1.msra.mxu0 0.0
      %2285 = vmatprep.mubr.f32.mxu0 0.0
      %2286 = vmatmul.mubr.f32.gmra.mrb[0].mxu0 %v726
      %v2287 = vpop.f32.mrb[0].mxu0
      %v2288 = vadd.f32 0.0, %v2287
      %v2289 = vpop.f32.mrb[0].mxu0
      %2290 = vmatprep.mubr.f32.mxu0 0.0
      %2291 = vmatmul.mubr.f32.gmra.mrb[0].mxu0 %v728
      %v2292 = vpop.f32.mrb[0].mxu0
      %v2293 = vadd.f32 0.0, %v2292
      %v2294 = vpop.f32.mrb[0].mxu0
      %2295 = vmatprep.mubr.f32.mxu0 0.0
      %2296 = vmatmul.mubr.f32.gmra.mrb[0].mxu0 %v730
      %v2297 = vpop.f32.mrb[0].mxu0
      %v2298 = vadd.f32 0.0, %v2297
      %v2299 = vpop.f32.mrb[0].mxu0
      %2300 = vmatprep.mubr.f32.mxu0 0.0
      %2301 = vmatmul.mubr.f32.gmra.mrb[0].mxu0 %v732
      %v2302 = vpop.f32.mrb[0].mxu0
      %v2303 = vadd.f32 0.0, %v2302
      %v2304 = vpop.f32.mrb[0].mxu0
      %2305 = vmatprep.mubr.f32.mxu0 0.0
      %2306 = vmatmul.mubr.f32.gmra.mrb[0].mxu0 %v734
      %v2307 = vpop.f32.mrb[0].mxu0
      %v2308 = vadd.f32 0.0, %v2307
      %v2309 = vpop.f32.mrb[0].mxu0
      %2310 = vmatprep.mubr.f32.mxu0 0.0
      %2311 = vmatmul.mubr.f32.gmra.mrb[0].mxu0 %v736
      %v2312 = vpop.f32.mrb[0].mxu0
      %v2313 = vadd.f32 0.0, %v2312
      %v2314 = vpop.f32.mrb[0].mxu0
      %2315 = vmatprep.mubr.f32.mxu0 0.0
      %2316 = vmatmul.mubr.f32.gmra.mrb[0].mxu0 %v738
      %v2317 = vpop.f32.mrb[0].mxu0
      %v2318 = vadd.f32 0.0, %v2317
      %v2319 = vpop.f32.mrb[0].mxu0
      %2320 = vmatprep.mubr.f32.mxu0 0.0
      %2321 = vmatmul.mubr.f32.gmra.mrb[0].mxu0 %v740
      %v2322 = vpop.f32.mrb[0].mxu0
      %v2323 = vadd.f32 0.0, %v2322
      %v2324 = vpop.f32.mrb[0].mxu0
      %2325 = vmatprep.mubr.f32.mxu0 0.0
      %2326 = vmatmul.mubr.f32.gmra.mrb[0].mxu0 %v742
      %v2327 = vpop.f32.mrb[0].mxu0
      %v2328 = vadd.f32 0.0, %v2327
      %v2329 = vpop.f32.mrb[0].mxu0
      %2330 = vmatprep.mubr.f32.mxu0 0.0
      %2331 = vmatmul.mubr.f32.gmra.mrb[0].mxu0 %v744
      %v2332 = vpop.f32.mrb[0].mxu0
      %v2333 = vadd.f32 0.0, %v2332
      %v2334 = vpop.f32.mrb[0].mxu0
      %2335 = vmatprep.mubr.f32.mxu0 0.0
      %2336 = vmatmul.mubr.f32.gmra.mrb[0].mxu0 %v746
      %v2337 = vpop.f32.mrb[0].mxu0
      %v2338 = vadd.f32 0.0, %v2337
      %v2339 = vpop.f32.mrb[0].mxu0
      %2340 = vmatprep.mubr.f32.mxu0 0.0
      %2341 = vmatmul.mubr.f32.gmra.mrb[0].mxu0 %v748
      %v2342 = vpop.f32.mrb[0].mxu0
      %v2343 = vadd.f32 0.0, %v2342
      %v2344 = vpop.f32.mrb[0].mxu0
      %2345 = vmatprep.mubr.f32.mxu0 0.0
      %2346 = vmatmul.mubr.f32.gmra.mrb[0].mxu0 %v750
      %v2347 = vpop.f32.mrb[0].mxu0
      %v2348 = vadd.f32 0.0, %v2347
      %v2349 = vpop.f32.mrb[0].mxu0
      %2350 = vmatprep.mubr.f32.mxu0 0.0
      %2351 = vmatmul.mubr.f32.gmra.mrb[0].mxu0 %v752
      %v2352 = vpop.f32.mrb[0].mxu0
      %v2353 = vadd.f32 0.0, %v2352
      %v2354 = vpop.f32.mrb[0].mxu0
      %2355 = vmatprep.mubr.f32.mxu0 0.0
      %2356 = vmatmul.mubr.f32.gmra.mrb[0].mxu0 %v754
      %v2357 = vpop.f32.mrb[0].mxu0
      %v2358 = vadd.f32 0.0, %v2357
      %v2359 = vpop.f32.mrb[0].mxu0
      %2360 = vmatprep.mubr.f32.mxu0 0.0
      %2361 = vmatmul.mubr.f32.gmra.mrb[0].mxu0 %v756
      %v2362 = vpop.f32.mrb[0].mxu0
      %v2363 = vadd.f32 0.0, %v2362
      %v2364 = vpop.f32.mrb[0].mxu0
      %2365 = vmatprep.mubr.f32.mxu0 0.0
      %2366 = vmatmul.mubr.f32.gmra.mrb[0].mxu0 %v758
      %v2367 = vpop.f32.mrb[0].mxu0
      %v2368 = vadd.f32 0.0, %v2367
      %v2369 = vpop.f32.mrb[0].mxu0
      %2370 = vmatprep.mubr.f32.mxu0 0.0
      %2371 = vmatmul.mubr.f32.gmra.mrb[0].mxu0 %v760
      %v2372 = vpop.f32.mrb[0].mxu0
      %v2373 = vadd.f32 0.0, %v2372
      %v2374 = vpop.f32.mrb[0].mxu0
      %2375 = vmatprep.mubr.f32.mxu0 0.0
      %2376 = vmatmul.mubr.f32.gmra.mrb[0].mxu0 %v762
      %v2377 = vpop.f32.mrb[0].mxu0
      %v2378 = vadd.f32 0.0, %v2377
      %v2379 = vpop.f32.mrb[0].mxu0
      %2380 = vmatprep.mubr.f32.mxu0 0.0
      %2381 = vmatmul.mubr.f32.gmra.mrb[0].mxu0 %v764
      %v2382 = vpop.f32.mrb[0].mxu0
      %v2383 = vadd.f32 0.0, %v2382
      %v2384 = vpop.f32.mrb[0].mxu0
      %2385 = vmatprep.mubr.f32.mxu0 0.0
      %2386 = vmatmul.mubr.f32.gmra.mrb[0].mxu0 %v766
      %v2387 = vpop.f32.mrb[0].mxu0
      %v2388 = vadd.f32 0.0, %v2387
      %v2389 = vpop.f32.mrb[0].mxu0
      %2390 = vmatprep.mubr.f32.mxu0 0.0
      %2391 = vmatmul.mubr.f32.gmra.mrb[0].mxu0 %v768
      %v2392 = vpop.f32.mrb[0].mxu0
      %v2393 = vadd.f32 0.0, %v2392
      %v2394 = vpop.f32.mrb[0].mxu0
      %2395 = vmatprep.mubr.f32.mxu0 0.0
      %2396 = vmatmul.mubr.f32.gmra.mrb[0].mxu0 %v770
      %v2397 = vpop.f32.mrb[0].mxu0
      %v2398 = vadd.f32 0.0, %v2397
      %v2399 = vpop.f32.mrb[0].mxu0
      %2400 = vmatprep.mubr.f32.mxu0 0.0
      %2401 = vmatmul.mubr.f32.gmra.mrb[0].mxu0 %v772
      %v2402 = vpop.f32.mrb[0].mxu0
      %v2403 = vadd.f32 0.0, %v2402
      %v2404 = vpop.f32.mrb[0].mxu0
      %2405 = vmatprep.mubr.f32.mxu0 0.0
      %2406 = vmatmul.mubr.f32.gmra.mrb[0].mxu0 %v774
      %v2407 = vpop.f32.mrb[0].mxu0
      %v2408 = vadd.f32 0.0, %v2407
      %v2409 = vpop.f32.mrb[0].mxu0
      %2410 = vmatprep.mubr.f32.mxu0 0.0
      %2411 = vmatmul.mubr.f32.gmra.mrb[0].mxu0 %v776
      %v2412 = vpop.f32.mrb[0].mxu0
      %v2413 = vadd.f32 0.0, %v2412
      %v2414 = vpop.f32.mrb[0].mxu0
      %2415 = vmatprep.mubr.f32.mxu0 0.0
      %2416 = vmatmul.mubr.f32.gmra.mrb[0].mxu0 %v778
      %v2417 = vpop.f32.mrb[0].mxu0
      %v2418 = vadd.f32 0.0, %v2417
      %v2419 = vpop.f32.mrb[0].mxu0
      %2420 = vmatprep.mubr.f32.mxu0 0.0
      %2421 = vmatmul.mubr.f32.gmra.mrb[0].mxu0 %v780
      %v2422 = vpop.f32.mrb[0].mxu0
      %v2423 = vadd.f32 0.0, %v2422
      %v2424 = vpop.f32.mrb[0].mxu0
      %2425 = vmatprep.mubr.f32.mxu0 0.0
      %2426 = vmatmul.mubr.f32.gmra.mrb[0].mxu0 %v1414
      %v2427 = vpop.f32.mrb[0].mxu0
      %v2428 = vadd.f32 0.0, %v2427
      %v2429 = vpop.f32.mrb[0].mxu0
      %2430 = vmatprep.mubr.f32.mxu0 0.0
      %2431 = vmatmul.mubr.f32.gmra.mrb[0].mxu0 %v1417
      %v2432 = vpop.f32.mrb[0].mxu0
      %v2433 = vadd.f32 0.0, %v2432
      %v2434 = vpop.f32.mrb[0].mxu0
      %2435 = vmatprep.mubr.f32.mxu0 0.0
      %2436 = vmatmul.mubr.f32.gmra.mrb[0].mxu0 %v2216
      %v2437 = vpop.f32.mrb[0].mxu0
      %v2438 = vadd.f32 0.0, %v2437
      %v2439 = vpop.f32.mrb[0].mxu0
      %2440 = vmatprep.mubr.f32.mxu0 0.0
      %2441 = vmatmul.mubr.f32.gmra.mrb[0].mxu0 %v2219
      %v2442 = vpop.f32.mrb[0].mxu0
      %v2443 = vadd.f32 0.0, %v2442
      %v2444 = vpop.f32.mrb[0].mxu0
      %2445 = vdwg.mxu0
      %v2446 = vadd.f32 %v2181, %v2288
      %v2447 = vadd.f32 %v2182, %v2293
      %v2448 = vadd.f32 %v2183, %v2298
      %v2449 = vadd.f32 %v2184, %v2303
      %v2450 = vadd.f32 %v2185, %v2308
      %v2451 = vadd.f32 %v2186, %v2313
      %v2452 = vadd.f32 %v2187, %v2318
      %v2453 = vadd.f32 %v2188, %v2323
      %v2454 = vadd.f32 %v2189, %v2328
      %v2455 = vadd.f32 %v2190, %v2333
      %v2456 = vadd.f32 %v2191, %v2338
      %v2457 = vadd.f32 %v2192, %v2343
      %v2458 = vadd.f32 %v2193, %v2348
      %v2459 = vadd.f32 %v2194, %v2353
      %v2460 = vadd.f32 %v2195, %v2358
      %v2461 = vadd.f32 %v2196, %v2363
      %v2462 = vadd.f32 %v2197, %v2368
      %v2463 = vadd.f32 %v2198, %v2373
      %v2464 = vadd.f32 %v2199, %v2378
      %v2465 = vadd.f32 %v2200, %v2383
      %v2466 = vadd.f32 %v2201, %v2388
      %v2467 = vadd.f32 %v2202, %v2393
      %v2468 = vadd.f32 %v2203, %v2398
      %v2469 = vadd.f32 %v2204, %v2403
      %v2470 = vadd.f32 %v2205, %v2408
      %v2471 = vadd.f32 %v2206, %v2413
      %v2472 = vadd.f32 %v2207, %v2418
      %v2473 = vadd.f32 %v2208, %v2423
      %v2474 = vadd.f32 %v2209, %v2428
      %v2475 = vadd.f32 %v2210, %v2433
      %v2476 = vadd.f32 %v2211, %v2438
      %v2477 = vadd.f32 %v2212, %v2443
      %v2479 = vrot.slane %v293, 1
      %v2480 = vrot.slane %v294, 1
      %v2481 = vsel %vm345, %v2479, %v2480
      %v2482 = vrot.slane %v295, 1
      %v2483 = vsel %vm345, %v2480, %v2482
      %s2484 = scalar_lea.vmem %s1, 56
      %v2485 = vld [vmem:[%s2484] sm:$0xff]
      %v2486 = vsel %vm428, %v2481, 0
      %v2488 = vsel %vm428, %v2483, 0
      %2490 = vmatprep.subr.mxu0 0.0
      %2491 = vmatpush1.msra.mxu0 %v2485
      %2492 = vmatprep.subr.mxu0 0.0
      %2493 = vmatpush1.msra.mxu0 0.0
      %2494 = vmatprep.subr.mxu0 0.0
      %2495 = vmatpush1.msra.mxu0 0.0
      %2496 = vmatprep.subr.mxu0 0.0
      %2497 = vmatpush1.msra.mxu0 0.0
      %2498 = vmatprep.subr.mxu0 0.0
      %2499 = vmatpush1.msra.mxu0 0.0
      %2500 = vmatprep.subr.mxu0 0.0
      %2501 = vmatpush1.msra.mxu0 0.0
      %2502 = vmatprep.subr.mxu0 0.0
      %2503 = vmatpush1.msra.mxu0 0.0
      %2504 = vmatprep.subr.mxu0 0.0
      %2505 = vmatpush1.msra.mxu0 0.0
      %2506 = vmatprep.subr.mxu0 0.0
      %2507 = vmatpush1.msra.mxu0 0.0
      %2508 = vmatprep.subr.mxu0 0.0
      %2509 = vmatpush1.msra.mxu0 0.0
      %2510 = vmatprep.subr.mxu0 0.0
      %2511 = vmatpush1.msra.mxu0 0.0
      %2512 = vmatprep.subr.mxu0 0.0
      %2513 = vmatpush1.msra.mxu0 0.0
      %2514 = vmatprep.subr.mxu0 0.0
      %2515 = vmatpush1.msra.mxu0 0.0
      %2516 = vmatprep.subr.mxu0 0.0
      %2517 = vmatpush1.msra.mxu0 0.0
      %2518 = vmatprep.subr.mxu0 0.0
      %2519 = vmatpush1.msra.mxu0 0.0
      %2520 = vmatprep.subr.mxu0 0.0
      %2521 = vmatpush1.msra.mxu0 0.0
      %2522 = vmatprep.subr.mxu0 0.0
      %2523 = vmatpush1.msra.mxu0 0.0
      %2524 = vmatprep.subr.mxu0 0.0
      %2525 = vmatpush1.msra.mxu0 0.0
      %2526 = vmatprep.subr.mxu0 0.0
      %2527 = vmatpush1.msra.mxu0 0.0
      %2528 = vmatprep.subr.mxu0 0.0
      %2529 = vmatpush1.msra.mxu0 0.0
      %2530 = vmatprep.subr.mxu0 0.0
      %2531 = vmatpush1.msra.mxu0 0.0
      %2532 = vmatprep.subr.mxu0 0.0
      %2533 = vmatpush1.msra.mxu0 0.0
      %2534 = vmatprep.subr.mxu0 0.0
      %2535 = vmatpush1.msra.mxu0 0.0
      %2536 = vmatprep.subr.mxu0 0.0
      %2537 = vmatpush1.msra.mxu0 0.0
      %2538 = vmatprep.subr.mxu0 0.0
      %2539 = vmatpush1.msra.mxu0 0.0
      %2540 = vmatprep.subr.mxu0 0.0
      %2541 = vmatpush1.msra.mxu0 0.0
      %2542 = vmatprep.subr.mxu0 0.0
      %2543 = vmatpush1.msra.mxu0 0.0
      %2544 = vmatprep.subr.mxu0 0.0
      %2545 = vmatpush1.msra.mxu0 0.0
      %2546 = vmatprep.subr.mxu0 0.0
      %2547 = vmatpush1.msra.mxu0 0.0
      %2548 = vmatprep.subr.mxu0 0.0
      %2549 = vmatpush1.msra.mxu0 0.0
      %2550 = vmatprep.subr.mxu0 0.0
      %2551 = vmatpush1.msra.mxu0 0.0
      %2552 = vmatprep.subr.mxu0 0.0
      %2553 = vmatpush1.msra.mxu0 0.0
      %2554 = vmatprep.mubr.f32.mxu0 0.0
      %2555 = vmatmul.mubr.f32.gmra.mrb[0].mxu0 %v437
      %v2556 = vpop.f32.mrb[0].mxu0
      %v2557 = vadd.f32 0.0, %v2556
      %v2558 = vpop.f32.mrb[0].mxu0
      %2559 = vmatprep.mubr.f32.mxu0 0.0
      %2560 = vmatmul.mubr.f32.gmra.mrb[0].mxu0 %v439
      %v2561 = vpop.f32.mrb[0].mxu0
      %v2562 = vadd.f32 0.0, %v2561
      %v2563 = vpop.f32.mrb[0].mxu0
      %2564 = vmatprep.mubr.f32.mxu0 0.0
      %2565 = vmatmul.mubr.f32.gmra.mrb[0].mxu0 %v441
      %v2566 = vpop.f32.mrb[0].mxu0
      %v2567 = vadd.f32 0.0, %v2566
      %v2568 = vpop.f32.mrb[0].mxu0
      %2569 = vmatprep.mubr.f32.mxu0 0.0
      %2570 = vmatmul.mubr.f32.gmra.mrb[0].mxu0 %v443
      %v2571 = vpop.f32.mrb[0].mxu0
      %v2572 = vadd.f32 0.0, %v2571
      %v2573 = vpop.f32.mrb[0].mxu0
      %2574 = vmatprep.mubr.f32.mxu0 0.0
      %2575 = vmatmul.mubr.f32.gmra.mrb[0].mxu0 %v445
      %v2576 = vpop.f32.mrb[0].mxu0
      %v2577 = vadd.f32 0.0, %v2576
      %v2578 = vpop.f32.mrb[0].mxu0
      %2579 = vmatprep.mubr.f32.mxu0 0.0
      %2580 = vmatmul.mubr.f32.gmra.mrb[0].mxu0 %v447
      %v2581 = vpop.f32.mrb[0].mxu0
      %v2582 = vadd.f32 0.0, %v2581
      %v2583 = vpop.f32.mrb[0].mxu0
      %2584 = vmatprep.mubr.f32.mxu0 0.0
      %2585 = vmatmul.mubr.f32.gmra.mrb[0].mxu0 %v449
      %v2586 = vpop.f32.mrb[0].mxu0
      %v2587 = vadd.f32 0.0, %v2586
      %v2588 = vpop.f32.mrb[0].mxu0
      %2589 = vmatprep.mubr.f32.mxu0 0.0
      %2590 = vmatmul.mubr.f32.gmra.mrb[0].mxu0 %v451
      %v2591 = vpop.f32.mrb[0].mxu0
      %v2592 = vadd.f32 0.0, %v2591
      %v2593 = vpop.f32.mrb[0].mxu0
      %2594 = vmatprep.mubr.f32.mxu0 0.0
      %2595 = vmatmul.mubr.f32.gmra.mrb[0].mxu0 %v453
      %v2596 = vpop.f32.mrb[0].mxu0
      %v2597 = vadd.f32 0.0, %v2596
      %v2598 = vpop.f32.mrb[0].mxu0
      %2599 = vmatprep.mubr.f32.mxu0 0.0
      %2600 = vmatmul.mubr.f32.gmra.mrb[0].mxu0 %v455
      %v2601 = vpop.f32.mrb[0].mxu0
      %v2602 = vadd.f32 0.0, %v2601
      %v2603 = vpop.f32.mrb[0].mxu0
      %2604 = vmatprep.mubr.f32.mxu0 0.0
      %2605 = vmatmul.mubr.f32.gmra.mrb[0].mxu0 %v457
      %v2606 = vpop.f32.mrb[0].mxu0
      %v2607 = vadd.f32 0.0, %v2606
      %v2608 = vpop.f32.mrb[0].mxu0
      %2609 = vmatprep.mubr.f32.mxu0 0.0
      %2610 = vmatmul.mubr.f32.gmra.mrb[0].mxu0 %v459
      %v2611 = vpop.f32.mrb[0].mxu0
      %v2612 = vadd.f32 0.0, %v2611
      %v2613 = vpop.f32.mrb[0].mxu0
      %2614 = vmatprep.mubr.f32.mxu0 0.0
      %2615 = vmatmul.mubr.f32.gmra.mrb[0].mxu0 %v461
      %v2616 = vpop.f32.mrb[0].mxu0
      %v2617 = vadd.f32 0.0, %v2616
      %v2618 = vpop.f32.mrb[0].mxu0
      %2619 = vmatprep.mubr.f32.mxu0 0.0
      %2620 = vmatmul.mubr.f32.gmra.mrb[0].mxu0 %v463
      %v2621 = vpop.f32.mrb[0].mxu0
      %v2622 = vadd.f32 0.0, %v2621
      %v2623 = vpop.f32.mrb[0].mxu0
      %2624 = vmatprep.mubr.f32.mxu0 0.0
      %2625 = vmatmul.mubr.f32.gmra.mrb[0].mxu0 %v465
      %v2626 = vpop.f32.mrb[0].mxu0
      %v2627 = vadd.f32 0.0, %v2626
      %v2628 = vpop.f32.mrb[0].mxu0
      %2629 = vmatprep.mubr.f32.mxu0 0.0
      %2630 = vmatmul.mubr.f32.gmra.mrb[0].mxu0 %v467
      %v2631 = vpop.f32.mrb[0].mxu0
      %v2632 = vadd.f32 0.0, %v2631
      %v2633 = vpop.f32.mrb[0].mxu0
      %2634 = vmatprep.mubr.f32.mxu0 0.0
      %2635 = vmatmul.mubr.f32.gmra.mrb[0].mxu0 %v469
      %v2636 = vpop.f32.mrb[0].mxu0
      %v2637 = vadd.f32 0.0, %v2636
      %v2638 = vpop.f32.mrb[0].mxu0
      %2639 = vmatprep.mubr.f32.mxu0 0.0
      %2640 = vmatmul.mubr.f32.gmra.mrb[0].mxu0 %v471
      %v2641 = vpop.f32.mrb[0].mxu0
      %v2642 = vadd.f32 0.0, %v2641
      %v2643 = vpop.f32.mrb[0].mxu0
      %2644 = vmatprep.mubr.f32.mxu0 0.0
      %2645 = vmatmul.mubr.f32.gmra.mrb[0].mxu0 %v473
      %v2646 = vpop.f32.mrb[0].mxu0
      %v2647 = vadd.f32 0.0, %v2646
      %v2648 = vpop.f32.mrb[0].mxu0
      %2649 = vmatprep.mubr.f32.mxu0 0.0
      %2650 = vmatmul.mubr.f32.gmra.mrb[0].mxu0 %v475
      %v2651 = vpop.f32.mrb[0].mxu0
      %v2652 = vadd.f32 0.0, %v2651
      %v2653 = vpop.f32.mrb[0].mxu0
      %2654 = vmatprep.mubr.f32.mxu0 0.0
      %2655 = vmatmul.mubr.f32.gmra.mrb[0].mxu0 %v477
      %v2656 = vpop.f32.mrb[0].mxu0
      %v2657 = vadd.f32 0.0, %v2656
      %v2658 = vpop.f32.mrb[0].mxu0
      %2659 = vmatprep.mubr.f32.mxu0 0.0
      %2660 = vmatmul.mubr.f32.gmra.mrb[0].mxu0 %v479
      %v2661 = vpop.f32.mrb[0].mxu0
      %v2662 = vadd.f32 0.0, %v2661
      %v2663 = vpop.f32.mrb[0].mxu0
      %2664 = vmatprep.mubr.f32.mxu0 0.0
      %2665 = vmatmul.mubr.f32.gmra.mrb[0].mxu0 %v481
      %v2666 = vpop.f32.mrb[0].mxu0
      %v2667 = vadd.f32 0.0, %v2666
      %v2668 = vpop.f32.mrb[0].mxu0
      %2669 = vmatprep.mubr.f32.mxu0 0.0
      %2670 = vmatmul.mubr.f32.gmra.mrb[0].mxu0 %v483
      %v2671 = vpop.f32.mrb[0].mxu0
      %v2672 = vadd.f32 0.0, %v2671
      %v2673 = vpop.f32.mrb[0].mxu0
      %2674 = vmatprep.mubr.f32.mxu0 0.0
      %2675 = vmatmul.mubr.f32.gmra.mrb[0].mxu0 %v485
      %v2676 = vpop.f32.mrb[0].mxu0
      %v2677 = vadd.f32 0.0, %v2676
      %v2678 = vpop.f32.mrb[0].mxu0
      %2679 = vmatprep.mubr.f32.mxu0 0.0
      %2680 = vmatmul.mubr.f32.gmra.mrb[0].mxu0 %v487
      %v2681 = vpop.f32.mrb[0].mxu0
      %v2682 = vadd.f32 0.0, %v2681
      %v2683 = vpop.f32.mrb[0].mxu0
      %2684 = vmatprep.mubr.f32.mxu0 0.0
      %2685 = vmatmul.mubr.f32.gmra.mrb[0].mxu0 %v489
      %v2686 = vpop.f32.mrb[0].mxu0
      %v2687 = vadd.f32 0.0, %v2686
      %v2688 = vpop.f32.mrb[0].mxu0
      %2689 = vmatprep.mubr.f32.mxu0 0.0
      %2690 = vmatmul.mubr.f32.gmra.mrb[0].mxu0 %v491
      %v2691 = vpop.f32.mrb[0].mxu0
      %v2692 = vadd.f32 0.0, %v2691
      %v2693 = vpop.f32.mrb[0].mxu0
      %2694 = vmatprep.mubr.f32.mxu0 0.0
      %2695 = vmatmul.mubr.f32.gmra.mrb[0].mxu0 %v1684
      %v2696 = vpop.f32.mrb[0].mxu0
      %v2697 = vadd.f32 0.0, %v2696
      %v2698 = vpop.f32.mrb[0].mxu0
      %2699 = vmatprep.mubr.f32.mxu0 0.0
      %2700 = vmatmul.mubr.f32.gmra.mrb[0].mxu0 %v1686
      %v2701 = vpop.f32.mrb[0].mxu0
      %v2702 = vadd.f32 0.0, %v2701
      %v2703 = vpop.f32.mrb[0].mxu0
      %2704 = vmatprep.mubr.f32.mxu0 0.0
      %2705 = vmatmul.mubr.f32.gmra.mrb[0].mxu0 %v2486
      %v2706 = vpop.f32.mrb[0].mxu0
      %v2707 = vadd.f32 0.0, %v2706
      %v2708 = vpop.f32.mrb[0].mxu0
      %2709 = vmatprep.mubr.f32.mxu0 0.0
      %2710 = vmatmul.mubr.f32.gmra.mrb[0].mxu0 %v2488
      %v2711 = vpop.f32.mrb[0].mxu0
      %v2712 = vadd.f32 0.0, %v2711
      %v2713 = vpop.f32.mrb[0].mxu0
      %2714 = vdwg.mxu0
      %v2715 = vadd.f32 %v2446, %v2557
      %v2716 = vadd.f32 %v2447, %v2562
      %v2717 = vadd.f32 %v2448, %v2567
      %v2718 = vadd.f32 %v2449, %v2572
      %v2719 = vadd.f32 %v2450, %v2577
      %v2720 = vadd.f32 %v2451, %v2582
      %v2721 = vadd.f32 %v2452, %v2587
      %v2722 = vadd.f32 %v2453, %v2592
      %v2723 = vadd.f32 %v2454, %v2597
      %v2724 = vadd.f32 %v2455, %v2602
      %v2725 = vadd.f32 %v2456, %v2607
      %v2726 = vadd.f32 %v2457, %v2612
      %v2727 = vadd.f32 %v2458, %v2617
      %v2728 = vadd.f32 %v2459, %v2622
      %v2729 = vadd.f32 %v2460, %v2627
      %v2730 = vadd.f32 %v2461, %v2632
      %v2731 = vadd.f32 %v2462, %v2637
      %v2732 = vadd.f32 %v2463, %v2642
      %v2733 = vadd.f32 %v2464, %v2647
      %v2734 = vadd.f32 %v2465, %v2652
      %v2735 = vadd.f32 %v2466, %v2657
      %v2736 = vadd.f32 %v2467, %v2662
      %v2737 = vadd.f32 %v2468, %v2667
      %v2738 = vadd.f32 %v2469, %v2672
      %v2739 = vadd.f32 %v2470, %v2677
      %v2740 = vadd.f32 %v2471, %v2682
      %v2741 = vadd.f32 %v2472, %v2687
      %v2742 = vadd.f32 %v2473, %v2692
      %v2743 = vadd.f32 %v2474, %v2697
      %v2744 = vadd.f32 %v2475, %v2702
      %v2745 = vadd.f32 %v2476, %v2707
      %v2746 = vadd.f32 %v2477, %v2712
      %v2747 = vrot.slane %v293, 2
      %v2748 = vrot.slane %v294, 2
      %v2749 = vsel %vm1007, %v2747, %v2748
      %v2750 = vrot.slane %v295, 2
      %v2751 = vsel %vm1007, %v2748, %v2750
      %s2752 = scalar_lea.vmem %s1, 64
      %v2753 = vld [vmem:[%s2752] sm:$0xff]
      %v2754 = vsel %vm428, %v2749, 0
      %v2756 = vsel %vm428, %v2751, 0
      %2758 = vmatprep.subr.mxu0 0.0
      %2759 = vmatpush1.msra.mxu0 %v2753
      %2760 = vmatprep.subr.mxu0 0.0
      %2761 = vmatpush1.msra.mxu0 0.0
      %2762 = vmatprep.subr.mxu0 0.0
      %2763 = vmatpush1.msra.mxu0 0.0
      %2764 = vmatprep.subr.mxu0 0.0
      %2765 = vmatpush1.msra.mxu0 0.0
      %2766 = vmatprep.subr.mxu0 0.0
      %2767 = vmatpush1.msra.mxu0 0.0
      %2768 = vmatprep.subr.mxu0 0.0
      %2769 = vmatpush1.msra.mxu0 0.0
      %2770 = vmatprep.subr.mxu0 0.0
      %2771 = vmatpush1.msra.mxu0 0.0
      %2772 = vmatprep.subr.mxu0 0.0
      %2773 = vmatpush1.msra.mxu0 0.0
      %2774 = vmatprep.subr.mxu0 0.0
      %2775 = vmatpush1.msra.mxu0 0.0
      %2776 = vmatprep.subr.mxu0 0.0
      %2777 = vmatpush1.msra.mxu0 0.0
      %2778 = vmatprep.subr.mxu0 0.0
      %2779 = vmatpush1.msra.mxu0 0.0
      %2780 = vmatprep.subr.mxu0 0.0
      %2781 = vmatpush1.msra.mxu0 0.0
      %2782 = vmatprep.subr.mxu0 0.0
      %2783 = vmatpush1.msra.mxu0 0.0
      %2784 = vmatprep.subr.mxu0 0.0
      %2785 = vmatpush1.msra.mxu0 0.0
      %2786 = vmatprep.subr.mxu0 0.0
      %2787 = vmatpush1.msra.mxu0 0.0
      %2788 = vmatprep.subr.mxu0 0.0
      %2789 = vmatpush1.msra.mxu0 0.0
      %2790 = vmatprep.subr.mxu0 0.0
      %2791 = vmatpush1.msra.mxu0 0.0
      %2792 = vmatprep.subr.mxu0 0.0
      %2793 = vmatpush1.msra.mxu0 0.0
      %2794 = vmatprep.subr.mxu0 0.0
      %2795 = vmatpush1.msra.mxu0 0.0
      %2796 = vmatprep.subr.mxu0 0.0
      %2797 = vmatpush1.msra.mxu0 0.0
      %2798 = vmatprep.subr.mxu0 0.0
      %2799 = vmatpush1.msra.mxu0 0.0
      %2800 = vmatprep.subr.mxu0 0.0
      %2801 = vmatpush1.msra.mxu0 0.0
      %2802 = vmatprep.subr.mxu0 0.0
      %2803 = vmatpush1.msra.mxu0 0.0
      %2804 = vmatprep.subr.mxu0 0.0
      %2805 = vmatpush1.msra.mxu0 0.0
      %2806 = vmatprep.subr.mxu0 0.0
      %2807 = vmatpush1.msra.mxu0 0.0
      %2808 = vmatprep.subr.mxu0 0.0
      %2809 = vmatpush1.msra.mxu0 0.0
      %2810 = vmatprep.subr.mxu0 0.0
      %2811 = vmatpush1.msra.mxu0 0.0
      %2812 = vmatprep.subr.mxu0 0.0
      %2813 = vmatpush1.msra.mxu0 0.0
      %2814 = vmatprep.subr.mxu0 0.0
      %2815 = vmatpush1.msra.mxu0 0.0
      %2816 = vmatprep.subr.mxu0 0.0
      %2817 = vmatpush1.msra.mxu0 0.0
      %2818 = vmatprep.subr.mxu0 0.0
      %2819 = vmatpush1.msra.mxu0 0.0
      %2820 = vmatprep.subr.mxu0 0.0
      %2821 = vmatpush1.msra.mxu0 0.0
      %2822 = vmatprep.mubr.f32.mxu0 0.0
      %2823 = vmatmul.mubr.f32.gmra.mrb[0].mxu0 %v1098
      %v2824 = vpop.f32.mrb[0].mxu0
      %v2825 = vadd.f32 0.0, %v2824
      %v2826 = vpop.f32.mrb[0].mxu0
      %2827 = vmatprep.mubr.f32.mxu0 0.0
      %2828 = vmatmul.mubr.f32.gmra.mrb[0].mxu0 %v1100
      %v2829 = vpop.f32.mrb[0].mxu0
      %v2830 = vadd.f32 0.0, %v2829
      %v2831 = vpop.f32.mrb[0].mxu0
      %2832 = vmatprep.mubr.f32.mxu0 0.0
      %2833 = vmatmul.mubr.f32.gmra.mrb[0].mxu0 %v1102
      %v2834 = vpop.f32.mrb[0].mxu0
      %v2835 = vadd.f32 0.0, %v2834
      %v2836 = vpop.f32.mrb[0].mxu0
      %2837 = vmatprep.mubr.f32.mxu0 0.0
      %2838 = vmatmul.mubr.f32.gmra.mrb[0].mxu0 %v1104
      %v2839 = vpop.f32.mrb[0].mxu0
      %v2840 = vadd.f32 0.0, %v2839
      %v2841 = vpop.f32.mrb[0].mxu0
      %2842 = vmatprep.mubr.f32.mxu0 0.0
      %2843 = vmatmul.mubr.f32.gmra.mrb[0].mxu0 %v1106
      %v2844 = vpop.f32.mrb[0].mxu0
      %v2845 = vadd.f32 0.0, %v2844
      %v2846 = vpop.f32.mrb[0].mxu0
      %2847 = vmatprep.mubr.f32.mxu0 0.0
      %2848 = vmatmul.mubr.f32.gmra.mrb[0].mxu0 %v1108
      %v2849 = vpop.f32.mrb[0].mxu0
      %v2850 = vadd.f32 0.0, %v2849
      %v2851 = vpop.f32.mrb[0].mxu0
      %2852 = vmatprep.mubr.f32.mxu0 0.0
      %2853 = vmatmul.mubr.f32.gmra.mrb[0].mxu0 %v1110
      %v2854 = vpop.f32.mrb[0].mxu0
      %v2855 = vadd.f32 0.0, %v2854
      %v2856 = vpop.f32.mrb[0].mxu0
      %2857 = vmatprep.mubr.f32.mxu0 0.0
      %2858 = vmatmul.mubr.f32.gmra.mrb[0].mxu0 %v1112
      %v2859 = vpop.f32.mrb[0].mxu0
      %v2860 = vadd.f32 0.0, %v2859
      %v2861 = vpop.f32.mrb[0].mxu0
      %2862 = vmatprep.mubr.f32.mxu0 0.0
      %2863 = vmatmul.mubr.f32.gmra.mrb[0].mxu0 %v1114
      %v2864 = vpop.f32.mrb[0].mxu0
      %v2865 = vadd.f32 0.0, %v2864
      %v2866 = vpop.f32.mrb[0].mxu0
      %2867 = vmatprep.mubr.f32.mxu0 0.0
      %2868 = vmatmul.mubr.f32.gmra.mrb[0].mxu0 %v1116
      %v2869 = vpop.f32.mrb[0].mxu0
      %v2870 = vadd.f32 0.0, %v2869
      %v2871 = vpop.f32.mrb[0].mxu0
      %2872 = vmatprep.mubr.f32.mxu0 0.0
      %2873 = vmatmul.mubr.f32.gmra.mrb[0].mxu0 %v1118
      %v2874 = vpop.f32.mrb[0].mxu0
      %v2875 = vadd.f32 0.0, %v2874
      %v2876 = vpop.f32.mrb[0].mxu0
      %2877 = vmatprep.mubr.f32.mxu0 0.0
      %2878 = vmatmul.mubr.f32.gmra.mrb[0].mxu0 %v1120
      %v2879 = vpop.f32.mrb[0].mxu0
      %v2880 = vadd.f32 0.0, %v2879
      %v2881 = vpop.f32.mrb[0].mxu0
      %2882 = vmatprep.mubr.f32.mxu0 0.0
      %2883 = vmatmul.mubr.f32.gmra.mrb[0].mxu0 %v1122
      %v2884 = vpop.f32.mrb[0].mxu0
      %v2885 = vadd.f32 0.0, %v2884
      %v2886 = vpop.f32.mrb[0].mxu0
      %2887 = vmatprep.mubr.f32.mxu0 0.0
      %2888 = vmatmul.mubr.f32.gmra.mrb[0].mxu0 %v1124
      %v2889 = vpop.f32.mrb[0].mxu0
      %v2890 = vadd.f32 0.0, %v2889
      %v2891 = vpop.f32.mrb[0].mxu0
      %2892 = vmatprep.mubr.f32.mxu0 0.0
      %2893 = vmatmul.mubr.f32.gmra.mrb[0].mxu0 %v1126
      %v2894 = vpop.f32.mrb[0].mxu0
      %v2895 = vadd.f32 0.0, %v2894
      %v2896 = vpop.f32.mrb[0].mxu0
      %2897 = vmatprep.mubr.f32.mxu0 0.0
      %2898 = vmatmul.mubr.f32.gmra.mrb[0].mxu0 %v1128
      %v2899 = vpop.f32.mrb[0].mxu0
      %v2900 = vadd.f32 0.0, %v2899
      %v2901 = vpop.f32.mrb[0].mxu0
      %2902 = vmatprep.mubr.f32.mxu0 0.0
      %2903 = vmatmul.mubr.f32.gmra.mrb[0].mxu0 %v1130
      %v2904 = vpop.f32.mrb[0].mxu0
      %v2905 = vadd.f32 0.0, %v2904
      %v2906 = vpop.f32.mrb[0].mxu0
      %2907 = vmatprep.mubr.f32.mxu0 0.0
      %2908 = vmatmul.mubr.f32.gmra.mrb[0].mxu0 %v1132
      %v2909 = vpop.f32.mrb[0].mxu0
      %v2910 = vadd.f32 0.0, %v2909
      %v2911 = vpop.f32.mrb[0].mxu0
      %2912 = vmatprep.mubr.f32.mxu0 0.0
      %2913 = vmatmul.mubr.f32.gmra.mrb[0].mxu0 %v1134
      %v2914 = vpop.f32.mrb[0].mxu0
      %v2915 = vadd.f32 0.0, %v2914
      %v2916 = vpop.f32.mrb[0].mxu0
      %2917 = vmatprep.mubr.f32.mxu0 0.0
      %2918 = vmatmul.mubr.f32.gmra.mrb[0].mxu0 %v1136
      %v2919 = vpop.f32.mrb[0].mxu0
      %v2920 = vadd.f32 0.0, %v2919
      %v2921 = vpop.f32.mrb[0].mxu0
      %2922 = vmatprep.mubr.f32.mxu0 0.0
      %2923 = vmatmul.mubr.f32.gmra.mrb[0].mxu0 %v1138
      %v2924 = vpop.f32.mrb[0].mxu0
      %v2925 = vadd.f32 0.0, %v2924
      %v2926 = vpop.f32.mrb[0].mxu0
      %2927 = vmatprep.mubr.f32.mxu0 0.0
      %2928 = vmatmul.mubr.f32.gmra.mrb[0].mxu0 %v1140
      %v2929 = vpop.f32.mrb[0].mxu0
      %v2930 = vadd.f32 0.0, %v2929
      %v2931 = vpop.f32.mrb[0].mxu0
      %2932 = vmatprep.mubr.f32.mxu0 0.0
      %2933 = vmatmul.mubr.f32.gmra.mrb[0].mxu0 %v1142
      %v2934 = vpop.f32.mrb[0].mxu0
      %v2935 = vadd.f32 0.0, %v2934
      %v2936 = vpop.f32.mrb[0].mxu0
      %2937 = vmatprep.mubr.f32.mxu0 0.0
      %2938 = vmatmul.mubr.f32.gmra.mrb[0].mxu0 %v1144
      %v2939 = vpop.f32.mrb[0].mxu0
      %v2940 = vadd.f32 0.0, %v2939
      %v2941 = vpop.f32.mrb[0].mxu0
      %2942 = vmatprep.mubr.f32.mxu0 0.0
      %2943 = vmatmul.mubr.f32.gmra.mrb[0].mxu0 %v1146
      %v2944 = vpop.f32.mrb[0].mxu0
      %v2945 = vadd.f32 0.0, %v2944
      %v2946 = vpop.f32.mrb[0].mxu0
      %2947 = vmatprep.mubr.f32.mxu0 0.0
      %2948 = vmatmul.mubr.f32.gmra.mrb[0].mxu0 %v1148
      %v2949 = vpop.f32.mrb[0].mxu0
      %v2950 = vadd.f32 0.0, %v2949
      %v2951 = vpop.f32.mrb[0].mxu0
      %2952 = vmatprep.mubr.f32.mxu0 0.0
      %2953 = vmatmul.mubr.f32.gmra.mrb[0].mxu0 %v1150
      %v2954 = vpop.f32.mrb[0].mxu0
      %v2955 = vadd.f32 0.0, %v2954
      %v2956 = vpop.f32.mrb[0].mxu0
      %2957 = vmatprep.mubr.f32.mxu0 0.0
      %2958 = vmatmul.mubr.f32.gmra.mrb[0].mxu0 %v1152
      %v2959 = vpop.f32.mrb[0].mxu0
      %v2960 = vadd.f32 0.0, %v2959
      %v2961 = vpop.f32.mrb[0].mxu0
      %2962 = vmatprep.mubr.f32.mxu0 0.0
      %2963 = vmatmul.mubr.f32.gmra.mrb[0].mxu0 %v1952
      %v2964 = vpop.f32.mrb[0].mxu0
      %v2965 = vadd.f32 0.0, %v2964
      %v2966 = vpop.f32.mrb[0].mxu0
      %2967 = vmatprep.mubr.f32.mxu0 0.0
      %2968 = vmatmul.mubr.f32.gmra.mrb[0].mxu0 %v1954
      %v2969 = vpop.f32.mrb[0].mxu0
      %v2970 = vadd.f32 0.0, %v2969
      %v2971 = vpop.f32.mrb[0].mxu0
      %2972 = vmatprep.mubr.f32.mxu0 0.0
      %2973 = vmatmul.mubr.f32.gmra.mrb[0].mxu0 %v2754
      %v2974 = vpop.f32.mrb[0].mxu0
      %v2975 = vadd.f32 0.0, %v2974
      %v2976 = vpop.f32.mrb[0].mxu0
      %2977 = vmatprep.mubr.f32.mxu0 0.0
      %2978 = vmatmul.mubr.f32.gmra.mrb[0].mxu0 %v2756
      %v2979 = vpop.f32.mrb[0].mxu0
      %v2980 = vadd.f32 0.0, %v2979
      %v2981 = vpop.f32.mrb[0].mxu0
      %2982 = vdwg.mxu0
      %v2983 = vadd.f32 %v2715, %v2825
      %v2984 = vadd.f32 %v2716, %v2830
      %v2985 = vadd.f32 %v2717, %v2835
      %v2986 = vadd.f32 %v2718, %v2840
      %v2987 = vadd.f32 %v2719, %v2845
      %v2988 = vadd.f32 %v2720, %v2850
      %v2989 = vadd.f32 %v2721, %v2855
      %v2990 = vadd.f32 %v2722, %v2860
      %v2991 = vadd.f32 %v2723, %v2865
      %v2992 = vadd.f32 %v2724, %v2870
      %v2993 = vadd.f32 %v2725, %v2875
      %v2994 = vadd.f32 %v2726, %v2880
      %v2995 = vadd.f32 %v2727, %v2885
      %v2996 = vadd.f32 %v2728, %v2890
      %v2997 = vadd.f32 %v2729, %v2895
      %v2998 = vadd.f32 %v2730, %v2900
      %v2999 = vadd.f32 %v2731, %v2905
      %v3000 = vadd.f32 %v2732, %v2910
      %v3001 = vadd.f32 %v2733, %v2915
      %v3002 = vadd.f32 %v2734, %v2920
      %v3003 = vadd.f32 %v2735, %v2925
      %v3004 = vadd.f32 %v2736, %v2930
      %v3005 = vadd.f32 %v2737, %v2935
      %v3006 = vadd.f32 %v2738, %v2940
      %v3007 = vadd.f32 %v2739, %v2945
      %v3008 = vadd.f32 %v2740, %v2950
      %v3009 = vadd.f32 %v2741, %v2955
      %v3010 = vadd.f32 %v2742, %v2960
      %v3011 = vadd.f32 %v2743, %v2965
      %v3012 = vadd.f32 %v2744, %v2970
      %v3013 = vadd.f32 %v2745, %v2975
      %v3014 = vadd.f32 %v2746, %v2980
      %v3015 = vld [vmem:[%s2] sm:$0x1]
      %v3017 = vlaneseq
      %v3018 = vshrl.u32 %v3017, 7
      %v3019 = vsub.s32 0, %v3018
      %v3020 = vrot.slane %v3015, %v3019
      %v3022 = vadd.f32 %v2983, %v3020
      %v3023 = vadd.f32 %v2984, %v3020
      %v3024 = vadd.f32 %v2985, %v3020
      %v3025 = vadd.f32 %v2986, %v3020
      %v3026 = vadd.f32 %v2987, %v3020
      %v3027 = vadd.f32 %v2988, %v3020
      %v3028 = vadd.f32 %v2989, %v3020
      %v3029 = vadd.f32 %v2990, %v3020
      %v3030 = vadd.f32 %v2991, %v3020
      %v3031 = vadd.f32 %v2992, %v3020
      %v3032 = vadd.f32 %v2993, %v3020
      %v3033 = vadd.f32 %v2994, %v3020
      %v3034 = vadd.f32 %v2995, %v3020
      %v3035 = vadd.f32 %v2996, %v3020
      %v3036 = vadd.f32 %v2997, %v3020
      %v3037 = vadd.f32 %v2998, %v3020
      %v3038 = vadd.f32 %v2999, %v3020
      %v3039 = vadd.f32 %v3000, %v3020
      %v3040 = vadd.f32 %v3001, %v3020
      %v3041 = vadd.f32 %v3002, %v3020
      %v3042 = vadd.f32 %v3003, %v3020
      %v3043 = vadd.f32 %v3004, %v3020
      %v3044 = vadd.f32 %v3005, %v3020
      %v3045 = vadd.f32 %v3006, %v3020
      %v3046 = vadd.f32 %v3007, %v3020
      %v3047 = vadd.f32 %v3008, %v3020
      %v3048 = vadd.f32 %v3009, %v3020
      %v3049 = vadd.f32 %v3010, %v3020
      %v3050 = vadd.f32 %v3011, %v3020
      %v3051 = vadd.f32 %v3012, %v3020
      %v3052 = vadd.f32 %v3013, %v3020
      %v3053 = vadd.f32 %v3014, %v3020
      %v3054 = vmax.f32 %v3022, 0.0
      %v3055 = vmax.f32 %v3023, 0.0
      %v3056 = vmax.f32 %v3024, 0.0
      %v3057 = vmax.f32 %v3025, 0.0
      %v3058 = vmax.f32 %v3026, 0.0
      %v3059 = vmax.f32 %v3027, 0.0
      %v3060 = vmax.f32 %v3028, 0.0
      %v3061 = vmax.f32 %v3029, 0.0
      %v3062 = vmax.f32 %v3030, 0.0
      %v3063 = vmax.f32 %v3031, 0.0
      %v3064 = vmax.f32 %v3032, 0.0
      %v3065 = vmax.f32 %v3033, 0.0
      %v3066 = vmax.f32 %v3034, 0.0
      %v3067 = vmax.f32 %v3035, 0.0
      %v3068 = vmax.f32 %v3036, 0.0
      %v3069 = vmax.f32 %v3037, 0.0
      %v3070 = vmax.f32 %v3038, 0.0
      %v3071 = vmax.f32 %v3039, 0.0
      %v3072 = vmax.f32 %v3040, 0.0
      %v3073 = vmax.f32 %v3041, 0.0
      %v3074 = vmax.f32 %v3042, 0.0
      %v3075 = vmax.f32 %v3043, 0.0
      %v3076 = vmax.f32 %v3044, 0.0
      %v3077 = vmax.f32 %v3045, 0.0
      %v3078 = vmax.f32 %v3046, 0.0
      %v3079 = vmax.f32 %v3047, 0.0
      %v3080 = vmax.f32 %v3048, 0.0
      %v3081 = vmax.f32 %v3049, 0.0
      %v3082 = vmax.f32 %v3050, 0.0
      %v3083 = vmax.f32 %v3051, 0.0
      %v3084 = vmax.f32 %v3052, 0.0
      %v3085 = vmax.f32 %v3053, 0.0
      %3086 = vst.msk [vmem:[%s235] sm:$0xff] %vm428, %v3054
      %3087 = vst.msk [vmem:[%s235 + $0x8] sm:$0xff] %vm428, %v3055
      %3088 = vst.msk [vmem:[%s235 + $0x10] sm:$0xff] %vm428, %v3056
      %3089 = vst.msk [vmem:[%s235 + $0x18] sm:$0xff] %vm428, %v3057
      %3090 = vst.msk [vmem:[%s235 + $0x20] sm:$0xff] %vm428, %v3058
      %3091 = vst.msk [vmem:[%s235 + $0x28] sm:$0xff] %vm428, %v3059
      %3092 = vst.msk [vmem:[%s235 + $0x30] sm:$0xff] %vm428, %v3060
      %3093 = vst.msk [vmem:[%s235 + $0x38] sm:$0xff] %vm428, %v3061
      %3094 = vst.msk [vmem:[%s235 + $0x40] sm:$0xff] %vm428, %v3062
      %3095 = vst.msk [vmem:[%s235 + $0x48] sm:$0xff] %vm428, %v3063
      %3096 = vst.msk [vmem:[%s235 + $0x50] sm:$0xff] %vm428, %v3064
      %3097 = vst.msk [vmem:[%s235 + $0x58] sm:$0xff] %vm428, %v3065
      %3098 = vst.msk [vmem:[%s235 + $0x60] sm:$0xff] %vm428, %v3066
      %3099 = vst.msk [vmem:[%s235 + $0x68] sm:$0xff] %vm428, %v3067
      %3100 = vst.msk [vmem:[%s235 + $0x70] sm:$0xff] %vm428, %v3068
      %3101 = vst.msk [vmem:[%s235 + $0x78] sm:$0xff] %vm428, %v3069
      %3102 = vst.msk [vmem:[%s235 + $0x80] sm:$0xff] %vm428, %v3070
      %3103 = vst.msk [vmem:[%s235 + $0x88] sm:$0xff] %vm428, %v3071
      %3104 = vst.msk [vmem:[%s235 + $0x90] sm:$0xff] %vm428, %v3072
      %3105 = vst.msk [vmem:[%s235 + $0x98] sm:$0xff] %vm428, %v3073
      %3106 = vst.msk [vmem:[%s235 + $0xa0] sm:$0xff] %vm428, %v3074
      %3107 = vst.msk [vmem:[%s235 + $0xa8] sm:$0xff] %vm428, %v3075
      %3108 = vst.msk [vmem:[%s235 + $0xb0] sm:$0xff] %vm428, %v3076
      %3109 = vst.msk [vmem:[%s235 + $0xb8] sm:$0xff] %vm428, %v3077
      %3110 = vst.msk [vmem:[%s235 + $0xc0] sm:$0xff] %vm428, %v3078
      %3111 = vst.msk [vmem:[%s235 + $0xc8] sm:$0xff] %vm428, %v3079
      %3112 = vst.msk [vmem:[%s235 + $0xd0] sm:$0xff] %vm428, %v3080
      %3113 = vst.msk [vmem:[%s235 + $0xd8] sm:$0xff] %vm428, %v3081
      %3114 = vst.msk [vmem:[%s235 + $0xe0] sm:$0xff] %vm428, %v3082
      %3115 = vst.msk [vmem:[%s235 + $0xe8] sm:$0xff] %vm428, %v3083
      %3116 = vst.msk [vmem:[%s235 + $0xf0] sm:$0xff] %vm428, %v3084
      %3117 = vst.msk [vmem:[%s235 + $0xf8] sm:$0xff] %vm428, %v3085
      %v3118 = vsel %vm428, %v3054, 0.0
      %v3119 = vsel %vm428, %v3055, 0.0
      %v3120 = vadd.f32 %v3118, %v3119
      %v3121 = vsel %vm428, %v3056, 0.0
      %v3122 = vadd.f32 %v3120, %v3121
      %v3123 = vsel %vm428, %v3057, 0.0
      %v3124 = vadd.f32 %v3122, %v3123
      %v3125 = vsel %vm428, %v3058, 0.0
      %v3126 = vadd.f32 %v3124, %v3125
      %v3127 = vsel %vm428, %v3059, 0.0
      %v3128 = vadd.f32 %v3126, %v3127
      %v3129 = vsel %vm428, %v3060, 0.0
      %v3130 = vadd.f32 %v3128, %v3129
      %v3131 = vsel %vm428, %v3061, 0.0
      %v3132 = vadd.f32 %v3130, %v3131
      %v3133 = vsel %vm428, %v3062, 0.0
      %v3134 = vadd.f32 %v3132, %v3133
      %v3135 = vsel %vm428, %v3063, 0.0
      %v3136 = vadd.f32 %v3134, %v3135
      %v3137 = vsel %vm428, %v3064, 0.0
      %v3138 = vadd.f32 %v3136, %v3137
      %v3139 = vsel %vm428, %v3065, 0.0
      %v3140 = vadd.f32 %v3138, %v3139
      %v3141 = vsel %vm428, %v3066, 0.0
      %v3142 = vadd.f32 %v3140, %v3141
      %v3143 = vsel %vm428, %v3067, 0.0
      %v3144 = vadd.f32 %v3142, %v3143
      %v3145 = vsel %vm428, %v3068, 0.0
      %v3146 = vadd.f32 %v3144, %v3145
      %v3147 = vsel %vm428, %v3069, 0.0
      %v3148 = vadd.f32 %v3146, %v3147
      %v3149 = vsel %vm428, %v3070, 0.0
      %v3150 = vadd.f32 %v3148, %v3149
      %v3151 = vsel %vm428, %v3071, 0.0
      %v3152 = vadd.f32 %v3150, %v3151
      %v3153 = vsel %vm428, %v3072, 0.0
      %v3154 = vadd.f32 %v3152, %v3153
      %v3155 = vsel %vm428, %v3073, 0.0
      %v3156 = vadd.f32 %v3154, %v3155
      %v3157 = vsel %vm428, %v3074, 0.0
      %v3158 = vadd.f32 %v3156, %v3157
      %v3159 = vsel %vm428, %v3075, 0.0
      %v3160 = vadd.f32 %v3158, %v3159
      %v3161 = vsel %vm428, %v3076, 0.0
      %v3162 = vadd.f32 %v3160, %v3161
      %v3163 = vsel %vm428, %v3077, 0.0
      %v3164 = vadd.f32 %v3162, %v3163
      %v3165 = vsel %vm428, %v3078, 0.0
      %v3166 = vadd.f32 %v3164, %v3165
      %v3167 = vsel %vm428, %v3079, 0.0
      %v3168 = vadd.f32 %v3166, %v3167
      %v3169 = vsel %vm428, %v3080, 0.0
      %v3170 = vadd.f32 %v3168, %v3169
      %v3171 = vsel %vm428, %v3081, 0.0
      %v3172 = vadd.f32 %v3170, %v3171
      %v3173 = vsel %vm428, %v3082, 0.0
      %v3174 = vadd.f32 %v3172, %v3173
      %v3175 = vsel %vm428, %v3083, 0.0
      %v3176 = vadd.f32 %v3174, %v3175
      %v3177 = vsel %vm428, %v3084, 0.0
      %v3178 = vadd.f32 %v3176, %v3177
      %v3179 = vsel %vm428, %v3085, 0.0
      %v3180 = vadd.f32 %v3178, %v3179
      %v3181 = vrot.slane %v3180, 4
      %v3182 = vadd.f32 %v3180, %v3181
      %v3183 = vrot.slane %v3182, 2
      %v3184 = vadd.f32 %v3182, %v3183
      %v3185 = vrot.slane %v3184, 1
      %v3186 = vadd.f32 %v3184, %v3185
      %vm3187 = vcmask 57344
      %3188 = vst.msk [vmem:[%s238] sm:$0x1] %vm3187, %v3186
      %v3189 = vmul.f32 %v3054, %v3054
      %v3190 = vmul.f32 %v3055, %v3055
      %v3191 = vmul.f32 %v3056, %v3056
      %v3192 = vmul.f32 %v3057, %v3057
      %v3193 = vmul.f32 %v3058, %v3058
      %v3194 = vmul.f32 %v3059, %v3059
      %v3195 = vmul.f32 %v3060, %v3060
      %v3196 = vmul.f32 %v3061, %v3061
      %v3197 = vmul.f32 %v3062, %v3062
      %v3198 = vmul.f32 %v3063, %v3063
      %v3199 = vmul.f32 %v3064, %v3064
      %v3200 = vmul.f32 %v3065, %v3065
      %v3201 = vmul.f32 %v3066, %v3066
      %v3202 = vmul.f32 %v3067, %v3067
      %v3203 = vmul.f32 %v3068, %v3068
      %v3204 = vmul.f32 %v3069, %v3069
      %v3205 = vmul.f32 %v3070, %v3070
      %v3206 = vmul.f32 %v3071, %v3071
      %v3207 = vmul.f32 %v3072, %v3072
      %v3208 = vmul.f32 %v3073, %v3073
      %v3209 = vmul.f32 %v3074, %v3074
      %v3210 = vmul.f32 %v3075, %v3075
      %v3211 = vmul.f32 %v3076, %v3076
      %v3212 = vmul.f32 %v3077, %v3077
      %v3213 = vmul.f32 %v3078, %v3078
      %v3214 = vmul.f32 %v3079, %v3079
      %v3215 = vmul.f32 %v3080, %v3080
      %v3216 = vmul.f32 %v3081, %v3081
      %v3217 = vmul.f32 %v3082, %v3082
      %v3218 = vmul.f32 %v3083, %v3083
      %v3219 = vmul.f32 %v3084, %v3084
      %v3220 = vmul.f32 %v3085, %v3085
      %v3221 = vsel %vm428, %v3189, 0.0
      %v3222 = vsel %vm428, %v3190, 0.0
      %v3223 = vadd.f32 %v3221, %v3222
      %v3224 = vsel %vm428, %v3191, 0.0
      %v3225 = vadd.f32 %v3223, %v3224
      %v3226 = vsel %vm428, %v3192, 0.0
      %v3227 = vadd.f32 %v3225, %v3226
      %v3228 = vsel %vm428, %v3193, 0.0
      %v3229 = vadd.f32 %v3227, %v3228
      %v3230 = vsel %vm428, %v3194, 0.0
      %v3231 = vadd.f32 %v3229, %v3230
      %v3232 = vsel %vm428, %v3195, 0.0
      %v3233 = vadd.f32 %v3231, %v3232
      %v3234 = vsel %vm428, %v3196, 0.0
      %v3235 = vadd.f32 %v3233, %v3234
      %v3236 = vsel %vm428, %v3197, 0.0
      %v3237 = vadd.f32 %v3235, %v3236
      %v3238 = vsel %vm428, %v3198, 0.0
      %v3239 = vadd.f32 %v3237, %v3238
      %v3240 = vsel %vm428, %v3199, 0.0
      %v3241 = vadd.f32 %v3239, %v3240
      %v3242 = vsel %vm428, %v3200, 0.0
      %v3243 = vadd.f32 %v3241, %v3242
      %v3244 = vsel %vm428, %v3201, 0.0
      %v3245 = vadd.f32 %v3243, %v3244
      %v3246 = vsel %vm428, %v3202, 0.0
      %v3247 = vadd.f32 %v3245, %v3246
      %v3248 = vsel %vm428, %v3203, 0.0
      %v3249 = vadd.f32 %v3247, %v3248
      %v3250 = vsel %vm428, %v3204, 0.0
      %v3251 = vadd.f32 %v3249, %v3250
      %v3252 = vsel %vm428, %v3205, 0.0
      %v3253 = vadd.f32 %v3251, %v3252
      %v3254 = vsel %vm428, %v3206, 0.0
      %v3255 = vadd.f32 %v3253, %v3254
      %v3256 = vsel %vm428, %v3207, 0.0
      %v3257 = vadd.f32 %v3255, %v3256
      %v3258 = vsel %vm428, %v3208, 0.0
      %v3259 = vadd.f32 %v3257, %v3258
      %v3260 = vsel %vm428, %v3209, 0.0
      %v3261 = vadd.f32 %v3259, %v3260
      %v3262 = vsel %vm428, %v3210, 0.0
      %v3263 = vadd.f32 %v3261, %v3262
      %v3264 = vsel %vm428, %v3211, 0.0
      %v3265 = vadd.f32 %v3263, %v3264
      %v3266 = vsel %vm428, %v3212, 0.0
      %v3267 = vadd.f32 %v3265, %v3266
      %v3268 = vsel %vm428, %v3213, 0.0
      %v3269 = vadd.f32 %v3267, %v3268
      %v3270 = vsel %vm428, %v3214, 0.0
      %v3271 = vadd.f32 %v3269, %v3270
      %v3272 = vsel %vm428, %v3215, 0.0
      %v3273 = vadd.f32 %v3271, %v3272
      %v3274 = vsel %vm428, %v3216, 0.0
      %v3275 = vadd.f32 %v3273, %v3274
      %v3276 = vsel %vm428, %v3217, 0.0
      %v3277 = vadd.f32 %v3275, %v3276
      %v3278 = vsel %vm428, %v3218, 0.0
      %v3279 = vadd.f32 %v3277, %v3278
      %v3280 = vsel %vm428, %v3219, 0.0
      %v3281 = vadd.f32 %v3279, %v3280
      %v3282 = vsel %vm428, %v3220, 0.0
      %v3283 = vadd.f32 %v3281, %v3282
      %v3284 = vrot.slane %v3283, 4
      %v3285 = vadd.f32 %v3283, %v3284
      %v3286 = vrot.slane %v3285, 2
      %v3287 = vadd.f32 %v3285, %v3286
      %v3288 = vrot.slane %v3287, 1
      %v3289 = vadd.f32 %v3287, %v3288
      %3290 = vst.msk [vmem:[%s241] sm:$0x1] %vm3187, %v3289
      %p3291 = scmp.lt.s32.totalorder %s17, 1
      %s3292 = scalar_select %p3291, %s17, 1
      %s3293 = smul.addr %s3292, 32
      %s3294 = smul.addr %s3293, 8
      %s3295 = scalar_lea.vmem %s3, %s3294
      %p3296 = scmp.lt.s32.totalorder %s17, 1
      %s3297 = scalar_select %p3296, %s17, 1
      %s3298 = scalar_lea.vmem %s4, %s3297
      %p3299 = scmp.lt.s32.totalorder %s17, 1
      %s3300 = scalar_select %p3299, %s17, 1
      %s3301 = scalar_lea.vmem %s5, %s3300
      // Predicated region
      $region33: #{block_forward.9} parent=31 // pred_check
        %p3302 = pneg %p103
      $region34: #{block_forward.9} parent=31 // pred_check_branch
        %3304 = sbr.rel (%p3302) target = $region36
      $region35: #{block_forward.9} parent=31 // pred_region
        _
      $region36: #{block_forward.9} parent=31 // pred_fallthru
        _
      // Predicated region
      $region37: #{block_forward.9} parent=31 // pred_check
        %p3305 = pneg %p129
      $region38: #{block_forward.9} parent=31 // pred_check_branch
        %3307 = sbr.rel (%p3305) target = $region40
      $region39: #{block_forward.9} parent=31 // pred_region
        _
      $region40: #{block_forward.9} parent=31 // pred_fallthru
        _
      // Predicated region
      $region41: #{block_forward.9} parent=31 // pred_check
        %p3308 = pneg %p155
      $region42: #{block_forward.9} parent=31 // pred_check_branch
        %3310 = sbr.rel (%p3308) target = $region44
      $region43: #{block_forward.9} parent=31 // pred_region
        _
      $region44: #{block_forward.9} parent=31 // pred_fallthru
        _
    $region32: #{block_forward.9} parent=5 // pred_fallthru
      _
    %p3311 = scmp.le.s32.totalorder 2, %s12
    // Predicated region
    $region45: #{block_forward.9} parent=5 // pred_check
      %p3312 = pneg %p3311
    $region46: #{block_forward.9} parent=5 // pred_check_branch
      %3314 = sbr.rel (%p3312) target = $region48
    $region47: #{block_forward.9} parent=5 // pred_region
      %s3315 = ssub.s32 %s12, 2
      // Predicated region
      $region49: #{block_forward.9} parent=47 // pred_check
        %p3316 = pneg %p109
      $region50: #{block_forward.9} parent=47 // pred_check_branch
        %3318 = sbr.rel (%p3316) target = $region52
      $region51: #{block_forward.9} parent=47 // pred_region
        %p3319 = scmp.lt.s32.totalorder %s18, 1
        %s3320 = scalar_select %p3319, %s18, 1
        %s3321 = smul.addr %s3320, 32
        %s3322 = smul.addr %s3321, 8
        %s3323 = scalar_lea.vmem %s3, %s3322
      $region52: #{block_forward.9} parent=47 // pred_fallthru
        _
      // Predicated region
      $region53: #{block_forward.9} parent=47 // pred_check
        %p3324 = pneg %p135
      $region54: #{block_forward.9} parent=47 // pred_check_branch
        %3326 = sbr.rel (%p3324) target = $region56
      $region55: #{block_forward.9} parent=47 // pred_region
        %p3327 = scmp.lt.s32.totalorder %s18, 1
        %s3328 = scalar_select %p3327, %s18, 1
        %s3329 = scalar_lea.vmem %s4, %s3328
      $region56: #{block_forward.9} parent=47 // pred_fallthru
        _
      // Predicated region
      $region57: #{block_forward.9} parent=47 // pred_check
        %p3330 = pneg %p161
      $region58: #{block_forward.9} parent=47 // pred_check_branch
        %3332 = sbr.rel (%p3330) target = $region60
      $region59: #{block_forward.9} parent=47 // pred_region
        %p3333 = scmp.lt.s32.totalorder %s18, 1
        %s3334 = scalar_select %p3333, %s18, 1
        %s3335 = scalar_lea.vmem %s5, %s3334
      $region60: #{block_forward.9} parent=47 // pred_fallthru
        _
    $region48: #{block_forward.9} parent=5 // pred_fallthru
      _
  $region6: #{block_forward.9} parent=0 // loop_footer
    %s16 = sadd.s32 1, %s12
  $region7: #{block_forward.9} parent=0 // loop_footer_branch
    %11 = sbr.rel target = $region3
  $region8: #{block_forward.9} parent=0 // loop_exit
    _

// kernel: block_forward.11
$region0: #{block_forward.11}
  #allocation0 [shape = 'u32[]', space=smem, size = 0x4, offset = 0x4, fixed_abs, tag = 'smem constant byte address 0x4 - core index']
  #allocation1 [shape = 'u32[144,128]{1,0:T(1,128)}', space=vmem, size = 0x12000, scoped, tag = 'internal scratch']
  %s0 = inlined_call_operand.vmem [shape: f32[2,9,9,32], index: 0, kind: input, shape index: {}]
  %s1 = inlined_call_operand.vmem [shape: f32[4,32,8], index: 1, kind: input, shape index: {}]
  %s2 = inlined_call_operand.vmem [shape: f32[1,8], index: 2, kind: input, shape index: {}]
  %s3 = inlined_call_operand.vmem [shape: f32[2,8,8,8], index: 3, kind: output, shape index: {}]
  %s4 = sld [smem:[#allocation0]]
  $region45: #{block_forward.11} parent=0
    _
  %s6 = ssub.s32 1, %s4
  %s7 = scalar_select 0, %s6, %s4
  loop: start=0, step=1, limit=4
  $region2: #{block_forward.11} parent=0 // loop_pre_header
    _
  $region3: #{block_forward.11} parent=0 // loop_header
    %s9 = sphi 0, %s13
    %p10 = scmp.ge.s32.totalorder %s9, 4
    %s19 = sphi 0, %s21
    %s22 = sphi 0, %s19
    %s23 = sphi 0, %s22
    %s39 = sphi 0, %s23
    %s43 = sphi 0, %s43
    %s45 = sphi 0, %s43
    %s46 = sphi 0, %s45
    %s60 = sphi 0, %s46
    %s64 = sphi 0, %s64
    %s66 = sphi 0, %s64
    %s67 = sphi 0, %s66
    %s81 = sphi 0, %s67
    %s87 = sphi 0, %s89
    %s90 = sphi 0, %s87
    %s91 = sphi 0, %s90
    %s107 = sphi 0, %s91
  $region4: #{block_forward.11} parent=0 // loop_header_branch
    %12 = sbr.rel (%p10) target = $region8
  $region5: #{block_forward.11} parent=0 // loop_body
    %s14 = ssub.s32 %s9, 1
    %s15 = ssub.s32 %s9, 2
    %s16 = sadd.s32 %s9, 1
    %s17 = ssub.s32 %s9, %s16
    %p18 = scmp.eq.s32.totalorder %s17, 0
    %s20 = sadd.s32 %s19, 1
    %s21 = scalar_select %p18, %s19, %s20
    %p24 = pneg %p18
    %p25 = scmp.eq.s32.totalorder %s9, 1
    %p26 = por %p24, %p25
    %p27 = scmp.ne.s32.totalorder %s19, %s22
    %p28 = scmp.eq.s32.totalorder %s9, 0
    %p29 = por %p27, %p28
    %p30 = scmp.ne.s32.totalorder %s19, %s22
    %p31 = scmp.eq.s32.totalorder %s14, 1
    %p32 = por %p30, %p31
    %p33 = scmp.ne.s32.totalorder %s22, %s23
    %p34 = scmp.eq.s32.totalorder %s14, 0
    %p35 = por %p33, %p34
    %p36 = scmp.ne.s32.totalorder %s22, %s23
    %p37 = scmp.eq.s32.totalorder %s15, 1
    %p38 = por %p36, %p37
    %p40 = scmp.ne.s32.totalorder %s23, %s39
    %p41 = scmp.eq.s32.totalorder %s15, 0
    %p42 = por %p40, %p41
    %s44 = sadd.s32 %s43, 1
    %p47 = scmp.eq.s32.totalorder %s9, 1
    %p48 = scmp.ne.s32.totalorder %s43, %s45
    %p49 = scmp.eq.s32.totalorder %s9, 0
    %p50 = por %p48, %p49
    %p51 = scmp.ne.s32.totalorder %s43, %s45
    %p52 = scmp.eq.s32.totalorder %s14, 1
    %p53 = por %p51, %p52
    %p54 = scmp.ne.s32.totalorder %s45, %s46
    %p55 = scmp.eq.s32.totalorder %s14, 0
    %p56 = por %p54, %p55
    %p57 = scmp.ne.s32.totalorder %s45, %s46
    %p58 = scmp.eq.s32.totalorder %s15, 1
    %p59 = por %p57, %p58
    %p61 = scmp.ne.s32.totalorder %s46, %s60
    %p62 = scmp.eq.s32.totalorder %s15, 0
    %p63 = por %p61, %p62
    %s65 = sadd.s32 %s64, 1
    %p68 = scmp.eq.s32.totalorder %s9, 1
    %p69 = scmp.ne.s32.totalorder %s64, %s66
    %p70 = scmp.eq.s32.totalorder %s9, 0
    %p71 = por %p69, %p70
    %p72 = scmp.ne.s32.totalorder %s64, %s66
    %p73 = scmp.eq.s32.totalorder %s14, 1
    %p74 = por %p72, %p73
    %p75 = scmp.ne.s32.totalorder %s66, %s67
    %p76 = scmp.eq.s32.totalorder %s14, 0
    %p77 = por %p75, %p76
    %p78 = scmp.ne.s32.totalorder %s66, %s67
    %p79 = scmp.eq.s32.totalorder %s15, 1
    %p80 = por %p78, %p79
    %p82 = scmp.ne.s32.totalorder %s67, %s81
    %p83 = scmp.eq.s32.totalorder %s15, 0
    %p84 = por %p82, %p83
    %s85 = ssub.s32 %s9, %s16
    %p86 = scmp.eq.s32.totalorder %s85, 0
    %s88 = sadd.s32 %s87, 1
    %s89 = scalar_select %p86, %s87, %s88
    %p92 = pneg %p86
    %p93 = scmp.eq.s32.totalorder %s9, 1
    %p94 = por %p92, %p93
    %p95 = scmp.ne.s32.totalorder %s87, %s90
    %p96 = scmp.eq.s32.totalorder %s9, 0
    %p97 = por %p95, %p96
    %p98 = scmp.ne.s32.totalorder %s87, %s90
    %p99 = scmp.eq.s32.totalorder %s14, 1
    %p100 = por %p98, %p99
    %p101 = scmp.ne.s32.totalorder %s90, %s91
    %p102 = scmp.eq.s32.totalorder %s14, 0
    %p103 = por %p101, %p102
    %p104 = scmp.ne.s32.totalorder %s90, %s91
    %p105 = scmp.eq.s32.totalorder %s15, 1
    %p106 = por %p104, %p105
    %p108 = scmp.ne.s32.totalorder %s91, %s107
    %p109 = scmp.eq.s32.totalorder %s15, 0
    %p110 = por %p108, %p109
    %p111 = scmp.le.s32.totalorder 1, %s9
    %p112 = scmp.lt.s32.totalorder %s9, 3
    %p113 = pnand %p111, %p112
    %p114 = pneg %p113
    // Predicated region
    $region9: #{block_forward.11} parent=5 // pred_check
      _
    $region10: #{block_forward.11} parent=5 // pred_check_branch
      %116 = sbr.rel (%p113) target = $region12
    $region11: #{block_forward.11} parent=5 // pred_region
      %s117 = ssub.s32 %s9, 1
      // Predicated region
      $region13: #{block_forward.11} parent=11 // pred_check
        %p118 = pneg %p56
      $region14: #{block_forward.11} parent=11 // pred_check_branch
        %120 = sbr.rel (%p118) target = $region16
      $region15: #{block_forward.11} parent=11 // pred_region
        _
      $region16: #{block_forward.11} parent=11 // pred_fallthru
        _
      // Predicated region
      $region17: #{block_forward.11} parent=11 // pred_check
        %p121 = pneg %p77
      $region18: #{block_forward.11} parent=11 // pred_check_branch
        %123 = sbr.rel (%p121) target = $region20
      $region19: #{block_forward.11} parent=11 // pred_region
        _
      $region20: #{block_forward.11} parent=11 // pred_fallthru
        _
    $region12: #{block_forward.11} parent=5 // pred_fallthru
      _
    %p124 = scmp.lt.s32.totalorder %s9, 2
    // Predicated region
    $region21: #{block_forward.11} parent=5 // pred_check
      %p125 = pneg %p124
    $region22: #{block_forward.11} parent=5 // pred_check_branch
      %127 = sbr.rel (%p125) target = $region24
    $region23: #{block_forward.11} parent=5 // pred_region
      // Predicated region
      $region25: #{block_forward.11} parent=23 // pred_check
        %p128 = pneg %p29
      $region26: #{block_forward.11} parent=23 // pred_check_branch
        %130 = sbr.rel (%p128) target = $region28
      $region27: #{block_forward.11} parent=23 // pred_region
        %p131 = scmp.lt.s32.totalorder %s9, 1
        %s132 = scalar_select %p131, %s9, 1
        %s133 = smul.addr %s132, 18
        %s134 = smul.addr %s133, 8
        %s135 = scalar_lea.vmem %s0, %s134
      $region28: #{block_forward.11} parent=23 // pred_fallthru
        _
    $region24: #{block_forward.11} parent=5 // pred_fallthru
      _
    %p136 = scmp.le.s32.totalorder 1, %s9
    %p137 = scmp.lt.s32.totalorder %s9, 3
    %p138 = pnand %p136, %p137
    %p139 = pneg %p138
    // Predicated region
    $region29: #{block_forward.11} parent=5 // pred_check
      _
    $region30: #{block_forward.11} parent=5 // pred_check_branch
      %141 = sbr.rel (%p138) target = $region32
    $region31: #{block_forward.11} parent=5 // pred_region
      %s142 = ssub.s32 %s9, 1
      %p143 = scmp.lt.s32.totalorder %s14, 1
      %s144 = scalar_select %p143, %s14, 1
      %s145 = smul.addr %s144, 18
      %s146 = smul.addr %s145, 8
      %s147 = scalar_lea.vmem %s0, %s146
      %p148 = pneg %p35
      %p149 = pneg %p32
      %p150 = pneg %p56
      %p151 = pneg %p53
      %p152 = pneg %p77
      %p153 = pneg %p74
      %p154 = pneg %p103
      %p155 = pneg %p100
      %p156 = scmp.lt.s32.totalorder %s14, 1
      %s157 = scalar_select %p156, %s14, 1
      %s158 = smul.addr %s157, 8
      %s159 = smul.addr %s158, 8
      %s160 = scalar_lea.vmem %s3, %s159
      %p161 = scmp.lt.s32.totalorder %s14, 1
      %s162 = scalar_select %p161, %s14, 1
      %s163 = smul.addr %s162, 18
      %s164 = smul.addr %s163, 8
      %s165 = scalar_lea.vmem %s0, %s164
      %p166 = scmp.lt.s32.totalorder %s14, 1
      %s167 = scalar_select %p166, %s14, 1
      %s168 = smul.addr %s167, 8
      %s169 = smul.addr %s168, 8
      %s170 = scalar_lea.vmem %s3, %s169
      %v171 = vld [vmem:[%s165] sm:$0xff]
      %v172 = vld [vmem:[%s165 + $0x8] sm:$0x1]
      %v173 = vld [vmem:[%s165 + $0x10] sm:$0xff]
      %v174 = vld [vmem:[%s165 + $0x18] sm:$0x1]
      %v175 = vld [vmem:[%s165 + $0x20] sm:$0xff]
      %v176 = vld [vmem:[%s165 + $0x28] sm:$0x1]
      %v177 = vld [vmem:[%s165 + $0x30] sm:$0xff]
      %v178 = vld [vmem:[%s165 + $0x38] sm:$0x1]
      %v179 = vld [vmem:[%s165 + $0x40] sm:$0xff]
      %v180 = vld [vmem:[%s165 + $0x48] sm:$0x1]
      %v181 = vld [vmem:[%s165 + $0x50] sm:$0xff]
      %v182 = vld [vmem:[%s165 + $0x58] sm:$0x1]
      %v183 = vld [vmem:[%s165 + $0x60] sm:$0xff]
      %v184 = vld [vmem:[%s165 + $0x68] sm:$0x1]
      %v185 = vld [vmem:[%s165 + $0x70] sm:$0xff]
      %v186 = vld [vmem:[%s165 + $0x78] sm:$0x1]
      %v187 = vld [vmem:[%s165 + $0x80] sm:$0xff]
      %v188 = vld [vmem:[%s165 + $0x88] sm:$0x1]
      %v189 = vld [vmem:[%s1] sm:$0xff]
      %v190 = vld [vmem:[%s1 + $0x8] sm:$0xff]
      %v191 = vld [vmem:[%s1 + $0x10] sm:$0xff]
      %v192 = vld [vmem:[%s1 + $0x18] sm:$0xff]
      %vm209 = vcmask 1046528
      %v210 = vrot.slane %v171, 1
      %v211 = vrot.slane %v172, 1
      %v212 = vsel %vm209, %v210, %v211
      %v213 = vrot.slane %v173, 1
      %v214 = vrot.slane %v174, 1
      %v215 = vsel %vm209, %v213, %v214
      %v216 = vrot.slane %v175, 1
      %v217 = vrot.slane %v176, 1
      %v218 = vsel %vm209, %v216, %v217
      %v219 = vrot.slane %v177, 1
      %v220 = vrot.slane %v178, 1
      %v221 = vsel %vm209, %v219, %v220
      %v222 = vrot.slane %v179, 1
      %v223 = vrot.slane %v180, 1
      %v224 = vsel %vm209, %v222, %v223
      %v225 = vrot.slane %v181, 1
      %v226 = vrot.slane %v182, 1
      %v227 = vsel %vm209, %v225, %v226
      %v228 = vrot.slane %v183, 1
      %v229 = vrot.slane %v184, 1
      %v230 = vsel %vm209, %v228, %v229
      %v231 = vrot.slane %v185, 1
      %v232 = vrot.slane %v186, 1
      %v233 = vsel %vm209, %v231, %v232
      %s234 = scalar_lea.vmem %s1, 32
      %v235 = vld [vmem:[%s234] sm:$0xff]
      %v236 = vld [vmem:[%s234 + $0x8] sm:$0xff]
      %v237 = vld [vmem:[%s234 + $0x10] sm:$0xff]
      %v238 = vld [vmem:[%s234 + $0x18] sm:$0xff]
      %vm239 = vcmask 261120
      %v240 = vsel %vm239, %v212, 0
      %v242 = vsel %vm239, %v215, 0
      %v244 = vsel %vm239, %v218, 0
      %v246 = vsel %vm239, %v221, 0
      %v248 = vsel %vm239, %v224, 0
      %v250 = vsel %vm239, %v227, 0
      %v252 = vsel %vm239, %v230, 0
      %v254 = vsel %vm239, %v233, 0
      %256 = vmatprep.subr.mxu0 0.0
      %257 = vmatpush1.msra.mxu0 %v235
      %258 = vmatprep.subr.mxu0 0.0
      %259 = vmatpush1.msra.mxu0 %v236
      %260 = vmatprep.subr.mxu0 0.0
      %261 = vmatpush1.msra.mxu0 %v237
      %262 = vmatprep.subr.mxu0 0.0
      %263 = vmatpush1.msra.mxu0 %v238
      %264 = vmatprep.subr.mxu0 0.0
      %265 = vmatpush1.msra.mxu0 0.0
      %266 = vmatprep.subr.mxu0 0.0
      %267 = vmatpush1.msra.mxu0 0.0
      %268 = vmatprep.subr.mxu0 0.0
      %269 = vmatpush1.msra.mxu0 0.0
      %270 = vmatprep.subr.mxu0 0.0
      %271 = vmatpush1.msra.mxu0 0.0
      %272 = vmatprep.subr.mxu0 0.0
      %273 = vmatpush1.msra.mxu0 0.0
      %274 = vmatprep.subr.mxu0 0.0
      %275 = vmatpush1.msra.mxu0 0.0
      %276 = vmatprep.subr.mxu0 0.0
      %277 = vmatpush1.msra.mxu0 0.0
      %278 = vmatprep.subr.mxu0 0.0
      %279 = vmatpush1.msra.mxu0 0.0
      %280 = vmatprep.subr.mxu0 0.0
      %281 = vmatpush1.msra.mxu0 0.0
      %282 = vmatprep.subr.mxu0 0.0
      %283 = vmatpush1.msra.mxu0 0.0
      %284 = vmatprep.subr.mxu0 0.0
      %285 = vmatpush1.msra.mxu0 0.0
      %286 = vmatprep.subr.mxu0 0.0
      %287 = vmatpush1.msra.mxu0 0.0
      %288 = vmatprep.subr.mxu0 0.0
      %289 = vmatpush1.msra.mxu0 0.0
      %290 = vmatprep.subr.mxu0 0.0
      %291 = vmatpush1.msra.mxu0 0.0
      %292 = vmatprep.subr.mxu0 0.0
      %293 = vmatpush1.msra.mxu0 0.0
      %294 = vmatprep.subr.mxu0 0.0
      %295 = vmatpush1.msra.mxu0 0.0
      %296 = vmatprep.subr.mxu0 0.0
      %297 = vmatpush1.msra.mxu0 0.0
      %298 = vmatprep.subr.mxu0 0.0
      %299 = vmatpush1.msra.mxu0 0.0
      %300 = vmatprep.subr.mxu0 0.0
      %301 = vmatpush1.msra.mxu0 0.0
      %302 = vmatprep.subr.mxu0 0.0
      %303 = vmatpush1.msra.mxu0 0.0
      %304 = vmatprep.subr.mxu0 0.0
      %305 = vmatpush1.msra.mxu0 0.0
      %306 = vmatprep.subr.mxu0 0.0
      %307 = vmatpush1.msra.mxu0 0.0
      %308 = vmatprep.subr.mxu0 0.0
      %309 = vmatpush1.msra.mxu0 0.0
      %310 = vmatprep.subr.mxu0 0.0
      %311 = vmatpush1.msra.mxu0 0.0
      %312 = vmatprep.subr.mxu0 0.0
      %313 = vmatpush1.msra.mxu0 0.0
      %314 = vmatprep.subr.mxu0 0.0
      %315 = vmatpush1.msra.mxu0 0.0
      %316 = vmatprep.subr.mxu0 0.0
      %317 = vmatpush1.msra.mxu0 0.0
      %318 = vmatprep.subr.mxu0 0.0
      %319 = vmatpush1.msra.mxu0 0.0
      %320 = vmatprep.mubr.f32.mxu0 0.0
      %321 = vmatmul.mubr.f32.gmra.mrb[0].mxu0 %v240
      %v322 = vpop.f32.mrb[0].mxu0
      %v323 = vadd.f32 0.0, %v322
      %v324 = vpop.f32.mrb[0].mxu0
      %325 = vmatprep.mubr.f32.mxu0 0.0
      %326 = vmatmul.mubr.f32.gmra.mrb[0].mxu0 %v242
      %v327 = vpop.f32.mrb[0].mxu0
      %v328 = vadd.f32 0.0, %v327
      %v329 = vpop.f32.mrb[0].mxu0
      %330 = vmatprep.mubr.f32.mxu0 0.0
      %331 = vmatmul.mubr.f32.gmra.mrb[0].mxu0 %v244
      %v332 = vpop.f32.mrb[0].mxu0
      %v333 = vadd.f32 0.0, %v332
      %v334 = vpop.f32.mrb[0].mxu0
      %335 = vmatprep.mubr.f32.mxu0 0.0
      %336 = vmatmul.mubr.f32.gmra.mrb[0].mxu0 %v246
      %v337 = vpop.f32.mrb[0].mxu0
      %v338 = vadd.f32 0.0, %v337
      %v339 = vpop.f32.mrb[0].mxu0
      %340 = vmatprep.mubr.f32.mxu0 0.0
      %341 = vmatmul.mubr.f32.gmra.mrb[0].mxu0 %v248
      %v342 = vpop.f32.mrb[0].mxu0
      %v343 = vadd.f32 0.0, %v342
      %v344 = vpop.f32.mrb[0].mxu0
      %345 = vmatprep.mubr.f32.mxu0 0.0
      %346 = vmatmul.mubr.f32.gmra.mrb[0].mxu0 %v250
      %v347 = vpop.f32.mrb[0].mxu0
      %v348 = vadd.f32 0.0, %v347
      %v349 = vpop.f32.mrb[0].mxu0
      %350 = vmatprep.mubr.f32.mxu0 0.0
      %351 = vmatmul.mubr.f32.gmra.mrb[0].mxu0 %v252
      %v352 = vpop.f32.mrb[0].mxu0
      %v353 = vadd.f32 0.0, %v352
      %v354 = vpop.f32.mrb[0].mxu0
      %355 = vmatprep.mubr.f32.mxu0 0.0
      %356 = vmatmul.mubr.f32.gmra.mrb[0].mxu0 %v254
      %v357 = vpop.f32.mrb[0].mxu0
      %v358 = vadd.f32 0.0, %v357
      %v359 = vpop.f32.mrb[0].mxu0
      %360 = vdwg.mxu0
      %v361 = vsel %vm239, %v171, 0
      %v363 = vsel %vm239, %v173, 0
      %v365 = vsel %vm239, %v175, 0
      %v367 = vsel %vm239, %v177, 0
      %v369 = vsel %vm239, %v179, 0
      %v371 = vsel %vm239, %v181, 0
      %v373 = vsel %vm239, %v183, 0
      %v375 = vsel %vm239, %v185, 0
      %377 = vmatprep.subr.mxu0 0.0
      %378 = vmatpush1.msra.mxu0 %v189
      %379 = vmatprep.subr.mxu0 0.0
      %380 = vmatpush1.msra.mxu0 %v190
      %381 = vmatprep.subr.mxu0 0.0
      %382 = vmatpush1.msra.mxu0 %v191
      %383 = vmatprep.subr.mxu0 0.0
      %384 = vmatpush1.msra.mxu0 %v192
      %385 = vmatprep.subr.mxu0 0.0
      %386 = vmatpush1.msra.mxu0 0.0
      %387 = vmatprep.subr.mxu0 0.0
      %388 = vmatpush1.msra.mxu0 0.0
      %389 = vmatprep.subr.mxu0 0.0
      %390 = vmatpush1.msra.mxu0 0.0
      %391 = vmatprep.subr.mxu0 0.0
      %392 = vmatpush1.msra.mxu0 0.0
      %393 = vmatprep.subr.mxu0 0.0
      %394 = vmatpush1.msra.mxu0 0.0
      %395 = vmatprep.subr.mxu0 0.0
      %396 = vmatpush1.msra.mxu0 0.0
      %397 = vmatprep.subr.mxu0 0.0
      %398 = vmatpush1.msra.mxu0 0.0
      %399 = vmatprep.subr.mxu0 0.0
      %400 = vmatpush1.msra.mxu0 0.0
      %401 = vmatprep.subr.mxu0 0.0
      %402 = vmatpush1.msra.mxu0 0.0
      %403 = vmatprep.subr.mxu0 0.0
      %404 = vmatpush1.msra.mxu0 0.0
      %405 = vmatprep.subr.mxu0 0.0
      %406 = vmatpush1.msra.mxu0 0.0
      %407 = vmatprep.subr.mxu0 0.0
      %408 = vmatpush1.msra.mxu0 0.0
      %409 = vmatprep.subr.mxu0 0.0
      %410 = vmatpush1.msra.mxu0 0.0
      %411 = vmatprep.subr.mxu0 0.0
      %412 = vmatpush1.msra.mxu0 0.0
      %413 = vmatprep.subr.mxu0 0.0
      %414 = vmatpush1.msra.mxu0 0.0
      %415 = vmatprep.subr.mxu0 0.0
      %416 = vmatpush1.msra.mxu0 0.0
      %417 = vmatprep.subr.mxu0 0.0
      %418 = vmatpush1.msra.mxu0 0.0
      %419 = vmatprep.subr.mxu0 0.0
      %420 = vmatpush1.msra.mxu0 0.0
      %421 = vmatprep.subr.mxu0 0.0
      %422 = vmatpush1.msra.mxu0 0.0
      %423 = vmatprep.subr.mxu0 0.0
      %424 = vmatpush1.msra.mxu0 0.0
      %425 = vmatprep.subr.mxu0 0.0
      %426 = vmatpush1.msra.mxu0 0.0
      %427 = vmatprep.subr.mxu0 0.0
      %428 = vmatpush1.msra.mxu0 0.0
      %429 = vmatprep.subr.mxu0 0.0
      %430 = vmatpush1.msra.mxu0 0.0
      %431 = vmatprep.subr.mxu0 0.0
      %432 = vmatpush1.msra.mxu0 0.0
      %433 = vmatprep.subr.mxu0 0.0
      %434 = vmatpush1.msra.mxu0 0.0
      %435 = vmatprep.subr.mxu0 0.0
      %436 = vmatpush1.msra.mxu0 0.0
      %437 = vmatprep.subr.mxu0 0.0
      %438 = vmatpush1.msra.mxu0 0.0
      %439 = vmatprep.subr.mxu0 0.0
      %440 = vmatpush1.msra.mxu0 0.0
      %441 = vmatprep.mubr.f32.mxu0 0.0
      %442 = vmatmul.mubr.f32.gmra.mrb[0].mxu0 %v361
      %v443 = vpop.f32.mrb[0].mxu0
      %v444 = vadd.f32 %v323, %v443
      %v445 = vpop.f32.mrb[0].mxu0
      %446 = vmatprep.mubr.f32.mxu0 0.0
      %447 = vmatmul.mubr.f32.gmra.mrb[0].mxu0 %v363
      %v448 = vpop.f32.mrb[0].mxu0
      %v449 = vadd.f32 %v328, %v448
      %v450 = vpop.f32.mrb[0].mxu0
      %451 = vmatprep.mubr.f32.mxu0 0.0
      %452 = vmatmul.mubr.f32.gmra.mrb[0].mxu0 %v365
      %v453 = vpop.f32.mrb[0].mxu0
      %v454 = vadd.f32 %v333, %v453
      %v455 = vpop.f32.mrb[0].mxu0
      %456 = vmatprep.mubr.f32.mxu0 0.0
      %457 = vmatmul.mubr.f32.gmra.mrb[0].mxu0 %v367
      %v458 = vpop.f32.mrb[0].mxu0
      %v459 = vadd.f32 %v338, %v458
      %v460 = vpop.f32.mrb[0].mxu0
      %461 = vmatprep.mubr.f32.mxu0 0.0
      %462 = vmatmul.mubr.f32.gmra.mrb[0].mxu0 %v369
      %v463 = vpop.f32.mrb[0].mxu0
      %v464 = vadd.f32 %v343, %v463
      %v465 = vpop.f32.mrb[0].mxu0
      %466 = vmatprep.mubr.f32.mxu0 0.0
      %467 = vmatmul.mubr.f32.gmra.mrb[0].mxu0 %v371
      %v468 = vpop.f32.mrb[0].mxu0
      %v469 = vadd.f32 %v348, %v468
      %v470 = vpop.f32.mrb[0].mxu0
      %471 = vmatprep.mubr.f32.mxu0 0.0
      %472 = vmatmul.mubr.f32.gmra.mrb[0].mxu0 %v373
      %v473 = vpop.f32.mrb[0].mxu0
      %v474 = vadd.f32 %v353, %v473
      %v475 = vpop.f32.mrb[0].mxu0
      %476 = vmatprep.mubr.f32.mxu0 0.0
      %477 = vmatmul.mubr.f32.gmra.mrb[0].mxu0 %v375
      %v478 = vpop.f32.mrb[0].mxu0
      %v479 = vadd.f32 %v358, %v478
      %v480 = vpop.f32.mrb[0].mxu0
      %481 = vdwg.mxu0
      %s482 = scalar_lea.vmem %s1, 64
      %v483 = vld [vmem:[%s482] sm:$0xff]
      %v484 = vld [vmem:[%s482 + $0x8] sm:$0xff]
      %v485 = vld [vmem:[%s482 + $0x10] sm:$0xff]
      %v486 = vld [vmem:[%s482 + $0x18] sm:$0xff]
      %v488 = vsel %vm239, %v187, 0
      %490 = vmatprep.subr.mxu0 0.0
      %491 = vmatpush1.msra.mxu0 %v483
      %492 = vmatprep.subr.mxu0 0.0
      %493 = vmatpush1.msra.mxu0 %v484
      %494 = vmatprep.subr.mxu0 0.0
      %495 = vmatpush1.msra.mxu0 %v485
      %496 = vmatprep.subr.mxu0 0.0
      %497 = vmatpush1.msra.mxu0 %v486
      %498 = vmatprep.subr.mxu0 0.0
      %499 = vmatpush1.msra.mxu0 0.0
      %500 = vmatprep.subr.mxu0 0.0
      %501 = vmatpush1.msra.mxu0 0.0
      %502 = vmatprep.subr.mxu0 0.0
      %503 = vmatpush1.msra.mxu0 0.0
      %504 = vmatprep.subr.mxu0 0.0
      %505 = vmatpush1.msra.mxu0 0.0
      %506 = vmatprep.subr.mxu0 0.0
      %507 = vmatpush1.msra.mxu0 0.0
      %508 = vmatprep.subr.mxu0 0.0
      %509 = vmatpush1.msra.mxu0 0.0
      %510 = vmatprep.subr.mxu0 0.0
      %511 = vmatpush1.msra.mxu0 0.0
      %512 = vmatprep.subr.mxu0 0.0
      %513 = vmatpush1.msra.mxu0 0.0
      %514 = vmatprep.subr.mxu0 0.0
      %515 = vmatpush1.msra.mxu0 0.0
      %516 = vmatprep.subr.mxu0 0.0
      %517 = vmatpush1.msra.mxu0 0.0
      %518 = vmatprep.subr.mxu0 0.0
      %519 = vmatpush1.msra.mxu0 0.0
      %520 = vmatprep.subr.mxu0 0.0
      %521 = vmatpush1.msra.mxu0 0.0
      %522 = vmatprep.subr.mxu0 0.0
      %523 = vmatpush1.msra.mxu0 0.0
      %524 = vmatprep.subr.mxu0 0.0
      %525 = vmatpush1.msra.mxu0 0.0
      %526 = vmatprep.subr.mxu0 0.0
      %527 = vmatpush1.msra.mxu0 0.0
      %528 = vmatprep.subr.mxu0 0.0
      %529 = vmatpush1.msra.mxu0 0.0
      %530 = vmatprep.subr.mxu0 0.0
      %531 = vmatpush1.msra.mxu0 0.0
      %532 = vmatprep.subr.mxu0 0.0
      %533 = vmatpush1.msra.mxu0 0.0
      %534 = vmatprep.subr.mxu0 0.0
      %535 = vmatpush1.msra.mxu0 0.0
      %536 = vmatprep.subr.mxu0 0.0
      %537 = vmatpush1.msra.mxu0 0.0
      %538 = vmatprep.subr.mxu0 0.0
      %539 = vmatpush1.msra.mxu0 0.0
      %540 = vmatprep.subr.mxu0 0.0
      %541 = vmatpush1.msra.mxu0 0.0
      %542 = vmatprep.subr.mxu0 0.0
      %543 = vmatpush1.msra.mxu0 0.0
      %544 = vmatprep.subr.mxu0 0.0
      %545 = vmatpush1.msra.mxu0 0.0
      %546 = vmatprep.subr.mxu0 0.0
      %547 = vmatpush1.msra.mxu0 0.0
      %548 = vmatprep.subr.mxu0 0.0
      %549 = vmatpush1.msra.mxu0 0.0
      %550 = vmatprep.subr.mxu0 0.0
      %551 = vmatpush1.msra.mxu0 0.0
      %552 = vmatprep.subr.mxu0 0.0
      %553 = vmatpush1.msra.mxu0 0.0
      %554 = vmatprep.mubr.f32.mxu0 0.0
      %555 = vmatmul.mubr.f32.gmra.mrb[0].mxu0 %v363
      %v556 = vpop.f32.mrb[0].mxu0
      %v557 = vadd.f32 0.0, %v556
      %v558 = vpop.f32.mrb[0].mxu0
      %559 = vmatprep.mubr.f32.mxu0 0.0
      %560 = vmatmul.mubr.f32.gmra.mrb[0].mxu0 %v365
      %v561 = vpop.f32.mrb[0].mxu0
      %v562 = vadd.f32 0.0, %v561
      %v563 = vpop.f32.mrb[0].mxu0
      %564 = vmatprep.mubr.f32.mxu0 0.0
      %565 = vmatmul.mubr.f32.gmra.mrb[0].mxu0 %v367
      %v566 = vpop.f32.mrb[0].mxu0
      %v567 = vadd.f32 0.0, %v566
      %v568 = vpop.f32.mrb[0].mxu0
      %569 = vmatprep.mubr.f32.mxu0 0.0
      %570 = vmatmul.mubr.f32.gmra.mrb[0].mxu0 %v369
      %v571 = vpop.f32.mrb[0].mxu0
      %v572 = vadd.f32 0.0, %v571
      %v573 = vpop.f32.mrb[0].mxu0
      %574 = vmatprep.mubr.f32.mxu0 0.0
      %575 = vmatmul.mubr.f32.gmra.mrb[0].mxu0 %v371
      %v576 = vpop.f32.mrb[0].mxu0
      %v577 = vadd.f32 0.0, %v576
      %v578 = vpop.f32.mrb[0].mxu0
      %579 = vmatprep.mubr.f32.mxu0 0.0
      %580 = vmatmul.mubr.f32.gmra.mrb[0].mxu0 %v373
      %v581 = vpop.f32.mrb[0].mxu0
      %v582 = vadd.f32 0.0, %v581
      %v583 = vpop.f32.mrb[0].mxu0
      %584 = vmatprep.mubr.f32.mxu0 0.0
      %585 = vmatmul.mubr.f32.gmra.mrb[0].mxu0 %v375
      %v586 = vpop.f32.mrb[0].mxu0
      %v587 = vadd.f32 0.0, %v586
      %v588 = vpop.f32.mrb[0].mxu0
      %589 = vmatprep.mubr.f32.mxu0 0.0
      %590 = vmatmul.mubr.f32.gmra.mrb[0].mxu0 %v488
      %v591 = vpop.f32.mrb[0].mxu0
      %v592 = vadd.f32 0.0, %v591
      %v593 = vpop.f32.mrb[0].mxu0
      %594 = vdwg.mxu0
      %v595 = vadd.f32 %v444, %v557
      %v596 = vadd.f32 %v449, %v562
      %v597 = vadd.f32 %v454, %v567
      %v598 = vadd.f32 %v459, %v572
      %v599 = vadd.f32 %v464, %v577
      %v600 = vadd.f32 %v469, %v582
      %v601 = vadd.f32 %v474, %v587
      %v602 = vadd.f32 %v479, %v592
      %v604 = vrot.slane %v187, 1
      %v605 = vrot.slane %v188, 1
      %v606 = vsel %vm209, %v604, %v605
      %s607 = scalar_lea.vmem %s1, 96
      %v608 = vld [vmem:[%s607] sm:$0xff]
      %v609 = vld [vmem:[%s607 + $0x8] sm:$0xff]
      %v610 = vld [vmem:[%s607 + $0x10] sm:$0xff]
      %v611 = vld [vmem:[%s607 + $0x18] sm:$0xff]
      %v612 = vsel %vm239, %v606, 0
      %614 = vmatprep.subr.mxu0 0.0
      %615 = vmatpush1.msra.mxu0 %v608
      %616 = vmatprep.subr.mxu0 0.0
      %617 = vmatpush1.msra.mxu0 %v609
      %618 = vmatprep.subr.mxu0 0.0
      %619 = vmatpush1.msra.mxu0 %v610
      %620 = vmatprep.subr.mxu0 0.0
      %621 = vmatpush1.msra.mxu0 %v611
      %622 = vmatprep.subr.mxu0 0.0
      %623 = vmatpush1.msra.mxu0 0.0
      %624 = vmatprep.subr.mxu0 0.0
      %625 = vmatpush1.msra.mxu0 0.0
      %626 = vmatprep.subr.mxu0 0.0
      %627 = vmatpush1.msra.mxu0 0.0
      %628 = vmatprep.subr.mxu0 0.0
      %629 = vmatpush1.msra.mxu0 0.0
      %630 = vmatprep.subr.mxu0 0.0
      %631 = vmatpush1.msra.mxu0 0.0
      %632 = vmatprep.subr.mxu0 0.0
      %633 = vmatpush1.msra.mxu0 0.0
      %634 = vmatprep.subr.mxu0 0.0
      %635 = vmatpush1.msra.mxu0 0.0
      %636 = vmatprep.subr.mxu0 0.0
      %637 = vmatpush1.msra.mxu0 0.0
      %638 = vmatprep.subr.mxu0 0.0
      %639 = vmatpush1.msra.mxu0 0.0
      %640 = vmatprep.subr.mxu0 0.0
      %641 = vmatpush1.msra.mxu0 0.0
      %642 = vmatprep.subr.mxu0 0.0
      %643 = vmatpush1.msra.mxu0 0.0
      %644 = vmatprep.subr.mxu0 0.0
      %645 = vmatpush1.msra.mxu0 0.0
      %646 = vmatprep.subr.mxu0 0.0
      %647 = vmatpush1.msra.mxu0 0.0
      %648 = vmatprep.subr.mxu0 0.0
      %649 = vmatpush1.msra.mxu0 0.0
      %650 = vmatprep.subr.mxu0 0.0
      %651 = vmatpush1.msra.mxu0 0.0
      %652 = vmatprep.subr.mxu0 0.0
      %653 = vmatpush1.msra.mxu0 0.0
      %654 = vmatprep.subr.mxu0 0.0
      %655 = vmatpush1.msra.mxu0 0.0
      %656 = vmatprep.subr.mxu0 0.0
      %657 = vmatpush1.msra.mxu0 0.0
      %658 = vmatprep.subr.mxu0 0.0
      %659 = vmatpush1.msra.mxu0 0.0
      %660 = vmatprep.subr.mxu0 0.0
      %661 = vmatpush1.msra.mxu0 0.0
      %662 = vmatprep.subr.mxu0 0.0
      %663 = vmatpush1.msra.mxu0 0.0
      %664 = vmatprep.subr.mxu0 0.0
      %665 = vmatpush1.msra.mxu0 0.0
      %666 = vmatprep.subr.mxu0 0.0
      %667 = vmatpush1.msra.mxu0 0.0
      %668 = vmatprep.subr.mxu0 0.0
      %669 = vmatpush1.msra.mxu0 0.0
      %670 = vmatprep.subr.mxu0 0.0
      %671 = vmatpush1.msra.mxu0 0.0
      %672 = vmatprep.subr.mxu0 0.0
      %673 = vmatpush1.msra.mxu0 0.0
      %674 = vmatprep.subr.mxu0 0.0
      %675 = vmatpush1.msra.mxu0 0.0
      %676 = vmatprep.subr.mxu0 0.0
      %677 = vmatpush1.msra.mxu0 0.0
      %678 = vmatprep.mubr.f32.mxu0 0.0
      %679 = vmatmul.mubr.f32.gmra.mrb[0].mxu0 %v242
      %v680 = vpop.f32.mrb[0].mxu0
      %v681 = vadd.f32 0.0, %v680
      %v682 = vpop.f32.mrb[0].mxu0
      %683 = vmatprep.mubr.f32.mxu0 0.0
      %684 = vmatmul.mubr.f32.gmra.mrb[0].mxu0 %v244
      %v685 = vpop.f32.mrb[0].mxu0
      %v686 = vadd.f32 0.0, %v685
      %v687 = vpop.f32.mrb[0].mxu0
      %688 = vmatprep.mubr.f32.mxu0 0.0
      %689 = vmatmul.mubr.f32.gmra.mrb[0].mxu0 %v246
      %v690 = vpop.f32.mrb[0].mxu0
      %v691 = vadd.f32 0.0, %v690
      %v692 = vpop.f32.mrb[0].mxu0
      %693 = vmatprep.mubr.f32.mxu0 0.0
      %694 = vmatmul.mubr.f32.gmra.mrb[0].mxu0 %v248
      %v695 = vpop.f32.mrb[0].mxu0
      %v696 = vadd.f32 0.0, %v695
      %v697 = vpop.f32.mrb[0].mxu0
      %698 = vmatprep.mubr.f32.mxu0 0.0
      %699 = vmatmul.mubr.f32.gmra.mrb[0].mxu0 %v250
      %v700 = vpop.f32.mrb[0].mxu0
      %v701 = vadd.f32 0.0, %v700
      %v702 = vpop.f32.mrb[0].mxu0
      %703 = vmatprep.mubr.f32.mxu0 0.0
      %704 = vmatmul.mubr.f32.gmra.mrb[0].mxu0 %v252
      %v705 = vpop.f32.mrb[0].mxu0
      %v706 = vadd.f32 0.0, %v705
      %v707 = vpop.f32.mrb[0].mxu0
      %708 = vmatprep.mubr.f32.mxu0 0.0
      %709 = vmatmul.mubr.f32.gmra.mrb[0].mxu0 %v254
      %v710 = vpop.f32.mrb[0].mxu0
      %v711 = vadd.f32 0.0, %v710
      %v712 = vpop.f32.mrb[0].mxu0
      %713 = vmatprep.mubr.f32.mxu0 0.0
      %714 = vmatmul.mubr.f32.gmra.mrb[0].mxu0 %v612
      %v715 = vpop.f32.mrb[0].mxu0
      %v716 = vadd.f32 0.0, %v715
      %v717 = vpop.f32.mrb[0].mxu0
      %718 = vdwg.mxu0
      %v719 = vadd.f32 %v595, %v681
      %v720 = vadd.f32 %v596, %v686
      %v721 = vadd.f32 %v597, %v691
      %v722 = vadd.f32 %v598, %v696
      %v723 = vadd.f32 %v599, %v701
      %v724 = vadd.f32 %v600, %v706
      %v725 = vadd.f32 %v601, %v711
      %v726 = vadd.f32 %v602, %v716
      %v727 = vld [vmem:[%s2] sm:$0x1]
      %v729 = vlaneseq
      %v730 = vshrl.u32 %v729, 7
      %v731 = vsub.s32 0, %v730
      %v732 = vrot.slane %v727, %v731
      %v734 = vadd.f32 %v719, %v732
      %v735 = vadd.f32 %v720, %v732
      %v736 = vadd.f32 %v721, %v732
      %v737 = vadd.f32 %v722, %v732
      %v738 = vadd.f32 %v723, %v732
      %v739 = vadd.f32 %v724, %v732
      %v740 = vadd.f32 %v725, %v732
      %v741 = vadd.f32 %v726, %v732
      %vm742 = vcmask 64512
      %743 = vst.msk [vmem:[%s170] sm:$0xff] %vm742, %v734
      %744 = vst.msk [vmem:[%s170 + $0x8] sm:$0xff] %vm742, %v735
      %745 = vst.msk [vmem:[%s170 + $0x10] sm:$0xff] %vm742, %v736
      %746 = vst.msk [vmem:[%s170 + $0x18] sm:$0xff] %vm742, %v737
      %747 = vst.msk [vmem:[%s170 + $0x20] sm:$0xff] %vm742, %v738
      %748 = vst.msk [vmem:[%s170 + $0x28] sm:$0xff] %vm742, %v739
      %749 = vst.msk [vmem:[%s170 + $0x30] sm:$0xff] %vm742, %v740
      %750 = vst.msk [vmem:[%s170 + $0x38] sm:$0xff] %vm742, %v741
      %p751 = scmp.lt.s32.totalorder %s14, 1
      %s752 = scalar_select %p751, %s14, 1
      %s753 = smul.addr %s752, 8
      %s754 = smul.addr %s753, 8
      %s755 = scalar_lea.vmem %s3, %s754
      // Predicated region
      $region33: #{block_forward.11} parent=31 // pred_check
        %p756 = pneg %p100
      $region34: #{block_forward.11} parent=31 // pred_check_branch
        %758 = sbr.rel (%p756) target = $region36
      $region35: #{block_forward.11} parent=31 // pred_region
        _
      $region36: #{block_forward.11} parent=31 // pred_fallthru
        _
    $region32: #{block_forward.11} parent=5 // pred_fallthru
      _
    %p759 = scmp.le.s32.totalorder 2, %s9
    // Predicated region
    $region37: #{block_forward.11} parent=5 // pred_check
      %p760 = pneg %p759
    $region38: #{block_forward.11} parent=5 // pred_check_branch
      %762 = sbr.rel (%p760) target = $region40
    $region39: #{block_forward.11} parent=5 // pred_region
      %s763 = ssub.s32 %s9, 2
      // Predicated region
      $region41: #{block_forward.11} parent=39 // pred_check
        %p764 = pneg %p106
      $region42: #{block_forward.11} parent=39 // pred_check_branch
        %766 = sbr.rel (%p764) target = $region44
      $region43: #{block_forward.11} parent=39 // pred_region
        %p767 = scmp.lt.s32.totalorder %s15, 1
        %s768 = scalar_select %p767, %s15, 1
        %s769 = smul.addr %s768, 8
        %s770 = smul.addr %s769, 8
        %s771 = scalar_lea.vmem %s3, %s770
      $region44: #{block_forward.11} parent=39 // pred_fallthru
        _
    $region40: #{block_forward.11} parent=5 // pred_fallthru
      _
  $region6: #{block_forward.11} parent=0 // loop_footer
    %s13 = sadd.s32 1, %s9
  $region7: #{block_forward.11} parent=0 // loop_footer_branch
    %8 = sbr.rel target = $region3
  $region8: #{block_forward.11} parent=0 // loop_exit
    _

</llo_original>
